<compile_context>
chip_gen: v5e
topology: v5e:2x2
jax: 0.10.0
libtpu: 0.0.40
codegen_flags: <defaults>
</compile_context>

<pallas_src>
import functools
import math

import jax
import jax.numpy as jnp
from jax.experimental import pallas as pl
from jax.experimental.pallas import tpu as pltpu

_SQRT2 = math.sqrt(2.0)


def _gelu(x):
    # exact (erf) GELU, matching torch.nn.GELU() default
    return 0.5 * x * (1.0 + jax.lax.erf(x / _SQRT2))


def _mlp_kernel(x_ref, w1_ref, b1_ref, w2_ref, b2_ref, o_ref, acc_ref):
    """Fused fc1 -> GELU -> fc2 on one (Cin, tl) spatial tile / hidden chunk.

    x_ref : (1, Cin, tl)   activation tile (lanes = spatial), bf16
    w1_ref: (th, Cin)      fc1.weight[:, :, 0, 0] chunk, bf16
    b1_ref: (th, 1)        fc1.bias chunk, f32
    w2_ref: (Cout, th)     fc2.weight[:, :, 0, 0] chunk, bf16
    b2_ref: (Cout, 1)      fc2.bias, f32
    o_ref : (1, Cout, tl)
    acc_ref: (Cout, tl)    f32 accumulator over hidden chunks
    """
    hi = pl.program_id(2)

    @pl.when(hi == 0)
    def _():
        acc_ref[...] = jnp.zeros_like(acc_ref)

    x = x_ref[0]                                                   # (Cin, tl)
    h = jnp.dot(w1_ref[...], x, preferred_element_type=jnp.float32)
    h = _gelu(h + b1_ref[...])                                     # (th, tl) f32
    # TODO(synk): Dropout (p=0.0 / eval mode) is the identity; no RNG path.
    h = h.astype(w2_ref.dtype)                                     # bf16 for MXU
    acc_ref[...] += jnp.dot(w2_ref[...], h, preferred_element_type=jnp.float32)

    @pl.when(hi == pl.num_programs(2) - 1)
    def _():
        o_ref[0] = (acc_ref[...] + b2_ref[...]).astype(o_ref.dtype)


def _pick_spatial_tile(L, N, max_tile=512):
    """Lane tile: multiple of 128 dividing L; shape-aware step count."""
    cands = [c for c in (1024, 768, 512, 384, 256, 128)
             if c <= max_tile and c <= L and L % c == 0]
    if not cands:
        return L                      # full-extent block (always legal)
    for c in cands:                   # largest tile still giving >= 8 steps
        if N * (L // c) >= 8:         # (>= 4 per TensorCore on v7x)
            return c
    return cands[-1]                  # otherwise maximize steps / TC balance


def _pick_hidden_tile(Hid, max_tile=1024):
    """Hidden chunk: full Hid when small (weights grid-invariant), else ~<=1024."""
    if Hid <= max_tile:
        return Hid
    for c in (1024, 768, 512, 384, 256, 128):
        if Hid % c == 0:
            return c
    return Hid


def mlp_forward(x_nchw, w1, b1, w2, b2, *, compute_dtype=jnp.bfloat16,
                max_spatial_tile=512, single_buffer_weights=True):
    """y = fc2(gelu(fc1(x))) with 1x1 convs; x: (N, Cin, H, W) NCHW.

    w1: (Hid, Cin)  = fc1.weight[:, :, 0, 0],  b1: (Hid,)
    w2: (Cout, Hid) = fc2.weight[:, :, 0, 0],  b2: (Cout,)
    """
    N, Cin, H, W = x_nchw.shape
    Hid, Cin1 = w1.shape
    Cout, Hid2 = w2.shape
    assert Cin1 == Cin and Hid2 == Hid and b1.shape == (Hid,) and b2.shape == (Cout,)

    out_dtype = x_nchw.dtype
    L = H * W
    tl = _pick_spatial_tile(L, N, max_spatial_tile)
    th = _pick_hidden_tile(Hid)
    n_l, n_h = L // tl, Hid // th

    # bf16 operands (MXU-native on all generations, half the DMA traffic);
    # f32 accumulation + f32 bias/GELU epilogue keep the numerics envelope.
    x3 = x_nchw.reshape(N, Cin, L).astype(compute_dtype)   # free reshape, no transpose
    w1c = w1.astype(compute_dtype)
    w2c = w2.astype(compute_dtype)
    b1c = b1.reshape(Hid, 1).astype(jnp.float32)
    b2c = b2.reshape(Cout, 1).astype(jnp.float32)

    # Grid-invariant blocks are DMA'd once -> single-buffer them to save VMEM.
    if single_buffer_weights:
        wkw = dict(pipeline_mode=pl.Buffered(1) if n_h == 1 else pl.Buffered(2))
        ckw = dict(pipeline_mode=pl.Buffered(1))   # b2 is always grid-invariant
    else:
        wkw, ckw = {}, {}

    # Explicit VMEM limit from the actual working set (v5e scoped default is
    # only 16 MiB; v7x physical is 64 MiB).
    itm_c = jnp.dtype(compute_dtype).itemsize
    itm_o = jnp.dtype(out_dtype).itemsize
    wbufs = 1 if (single_buffer_weights and n_h == 1) else 2
    est = (2 * Cin * tl * itm_c                        # x tile, double-buffered
           + 2 * Cout * tl * itm_o                     # out tile, double-buffered
           + wbufs * (th * Cin + Cout * th) * itm_c    # weight blocks
           + wbufs * (th + Cout) * 128 * 4             # biases pad to 128 lanes
           + Cout * tl * 4                             # f32 accumulator scratch
           + 2 * th * tl * (4 + itm_c))                # f32 hidden + bf16 copy
    vmem_limit = int(min(max(2 * est + (8 << 20), 32 << 20), 64 << 20))

    cost = pl.CostEstimate(
        flops=2 * N * L * Hid * (Cin + Cout),
        transcendentals=N * L * Hid,
        bytes_accessed=int(x3.size * itm_c + N * Cout * L * itm_o
                           + (w1c.size + w2c.size) * itm_c
                           + (b1c.size + b2c.size) * 4),
    )

    out = pl.pallas_call(
        _mlp_kernel,
        grid=(N, n_l, n_h),
        in_specs=[
            pl.BlockSpec((1, Cin, tl), lambda n, l, h: (n, 0, l)),
            pl.BlockSpec((th, Cin), lambda n, l, h: (h, 0), **wkw),
            pl.BlockSpec((th, 1), lambda n, l, h: (h, 0), **wkw),
            pl.BlockSpec((Cout, th), lambda n, l, h: (0, h), **wkw),
            pl.BlockSpec((Cout, 1), lambda n, l, h: (0, 0), **ckw),
        ],
        out_specs=pl.BlockSpec((1, Cout, tl), lambda n, l, h: (n, 0, l)),
        out_shape=jax.ShapeDtypeStruct((N, Cout, L), out_dtype),
        scratch_shapes=[pltpu.VMEM((Cout, tl), jnp.float32)],
        compiler_params=pltpu.CompilerParams(
            dimension_semantics=("parallel", "parallel", "arbitrary"),
            vmem_limit_bytes=vmem_limit),
        cost_estimate=cost,
    )(x3, w1c, b1c, w2c, b2c)
    return out.reshape(N, Cout, H, W)


if __name__ == "__main__":
    # Small shapes consistent with the module; channel dims multiples of 8
    # (sublane), spatial extent per image >= 128 (lane-dense).
    N, Cin, H, W = 2, 128, 16, 16
    Hid = 384                      # hidden_features
    Cout = Cin                     # out_features defaults to in_features

    key = jax.random.PRNGKey(0)
    kx, k1, kb1, k2, kb2 = jax.random.split(key, 5)
    x = jax.random.normal(kx, (N, Cin, H, W), jnp.float32)
    w1 = 0.05 * jax.random.normal(k1, (Hid, Cin), jnp.float32)    # fc1.weight[:,:,0,0]
    b1 = 0.05 * jax.random.normal(kb1, (Hid,), jnp.float32)       # fc1.bias
    w2 = 0.05 * jax.random.normal(k2, (Cout, Hid), jnp.float32)   # fc2.weight[:,:,0,0]
    b2 = 0.05 * jax.random.normal(kb2, (Cout,), jnp.float32)      # fc2.bias

    def make_fwd(single_buf):
        return jax.jit(functools.partial(
            mlp_forward, w1=w1, b1=b1, w2=w2, b2=b2,
            single_buffer_weights=single_buf))

    try:
        y = make_fwd(True)(x)
        jax.block_until_ready(y)
    except Exception:
        # Single-buffered weights unavailable in this build -> default buffering.
        y = make_fwd(False)(x)
        jax.block_until_ready(y)

    # Reference with the same bf16-operand / f32-accumulate numerics.
    def ref(a):
        ab = a.astype(jnp.bfloat16).astype(jnp.float32)
        w1b = w1.astype(jnp.bfloat16).astype(jnp.float32)
        w2b = w2.astype(jnp.bfloat16).astype(jnp.float32)
        h = jnp.einsum("oc,nchw->nohw", w1b, ab) + b1[None, :, None, None]
        h = jax.nn.gelu(h, approximate=False)
        return jnp.einsum("oc,nchw->nohw", w2b, h) + b2[None, :, None, None]

    y_ref = ref(x)
    assert y.shape == (N, Cout, H, W) and y.dtype == x.dtype
    err = float(jnp.max(jnp.abs(y - y_ref)))
    assert math.isfinite(err) and err < 5e-2, err
    print("KERNEL_OK")
</pallas_src>

<mosaic_0001>
module attributes {stable_mosaic.version = 11 : i64} {
  func.func @_mlp_kernel(%arg0: i32, %arg1: i32, %arg2: i32, %arg3: memref<1x128x128xbf16, #tpu.memory_space<vmem>>, %arg4: memref<384x128xbf16, #tpu.memory_space<vmem>>, %arg5: memref<384x1xf32, #tpu.memory_space<vmem>>, %arg6: memref<128x384xbf16, #tpu.memory_space<vmem>>, %arg7: memref<128x1xf32, #tpu.memory_space<vmem>>, %arg8: memref<1x128x128xf32, #tpu.memory_space<vmem>>, %arg9: memref<128x128xf32, #tpu.memory_space<vmem>>) attributes {dimension_semantics = [#tpu.dimension_semantics<parallel>, #tpu.dimension_semantics<parallel>, #tpu.dimension_semantics<arbitrary>], iteration_bounds = array<i64: 2, 2, 1>, scalar_prefetch = 0 : i64, scratch_operands = 1 : i64, tpu.core_type = #tpu.core_type<tc>, window_params = [{transform_indices = @transform_0, window_bounds = array<i64: 1, 128, 128>}, {pipeline_mode = #tpu.pipeline_mode<synchronous>, transform_indices = @transform_1, window_bounds = array<i64: 384, 128>}, {pipeline_mode = #tpu.pipeline_mode<synchronous>, transform_indices = @transform_2, window_bounds = array<i64: 384, 1>}, {pipeline_mode = #tpu.pipeline_mode<synchronous>, transform_indices = @transform_3, window_bounds = array<i64: 128, 384>}, {pipeline_mode = #tpu.pipeline_mode<synchronous>, transform_indices = @transform_4, window_bounds = array<i64: 128, 1>}, {transform_indices = @transform_5, window_bounds = array<i64: 1, 128, 128>}]} {
    %c0_i32 = arith.constant 0 : i32
    %0 = arith.cmpi eq, %arg2, %c0_i32 : i32
    %1 = arith.extui %0 : i1 to i32
    %c0_i32_0 = arith.constant 0 : i32
    %2 = arith.cmpi ne, %1, %c0_i32_0 : i32
    scf.if %2 {
      %cst_19 = arith.constant 0.000000e+00 : f32
      %27 = vector.broadcast %cst_19 : f32 to vector<128x128xf32>
      %c0_20 = arith.constant 0 : index
      %c0_21 = arith.constant 0 : index
      %28 = vector.load %arg9[%c0_20, %c0_21] : memref<128x128xf32, #tpu.memory_space<vmem>>, vector<128x128xf32>
      tpu.vector_store %arg9[%c0_20, %c0_21], %27 {strides = array<i32>} : memref<128x128xf32, #tpu.memory_space<vmem>>, vector<128x128xf32>,
    } else {
    }
    %c0 = arith.constant 0 : index
    %c0_1 = arith.constant 0 : index
    %c0_2 = arith.constant 0 : index
    %3 = vector.load %arg3[%c0, %c0_1, %c0_2] : memref<1x128x128xbf16, #tpu.memory_space<vmem>>, vector<1x128x128xbf16>
    %4 = vector.shape_cast %3 : vector<1x128x128xbf16> to vector<128x128xbf16>
    %c0_3 = arith.constant 0 : index
    %c0_4 = arith.constant 0 : index
    %5 = vector.load %arg4[%c0_3, %c0_4] : memref<384x128xbf16, #tpu.memory_space<vmem>>, vector<384x128xbf16>
    %cst = arith.constant dense<0.000000e+00> : vector<384x128xf32>
    %6 = tpu.matmul %5, %4, %cst {dimension_numbers = #tpu.dot_dimension_numbers<[1], [0], [0], [1], [0, 0, 1, 1], [], []>} : vector<384x128xbf16>, vector<128x128xbf16>, vector<384x128xf32> -> vector<384x128xf32>
    %c0_5 = arith.constant 0 : index
    %c0_6 = arith.constant 0 : index
    %7 = vector.load %arg5[%c0_5, %c0_6] : memref<384x1xf32, #tpu.memory_space<vmem>>, vector<384x1xf32>
    %8 = vector.broadcast %7 : vector<384x1xf32> to vector<384x128xf32>
    %9 = arith.addf %6, %8 : vector<384x128xf32>
    %cst_7 = arith.constant 5.000000e-01 : f32
    %10 = vector.broadcast %cst_7 : f32 to vector<384x128xf32>
    %11 = arith.mulf %10, %9 : vector<384x128xf32>
    %cst_8 = arith.constant 1.41421354 : f32
    %12 = vector.broadcast %cst_8 : f32 to vector<384x128xf32>
    %13 = arith.divf %9, %12 : vector<384x128xf32>
    %14 = math.erf %13 : vector<384x128xf32>
    %cst_9 = arith.constant 1.000000e+00 : f32
    %15 = vector.broadcast %cst_9 : f32 to vector<384x128xf32>
    %16 = arith.addf %15, %14 : vector<384x128xf32>
    %17 = arith.mulf %11, %16 : vector<384x128xf32>
    %18 = arith.truncf %17 : vector<384x128xf32> to vector<384x128xbf16>
    %c0_10 = arith.constant 0 : index
    %c0_11 = arith.constant 0 : index
    %19 = vector.load %arg9[%c0_10, %c0_11] : memref<128x128xf32, #tpu.memory_space<vmem>>, vector<128x128xf32>
    %c0_12 = arith.constant 0 : index
    %c0_13 = arith.constant 0 : index
    %20 = vector.load %arg6[%c0_12, %c0_13] : memref<128x384xbf16, #tpu.memory_space<vmem>>, vector<128x384xbf16>
    %cst_14 = arith.constant dense<0.000000e+00> : vector<128x128xf32>
    %21 = tpu.matmul %20, %18, %cst_14 {dimension_numbers = #tpu.dot_dimension_numbers<[1], [0], [0], [1], [0, 0, 1, 1], [], []>} : vector<128x384xbf16>, vector<384x128xbf16>, vector<128x128xf32> -> vector<128x128xf32>
    %22 = arith.addf %19, %21 : vector<128x128xf32>
    %c0_15 = arith.constant 0 : index
    %c0_16 = arith.constant 0 : index
    %23 = vector.load %arg9[%c0_15, %c0_16] : memref<128x128xf32, #tpu.memory_space<vmem>>, vector<128x128xf32>
    tpu.vector_store %arg9[%c0_15, %c0_16], %22 {strides = array<i32>} : memref<128x128xf32, #tpu.memory_space<vmem>>, vector<128x128xf32>,
    %c0_i32_17 = arith.constant 0 : i32
    %24 = arith.cmpi eq, %arg2, %c0_i32_17 : i32
    %25 = arith.extui %24 : i1 to i32
    %c0_i32_18 = arith.constant 0 : i32
    %26 = arith.cmpi ne, %25, %c0_i32_18 : i32
    scf.if %26 {
      %c0_19 = arith.constant 0 : index
      %c0_20 = arith.constant 0 : index
      %27 = vector.load %arg9[%c0_19, %c0_20] : memref<128x128xf32, #tpu.memory_space<vmem>>, vector<128x128xf32>
      %c0_21 = arith.constant 0 : index
      %c0_22 = arith.constant 0 : index
      %28 = vector.load %arg7[%c0_21, %c0_22] : memref<128x1xf32, #tpu.memory_space<vmem>>, vector<128x1xf32>
      %29 = vector.broadcast %28 : vector<128x1xf32> to vector<128x128xf32>
      %30 = arith.addf %27, %29 : vector<128x128xf32>
      %c0_23 = arith.constant 0 : index
      %c0_24 = arith.constant 0 : index
      %c0_25 = arith.constant 0 : index
      %31 = vector.load %arg8[%c0_23, %c0_24, %c0_25] : memref<1x128x128xf32, #tpu.memory_space<vmem>>, vector<1x128x128xf32>
      %32 = vector.shape_cast %31 : vector<1x128x128xf32> to vector<128x128xf32>
      %33 = vector.shape_cast %30 : vector<128x128xf32> to vector<1x128x128xf32>
      tpu.vector_store %arg8[%c0_23, %c0_24, %c0_25], %33 {strides = array<i32>} : memref<1x128x128xf32, #tpu.memory_space<vmem>>, vector<1x128x128xf32>,
    } else {
    }
    return
  }
  func.func @transform_0(%arg0: i32, %arg1: i32, %arg2: i32) -> (i32, i32, i32) {
    %c0_i32 = arith.constant 0 : i32
    %c0_i32_0 = arith.constant 0 : i32
    return %arg0, %c0_i32, %arg1 : i32, i32, i32
  }
  func.func @transform_1(%arg0: i32, %arg1: i32, %arg2: i32) -> (i32, i32) {
    %c0_i32 = arith.constant 0 : i32
    %c0_i32_0 = arith.constant 0 : i32
    return %arg2, %c0_i32 : i32, i32
  }
  func.func @transform_2(%arg0: i32, %arg1: i32, %arg2: i32) -> (i32, i32) {
    %c0_i32 = arith.constant 0 : i32
    %c0_i32_0 = arith.constant 0 : i32
    return %arg2, %c0_i32 : i32, i32
  }
  func.func @transform_3(%arg0: i32, %arg1: i32, %arg2: i32) -> (i32, i32) {
    %c0_i32 = arith.constant 0 : i32
    %c0_i32_0 = arith.constant 0 : i32
    return %c0_i32, %arg2 : i32, i32
  }
  func.func @transform_4(%arg0: i32, %arg1: i32, %arg2: i32) -> (i32, i32) {
    %c0_i32 = arith.constant 0 : i32
    %c0_i32_0 = arith.constant 0 : i32
    %c0_i32_1 = arith.constant 0 : i32
    return %c0_i32, %c0_i32_0 : i32, i32
  }
  func.func @transform_5(%arg0: i32, %arg1: i32, %arg2: i32) -> (i32, i32, i32) {
    %c0_i32 = arith.constant 0 : i32
    %c0_i32_0 = arith.constant 0 : i32
    return %arg0, %c0_i32, %arg1 : i32, i32, i32
  }
}

module attributes {stable_mosaic.version = 11 : i64} {
  func.func @_mlp_kernel(%arg0: i32, %arg1: i32, %arg2: i32, %arg3: memref<1x128x128xbf16, #tpu.memory_space<vmem>>, %arg4: memref<384x128xbf16, #tpu.memory_space<vmem>>, %arg5: memref<384x1xf32, #tpu.memory_space<vmem>>, %arg6: memref<128x384xbf16, #tpu.memory_space<vmem>>, %arg7: memref<128x1xf32, #tpu.memory_space<vmem>>, %arg8: memref<1x128x128xf32, #tpu.memory_space<vmem>>, %arg9: memref<128x128xf32, #tpu.memory_space<vmem>>) attributes {dimension_semantics = [#tpu.dimension_semantics<parallel>, #tpu.dimension_semantics<parallel>, #tpu.dimension_semantics<arbitrary>], iteration_bounds = array<i64: 2, 2, 1>, scalar_prefetch = 0 : i64, scratch_operands = 1 : i64, tpu.core_type = #tpu.core_type<tc>, window_params = [{transform_indices = @transform_0, window_bounds = array<i64: 1, 128, 128>}, {transform_indices = @transform_1, window_bounds = array<i64: 384, 128>}, {transform_indices = @transform_2, window_bounds = array<i64: 384, 1>}, {transform_indices = @transform_3, window_bounds = array<i64: 128, 384>}, {pipeline_mode = #tpu.pipeline_mode<synchronous>, transform_indices = @transform_4, window_bounds = array<i64: 128, 1>}, {transform_indices = @transform_5, window_bounds = array<i64: 1, 128, 128>}]} {
    %c0_i32 = arith.constant 0 : i32
    %0 = arith.cmpi eq, %arg2, %c0_i32 : i32
    %1 = arith.extui %0 : i1 to i32
    %c0_i32_0 = arith.constant 0 : i32
    %2 = arith.cmpi ne, %1, %c0_i32_0 : i32
    scf.if %2 {
      %cst_19 = arith.constant 0.000000e+00 : f32
      %27 = vector.broadcast %cst_19 : f32 to vector<128x128xf32>
      %c0_20 = arith.constant 0 : index
      %c0_21 = arith.constant 0 : index
      %28 = vector.load %arg9[%c0_20, %c0_21] : memref<128x128xf32, #tpu.memory_space<vmem>>, vector<128x128xf32>
      tpu.vector_store %arg9[%c0_20, %c0_21], %27 {strides = array<i32>} : memref<128x128xf32, #tpu.memory_space<vmem>>, vector<128x128xf32>,
    } else {
    }
    %c0 = arith.constant 0 : index
    %c0_1 = arith.constant 0 : index
    %c0_2 = arith.constant 0 : index
    %3 = vector.load %arg3[%c0, %c0_1, %c0_2] : memref<1x128x128xbf16, #tpu.memory_space<vmem>>, vector<1x128x128xbf16>
    %4 = vector.shape_cast %3 : vector<1x128x128xbf16> to vector<128x128xbf16>
    %c0_3 = arith.constant 0 : index
    %c0_4 = arith.constant 0 : index
    %5 = vector.load %arg4[%c0_3, %c0_4] : memref<384x128xbf16, #tpu.memory_space<vmem>>, vector<384x128xbf16>
    %cst = arith.constant dense<0.000000e+00> : vector<384x128xf32>
    %6 = tpu.matmul %5, %4, %cst {dimension_numbers = #tpu.dot_dimension_numbers<[1], [0], [0], [1], [0, 0, 1, 1], [], []>} : vector<384x128xbf16>, vector<128x128xbf16>, vector<384x128xf32> -> vector<384x128xf32>
    %c0_5 = arith.constant 0 : index
    %c0_6 = arith.constant 0 : index
    %7 = vector.load %arg5[%c0_5, %c0_6] : memref<384x1xf32, #tpu.memory_space<vmem>>, vector<384x1xf32>
    %8 = vector.broadcast %7 : vector<384x1xf32> to vector<384x128xf32>
    %9 = arith.addf %6, %8 : vector<384x128xf32>
    %cst_7 = arith.constant 5.000000e-01 : f32
    %10 = vector.broadcast %cst_7 : f32 to vector<384x128xf32>
    %11 = arith.mulf %10, %9 : vector<384x128xf32>
    %cst_8 = arith.constant 1.41421354 : f32
    %12 = vector.broadcast %cst_8 : f32 to vector<384x128xf32>
    %13 = arith.divf %9, %12 : vector<384x128xf32>
    %14 = math.erf %13 : vector<384x128xf32>
    %cst_9 = arith.constant 1.000000e+00 : f32
    %15 = vector.broadcast %cst_9 : f32 to vector<384x128xf32>
    %16 = arith.addf %15, %14 : vector<384x128xf32>
    %17 = arith.mulf %11, %16 : vector<384x128xf32>
    %18 = arith.truncf %17 : vector<384x128xf32> to vector<384x128xbf16>
    %c0_10 = arith.constant 0 : index
    %c0_11 = arith.constant 0 : index
    %19 = vector.load %arg9[%c0_10, %c0_11] : memref<128x128xf32, #tpu.memory_space<vmem>>, vector<128x128xf32>
    %c0_12 = arith.constant 0 : index
    %c0_13 = arith.constant 0 : index
    %20 = vector.load %arg6[%c0_12, %c0_13] : memref<128x384xbf16, #tpu.memory_space<vmem>>, vector<128x384xbf16>
    %cst_14 = arith.constant dense<0.000000e+00> : vector<128x128xf32>
    %21 = tpu.matmul %20, %18, %cst_14 {dimension_numbers = #tpu.dot_dimension_numbers<[1], [0], [0], [1], [0, 0, 1, 1], [], []>} : vector<128x384xbf16>, vector<384x128xbf16>, vector<128x128xf32> -> vector<128x128xf32>
    %22 = arith.addf %19, %21 : vector<128x128xf32>
    %c0_15 = arith.constant 0 : index
    %c0_16 = arith.constant 0 : index
    %23 = vector.load %arg9[%c0_15, %c0_16] : memref<128x128xf32, #tpu.memory_space<vmem>>, vector<128x128xf32>
    tpu.vector_store %arg9[%c0_15, %c0_16], %22 {strides = array<i32>} : memref<128x128xf32, #tpu.memory_space<vmem>>, vector<128x128xf32>,
    %c0_i32_17 = arith.constant 0 : i32
    %24 = arith.cmpi eq, %arg2, %c0_i32_17 : i32
    %25 = arith.extui %24 : i1 to i32
    %c0_i32_18 = arith.constant 0 : i32
    %26 = arith.cmpi ne, %25, %c0_i32_18 : i32
    scf.if %26 {
      %c0_19 = arith.constant 0 : index
      %c0_20 = arith.constant 0 : index
      %27 = vector.load %arg9[%c0_19, %c0_20] : memref<128x128xf32, #tpu.memory_space<vmem>>, vector<128x128xf32>
      %c0_21 = arith.constant 0 : index
      %c0_22 = arith.constant 0 : index
      %28 = vector.load %arg7[%c0_21, %c0_22] : memref<128x1xf32, #tpu.memory_space<vmem>>, vector<128x1xf32>
      %29 = vector.broadcast %28 : vector<128x1xf32> to vector<128x128xf32>
      %30 = arith.addf %27, %29 : vector<128x128xf32>
      %c0_23 = arith.constant 0 : index
      %c0_24 = arith.constant 0 : index
      %c0_25 = arith.constant 0 : index
      %31 = vector.load %arg8[%c0_23, %c0_24, %c0_25] : memref<1x128x128xf32, #tpu.memory_space<vmem>>, vector<1x128x128xf32>
      %32 = vector.shape_cast %31 : vector<1x128x128xf32> to vector<128x128xf32>
      %33 = vector.shape_cast %30 : vector<128x128xf32> to vector<1x128x128xf32>
      tpu.vector_store %arg8[%c0_23, %c0_24, %c0_25], %33 {strides = array<i32>} : memref<1x128x128xf32, #tpu.memory_space<vmem>>, vector<1x128x128xf32>,
    } else {
    }
    return
  }
  func.func @transform_0(%arg0: i32, %arg1: i32, %arg2: i32) -> (i32, i32, i32) {
    %c0_i32 = arith.constant 0 : i32
    %c0_i32_0 = arith.constant 0 : i32
    return %arg0, %c0_i32, %arg1 : i32, i32, i32
  }
  func.func @transform_1(%arg0: i32, %arg1: i32, %arg2: i32) -> (i32, i32) {
    %c0_i32 = arith.constant 0 : i32
    %c0_i32_0 = arith.constant 0 : i32
    return %arg2, %c0_i32 : i32, i32
  }
  func.func @transform_2(%arg0: i32, %arg1: i32, %arg2: i32) -> (i32, i32) {
    %c0_i32 = arith.constant 0 : i32
    %c0_i32_0 = arith.constant 0 : i32
    return %arg2, %c0_i32 : i32, i32
  }
  func.func @transform_3(%arg0: i32, %arg1: i32, %arg2: i32) -> (i32, i32) {
    %c0_i32 = arith.constant 0 : i32
    %c0_i32_0 = arith.constant 0 : i32
    return %c0_i32, %arg2 : i32, i32
  }
  func.func @transform_4(%arg0: i32, %arg1: i32, %arg2: i32) -> (i32, i32) {
    %c0_i32 = arith.constant 0 : i32
    %c0_i32_0 = arith.constant 0 : i32
    %c0_i32_1 = arith.constant 0 : i32
    return %c0_i32, %c0_i32_0 : i32, i32
  }
  func.func @transform_5(%arg0: i32, %arg1: i32, %arg2: i32) -> (i32, i32, i32) {
    %c0_i32 = arith.constant 0 : i32
    %c0_i32_0 = arith.constant 0 : i32
    return %arg0, %c0_i32, %arg1 : i32, i32, i32
  }
}

</mosaic_0001>

<llo_original>
// kernel: mlp_forward.1
$region0: #{mlp_forward.1}
  #allocation0 [shape = 'u32[]', space=smem, size = 0x4, offset = 0x4, fixed_abs, tag = 'smem constant byte address 0x4 - core index']
  #allocation1 [shape = 'u32[72,128]{1,0:T(1,128)}', space=vmem, size = 0x9000, scoped, tag = 'internal scratch']
  #allocation2 [shape = 'f32[128,128]{1,0:T(8,128)}', space=vmem, size = 0x10000, scoped, tag = 'scratch operand']
  %s0 = inlined_call_operand.vmem [shape: bf16[2,128,256], index: 0, kind: input, shape index: {}]
  %s1 = inlined_call_operand.vmem [shape: bf16[384,128], index: 1, kind: input, shape index: {}]
  %s2 = inlined_call_operand.vmem [shape: f32[384,1], index: 2, kind: input, shape index: {}]
  %s3 = inlined_call_operand.vmem [shape: bf16[128,384], index: 3, kind: input, shape index: {}]
  %s4 = inlined_call_operand.vmem [shape: f32[128,1], index: 4, kind: input, shape index: {}]
  %s5 = inlined_call_operand.vmem [shape: f32[2,128,256], index: 5, kind: output, shape index: {}]
  %s6 = sld [smem:[#allocation0]]
  $region136: #{mlp_forward.1} parent=0
    _
  %s8 = ssub.s32 1, %s6
  %s9 = scalar_select 0, %s8, %s6
  $region1: #{mlp_forward.1} parent=0
    #allocation3 [shape = 'u8[65536]{0}', space=vmem, size = 0x10000, scoped, tag = 'input window, operand 0']
    #allocation4 [shape = 'u8[131072]{0}', space=vmem, size = 0x20000, scoped, tag = 'output window, operand 0']
    loop: start=0, step=1, limit=6
    $region2: #{mlp_forward.1} parent=1 // loop_pre_header
      _
    $region3: #{mlp_forward.1} parent=1 // loop_header
      %s11 = sphi 0, %s15
      %p12 = scmp.ge.s32.totalorder %s11, 6
      %s18 = sphi 0, %s37
      %s19 = sphi 0, %s33
      %s20 = sphi 0, %s29
      %s21 = sphi 0, %s18
      %s22 = sphi 0, %s19
      %s23 = sphi 0, %s20
      %s24 = sphi 0, %s21
      %s25 = sphi 0, %s22
      %s26 = sphi 0, %s23
      %s42 = sphi 0, %s44
      %s45 = sphi 0, %s42
      %s46 = sphi 0, %s45
      %s62 = sphi 0, %s46
      %s68 = sphi 0, %s70
      %s71 = sphi 0, %s68
      %s72 = sphi 0, %s71
      %s88 = sphi 0, %s72
      %s94 = sphi 0, %s96
      %s97 = sphi 0, %s94
      %s98 = sphi 0, %s97
      %s114 = sphi 0, %s98
      %s120 = sphi 0, %s122
      %s123 = sphi 0, %s120
      %s124 = sphi 0, %s123
      %s140 = sphi 0, %s124
      %s144 = sphi 0, %s144
      %s146 = sphi 0, %s144
      %s147 = sphi 0, %s146
      %s161 = sphi 0, %s147
      %s169 = sphi 0, %s171
      %s172 = sphi 0, %s169
      %s173 = sphi 0, %s172
      %s189 = sphi 0, %s173
    $region4: #{mlp_forward.1} parent=1 // loop_header_branch
      %14 = sbr.rel (%p12) target = $region8
    $region5: #{mlp_forward.1} parent=1 // loop_body
      %s16 = ssub.s32 %s11, 1
      %s17 = ssub.s32 %s11, 2
      %s27 = sadd.s32 1, %s20
      %p28 = scmp.ge.s32.totalorder %s27, 1
      %s29 = scalar_select %p28, 0, %s27
      %s30 = sadd.s32 1, %s19
      %s31 = scalar_select %p28, %s30, %s19
      %p32 = scmp.ge.s32.totalorder %s31, 2
      %s33 = scalar_select %p32, 0, %s31
      %s34 = sadd.s32 1, %s18
      %s35 = scalar_select %p32, %s34, %s18
      %p36 = scmp.ge.s32.totalorder %s35, 2
      %s37 = scalar_select %p36, 0, %s35
      %s38 = ssub.s32 %s18, %s37
      %s39 = ssub.s32 %s19, %s33
      %s40 = sor.u32 %s38, %s39
      %p41 = scmp.eq.s32.totalorder %s40, 0
      %s43 = sadd.s32 %s42, 1
      %s44 = scalar_select %p41, %s42, %s43
      %p47 = pneg %p41
      %p48 = scmp.eq.s32.totalorder %s11, 3
      %p49 = por %p47, %p48
      %p50 = scmp.ne.s32.totalorder %s42, %s45
      %p51 = scmp.eq.s32.totalorder %s11, 0
      %p52 = por %p50, %p51
      %p53 = scmp.ne.s32.totalorder %s42, %s45
      %p54 = scmp.eq.s32.totalorder %s16, 3
      %p55 = por %p53, %p54
      %p56 = scmp.ne.s32.totalorder %s45, %s46
      %p57 = scmp.eq.s32.totalorder %s16, 0
      %p58 = por %p56, %p57
      %p59 = scmp.ne.s32.totalorder %s45, %s46
      %p60 = scmp.eq.s32.totalorder %s17, 3
      %p61 = por %p59, %p60
      %p63 = scmp.ne.s32.totalorder %s46, %s62
      %p64 = scmp.eq.s32.totalorder %s17, 0
      %p65 = por %p63, %p64
      %s66 = ssub.s32 %s20, %s29
      %p67 = scmp.eq.s32.totalorder %s66, 0
      %s69 = sadd.s32 %s68, 1
      %s70 = scalar_select %p67, %s68, %s69
      %p73 = pneg %p67
      %p74 = scmp.eq.s32.totalorder %s11, 3
      %p75 = por %p73, %p74
      %p76 = scmp.ne.s32.totalorder %s68, %s71
      %p77 = scmp.eq.s32.totalorder %s11, 0
      %p78 = por %p76, %p77
      %p79 = scmp.ne.s32.totalorder %s68, %s71
      %p80 = scmp.eq.s32.totalorder %s16, 3
      %p81 = por %p79, %p80
      %p82 = scmp.ne.s32.totalorder %s71, %s72
      %p83 = scmp.eq.s32.totalorder %s16, 0
      %p84 = por %p82, %p83
      %p85 = scmp.ne.s32.totalorder %s71, %s72
      %p86 = scmp.eq.s32.totalorder %s17, 3
      %p87 = por %p85, %p86
      %p89 = scmp.ne.s32.totalorder %s72, %s88
      %p90 = scmp.eq.s32.totalorder %s17, 0
      %p91 = por %p89, %p90
      %s92 = ssub.s32 %s20, %s29
      %p93 = scmp.eq.s32.totalorder %s92, 0
      %s95 = sadd.s32 %s94, 1
      %s96 = scalar_select %p93, %s94, %s95
      %p99 = pneg %p93
      %p100 = scmp.eq.s32.totalorder %s11, 3
      %p101 = por %p99, %p100
      %p102 = scmp.ne.s32.totalorder %s94, %s97
      %p103 = scmp.eq.s32.totalorder %s11, 0
      %p104 = por %p102, %p103
      %p105 = scmp.ne.s32.totalorder %s94, %s97
      %p106 = scmp.eq.s32.totalorder %s16, 3
      %p107 = por %p105, %p106
      %p108 = scmp.ne.s32.totalorder %s97, %s98
      %p109 = scmp.eq.s32.totalorder %s16, 0
      %p110 = por %p108, %p109
      %p111 = scmp.ne.s32.totalorder %s97, %s98
      %p112 = scmp.eq.s32.totalorder %s17, 3
      %p113 = por %p111, %p112
      %p115 = scmp.ne.s32.totalorder %s98, %s114
      %p116 = scmp.eq.s32.totalorder %s17, 0
      %p117 = por %p115, %p116
      %s118 = ssub.s32 %s20, %s29
      %p119 = scmp.eq.s32.totalorder %s118, 0
      %s121 = sadd.s32 %s120, 1
      %s122 = scalar_select %p119, %s120, %s121
      %p125 = pneg %p119
      %p126 = scmp.eq.s32.totalorder %s11, 3
      %p127 = por %p125, %p126
      %p128 = scmp.ne.s32.totalorder %s120, %s123
      %p129 = scmp.eq.s32.totalorder %s11, 0
      %p130 = por %p128, %p129
      %p131 = scmp.ne.s32.totalorder %s120, %s123
      %p132 = scmp.eq.s32.totalorder %s16, 3
      %p133 = por %p131, %p132
      %p134 = scmp.ne.s32.totalorder %s123, %s124
      %p135 = scmp.eq.s32.totalorder %s16, 0
      %p136 = por %p134, %p135
      %p137 = scmp.ne.s32.totalorder %s123, %s124
      %p138 = scmp.eq.s32.totalorder %s17, 3
      %p139 = por %p137, %p138
      %p141 = scmp.ne.s32.totalorder %s124, %s140
      %p142 = scmp.eq.s32.totalorder %s17, 0
      %p143 = por %p141, %p142
      %s145 = sadd.s32 %s144, 1
      %p148 = scmp.eq.s32.totalorder %s11, 3
      %p149 = scmp.ne.s32.totalorder %s144, %s146
      %p150 = scmp.eq.s32.totalorder %s11, 0
      %p151 = por %p149, %p150
      %p152 = scmp.ne.s32.totalorder %s144, %s146
      %p153 = scmp.eq.s32.totalorder %s16, 3
      %p154 = por %p152, %p153
      %p155 = scmp.ne.s32.totalorder %s146, %s147
      %p156 = scmp.eq.s32.totalorder %s16, 0
      %p157 = por %p155, %p156
      %p158 = scmp.ne.s32.totalorder %s146, %s147
      %p159 = scmp.eq.s32.totalorder %s17, 3
      %p160 = por %p158, %p159
      %p162 = scmp.ne.s32.totalorder %s147, %s161
      %p163 = scmp.eq.s32.totalorder %s17, 0
      %p164 = por %p162, %p163
      %s165 = ssub.s32 %s18, %s37
      %s166 = ssub.s32 %s19, %s33
      %s167 = sor.u32 %s165, %s166
      %p168 = scmp.eq.s32.totalorder %s167, 0
      %s170 = sadd.s32 %s169, 1
      %s171 = scalar_select %p168, %s169, %s170
      %p174 = pneg %p168
      %p175 = scmp.eq.s32.totalorder %s11, 3
      %p176 = por %p174, %p175
      %p177 = scmp.ne.s32.totalorder %s169, %s172
      %p178 = scmp.eq.s32.totalorder %s11, 0
      %p179 = por %p177, %p178
      %p180 = scmp.ne.s32.totalorder %s169, %s172
      %p181 = scmp.eq.s32.totalorder %s16, 3
      %p182 = por %p180, %p181
      %p183 = scmp.ne.s32.totalorder %s172, %s173
      %p184 = scmp.eq.s32.totalorder %s16, 0
      %p185 = por %p183, %p184
      %p186 = scmp.ne.s32.totalorder %s172, %s173
      %p187 = scmp.eq.s32.totalorder %s17, 3
      %p188 = por %p186, %p187
      %p190 = scmp.ne.s32.totalorder %s173, %s189
      %p191 = scmp.eq.s32.totalorder %s17, 0
      %p192 = por %p190, %p191
      %p193 = scmp.le.s32.totalorder 1, %s11
      %p194 = scmp.lt.s32.totalorder %s11, 5
      %p195 = pnand %p193, %p194
      %p196 = pneg %p195
      // Predicated region
      $region9: #{mlp_forward.1} parent=5 // pred_check
        _
      $region10: #{mlp_forward.1} parent=5 // pred_check_branch
        %198 = sbr.rel (%p195) target = $region12
      $region11: #{mlp_forward.1} parent=5 // pred_region
        %s199 = ssub.s32 %s11, 1
        // Predicated region
        $region13: #{mlp_forward.1} parent=11 // pred_check
          %p200 = pneg %p84
        $region14: #{mlp_forward.1} parent=11 // pred_check_branch
          %202 = sbr.rel (%p200) target = $region16
        $region15: #{mlp_forward.1} parent=11 // pred_region
          %s203 = smul.u32 48, %s23
          %p204 = scmp.lt.s32.totalorder %s203, 47
          %s205 = scalar_select %p204, %s203, 47
          %s206 = smul.addr %s205, 4
          %s207 = scalar_lea.vmem %s1, %s206
          %s208 = smul.u32 48, %s23
        $region16: #{mlp_forward.1} parent=11 // pred_fallthru
          _
        // Predicated region
        $region17: #{mlp_forward.1} parent=11 // pred_check
          %p209 = pneg %p110
        $region18: #{mlp_forward.1} parent=11 // pred_check_branch
          %211 = sbr.rel (%p209) target = $region20
        $region19: #{mlp_forward.1} parent=11 // pred_region
          %s212 = smul.u32 48, %s23
          %p213 = scmp.lt.s32.totalorder %s212, 47
          %s214 = scalar_select %p213, %s212, 47
          %s215 = smul.addr %s214, 8
          %s216 = scalar_lea.vmem %s2, %s215
          %s217 = smul.u32 48, %s23
        $region20: #{mlp_forward.1} parent=11 // pred_fallthru
          _
        // Predicated region
        $region21: #{mlp_forward.1} parent=11 // pred_check
          %p218 = pneg %p136
        $region22: #{mlp_forward.1} parent=11 // pred_check_branch
          %220 = sbr.rel (%p218) target = $region24
        $region23: #{mlp_forward.1} parent=11 // pred_region
          %s221 = smul.u32 3, %s23
          %p222 = scmp.lt.s32.totalorder %s221, 2
          %s223 = scalar_select %p222, %s221, 2
          %s224 = smul.addr %s223, 4
          %s225 = scalar_lea.vmem %s3, %s224
          %s226 = smul.u32 3, %s23
        $region24: #{mlp_forward.1} parent=11 // pred_fallthru
          _
        // Predicated region
        $region25: #{mlp_forward.1} parent=11 // pred_check
          %p227 = pneg %p157
        $region26: #{mlp_forward.1} parent=11 // pred_check_branch
          %229 = sbr.rel (%p227) target = $region28
        $region27: #{mlp_forward.1} parent=11 // pred_region
          _
        $region28: #{mlp_forward.1} parent=11 // pred_fallthru
          _
      $region12: #{mlp_forward.1} parent=5 // pred_fallthru
        _
      %p230 = scmp.lt.s32.totalorder %s11, 4
      // Predicated region
      $region29: #{mlp_forward.1} parent=5 // pred_check
        %p231 = pneg %p230
      $region30: #{mlp_forward.1} parent=5 // pred_check_branch
        %233 = sbr.rel (%p231) target = $region32
      $region31: #{mlp_forward.1} parent=5 // pred_region
        // Predicated region
        $region33: #{mlp_forward.1} parent=31 // pred_check
          %p234 = pneg %p52
        $region34: #{mlp_forward.1} parent=31 // pred_check_branch
          %236 = sbr.rel (%p234) target = $region36
        $region35: #{mlp_forward.1} parent=31 // pred_region
          %s237 = sand.u32 %s42, 1
          %s238 = sand.u32 %s42, 1
          %s239 = smul.addr %s238, 64
          %s240 = scalar_lea.vmem [#allocation3], %s239
          %s241 = smul.addr %s18, 32
          %s242 = sadd.s32 %s19, %s241
          %s243 = smul.addr %s242, 4
          %s244 = scalar_lea.vmem %s0, %s243
          // Predicated region
          $region37: #{mlp_forward.1} parent=35 // pred_check
            _
          $region38: #{mlp_forward.1} parent=35 // pred_check_branch
            %246 = sbr.rel (0) target = $region40
          $region39: #{mlp_forward.1} parent=35 // pred_region
            // Predicated region
            $region41: #{mlp_forward.1} parent=39 // pred_check
              _
            $region42: #{mlp_forward.1} parent=39 // pred_check_branch
              %248 = sbr.rel target = $region44
            $region43: #{mlp_forward.1} parent=39 // pred_region
              // Predicated region
              $region56: #{mlp_forward.1} parent=43 // pred_check
                _
              $region57: #{mlp_forward.1} parent=43 // pred_check_branch
                %294 = sbr.rel (0) target = $region59
              $region58: #{mlp_forward.1} parent=43 // pred_region
                loop: start=0, step=1, limit=1
                $region60: #{mlp_forward.1} parent=58 // loop_pre_header
                  _
                $region61: #{mlp_forward.1} parent=58 // loop_header
                  %s296 = sphi 0, %s300
                  %p297 = scmp.ge.s32.totalorder %s296, 1
                  %s301 = sphi %s244, %s244
                  %s302 = sphi %s240, %s240
                $region62: #{mlp_forward.1} parent=58 // loop_header_branch
                  %299 = sbr.rel (%p297) target = $region66
                $region63: #{mlp_forward.1} parent=58 // loop_body
                  _
                $region64: #{mlp_forward.1} parent=58 // loop_footer
                  %s300 = sadd.s32 1, %s296
                $region65: #{mlp_forward.1} parent=58 // loop_footer_branch
                  %295 = sbr.rel target = $region61
                $region66: #{mlp_forward.1} parent=58 // loop_exit
                  _
                %s304 = ssub.s32 16, 1
                loop: start=0, step=1, limit=1
                $region67: #{mlp_forward.1} parent=58 // loop_pre_header
                  _
                $region68: #{mlp_forward.1} parent=58 // loop_header
                  %s306 = sphi 0, %s310
                  %p307 = scmp.ge.s32.totalorder %s306, 1
                  %s311 = sphi %s244, %s244
                  %s312 = sphi %s240, %s240
                $region69: #{mlp_forward.1} parent=58 // loop_header_branch
                  %309 = sbr.rel (%p307) target = $region73
                $region70: #{mlp_forward.1} parent=58 // loop_body
                  %v313 = vld [vmem:[%s311] sm:%s304]
                  %314 = vst [vmem:[%s312] sm:%s304] %v313
                  %v315 = vld [vmem:[%s311 + $0x8] sm:%s304]
                  %316 = vst [vmem:[%s312 + $0x4] sm:%s304] %v315
                  %v317 = vld [vmem:[%s311 + $0x10] sm:%s304]
                  %318 = vst [vmem:[%s312 + $0x8] sm:%s304] %v317
                  %v319 = vld [vmem:[%s311 + $0x18] sm:%s304]
                  %320 = vst [vmem:[%s312 + $0xc] sm:%s304] %v319
                  %v321 = vld [vmem:[%s311 + $0x20] sm:%s304]
                  %322 = vst [vmem:[%s312 + $0x10] sm:%s304] %v321
                  %v323 = vld [vmem:[%s311 + $0x28] sm:%s304]
                  %324 = vst [vmem:[%s312 + $0x14] sm:%s304] %v323
                  %v325 = vld [vmem:[%s311 + $0x30] sm:%s304]
                  %326 = vst [vmem:[%s312 + $0x18] sm:%s304] %v325
                  %v327 = vld [vmem:[%s311 + $0x38] sm:%s304]
                  %328 = vst [vmem:[%s312 + $0x1c] sm:%s304] %v327
                  %v329 = vld [vmem:[%s311 + $0x40] sm:%s304]
                  %330 = vst [vmem:[%s312 + $0x20] sm:%s304] %v329
                  %v331 = vld [vmem:[%s311 + $0x48] sm:%s304]
                  %332 = vst [vmem:[%s312 + $0x24] sm:%s304] %v331
                  %v333 = vld [vmem:[%s311 + $0x50] sm:%s304]
                  %334 = vst [vmem:[%s312 + $0x28] sm:%s304] %v333
                  %v335 = vld [vmem:[%s311 + $0x58] sm:%s304]
                  %336 = vst [vmem:[%s312 + $0x2c] sm:%s304] %v335
                  %v337 = vld [vmem:[%s311 + $0x60] sm:%s304]
                  %338 = vst [vmem:[%s312 + $0x30] sm:%s304] %v337
                  %v339 = vld [vmem:[%s311 + $0x68] sm:%s304]
                  %340 = vst [vmem:[%s312 + $0x34] sm:%s304] %v339
                  %v341 = vld [vmem:[%s311 + $0x70] sm:%s304]
                  %342 = vst [vmem:[%s312 + $0x38] sm:%s304] %v341
                  %v343 = vld [vmem:[%s311 + $0x78] sm:%s304]
                  %344 = vst [vmem:[%s312 + $0x3c] sm:%s304] %v343
                $region71: #{mlp_forward.1} parent=58 // loop_footer
                  %s310 = sadd.s32 1, %s306
                $region72: #{mlp_forward.1} parent=58 // loop_footer_branch
                  %305 = sbr.rel target = $region68
                $region73: #{mlp_forward.1} parent=58 // loop_exit
                  _
              $region59: #{mlp_forward.1} parent=43 // pred_fallthru
                _
            $region44: #{mlp_forward.1} parent=39 // pred_fallthru
              _
            // Predicated region
            $region45: #{mlp_forward.1} parent=39 // pred_check
              _
            $region46: #{mlp_forward.1} parent=39 // pred_check_branch
              %250 = sbr.rel (0) target = $region48
            $region47: #{mlp_forward.1} parent=39 // pred_region
              %s252 = ssub.s32 16, 1
              loop: start=0, step=1, limit=1
              $region49: #{mlp_forward.1} parent=47 // loop_pre_header
                _
              $region50: #{mlp_forward.1} parent=47 // loop_header
                %s254 = sphi 0, %s258
                %p255 = scmp.ge.s32.totalorder %s254, 1
                %s259 = sphi %s244, %s244
                %s260 = sphi %s240, %s240
              $region51: #{mlp_forward.1} parent=47 // loop_header_branch
                %257 = sbr.rel (%p255) target = $region55
              $region52: #{mlp_forward.1} parent=47 // loop_body
                %v261 = vld [vmem:[%s259] sm:%s252]
                %262 = vst [vmem:[%s260] sm:%s252] %v261
                %v263 = vld [vmem:[%s259 + $0x8] sm:%s252]
                %264 = vst [vmem:[%s260 + $0x4] sm:%s252] %v263
                %v265 = vld [vmem:[%s259 + $0x10] sm:%s252]
                %266 = vst [vmem:[%s260 + $0x8] sm:%s252] %v265
                %v267 = vld [vmem:[%s259 + $0x18] sm:%s252]
                %268 = vst [vmem:[%s260 + $0xc] sm:%s252] %v267
                %v269 = vld [vmem:[%s259 + $0x20] sm:%s252]
                %270 = vst [vmem:[%s260 + $0x10] sm:%s252] %v269
                %v271 = vld [vmem:[%s259 + $0x28] sm:%s252]
                %272 = vst [vmem:[%s260 + $0x14] sm:%s252] %v271
                %v273 = vld [vmem:[%s259 + $0x30] sm:%s252]
                %274 = vst [vmem:[%s260 + $0x18] sm:%s252] %v273
                %v275 = vld [vmem:[%s259 + $0x38] sm:%s252]
                %276 = vst [vmem:[%s260 + $0x1c] sm:%s252] %v275
                %v277 = vld [vmem:[%s259 + $0x40] sm:%s252]
                %278 = vst [vmem:[%s260 + $0x20] sm:%s252] %v277
                %v279 = vld [vmem:[%s259 + $0x48] sm:%s252]
                %280 = vst [vmem:[%s260 + $0x24] sm:%s252] %v279
                %v281 = vld [vmem:[%s259 + $0x50] sm:%s252]
                %282 = vst [vmem:[%s260 + $0x28] sm:%s252] %v281
                %v283 = vld [vmem:[%s259 + $0x58] sm:%s252]
                %284 = vst [vmem:[%s260 + $0x2c] sm:%s252] %v283
                %v285 = vld [vmem:[%s259 + $0x60] sm:%s252]
                %286 = vst [vmem:[%s260 + $0x30] sm:%s252] %v285
                %v287 = vld [vmem:[%s259 + $0x68] sm:%s252]
                %288 = vst [vmem:[%s260 + $0x34] sm:%s252] %v287
                %v289 = vld [vmem:[%s259 + $0x70] sm:%s252]
                %290 = vst [vmem:[%s260 + $0x38] sm:%s252] %v289
                %v291 = vld [vmem:[%s259 + $0x78] sm:%s252]
                %292 = vst [vmem:[%s260 + $0x3c] sm:%s252] %v291
              $region53: #{mlp_forward.1} parent=47 // loop_footer
                %s258 = sadd.s32 1, %s254
              $region54: #{mlp_forward.1} parent=47 // loop_footer_branch
                %253 = sbr.rel target = $region50
              $region55: #{mlp_forward.1} parent=47 // loop_exit
                _
            $region48: #{mlp_forward.1} parent=39 // pred_fallthru
              _
          $region40: #{mlp_forward.1} parent=35 // pred_fallthru
            _
          %345 = vnop
        $region36: #{mlp_forward.1} parent=31 // pred_fallthru
          _
      $region32: #{mlp_forward.1} parent=5 // pred_fallthru
        _
      %p346 = scmp.le.s32.totalorder 1, %s11
      %p347 = scmp.lt.s32.totalorder %s11, 5
      %p348 = pnand %p346, %p347
      %p349 = pneg %p348
      // Predicated region
      $region74: #{mlp_forward.1} parent=5 // pred_check
        _
      $region75: #{mlp_forward.1} parent=5 // pred_check_branch
        %351 = sbr.rel (%p348) target = $region77
      $region76: #{mlp_forward.1} parent=5 // pred_region
        %s352 = ssub.s32 %s11, 1
        %s353 = sand.u32 %s45, 1
        %s354 = sand.u32 %s45, 1
        %s355 = smul.addr %s354, 64
        %s356 = scalar_lea.vmem [#allocation3], %s355
        // Predicated region
        $region78: #{mlp_forward.1} parent=76 // pred_check
          %p357 = pneg %p58
        $region79: #{mlp_forward.1} parent=76 // pred_check_branch
          %359 = sbr.rel (%p357) target = $region81
        $region80: #{mlp_forward.1} parent=76 // pred_region
          _
        $region81: #{mlp_forward.1} parent=76 // pred_fallthru
          _
        %s360 = sand.u32 %s45, 1
        %s361 = sand.u32 %s45, 1
        %s362 = smul.addr %s361, 64
        %s363 = scalar_lea.vmem [#allocation3], %s362
        %p364 = pneg %p58
        %p365 = pneg %p55
        %s366 = smul.u32 48, %s23
        %p367 = scmp.lt.s32.totalorder %s366, 47
        %s368 = scalar_select %p367, %s366, 47
        %s369 = smul.addr %s368, 4
        %s370 = scalar_lea.vmem %s1, %s369
        %p371 = pneg %p84
        %p372 = pneg %p81
        %s373 = smul.u32 48, %s23
        %p374 = scmp.lt.s32.totalorder %s373, 47
        %s375 = scalar_select %p374, %s373, 47
        %s376 = smul.addr %s375, 8
        %s377 = scalar_lea.vmem %s2, %s376
        %p378 = pneg %p110
        %p379 = pneg %p107
        %s380 = smul.u32 3, %s23
        %p381 = scmp.lt.s32.totalorder %s380, 2
        %s382 = scalar_select %p381, %s380, 2
        %s383 = smul.addr %s382, 4
        %s384 = scalar_lea.vmem %s3, %s383
        %p385 = pneg %p136
        %p386 = pneg %p133
        %p387 = pneg %p157
        %p388 = pneg %p154
        %p389 = pneg %p185
        %p390 = pneg %p182
        %s391 = sand.u32 %s172, 1
        %s392 = sand.u32 %s172, 1
        %s393 = smul.addr %s392, 128
        %s394 = scalar_lea.vmem [#allocation4], %s393
        %s395 = smul.u32 48, %s23
        %p396 = scmp.lt.s32.totalorder %s395, 47
        %s397 = scalar_select %p396, %s395, 47
        %s398 = smul.addr %s397, 4
        %s399 = scalar_lea.vmem %s1, %s398
        %s400 = smul.u32 48, %s23
        %s401 = smul.u32 48, %s23
        %p402 = scmp.lt.s32.totalorder %s401, 47
        %s403 = scalar_select %p402, %s401, 47
        %s404 = smul.addr %s403, 8
        %s405 = scalar_lea.vmem %s2, %s404
        %s406 = smul.u32 48, %s23
        %s407 = smul.u32 3, %s23
        %p408 = scmp.lt.s32.totalorder %s407, 2
        %s409 = scalar_select %p408, %s407, 2
        %s410 = smul.addr %s409, 4
        %s411 = scalar_lea.vmem %s3, %s410
        %s412 = smul.u32 3, %s23
        %p413 = scmp.eq.s32.totalorder %s23, 0
        // Predicated region
        $region82: #{mlp_forward.1} parent=76 // pred_check
          %p414 = pneg %p413
        $region83: #{mlp_forward.1} parent=76 // pred_check_branch
          %416 = sbr.rel (%p414) target = $region85
        $region84: #{mlp_forward.1} parent=76 // pred_region
          %417 = vst [vmem:[#allocation2] sm:$0xff] 0.0
          %418 = vst [vmem:[#allocation2 + $0x8] sm:$0xff] 0.0
          %419 = vst [vmem:[#allocation2 + $0x10] sm:$0xff] 0.0
          %420 = vst [vmem:[#allocation2 + $0x18] sm:$0xff] 0.0
          %421 = vst [vmem:[#allocation2 + $0x20] sm:$0xff] 0.0
          %422 = vst [vmem:[#allocation2 + $0x28] sm:$0xff] 0.0
          %423 = vst [vmem:[#allocation2 + $0x30] sm:$0xff] 0.0
          %424 = vst [vmem:[#allocation2 + $0x38] sm:$0xff] 0.0
          %425 = vst [vmem:[#allocation2 + $0x40] sm:$0xff] 0.0
          %426 = vst [vmem:[#allocation2 + $0x48] sm:$0xff] 0.0
          %427 = vst [vmem:[#allocation2 + $0x50] sm:$0xff] 0.0
          %428 = vst [vmem:[#allocation2 + $0x58] sm:$0xff] 0.0
          %429 = vst [vmem:[#allocation2 + $0x60] sm:$0xff] 0.0
          %430 = vst [vmem:[#allocation2 + $0x68] sm:$0xff] 0.0
          %431 = vst [vmem:[#allocation2 + $0x70] sm:$0xff] 0.0
          %432 = vst [vmem:[#allocation2 + $0x78] sm:$0xff] 0.0
        $region85: #{mlp_forward.1} parent=76 // pred_fallthru
          _
        %v433 = vld [vmem:[%s356] sm:$0xf]
        %v434 = vld [vmem:[%s356 + $0x4] sm:$0xf]
        %v435 = vld [vmem:[%s356 + $0x8] sm:$0xf]
        %v436 = vld [vmem:[%s356 + $0xc] sm:$0xf]
        %v437 = vld [vmem:[%s356 + $0x10] sm:$0xf]
        %v438 = vld [vmem:[%s356 + $0x14] sm:$0xf]
        %v439 = vld [vmem:[%s356 + $0x18] sm:$0xf]
        %v440 = vld [vmem:[%s356 + $0x1c] sm:$0xf]
        %v441 = vld [vmem:[%s356 + $0x20] sm:$0xf]
        %v442 = vld [vmem:[%s356 + $0x24] sm:$0xf]
        %v443 = vld [vmem:[%s356 + $0x28] sm:$0xf]
        %v444 = vld [vmem:[%s356 + $0x2c] sm:$0xf]
        %v445 = vld [vmem:[%s356 + $0x30] sm:$0xf]
        %v446 = vld [vmem:[%s356 + $0x34] sm:$0xf]
        %v447 = vld [vmem:[%s356 + $0x38] sm:$0xf]
        %v448 = vld [vmem:[%s356 + $0x3c] sm:$0xf]
        %v449 = vld [vmem:[%s399] sm:$0xf]
        %v450 = vld [vmem:[%s399 + $0x4] sm:$0xf]
        %v451 = vld [vmem:[%s399 + $0x8] sm:$0xf]
        %v452 = vld [vmem:[%s399 + $0xc] sm:$0xf]
        %v453 = vld [vmem:[%s399 + $0x10] sm:$0xf]
        %v454 = vld [vmem:[%s399 + $0x14] sm:$0xf]
        %v455 = vld [vmem:[%s399 + $0x18] sm:$0xf]
        %v456 = vld [vmem:[%s399 + $0x1c] sm:$0xf]
        %v457 = vld [vmem:[%s399 + $0x20] sm:$0xf]
        %v458 = vld [vmem:[%s399 + $0x24] sm:$0xf]
        %v459 = vld [vmem:[%s399 + $0x28] sm:$0xf]
        %v460 = vld [vmem:[%s399 + $0x2c] sm:$0xf]
        %v461 = vld [vmem:[%s399 + $0x30] sm:$0xf]
        %v462 = vld [vmem:[%s399 + $0x34] sm:$0xf]
        %v463 = vld [vmem:[%s399 + $0x38] sm:$0xf]
        %v464 = vld [vmem:[%s399 + $0x3c] sm:$0xf]
        %v465 = vld [vmem:[%s399 + $0x40] sm:$0xf]
        %v466 = vld [vmem:[%s399 + $0x44] sm:$0xf]
        %v467 = vld [vmem:[%s399 + $0x48] sm:$0xf]
        %v468 = vld [vmem:[%s399 + $0x4c] sm:$0xf]
        %v469 = vld [vmem:[%s399 + $0x50] sm:$0xf]
        %v470 = vld [vmem:[%s399 + $0x54] sm:$0xf]
        %v471 = vld [vmem:[%s399 + $0x58] sm:$0xf]
        %v472 = vld [vmem:[%s399 + $0x5c] sm:$0xf]
        %v473 = vld [vmem:[%s399 + $0x60] sm:$0xf]
        %v474 = vld [vmem:[%s399 + $0x64] sm:$0xf]
        %v475 = vld [vmem:[%s399 + $0x68] sm:$0xf]
        %v476 = vld [vmem:[%s399 + $0x6c] sm:$0xf]
        %v477 = vld [vmem:[%s399 + $0x70] sm:$0xf]
        %v478 = vld [vmem:[%s399 + $0x74] sm:$0xf]
        %v479 = vld [vmem:[%s399 + $0x78] sm:$0xf]
        %v480 = vld [vmem:[%s399 + $0x7c] sm:$0xf]
        %v481 = vld [vmem:[%s399 + $0x80] sm:$0xf]
        %v482 = vld [vmem:[%s399 + $0x84] sm:$0xf]
        %v483 = vld [vmem:[%s399 + $0x88] sm:$0xf]
        %v484 = vld [vmem:[%s399 + $0x8c] sm:$0xf]
        %v485 = vld [vmem:[%s399 + $0x90] sm:$0xf]
        %v486 = vld [vmem:[%s399 + $0x94] sm:$0xf]
        %v487 = vld [vmem:[%s399 + $0x98] sm:$0xf]
        %v488 = vld [vmem:[%s399 + $0x9c] sm:$0xf]
        %v489 = vld [vmem:[%s399 + $0xa0] sm:$0xf]
        %v490 = vld [vmem:[%s399 + $0xa4] sm:$0xf]
        %v491 = vld [vmem:[%s399 + $0xa8] sm:$0xf]
        %v492 = vld [vmem:[%s399 + $0xac] sm:$0xf]
        %v493 = vld [vmem:[%s399 + $0xb0] sm:$0xf]
        %v494 = vld [vmem:[%s399 + $0xb4] sm:$0xf]
        %v495 = vld [vmem:[%s399 + $0xb8] sm:$0xf]
        %v496 = vld [vmem:[%s399 + $0xbc] sm:$0xf]
        %v497 = vld [vmem:[%s405] sm:$0xff]
        %v498 = vld [vmem:[%s405 + $0x8] sm:$0xff]
        %v499 = vld [vmem:[%s405 + $0x10] sm:$0xff]
        %v500 = vld [vmem:[%s405 + $0x18] sm:$0xff]
        %v501 = vld [vmem:[%s405 + $0x20] sm:$0xff]
        %v502 = vld [vmem:[%s405 + $0x28] sm:$0xff]
        %v503 = vld [vmem:[%s405 + $0x30] sm:$0xff]
        %v504 = vld [vmem:[%s405 + $0x38] sm:$0xff]
        %v505 = vld [vmem:[%s405 + $0x40] sm:$0xff]
        %v506 = vld [vmem:[%s405 + $0x48] sm:$0xff]
        %v507 = vld [vmem:[%s405 + $0x50] sm:$0xff]
        %v508 = vld [vmem:[%s405 + $0x58] sm:$0xff]
        %v509 = vld [vmem:[%s405 + $0x60] sm:$0xff]
        %v510 = vld [vmem:[%s405 + $0x68] sm:$0xff]
        %v511 = vld [vmem:[%s405 + $0x70] sm:$0xff]
        %v512 = vld [vmem:[%s405 + $0x78] sm:$0xff]
        %v513 = vld [vmem:[%s405 + $0x80] sm:$0xff]
        %v514 = vld [vmem:[%s405 + $0x88] sm:$0xff]
        %v515 = vld [vmem:[%s405 + $0x90] sm:$0xff]
        %v516 = vld [vmem:[%s405 + $0x98] sm:$0xff]
        %v517 = vld [vmem:[%s405 + $0xa0] sm:$0xff]
        %v518 = vld [vmem:[%s405 + $0xa8] sm:$0xff]
        %v519 = vld [vmem:[%s405 + $0xb0] sm:$0xff]
        %v520 = vld [vmem:[%s405 + $0xb8] sm:$0xff]
        %v521 = vld [vmem:[%s405 + $0xc0] sm:$0xff]
        %v522 = vld [vmem:[%s405 + $0xc8] sm:$0xff]
        %v523 = vld [vmem:[%s405 + $0xd0] sm:$0xff]
        %v524 = vld [vmem:[%s405 + $0xd8] sm:$0xff]
        %v525 = vld [vmem:[%s405 + $0xe0] sm:$0xff]
        %v526 = vld [vmem:[%s405 + $0xe8] sm:$0xff]
        %v527 = vld [vmem:[%s405 + $0xf0] sm:$0xff]
        %v528 = vld [vmem:[%s405 + $0xf8] sm:$0xff]
        %v529 = vld [vmem:[%s405 + $0x100] sm:$0xff]
        %v530 = vld [vmem:[%s405 + $0x108] sm:$0xff]
        %v531 = vld [vmem:[%s405 + $0x110] sm:$0xff]
        %v532 = vld [vmem:[%s405 + $0x118] sm:$0xff]
        %v533 = vld [vmem:[%s405 + $0x120] sm:$0xff]
        %v534 = vld [vmem:[%s405 + $0x128] sm:$0xff]
        %v535 = vld [vmem:[%s405 + $0x130] sm:$0xff]
        %v536 = vld [vmem:[%s405 + $0x138] sm:$0xff]
        %v537 = vld [vmem:[%s405 + $0x140] sm:$0xff]
        %v538 = vld [vmem:[%s405 + $0x148] sm:$0xff]
        %v539 = vld [vmem:[%s405 + $0x150] sm:$0xff]
        %v540 = vld [vmem:[%s405 + $0x158] sm:$0xff]
        %v541 = vld [vmem:[%s405 + $0x160] sm:$0xff]
        %v542 = vld [vmem:[%s405 + $0x168] sm:$0xff]
        %v543 = vld [vmem:[%s405 + $0x170] sm:$0xff]
        %v544 = vld [vmem:[%s405 + $0x178] sm:$0xff]
        %546 = vset.pattern.permute.xlu0 0
        %547 = vperm.xlu0 %546, %v497
        %v548 = vpop.permute.xlu0 %547
        %551 = vset.pattern.permute.xlu0 0
        %552 = vperm.xlu0 %551, %v498
        %v553 = vpop.permute.xlu0 %552
        %556 = vset.pattern.permute.xlu0 0
        %557 = vperm.xlu0 %556, %v499
        %v558 = vpop.permute.xlu0 %557
        %561 = vset.pattern.permute.xlu0 0
        %562 = vperm.xlu0 %561, %v500
        %v563 = vpop.permute.xlu0 %562
        %566 = vset.pattern.permute.xlu0 0
        %567 = vperm.xlu0 %566, %v501
        %v568 = vpop.permute.xlu0 %567
        %571 = vset.pattern.permute.xlu0 0
        %572 = vperm.xlu0 %571, %v502
        %v573 = vpop.permute.xlu0 %572
        %576 = vset.pattern.permute.xlu0 0
        %577 = vperm.xlu0 %576, %v503
        %v578 = vpop.permute.xlu0 %577
        %581 = vset.pattern.permute.xlu0 0
        %582 = vperm.xlu0 %581, %v504
        %v583 = vpop.permute.xlu0 %582
        %586 = vset.pattern.permute.xlu0 0
        %587 = vperm.xlu0 %586, %v505
        %v588 = vpop.permute.xlu0 %587
        %591 = vset.pattern.permute.xlu0 0
        %592 = vperm.xlu0 %591, %v506
        %v593 = vpop.permute.xlu0 %592
        %596 = vset.pattern.permute.xlu0 0
        %597 = vperm.xlu0 %596, %v507
        %v598 = vpop.permute.xlu0 %597
        %601 = vset.pattern.permute.xlu0 0
        %602 = vperm.xlu0 %601, %v508
        %v603 = vpop.permute.xlu0 %602
        %606 = vset.pattern.permute.xlu0 0
        %607 = vperm.xlu0 %606, %v509
        %v608 = vpop.permute.xlu0 %607
        %611 = vset.pattern.permute.xlu0 0
        %612 = vperm.xlu0 %611, %v510
        %v613 = vpop.permute.xlu0 %612
        %616 = vset.pattern.permute.xlu0 0
        %617 = vperm.xlu0 %616, %v511
        %v618 = vpop.permute.xlu0 %617
        %621 = vset.pattern.permute.xlu0 0
        %622 = vperm.xlu0 %621, %v512
        %v623 = vpop.permute.xlu0 %622
        %626 = vset.pattern.permute.xlu0 0
        %627 = vperm.xlu0 %626, %v513
        %v628 = vpop.permute.xlu0 %627
        %631 = vset.pattern.permute.xlu0 0
        %632 = vperm.xlu0 %631, %v514
        %v633 = vpop.permute.xlu0 %632
        %636 = vset.pattern.permute.xlu0 0
        %637 = vperm.xlu0 %636, %v515
        %v638 = vpop.permute.xlu0 %637
        %641 = vset.pattern.permute.xlu0 0
        %642 = vperm.xlu0 %641, %v516
        %v643 = vpop.permute.xlu0 %642
        %646 = vset.pattern.permute.xlu0 0
        %647 = vperm.xlu0 %646, %v517
        %v648 = vpop.permute.xlu0 %647
        %651 = vset.pattern.permute.xlu0 0
        %652 = vperm.xlu0 %651, %v518
        %v653 = vpop.permute.xlu0 %652
        %656 = vset.pattern.permute.xlu0 0
        %657 = vperm.xlu0 %656, %v519
        %v658 = vpop.permute.xlu0 %657
        %661 = vset.pattern.permute.xlu0 0
        %662 = vperm.xlu0 %661, %v520
        %v663 = vpop.permute.xlu0 %662
        %666 = vset.pattern.permute.xlu0 0
        %667 = vperm.xlu0 %666, %v521
        %v668 = vpop.permute.xlu0 %667
        %671 = vset.pattern.permute.xlu0 0
        %672 = vperm.xlu0 %671, %v522
        %v673 = vpop.permute.xlu0 %672
        %676 = vset.pattern.permute.xlu0 0
        %677 = vperm.xlu0 %676, %v523
        %v678 = vpop.permute.xlu0 %677
        %681 = vset.pattern.permute.xlu0 0
        %682 = vperm.xlu0 %681, %v524
        %v683 = vpop.permute.xlu0 %682
        %686 = vset.pattern.permute.xlu0 0
        %687 = vperm.xlu0 %686, %v525
        %v688 = vpop.permute.xlu0 %687
        %691 = vset.pattern.permute.xlu0 0
        %692 = vperm.xlu0 %691, %v526
        %v693 = vpop.permute.xlu0 %692
        %696 = vset.pattern.permute.xlu0 0
        %697 = vperm.xlu0 %696, %v527
        %v698 = vpop.permute.xlu0 %697
        %701 = vset.pattern.permute.xlu0 0
        %702 = vperm.xlu0 %701, %v528
        %v703 = vpop.permute.xlu0 %702
        %706 = vset.pattern.permute.xlu0 0
        %707 = vperm.xlu0 %706, %v529
        %v708 = vpop.permute.xlu0 %707
        %711 = vset.pattern.permute.xlu0 0
        %712 = vperm.xlu0 %711, %v530
        %v713 = vpop.permute.xlu0 %712
        %716 = vset.pattern.permute.xlu0 0
        %717 = vperm.xlu0 %716, %v531
        %v718 = vpop.permute.xlu0 %717
        %721 = vset.pattern.permute.xlu0 0
        %722 = vperm.xlu0 %721, %v532
        %v723 = vpop.permute.xlu0 %722
        %726 = vset.pattern.permute.xlu0 0
        %727 = vperm.xlu0 %726, %v533
        %v728 = vpop.permute.xlu0 %727
        %731 = vset.pattern.permute.xlu0 0
        %732 = vperm.xlu0 %731, %v534
        %v733 = vpop.permute.xlu0 %732
        %736 = vset.pattern.permute.xlu0 0
        %737 = vperm.xlu0 %736, %v535
        %v738 = vpop.permute.xlu0 %737
        %741 = vset.pattern.permute.xlu0 0
        %742 = vperm.xlu0 %741, %v536
        %v743 = vpop.permute.xlu0 %742
        %746 = vset.pattern.permute.xlu0 0
        %747 = vperm.xlu0 %746, %v537
        %v748 = vpop.permute.xlu0 %747
        %751 = vset.pattern.permute.xlu0 0
        %752 = vperm.xlu0 %751, %v538
        %v753 = vpop.permute.xlu0 %752
        %756 = vset.pattern.permute.xlu0 0
        %757 = vperm.xlu0 %756, %v539
        %v758 = vpop.permute.xlu0 %757
        %761 = vset.pattern.permute.xlu0 0
        %762 = vperm.xlu0 %761, %v540
        %v763 = vpop.permute.xlu0 %762
        %766 = vset.pattern.permute.xlu0 0
        %767 = vperm.xlu0 %766, %v541
        %v768 = vpop.permute.xlu0 %767
        %771 = vset.pattern.permute.xlu0 0
        %772 = vperm.xlu0 %771, %v542
        %v773 = vpop.permute.xlu0 %772
        %776 = vset.pattern.permute.xlu0 0
        %777 = vperm.xlu0 %776, %v543
        %v778 = vpop.permute.xlu0 %777
        %781 = vset.pattern.permute.xlu0 0
        %782 = vperm.xlu0 %781, %v544
        %v783 = vpop.permute.xlu0 %782
        %v833 = vunpack.c.l.b16 %v449
        %v834 = vunpack.c.l.b16 %v450
        %v835 = vunpack.c.l.b16 %v451
        %v836 = vunpack.c.l.b16 %v452
        %v837 = vunpack.c.l.b16 %v453
        %v838 = vunpack.c.l.b16 %v454
        %v839 = vunpack.c.l.b16 %v455
        %v840 = vunpack.c.l.b16 %v456
        %v841 = vunpack.c.l.b16 %v457
        %v842 = vunpack.c.l.b16 %v458
        %v843 = vunpack.c.l.b16 %v459
        %v844 = vunpack.c.l.b16 %v460
        %v845 = vunpack.c.l.b16 %v461
        %v846 = vunpack.c.l.b16 %v462
        %v847 = vunpack.c.l.b16 %v463
        %v848 = vunpack.c.l.b16 %v464
        %v849 = vunpack.c.l.b16 %v465
        %v850 = vunpack.c.l.b16 %v466
        %v851 = vunpack.c.l.b16 %v467
        %v852 = vunpack.c.l.b16 %v468
        %v853 = vunpack.c.l.b16 %v469
        %v854 = vunpack.c.l.b16 %v470
        %v855 = vunpack.c.l.b16 %v471
        %v856 = vunpack.c.l.b16 %v472
        %v857 = vunpack.c.l.b16 %v473
        %v858 = vunpack.c.l.b16 %v474
        %v859 = vunpack.c.l.b16 %v475
        %v860 = vunpack.c.l.b16 %v476
        %v861 = vunpack.c.l.b16 %v477
        %v862 = vunpack.c.l.b16 %v478
        %v863 = vunpack.c.l.b16 %v479
        %v864 = vunpack.c.l.b16 %v480
        %v865 = vunpack.c.l.b16 %v481
        %v866 = vunpack.c.l.b16 %v482
        %v867 = vunpack.c.l.b16 %v483
        %v868 = vunpack.c.l.b16 %v484
        %v869 = vunpack.c.l.b16 %v485
        %v870 = vunpack.c.l.b16 %v486
        %v871 = vunpack.c.l.b16 %v487
        %v872 = vunpack.c.l.b16 %v488
        %v873 = vunpack.c.l.b16 %v489
        %v874 = vunpack.c.l.b16 %v490
        %v875 = vunpack.c.l.b16 %v491
        %v876 = vunpack.c.l.b16 %v492
        %v877 = vunpack.c.l.b16 %v493
        %v878 = vunpack.c.l.b16 %v494
        %v879 = vunpack.c.l.b16 %v495
        %v880 = vunpack.c.l.b16 %v496
        %v881 = vpack.c.b16 %v834, %v833
        %v882 = vpack.c.b16 %v836, %v835
        %v883 = vpack.c.b16 %v838, %v837
        %v884 = vpack.c.b16 %v840, %v839
        %v885 = vpack.c.b16 %v842, %v841
        %v886 = vpack.c.b16 %v844, %v843
        %v887 = vpack.c.b16 %v846, %v845
        %v888 = vpack.c.b16 %v848, %v847
        %v889 = vpack.c.b16 %v850, %v849
        %v890 = vpack.c.b16 %v852, %v851
        %v891 = vpack.c.b16 %v854, %v853
        %v892 = vpack.c.b16 %v856, %v855
        %v893 = vpack.c.b16 %v858, %v857
        %v894 = vpack.c.b16 %v860, %v859
        %v895 = vpack.c.b16 %v862, %v861
        %v896 = vpack.c.b16 %v864, %v863
        %v897 = vpack.c.b16 %v866, %v865
        %v898 = vpack.c.b16 %v868, %v867
        %v899 = vpack.c.b16 %v870, %v869
        %v900 = vpack.c.b16 %v872, %v871
        %v901 = vpack.c.b16 %v874, %v873
        %v902 = vpack.c.b16 %v876, %v875
        %v903 = vpack.c.b16 %v878, %v877
        %v904 = vpack.c.b16 %v880, %v879
        %v945 = vunpack.c.l.b16 %v433
        %v946 = vunpack.c.l.b16 %v434
        %v947 = vunpack.c.l.b16 %v435
        %v948 = vunpack.c.l.b16 %v436
        %v949 = vunpack.c.l.b16 %v437
        %v950 = vunpack.c.l.b16 %v438
        %v951 = vunpack.c.l.b16 %v439
        %v952 = vunpack.c.l.b16 %v440
        %v953 = vunpack.c.l.b16 %v441
        %v954 = vunpack.c.l.b16 %v442
        %v955 = vunpack.c.l.b16 %v443
        %v956 = vunpack.c.l.b16 %v444
        %v957 = vunpack.c.l.b16 %v445
        %v958 = vunpack.c.l.b16 %v446
        %v959 = vunpack.c.l.b16 %v447
        %v960 = vunpack.c.l.b16 %v448
        %v961 = vpack.c.b16 %v946, %v945
        %v962 = vpack.c.b16 %v948, %v947
        %v963 = vpack.c.b16 %v950, %v949
        %v964 = vpack.c.b16 %v952, %v951
        %v965 = vpack.c.b16 %v954, %v953
        %v966 = vpack.c.b16 %v956, %v955
        %v967 = vpack.c.b16 %v958, %v957
        %v968 = vpack.c.b16 %v960, %v959
        %977 = vmatpush.bf16.msra.mxu0 %v968
        %978 = vmatpush.bf16.msra.mxu0 %v967
        %979 = vmatpush.bf16.msra.mxu0 %v966
        %980 = vmatpush.bf16.msra.mxu0 %v965
        %981 = vmatpush.bf16.msra.mxu0 %v964
        %982 = vmatpush.bf16.msra.mxu0 %v963
        %983 = vmatpush.bf16.msra.mxu0 %v962
        %984 = vmatpush.bf16.msra.mxu0 %v961
        %985 = vmatmul.bf16.gmra.mxu0 %v881
        %v986 = vpop.f32.mrf.mxu0
        %v987 = vadd.f32 %v548, %v986
        %v988 = vpop.f32.mrf.mxu0
        %v989 = vadd.f32 %v553, %v988
        %990 = vmatmul.bf16.gmra.mxu0 %v882
        %v991 = vpop.f32.mrf.mxu0
        %v992 = vadd.f32 %v558, %v991
        %v993 = vpop.f32.mrf.mxu0
        %v994 = vadd.f32 %v563, %v993
        %995 = vmatmul.bf16.gmra.mxu0 %v883
        %v996 = vpop.f32.mrf.mxu0
        %v997 = vadd.f32 %v568, %v996
        %v998 = vpop.f32.mrf.mxu0
        %v999 = vadd.f32 %v573, %v998
        %1000 = vmatmul.bf16.gmra.mxu0 %v884
        %v1001 = vpop.f32.mrf.mxu0
        %v1002 = vadd.f32 %v578, %v1001
        %v1003 = vpop.f32.mrf.mxu0
        %v1004 = vadd.f32 %v583, %v1003
        %1005 = vmatmul.bf16.gmra.mxu0 %v885
        %v1006 = vpop.f32.mrf.mxu0
        %v1007 = vadd.f32 %v588, %v1006
        %v1008 = vpop.f32.mrf.mxu0
        %v1009 = vadd.f32 %v593, %v1008
        %1010 = vmatmul.bf16.gmra.mxu0 %v886
        %v1011 = vpop.f32.mrf.mxu0
        %v1012 = vadd.f32 %v598, %v1011
        %v1013 = vpop.f32.mrf.mxu0
        %v1014 = vadd.f32 %v603, %v1013
        %1015 = vmatmul.bf16.gmra.mxu0 %v887
        %v1016 = vpop.f32.mrf.mxu0
        %v1017 = vadd.f32 %v608, %v1016
        %v1018 = vpop.f32.mrf.mxu0
        %v1019 = vadd.f32 %v613, %v1018
        %1020 = vmatmul.bf16.gmra.mxu0 %v888
        %v1021 = vpop.f32.mrf.mxu0
        %v1022 = vadd.f32 %v618, %v1021
        %v1023 = vpop.f32.mrf.mxu0
        %v1024 = vadd.f32 %v623, %v1023
        %1025 = vmatmul.bf16.gmra.mxu0 %v889
        %v1026 = vpop.f32.mrf.mxu0
        %v1027 = vadd.f32 %v628, %v1026
        %v1028 = vpop.f32.mrf.mxu0
        %v1029 = vadd.f32 %v633, %v1028
        %1030 = vmatmul.bf16.gmra.mxu0 %v890
        %v1031 = vpop.f32.mrf.mxu0
        %v1032 = vadd.f32 %v638, %v1031
        %v1033 = vpop.f32.mrf.mxu0
        %v1034 = vadd.f32 %v643, %v1033
        %1035 = vmatmul.bf16.gmra.mxu0 %v891
        %v1036 = vpop.f32.mrf.mxu0
        %v1037 = vadd.f32 %v648, %v1036
        %v1038 = vpop.f32.mrf.mxu0
        %v1039 = vadd.f32 %v653, %v1038
        %1040 = vmatmul.bf16.gmra.mxu0 %v892
        %v1041 = vpop.f32.mrf.mxu0
        %v1042 = vadd.f32 %v658, %v1041
        %v1043 = vpop.f32.mrf.mxu0
        %v1044 = vadd.f32 %v663, %v1043
        %1045 = vmatmul.bf16.gmra.mxu0 %v893
        %v1046 = vpop.f32.mrf.mxu0
        %v1047 = vadd.f32 %v668, %v1046
        %v1048 = vpop.f32.mrf.mxu0
        %v1049 = vadd.f32 %v673, %v1048
        %1050 = vmatmul.bf16.gmra.mxu0 %v894
        %v1051 = vpop.f32.mrf.mxu0
        %v1052 = vadd.f32 %v678, %v1051
        %v1053 = vpop.f32.mrf.mxu0
        %v1054 = vadd.f32 %v683, %v1053
        %1055 = vmatmul.bf16.gmra.mxu0 %v895
        %v1056 = vpop.f32.mrf.mxu0
        %v1057 = vadd.f32 %v688, %v1056
        %v1058 = vpop.f32.mrf.mxu0
        %v1059 = vadd.f32 %v693, %v1058
        %1060 = vmatmul.bf16.gmra.mxu0 %v896
        %v1061 = vpop.f32.mrf.mxu0
        %v1062 = vadd.f32 %v698, %v1061
        %v1063 = vpop.f32.mrf.mxu0
        %v1064 = vadd.f32 %v703, %v1063
        %1065 = vmatmul.bf16.gmra.mxu0 %v897
        %v1066 = vpop.f32.mrf.mxu0
        %v1067 = vadd.f32 %v708, %v1066
        %v1068 = vpop.f32.mrf.mxu0
        %v1069 = vadd.f32 %v713, %v1068
        %1070 = vmatmul.bf16.gmra.mxu0 %v898
        %v1071 = vpop.f32.mrf.mxu0
        %v1072 = vadd.f32 %v718, %v1071
        %v1073 = vpop.f32.mrf.mxu0
        %v1074 = vadd.f32 %v723, %v1073
        %1075 = vmatmul.bf16.gmra.mxu0 %v899
        %v1076 = vpop.f32.mrf.mxu0
        %v1077 = vadd.f32 %v728, %v1076
        %v1078 = vpop.f32.mrf.mxu0
        %v1079 = vadd.f32 %v733, %v1078
        %1080 = vmatmul.bf16.gmra.mxu0 %v900
        %v1081 = vpop.f32.mrf.mxu0
        %v1082 = vadd.f32 %v738, %v1081
        %v1083 = vpop.f32.mrf.mxu0
        %v1084 = vadd.f32 %v743, %v1083
        %1085 = vmatmul.bf16.gmra.mxu0 %v901
        %v1086 = vpop.f32.mrf.mxu0
        %v1087 = vadd.f32 %v748, %v1086
        %v1088 = vpop.f32.mrf.mxu0
        %v1089 = vadd.f32 %v753, %v1088
        %1090 = vmatmul.bf16.gmra.mxu0 %v902
        %v1091 = vpop.f32.mrf.mxu0
        %v1092 = vadd.f32 %v758, %v1091
        %v1093 = vpop.f32.mrf.mxu0
        %v1094 = vadd.f32 %v763, %v1093
        %1095 = vmatmul.bf16.gmra.mxu0 %v903
        %v1096 = vpop.f32.mrf.mxu0
        %v1097 = vadd.f32 %v768, %v1096
        %v1098 = vpop.f32.mrf.mxu0
        %v1099 = vadd.f32 %v773, %v1098
        %1100 = vmatmul.bf16.gmra.mxu0 %v904
        %v1101 = vpop.f32.mrf.mxu0
        %v1102 = vadd.f32 %v778, %v1101
        %v1103 = vpop.f32.mrf.mxu0
        %v1104 = vadd.f32 %v783, %v1103
        %1105 = vdwg.mxu0
        %v1106 = vmul.f32 %v987, 0.5
        %v1107 = vmul.f32 %v989, 0.5
        %v1108 = vmul.f32 %v992, 0.5
        %v1109 = vmul.f32 %v994, 0.5
        %v1110 = vmul.f32 %v997, 0.5
        %v1111 = vmul.f32 %v999, 0.5
        %v1112 = vmul.f32 %v1002, 0.5
        %v1113 = vmul.f32 %v1004, 0.5
        %v1114 = vmul.f32 %v1007, 0.5
        %v1115 = vmul.f32 %v1009, 0.5
        %v1116 = vmul.f32 %v1012, 0.5
        %v1117 = vmul.f32 %v1014, 0.5
        %v1118 = vmul.f32 %v1017, 0.5
        %v1119 = vmul.f32 %v1019, 0.5
        %v1120 = vmul.f32 %v1022, 0.5
        %v1121 = vmul.f32 %v1024, 0.5
        %v1122 = vmul.f32 %v1027, 0.5
        %v1123 = vmul.f32 %v1029, 0.5
        %v1124 = vmul.f32 %v1032, 0.5
        %v1125 = vmul.f32 %v1034, 0.5
        %v1126 = vmul.f32 %v1037, 0.5
        %v1127 = vmul.f32 %v1039, 0.5
        %v1128 = vmul.f32 %v1042, 0.5
        %v1129 = vmul.f32 %v1044, 0.5
        %v1130 = vmul.f32 %v1047, 0.5
        %v1131 = vmul.f32 %v1049, 0.5
        %v1132 = vmul.f32 %v1052, 0.5
        %v1133 = vmul.f32 %v1054, 0.5
        %v1134 = vmul.f32 %v1057, 0.5
        %v1135 = vmul.f32 %v1059, 0.5
        %v1136 = vmul.f32 %v1062, 0.5
        %v1137 = vmul.f32 %v1064, 0.5
        %v1138 = vmul.f32 %v1067, 0.5
        %v1139 = vmul.f32 %v1069, 0.5
        %v1140 = vmul.f32 %v1072, 0.5
        %v1141 = vmul.f32 %v1074, 0.5
        %v1142 = vmul.f32 %v1077, 0.5
        %v1143 = vmul.f32 %v1079, 0.5
        %v1144 = vmul.f32 %v1082, 0.5
        %v1145 = vmul.f32 %v1084, 0.5
        %v1146 = vmul.f32 %v1087, 0.5
        %v1147 = vmul.f32 %v1089, 0.5
        %v1148 = vmul.f32 %v1092, 0.5
        %v1149 = vmul.f32 %v1094, 0.5
        %v1150 = vmul.f32 %v1097, 0.5
        %v1151 = vmul.f32 %v1099, 0.5
        %v1152 = vmul.f32 %v1102, 0.5
        %v1153 = vmul.f32 %v1104, 0.5
        %v1154 = vrcp.pop 1.4142135
        %v1155 = vmul.f32 1.4142135, %v1154
        %v1156 = vsub.f32 1.0, %v1155
        %v1157 = vmul.f32 %v1154, %v1156
        %v1158 = vadd.f32 %v1154, %v1157
        %vm1159 = vweird.f32 %v1154
        %v1160 = vsel %vm1159, %v1154, %v1158
        %v1161 = vmul.f32 %v987, %v1160
        %v1162 = vmul.f32 %v989, %v1160
        %v1163 = vmul.f32 %v992, %v1160
        %v1164 = vmul.f32 %v994, %v1160
        %v1165 = vmul.f32 %v997, %v1160
        %v1166 = vmul.f32 %v999, %v1160
        %v1167 = vmul.f32 %v1002, %v1160
        %v1168 = vmul.f32 %v1004, %v1160
        %v1169 = vmul.f32 %v1007, %v1160
        %v1170 = vmul.f32 %v1009, %v1160
        %v1171 = vmul.f32 %v1012, %v1160
        %v1172 = vmul.f32 %v1014, %v1160
        %v1173 = vmul.f32 %v1017, %v1160
        %v1174 = vmul.f32 %v1019, %v1160
        %v1175 = vmul.f32 %v1022, %v1160
        %v1176 = vmul.f32 %v1024, %v1160
        %v1177 = vmul.f32 %v1027, %v1160
        %v1178 = vmul.f32 %v1029, %v1160
        %v1179 = vmul.f32 %v1032, %v1160
        %v1180 = vmul.f32 %v1034, %v1160
        %v1181 = vmul.f32 %v1037, %v1160
        %v1182 = vmul.f32 %v1039, %v1160
        %v1183 = vmul.f32 %v1042, %v1160
        %v1184 = vmul.f32 %v1044, %v1160
        %v1185 = vmul.f32 %v1047, %v1160
        %v1186 = vmul.f32 %v1049, %v1160
        %v1187 = vmul.f32 %v1052, %v1160
        %v1188 = vmul.f32 %v1054, %v1160
        %v1189 = vmul.f32 %v1057, %v1160
        %v1190 = vmul.f32 %v1059, %v1160
        %v1191 = vmul.f32 %v1062, %v1160
        %v1192 = vmul.f32 %v1064, %v1160
        %v1193 = vmul.f32 %v1067, %v1160
        %v1194 = vmul.f32 %v1069, %v1160
        %v1195 = vmul.f32 %v1072, %v1160
        %v1196 = vmul.f32 %v1074, %v1160
        %v1197 = vmul.f32 %v1077, %v1160
        %v1198 = vmul.f32 %v1079, %v1160
        %v1199 = vmul.f32 %v1082, %v1160
        %v1200 = vmul.f32 %v1084, %v1160
        %v1201 = vmul.f32 %v1087, %v1160
        %v1202 = vmul.f32 %v1089, %v1160
        %v1203 = vmul.f32 %v1092, %v1160
        %v1204 = vmul.f32 %v1094, %v1160
        %v1205 = vmul.f32 %v1097, %v1160
        %v1206 = vmul.f32 %v1099, %v1160
        %v1207 = vmul.f32 %v1102, %v1160
        %v1208 = vmul.f32 %v1104, %v1160
        %v1209 = vmul.f32 %v1161, %v1161
        %v1210 = vmin.f32 16.0, %v1209
        %v1211 = vmul.f32 %v1210, 2.1237322e-06
        %v1212 = vadd.f32 %v1211, 0.00028619796
        %v1213 = vmul.f32 %v1210, %v1212
        %v1214 = vadd.f32 %v1213, 0.0036580483
        %v1215 = vmul.f32 %v1210, %v1214
        %v1216 = vadd.f32 %v1215, 0.05243302
        %v1217 = vmul.f32 %v1210, %v1216
        %v1218 = vadd.f32 %v1217, 0.18741608
        %v1219 = vmul.f32 %v1210, %v1218
        %v1220 = vadd.f32 %v1219, 1.1283791
        %v1221 = vmul.f32 %v1161, %v1220
        %v1222 = vmul.f32 %v1210, 3.8918573e-05
        %v1223 = vadd.f32 %v1222, 0.001143296
        %v1224 = vmul.f32 %v1210, %v1223
        %v1225 = vadd.f32 %v1224, 0.014752088
        %v1226 = vmul.f32 %v1210, %v1225
        %v1227 = vadd.f32 %v1226, 0.112945676
        %v1228 = vmul.f32 %v1210, %v1227
        %v1229 = vadd.f32 %v1228, 0.4994258
        %v1230 = vmul.f32 %v1210, %v1229
        %v1231 = vadd.f32 %v1230, 1.0
        %v1232 = vrcp.pop %v1231
        %v1233 = vmul.f32 %v1231, %v1232
        %v1234 = vsub.f32 1.0, %v1233
        %v1235 = vmul.f32 %v1232, %v1234
        %v1236 = vadd.f32 %v1232, %v1235
        %vm1237 = vweird.f32 %v1231
        %vm1238 = vweird.f32 %v1232
        %vm1239 = vmor %vm1237, %vm1238
        %v1240 = vsel %vm1239, %v1232, %v1236
        %v1241 = vand.u32 2147483647, %v1231
        %vm1242 = vcmp.eq.f32.partialorder %v1241, 8.507059e+37
        %v1243 = vand.u32 %v1231, 2147483648
        %v1244 = vor.u32 1.1754944e-38, %v1243
        %v1245 = vsel %vm1242, %v1244, %v1240
        %v1246 = vmul.f32 %v1221, %v1245
        %v1247 = vmin.f32 %v1246, 1.0
        %v1248 = vmax.f32 %v1247, -1.0
        %v1249 = vmul.f32 %v1162, %v1162
        %v1250 = vmin.f32 16.0, %v1249
        %v1251 = vmul.f32 %v1250, 2.1237322e-06
        %v1252 = vadd.f32 %v1251, 0.00028619796
        %v1253 = vmul.f32 %v1250, %v1252
        %v1254 = vadd.f32 %v1253, 0.0036580483
        %v1255 = vmul.f32 %v1250, %v1254
        %v1256 = vadd.f32 %v1255, 0.05243302
        %v1257 = vmul.f32 %v1250, %v1256
        %v1258 = vadd.f32 %v1257, 0.18741608
        %v1259 = vmul.f32 %v1250, %v1258
        %v1260 = vadd.f32 %v1259, 1.1283791
        %v1261 = vmul.f32 %v1162, %v1260
        %v1262 = vmul.f32 %v1250, 3.8918573e-05
        %v1263 = vadd.f32 %v1262, 0.001143296
        %v1264 = vmul.f32 %v1250, %v1263
        %v1265 = vadd.f32 %v1264, 0.014752088
        %v1266 = vmul.f32 %v1250, %v1265
        %v1267 = vadd.f32 %v1266, 0.112945676
        %v1268 = vmul.f32 %v1250, %v1267
        %v1269 = vadd.f32 %v1268, 0.4994258
        %v1270 = vmul.f32 %v1250, %v1269
        %v1271 = vadd.f32 %v1270, 1.0
        %v1272 = vrcp.pop %v1271
        %v1273 = vmul.f32 %v1271, %v1272
        %v1274 = vsub.f32 1.0, %v1273
        %v1275 = vmul.f32 %v1272, %v1274
        %v1276 = vadd.f32 %v1272, %v1275
        %vm1277 = vweird.f32 %v1271
        %vm1278 = vweird.f32 %v1272
        %vm1279 = vmor %vm1277, %vm1278
        %v1280 = vsel %vm1279, %v1272, %v1276
        %v1281 = vand.u32 2147483647, %v1271
        %vm1282 = vcmp.eq.f32.partialorder %v1281, 8.507059e+37
        %v1283 = vand.u32 %v1271, 2147483648
        %v1284 = vor.u32 1.1754944e-38, %v1283
        %v1285 = vsel %vm1282, %v1284, %v1280
        %v1286 = vmul.f32 %v1261, %v1285
        %v1287 = vmin.f32 %v1286, 1.0
        %v1288 = vmax.f32 %v1287, -1.0
        %v1289 = vmul.f32 %v1163, %v1163
        %v1290 = vmin.f32 16.0, %v1289
        %v1291 = vmul.f32 %v1290, 2.1237322e-06
        %v1292 = vadd.f32 %v1291, 0.00028619796
        %v1293 = vmul.f32 %v1290, %v1292
        %v1294 = vadd.f32 %v1293, 0.0036580483
        %v1295 = vmul.f32 %v1290, %v1294
        %v1296 = vadd.f32 %v1295, 0.05243302
        %v1297 = vmul.f32 %v1290, %v1296
        %v1298 = vadd.f32 %v1297, 0.18741608
        %v1299 = vmul.f32 %v1290, %v1298
        %v1300 = vadd.f32 %v1299, 1.1283791
        %v1301 = vmul.f32 %v1163, %v1300
        %v1302 = vmul.f32 %v1290, 3.8918573e-05
        %v1303 = vadd.f32 %v1302, 0.001143296
        %v1304 = vmul.f32 %v1290, %v1303
        %v1305 = vadd.f32 %v1304, 0.014752088
        %v1306 = vmul.f32 %v1290, %v1305
        %v1307 = vadd.f32 %v1306, 0.112945676
        %v1308 = vmul.f32 %v1290, %v1307
        %v1309 = vadd.f32 %v1308, 0.4994258
        %v1310 = vmul.f32 %v1290, %v1309
        %v1311 = vadd.f32 %v1310, 1.0
        %v1312 = vrcp.pop %v1311
        %v1313 = vmul.f32 %v1311, %v1312
        %v1314 = vsub.f32 1.0, %v1313
        %v1315 = vmul.f32 %v1312, %v1314
        %v1316 = vadd.f32 %v1312, %v1315
        %vm1317 = vweird.f32 %v1311
        %vm1318 = vweird.f32 %v1312
        %vm1319 = vmor %vm1317, %vm1318
        %v1320 = vsel %vm1319, %v1312, %v1316
        %v1321 = vand.u32 2147483647, %v1311
        %vm1322 = vcmp.eq.f32.partialorder %v1321, 8.507059e+37
        %v1323 = vand.u32 %v1311, 2147483648
        %v1324 = vor.u32 1.1754944e-38, %v1323
        %v1325 = vsel %vm1322, %v1324, %v1320
        %v1326 = vmul.f32 %v1301, %v1325
        %v1327 = vmin.f32 %v1326, 1.0
        %v1328 = vmax.f32 %v1327, -1.0
        %v1329 = vmul.f32 %v1164, %v1164
        %v1330 = vmin.f32 16.0, %v1329
        %v1331 = vmul.f32 %v1330, 2.1237322e-06
        %v1332 = vadd.f32 %v1331, 0.00028619796
        %v1333 = vmul.f32 %v1330, %v1332
        %v1334 = vadd.f32 %v1333, 0.0036580483
        %v1335 = vmul.f32 %v1330, %v1334
        %v1336 = vadd.f32 %v1335, 0.05243302
        %v1337 = vmul.f32 %v1330, %v1336
        %v1338 = vadd.f32 %v1337, 0.18741608
        %v1339 = vmul.f32 %v1330, %v1338
        %v1340 = vadd.f32 %v1339, 1.1283791
        %v1341 = vmul.f32 %v1164, %v1340
        %v1342 = vmul.f32 %v1330, 3.8918573e-05
        %v1343 = vadd.f32 %v1342, 0.001143296
        %v1344 = vmul.f32 %v1330, %v1343
        %v1345 = vadd.f32 %v1344, 0.014752088
        %v1346 = vmul.f32 %v1330, %v1345
        %v1347 = vadd.f32 %v1346, 0.112945676
        %v1348 = vmul.f32 %v1330, %v1347
        %v1349 = vadd.f32 %v1348, 0.4994258
        %v1350 = vmul.f32 %v1330, %v1349
        %v1351 = vadd.f32 %v1350, 1.0
        %v1352 = vrcp.pop %v1351
        %v1353 = vmul.f32 %v1351, %v1352
        %v1354 = vsub.f32 1.0, %v1353
        %v1355 = vmul.f32 %v1352, %v1354
        %v1356 = vadd.f32 %v1352, %v1355
        %vm1357 = vweird.f32 %v1351
        %vm1358 = vweird.f32 %v1352
        %vm1359 = vmor %vm1357, %vm1358
        %v1360 = vsel %vm1359, %v1352, %v1356
        %v1361 = vand.u32 2147483647, %v1351
        %vm1362 = vcmp.eq.f32.partialorder %v1361, 8.507059e+37
        %v1363 = vand.u32 %v1351, 2147483648
        %v1364 = vor.u32 1.1754944e-38, %v1363
        %v1365 = vsel %vm1362, %v1364, %v1360
        %v1366 = vmul.f32 %v1341, %v1365
        %v1367 = vmin.f32 %v1366, 1.0
        %v1368 = vmax.f32 %v1367, -1.0
        %v1369 = vmul.f32 %v1165, %v1165
        %v1370 = vmin.f32 16.0, %v1369
        %v1371 = vmul.f32 %v1370, 2.1237322e-06
        %v1372 = vadd.f32 %v1371, 0.00028619796
        %v1373 = vmul.f32 %v1370, %v1372
        %v1374 = vadd.f32 %v1373, 0.0036580483
        %v1375 = vmul.f32 %v1370, %v1374
        %v1376 = vadd.f32 %v1375, 0.05243302
        %v1377 = vmul.f32 %v1370, %v1376
        %v1378 = vadd.f32 %v1377, 0.18741608
        %v1379 = vmul.f32 %v1370, %v1378
        %v1380 = vadd.f32 %v1379, 1.1283791
        %v1381 = vmul.f32 %v1165, %v1380
        %v1382 = vmul.f32 %v1370, 3.8918573e-05
        %v1383 = vadd.f32 %v1382, 0.001143296
        %v1384 = vmul.f32 %v1370, %v1383
        %v1385 = vadd.f32 %v1384, 0.014752088
        %v1386 = vmul.f32 %v1370, %v1385
        %v1387 = vadd.f32 %v1386, 0.112945676
        %v1388 = vmul.f32 %v1370, %v1387
        %v1389 = vadd.f32 %v1388, 0.4994258
        %v1390 = vmul.f32 %v1370, %v1389
        %v1391 = vadd.f32 %v1390, 1.0
        %v1392 = vrcp.pop %v1391
        %v1393 = vmul.f32 %v1391, %v1392
        %v1394 = vsub.f32 1.0, %v1393
        %v1395 = vmul.f32 %v1392, %v1394
        %v1396 = vadd.f32 %v1392, %v1395
        %vm1397 = vweird.f32 %v1391
        %vm1398 = vweird.f32 %v1392
        %vm1399 = vmor %vm1397, %vm1398
        %v1400 = vsel %vm1399, %v1392, %v1396
        %v1401 = vand.u32 2147483647, %v1391
        %vm1402 = vcmp.eq.f32.partialorder %v1401, 8.507059e+37
        %v1403 = vand.u32 %v1391, 2147483648
        %v1404 = vor.u32 1.1754944e-38, %v1403
        %v1405 = vsel %vm1402, %v1404, %v1400
        %v1406 = vmul.f32 %v1381, %v1405
        %v1407 = vmin.f32 %v1406, 1.0
        %v1408 = vmax.f32 %v1407, -1.0
        %v1409 = vmul.f32 %v1166, %v1166
        %v1410 = vmin.f32 16.0, %v1409
        %v1411 = vmul.f32 %v1410, 2.1237322e-06
        %v1412 = vadd.f32 %v1411, 0.00028619796
        %v1413 = vmul.f32 %v1410, %v1412
        %v1414 = vadd.f32 %v1413, 0.0036580483
        %v1415 = vmul.f32 %v1410, %v1414
        %v1416 = vadd.f32 %v1415, 0.05243302
        %v1417 = vmul.f32 %v1410, %v1416
        %v1418 = vadd.f32 %v1417, 0.18741608
        %v1419 = vmul.f32 %v1410, %v1418
        %v1420 = vadd.f32 %v1419, 1.1283791
        %v1421 = vmul.f32 %v1166, %v1420
        %v1422 = vmul.f32 %v1410, 3.8918573e-05
        %v1423 = vadd.f32 %v1422, 0.001143296
        %v1424 = vmul.f32 %v1410, %v1423
        %v1425 = vadd.f32 %v1424, 0.014752088
        %v1426 = vmul.f32 %v1410, %v1425
        %v1427 = vadd.f32 %v1426, 0.112945676
        %v1428 = vmul.f32 %v1410, %v1427
        %v1429 = vadd.f32 %v1428, 0.4994258
        %v1430 = vmul.f32 %v1410, %v1429
        %v1431 = vadd.f32 %v1430, 1.0
        %v1432 = vrcp.pop %v1431
        %v1433 = vmul.f32 %v1431, %v1432
        %v1434 = vsub.f32 1.0, %v1433
        %v1435 = vmul.f32 %v1432, %v1434
        %v1436 = vadd.f32 %v1432, %v1435
        %vm1437 = vweird.f32 %v1431
        %vm1438 = vweird.f32 %v1432
        %vm1439 = vmor %vm1437, %vm1438
        %v1440 = vsel %vm1439, %v1432, %v1436
        %v1441 = vand.u32 2147483647, %v1431
        %vm1442 = vcmp.eq.f32.partialorder %v1441, 8.507059e+37
        %v1443 = vand.u32 %v1431, 2147483648
        %v1444 = vor.u32 1.1754944e-38, %v1443
        %v1445 = vsel %vm1442, %v1444, %v1440
        %v1446 = vmul.f32 %v1421, %v1445
        %v1447 = vmin.f32 %v1446, 1.0
        %v1448 = vmax.f32 %v1447, -1.0
        %v1449 = vmul.f32 %v1167, %v1167
        %v1450 = vmin.f32 16.0, %v1449
        %v1451 = vmul.f32 %v1450, 2.1237322e-06
        %v1452 = vadd.f32 %v1451, 0.00028619796
        %v1453 = vmul.f32 %v1450, %v1452
        %v1454 = vadd.f32 %v1453, 0.0036580483
        %v1455 = vmul.f32 %v1450, %v1454
        %v1456 = vadd.f32 %v1455, 0.05243302
        %v1457 = vmul.f32 %v1450, %v1456
        %v1458 = vadd.f32 %v1457, 0.18741608
        %v1459 = vmul.f32 %v1450, %v1458
        %v1460 = vadd.f32 %v1459, 1.1283791
        %v1461 = vmul.f32 %v1167, %v1460
        %v1462 = vmul.f32 %v1450, 3.8918573e-05
        %v1463 = vadd.f32 %v1462, 0.001143296
        %v1464 = vmul.f32 %v1450, %v1463
        %v1465 = vadd.f32 %v1464, 0.014752088
        %v1466 = vmul.f32 %v1450, %v1465
        %v1467 = vadd.f32 %v1466, 0.112945676
        %v1468 = vmul.f32 %v1450, %v1467
        %v1469 = vadd.f32 %v1468, 0.4994258
        %v1470 = vmul.f32 %v1450, %v1469
        %v1471 = vadd.f32 %v1470, 1.0
        %v1472 = vrcp.pop %v1471
        %v1473 = vmul.f32 %v1471, %v1472
        %v1474 = vsub.f32 1.0, %v1473
        %v1475 = vmul.f32 %v1472, %v1474
        %v1476 = vadd.f32 %v1472, %v1475
        %vm1477 = vweird.f32 %v1471
        %vm1478 = vweird.f32 %v1472
        %vm1479 = vmor %vm1477, %vm1478
        %v1480 = vsel %vm1479, %v1472, %v1476
        %v1481 = vand.u32 2147483647, %v1471
        %vm1482 = vcmp.eq.f32.partialorder %v1481, 8.507059e+37
        %v1483 = vand.u32 %v1471, 2147483648
        %v1484 = vor.u32 1.1754944e-38, %v1483
        %v1485 = vsel %vm1482, %v1484, %v1480
        %v1486 = vmul.f32 %v1461, %v1485
        %v1487 = vmin.f32 %v1486, 1.0
        %v1488 = vmax.f32 %v1487, -1.0
        %v1489 = vmul.f32 %v1168, %v1168
        %v1490 = vmin.f32 16.0, %v1489
        %v1491 = vmul.f32 %v1490, 2.1237322e-06
        %v1492 = vadd.f32 %v1491, 0.00028619796
        %v1493 = vmul.f32 %v1490, %v1492
        %v1494 = vadd.f32 %v1493, 0.0036580483
        %v1495 = vmul.f32 %v1490, %v1494
        %v1496 = vadd.f32 %v1495, 0.05243302
        %v1497 = vmul.f32 %v1490, %v1496
        %v1498 = vadd.f32 %v1497, 0.18741608
        %v1499 = vmul.f32 %v1490, %v1498
        %v1500 = vadd.f32 %v1499, 1.1283791
        %v1501 = vmul.f32 %v1168, %v1500
        %v1502 = vmul.f32 %v1490, 3.8918573e-05
        %v1503 = vadd.f32 %v1502, 0.001143296
        %v1504 = vmul.f32 %v1490, %v1503
        %v1505 = vadd.f32 %v1504, 0.014752088
        %v1506 = vmul.f32 %v1490, %v1505
        %v1507 = vadd.f32 %v1506, 0.112945676
        %v1508 = vmul.f32 %v1490, %v1507
        %v1509 = vadd.f32 %v1508, 0.4994258
        %v1510 = vmul.f32 %v1490, %v1509
        %v1511 = vadd.f32 %v1510, 1.0
        %v1512 = vrcp.pop %v1511
        %v1513 = vmul.f32 %v1511, %v1512
        %v1514 = vsub.f32 1.0, %v1513
        %v1515 = vmul.f32 %v1512, %v1514
        %v1516 = vadd.f32 %v1512, %v1515
        %vm1517 = vweird.f32 %v1511
        %vm1518 = vweird.f32 %v1512
        %vm1519 = vmor %vm1517, %vm1518
        %v1520 = vsel %vm1519, %v1512, %v1516
        %v1521 = vand.u32 2147483647, %v1511
        %vm1522 = vcmp.eq.f32.partialorder %v1521, 8.507059e+37
        %v1523 = vand.u32 %v1511, 2147483648
        %v1524 = vor.u32 1.1754944e-38, %v1523
        %v1525 = vsel %vm1522, %v1524, %v1520
        %v1526 = vmul.f32 %v1501, %v1525
        %v1527 = vmin.f32 %v1526, 1.0
        %v1528 = vmax.f32 %v1527, -1.0
        %v1529 = vmul.f32 %v1169, %v1169
        %v1530 = vmin.f32 16.0, %v1529
        %v1531 = vmul.f32 %v1530, 2.1237322e-06
        %v1532 = vadd.f32 %v1531, 0.00028619796
        %v1533 = vmul.f32 %v1530, %v1532
        %v1534 = vadd.f32 %v1533, 0.0036580483
        %v1535 = vmul.f32 %v1530, %v1534
        %v1536 = vadd.f32 %v1535, 0.05243302
        %v1537 = vmul.f32 %v1530, %v1536
        %v1538 = vadd.f32 %v1537, 0.18741608
        %v1539 = vmul.f32 %v1530, %v1538
        %v1540 = vadd.f32 %v1539, 1.1283791
        %v1541 = vmul.f32 %v1169, %v1540
        %v1542 = vmul.f32 %v1530, 3.8918573e-05
        %v1543 = vadd.f32 %v1542, 0.001143296
        %v1544 = vmul.f32 %v1530, %v1543
        %v1545 = vadd.f32 %v1544, 0.014752088
        %v1546 = vmul.f32 %v1530, %v1545
        %v1547 = vadd.f32 %v1546, 0.112945676
        %v1548 = vmul.f32 %v1530, %v1547
        %v1549 = vadd.f32 %v1548, 0.4994258
        %v1550 = vmul.f32 %v1530, %v1549
        %v1551 = vadd.f32 %v1550, 1.0
        %v1552 = vrcp.pop %v1551
        %v1553 = vmul.f32 %v1551, %v1552
        %v1554 = vsub.f32 1.0, %v1553
        %v1555 = vmul.f32 %v1552, %v1554
        %v1556 = vadd.f32 %v1552, %v1555
        %vm1557 = vweird.f32 %v1551
        %vm1558 = vweird.f32 %v1552
        %vm1559 = vmor %vm1557, %vm1558
        %v1560 = vsel %vm1559, %v1552, %v1556
        %v1561 = vand.u32 2147483647, %v1551
        %vm1562 = vcmp.eq.f32.partialorder %v1561, 8.507059e+37
        %v1563 = vand.u32 %v1551, 2147483648
        %v1564 = vor.u32 1.1754944e-38, %v1563
        %v1565 = vsel %vm1562, %v1564, %v1560
        %v1566 = vmul.f32 %v1541, %v1565
        %v1567 = vmin.f32 %v1566, 1.0
        %v1568 = vmax.f32 %v1567, -1.0
        %v1569 = vmul.f32 %v1170, %v1170
        %v1570 = vmin.f32 16.0, %v1569
        %v1571 = vmul.f32 %v1570, 2.1237322e-06
        %v1572 = vadd.f32 %v1571, 0.00028619796
        %v1573 = vmul.f32 %v1570, %v1572
        %v1574 = vadd.f32 %v1573, 0.0036580483
        %v1575 = vmul.f32 %v1570, %v1574
        %v1576 = vadd.f32 %v1575, 0.05243302
        %v1577 = vmul.f32 %v1570, %v1576
        %v1578 = vadd.f32 %v1577, 0.18741608
        %v1579 = vmul.f32 %v1570, %v1578
        %v1580 = vadd.f32 %v1579, 1.1283791
        %v1581 = vmul.f32 %v1170, %v1580
        %v1582 = vmul.f32 %v1570, 3.8918573e-05
        %v1583 = vadd.f32 %v1582, 0.001143296
        %v1584 = vmul.f32 %v1570, %v1583
        %v1585 = vadd.f32 %v1584, 0.014752088
        %v1586 = vmul.f32 %v1570, %v1585
        %v1587 = vadd.f32 %v1586, 0.112945676
        %v1588 = vmul.f32 %v1570, %v1587
        %v1589 = vadd.f32 %v1588, 0.4994258
        %v1590 = vmul.f32 %v1570, %v1589
        %v1591 = vadd.f32 %v1590, 1.0
        %v1592 = vrcp.pop %v1591
        %v1593 = vmul.f32 %v1591, %v1592
        %v1594 = vsub.f32 1.0, %v1593
        %v1595 = vmul.f32 %v1592, %v1594
        %v1596 = vadd.f32 %v1592, %v1595
        %vm1597 = vweird.f32 %v1591
        %vm1598 = vweird.f32 %v1592
        %vm1599 = vmor %vm1597, %vm1598
        %v1600 = vsel %vm1599, %v1592, %v1596
        %v1601 = vand.u32 2147483647, %v1591
        %vm1602 = vcmp.eq.f32.partialorder %v1601, 8.507059e+37
        %v1603 = vand.u32 %v1591, 2147483648
        %v1604 = vor.u32 1.1754944e-38, %v1603
        %v1605 = vsel %vm1602, %v1604, %v1600
        %v1606 = vmul.f32 %v1581, %v1605
        %v1607 = vmin.f32 %v1606, 1.0
        %v1608 = vmax.f32 %v1607, -1.0
        %v1609 = vmul.f32 %v1171, %v1171
        %v1610 = vmin.f32 16.0, %v1609
        %v1611 = vmul.f32 %v1610, 2.1237322e-06
        %v1612 = vadd.f32 %v1611, 0.00028619796
        %v1613 = vmul.f32 %v1610, %v1612
        %v1614 = vadd.f32 %v1613, 0.0036580483
        %v1615 = vmul.f32 %v1610, %v1614
        %v1616 = vadd.f32 %v1615, 0.05243302
        %v1617 = vmul.f32 %v1610, %v1616
        %v1618 = vadd.f32 %v1617, 0.18741608
        %v1619 = vmul.f32 %v1610, %v1618
        %v1620 = vadd.f32 %v1619, 1.1283791
        %v1621 = vmul.f32 %v1171, %v1620
        %v1622 = vmul.f32 %v1610, 3.8918573e-05
        %v1623 = vadd.f32 %v1622, 0.001143296
        %v1624 = vmul.f32 %v1610, %v1623
        %v1625 = vadd.f32 %v1624, 0.014752088
        %v1626 = vmul.f32 %v1610, %v1625
        %v1627 = vadd.f32 %v1626, 0.112945676
        %v1628 = vmul.f32 %v1610, %v1627
        %v1629 = vadd.f32 %v1628, 0.4994258
        %v1630 = vmul.f32 %v1610, %v1629
        %v1631 = vadd.f32 %v1630, 1.0
        %v1632 = vrcp.pop %v1631
        %v1633 = vmul.f32 %v1631, %v1632
        %v1634 = vsub.f32 1.0, %v1633
        %v1635 = vmul.f32 %v1632, %v1634
        %v1636 = vadd.f32 %v1632, %v1635
        %vm1637 = vweird.f32 %v1631
        %vm1638 = vweird.f32 %v1632
        %vm1639 = vmor %vm1637, %vm1638
        %v1640 = vsel %vm1639, %v1632, %v1636
        %v1641 = vand.u32 2147483647, %v1631
        %vm1642 = vcmp.eq.f32.partialorder %v1641, 8.507059e+37
        %v1643 = vand.u32 %v1631, 2147483648
        %v1644 = vor.u32 1.1754944e-38, %v1643
        %v1645 = vsel %vm1642, %v1644, %v1640
        %v1646 = vmul.f32 %v1621, %v1645
        %v1647 = vmin.f32 %v1646, 1.0
        %v1648 = vmax.f32 %v1647, -1.0
        %v1649 = vmul.f32 %v1172, %v1172
        %v1650 = vmin.f32 16.0, %v1649
        %v1651 = vmul.f32 %v1650, 2.1237322e-06
        %v1652 = vadd.f32 %v1651, 0.00028619796
        %v1653 = vmul.f32 %v1650, %v1652
        %v1654 = vadd.f32 %v1653, 0.0036580483
        %v1655 = vmul.f32 %v1650, %v1654
        %v1656 = vadd.f32 %v1655, 0.05243302
        %v1657 = vmul.f32 %v1650, %v1656
        %v1658 = vadd.f32 %v1657, 0.18741608
        %v1659 = vmul.f32 %v1650, %v1658
        %v1660 = vadd.f32 %v1659, 1.1283791
        %v1661 = vmul.f32 %v1172, %v1660
        %v1662 = vmul.f32 %v1650, 3.8918573e-05
        %v1663 = vadd.f32 %v1662, 0.001143296
        %v1664 = vmul.f32 %v1650, %v1663
        %v1665 = vadd.f32 %v1664, 0.014752088
        %v1666 = vmul.f32 %v1650, %v1665
        %v1667 = vadd.f32 %v1666, 0.112945676
        %v1668 = vmul.f32 %v1650, %v1667
        %v1669 = vadd.f32 %v1668, 0.4994258
        %v1670 = vmul.f32 %v1650, %v1669
        %v1671 = vadd.f32 %v1670, 1.0
        %v1672 = vrcp.pop %v1671
        %v1673 = vmul.f32 %v1671, %v1672
        %v1674 = vsub.f32 1.0, %v1673
        %v1675 = vmul.f32 %v1672, %v1674
        %v1676 = vadd.f32 %v1672, %v1675
        %vm1677 = vweird.f32 %v1671
        %vm1678 = vweird.f32 %v1672
        %vm1679 = vmor %vm1677, %vm1678
        %v1680 = vsel %vm1679, %v1672, %v1676
        %v1681 = vand.u32 2147483647, %v1671
        %vm1682 = vcmp.eq.f32.partialorder %v1681, 8.507059e+37
        %v1683 = vand.u32 %v1671, 2147483648
        %v1684 = vor.u32 1.1754944e-38, %v1683
        %v1685 = vsel %vm1682, %v1684, %v1680
        %v1686 = vmul.f32 %v1661, %v1685
        %v1687 = vmin.f32 %v1686, 1.0
        %v1688 = vmax.f32 %v1687, -1.0
        %v1689 = vmul.f32 %v1173, %v1173
        %v1690 = vmin.f32 16.0, %v1689
        %v1691 = vmul.f32 %v1690, 2.1237322e-06
        %v1692 = vadd.f32 %v1691, 0.00028619796
        %v1693 = vmul.f32 %v1690, %v1692
        %v1694 = vadd.f32 %v1693, 0.0036580483
        %v1695 = vmul.f32 %v1690, %v1694
        %v1696 = vadd.f32 %v1695, 0.05243302
        %v1697 = vmul.f32 %v1690, %v1696
        %v1698 = vadd.f32 %v1697, 0.18741608
        %v1699 = vmul.f32 %v1690, %v1698
        %v1700 = vadd.f32 %v1699, 1.1283791
        %v1701 = vmul.f32 %v1173, %v1700
        %v1702 = vmul.f32 %v1690, 3.8918573e-05
        %v1703 = vadd.f32 %v1702, 0.001143296
        %v1704 = vmul.f32 %v1690, %v1703
        %v1705 = vadd.f32 %v1704, 0.014752088
        %v1706 = vmul.f32 %v1690, %v1705
        %v1707 = vadd.f32 %v1706, 0.112945676
        %v1708 = vmul.f32 %v1690, %v1707
        %v1709 = vadd.f32 %v1708, 0.4994258
        %v1710 = vmul.f32 %v1690, %v1709
        %v1711 = vadd.f32 %v1710, 1.0
        %v1712 = vrcp.pop %v1711
        %v1713 = vmul.f32 %v1711, %v1712
        %v1714 = vsub.f32 1.0, %v1713
        %v1715 = vmul.f32 %v1712, %v1714
        %v1716 = vadd.f32 %v1712, %v1715
        %vm1717 = vweird.f32 %v1711
        %vm1718 = vweird.f32 %v1712
        %vm1719 = vmor %vm1717, %vm1718
        %v1720 = vsel %vm1719, %v1712, %v1716
        %v1721 = vand.u32 2147483647, %v1711
        %vm1722 = vcmp.eq.f32.partialorder %v1721, 8.507059e+37
        %v1723 = vand.u32 %v1711, 2147483648
        %v1724 = vor.u32 1.1754944e-38, %v1723
        %v1725 = vsel %vm1722, %v1724, %v1720
        %v1726 = vmul.f32 %v1701, %v1725
        %v1727 = vmin.f32 %v1726, 1.0
        %v1728 = vmax.f32 %v1727, -1.0
        %v1729 = vmul.f32 %v1174, %v1174
        %v1730 = vmin.f32 16.0, %v1729
        %v1731 = vmul.f32 %v1730, 2.1237322e-06
        %v1732 = vadd.f32 %v1731, 0.00028619796
        %v1733 = vmul.f32 %v1730, %v1732
        %v1734 = vadd.f32 %v1733, 0.0036580483
        %v1735 = vmul.f32 %v1730, %v1734
        %v1736 = vadd.f32 %v1735, 0.05243302
        %v1737 = vmul.f32 %v1730, %v1736
        %v1738 = vadd.f32 %v1737, 0.18741608
        %v1739 = vmul.f32 %v1730, %v1738
        %v1740 = vadd.f32 %v1739, 1.1283791
        %v1741 = vmul.f32 %v1174, %v1740
        %v1742 = vmul.f32 %v1730, 3.8918573e-05
        %v1743 = vadd.f32 %v1742, 0.001143296
        %v1744 = vmul.f32 %v1730, %v1743
        %v1745 = vadd.f32 %v1744, 0.014752088
        %v1746 = vmul.f32 %v1730, %v1745
        %v1747 = vadd.f32 %v1746, 0.112945676
        %v1748 = vmul.f32 %v1730, %v1747
        %v1749 = vadd.f32 %v1748, 0.4994258
        %v1750 = vmul.f32 %v1730, %v1749
        %v1751 = vadd.f32 %v1750, 1.0
        %v1752 = vrcp.pop %v1751
        %v1753 = vmul.f32 %v1751, %v1752
        %v1754 = vsub.f32 1.0, %v1753
        %v1755 = vmul.f32 %v1752, %v1754
        %v1756 = vadd.f32 %v1752, %v1755
        %vm1757 = vweird.f32 %v1751
        %vm1758 = vweird.f32 %v1752
        %vm1759 = vmor %vm1757, %vm1758
        %v1760 = vsel %vm1759, %v1752, %v1756
        %v1761 = vand.u32 2147483647, %v1751
        %vm1762 = vcmp.eq.f32.partialorder %v1761, 8.507059e+37
        %v1763 = vand.u32 %v1751, 2147483648
        %v1764 = vor.u32 1.1754944e-38, %v1763
        %v1765 = vsel %vm1762, %v1764, %v1760
        %v1766 = vmul.f32 %v1741, %v1765
        %v1767 = vmin.f32 %v1766, 1.0
        %v1768 = vmax.f32 %v1767, -1.0
        %v1769 = vmul.f32 %v1175, %v1175
        %v1770 = vmin.f32 16.0, %v1769
        %v1771 = vmul.f32 %v1770, 2.1237322e-06
        %v1772 = vadd.f32 %v1771, 0.00028619796
        %v1773 = vmul.f32 %v1770, %v1772
        %v1774 = vadd.f32 %v1773, 0.0036580483
        %v1775 = vmul.f32 %v1770, %v1774
        %v1776 = vadd.f32 %v1775, 0.05243302
        %v1777 = vmul.f32 %v1770, %v1776
        %v1778 = vadd.f32 %v1777, 0.18741608
        %v1779 = vmul.f32 %v1770, %v1778
        %v1780 = vadd.f32 %v1779, 1.1283791
        %v1781 = vmul.f32 %v1175, %v1780
        %v1782 = vmul.f32 %v1770, 3.8918573e-05
        %v1783 = vadd.f32 %v1782, 0.001143296
        %v1784 = vmul.f32 %v1770, %v1783
        %v1785 = vadd.f32 %v1784, 0.014752088
        %v1786 = vmul.f32 %v1770, %v1785
        %v1787 = vadd.f32 %v1786, 0.112945676
        %v1788 = vmul.f32 %v1770, %v1787
        %v1789 = vadd.f32 %v1788, 0.4994258
        %v1790 = vmul.f32 %v1770, %v1789
        %v1791 = vadd.f32 %v1790, 1.0
        %v1792 = vrcp.pop %v1791
        %v1793 = vmul.f32 %v1791, %v1792
        %v1794 = vsub.f32 1.0, %v1793
        %v1795 = vmul.f32 %v1792, %v1794
        %v1796 = vadd.f32 %v1792, %v1795
        %vm1797 = vweird.f32 %v1791
        %vm1798 = vweird.f32 %v1792
        %vm1799 = vmor %vm1797, %vm1798
        %v1800 = vsel %vm1799, %v1792, %v1796
        %v1801 = vand.u32 2147483647, %v1791
        %vm1802 = vcmp.eq.f32.partialorder %v1801, 8.507059e+37
        %v1803 = vand.u32 %v1791, 2147483648
        %v1804 = vor.u32 1.1754944e-38, %v1803
        %v1805 = vsel %vm1802, %v1804, %v1800
        %v1806 = vmul.f32 %v1781, %v1805
        %v1807 = vmin.f32 %v1806, 1.0
        %v1808 = vmax.f32 %v1807, -1.0
        %v1809 = vmul.f32 %v1176, %v1176
        %v1810 = vmin.f32 16.0, %v1809
        %v1811 = vmul.f32 %v1810, 2.1237322e-06
        %v1812 = vadd.f32 %v1811, 0.00028619796
        %v1813 = vmul.f32 %v1810, %v1812
        %v1814 = vadd.f32 %v1813, 0.0036580483
        %v1815 = vmul.f32 %v1810, %v1814
        %v1816 = vadd.f32 %v1815, 0.05243302
        %v1817 = vmul.f32 %v1810, %v1816
        %v1818 = vadd.f32 %v1817, 0.18741608
        %v1819 = vmul.f32 %v1810, %v1818
        %v1820 = vadd.f32 %v1819, 1.1283791
        %v1821 = vmul.f32 %v1176, %v1820
        %v1822 = vmul.f32 %v1810, 3.8918573e-05
        %v1823 = vadd.f32 %v1822, 0.001143296
        %v1824 = vmul.f32 %v1810, %v1823
        %v1825 = vadd.f32 %v1824, 0.014752088
        %v1826 = vmul.f32 %v1810, %v1825
        %v1827 = vadd.f32 %v1826, 0.112945676
        %v1828 = vmul.f32 %v1810, %v1827
        %v1829 = vadd.f32 %v1828, 0.4994258
        %v1830 = vmul.f32 %v1810, %v1829
        %v1831 = vadd.f32 %v1830, 1.0
        %v1832 = vrcp.pop %v1831
        %v1833 = vmul.f32 %v1831, %v1832
        %v1834 = vsub.f32 1.0, %v1833
        %v1835 = vmul.f32 %v1832, %v1834
        %v1836 = vadd.f32 %v1832, %v1835
        %vm1837 = vweird.f32 %v1831
        %vm1838 = vweird.f32 %v1832
        %vm1839 = vmor %vm1837, %vm1838
        %v1840 = vsel %vm1839, %v1832, %v1836
        %v1841 = vand.u32 2147483647, %v1831
        %vm1842 = vcmp.eq.f32.partialorder %v1841, 8.507059e+37
        %v1843 = vand.u32 %v1831, 2147483648
        %v1844 = vor.u32 1.1754944e-38, %v1843
        %v1845 = vsel %vm1842, %v1844, %v1840
        %v1846 = vmul.f32 %v1821, %v1845
        %v1847 = vmin.f32 %v1846, 1.0
        %v1848 = vmax.f32 %v1847, -1.0
        %v1849 = vmul.f32 %v1177, %v1177
        %v1850 = vmin.f32 16.0, %v1849
        %v1851 = vmul.f32 %v1850, 2.1237322e-06
        %v1852 = vadd.f32 %v1851, 0.00028619796
        %v1853 = vmul.f32 %v1850, %v1852
        %v1854 = vadd.f32 %v1853, 0.0036580483
        %v1855 = vmul.f32 %v1850, %v1854
        %v1856 = vadd.f32 %v1855, 0.05243302
        %v1857 = vmul.f32 %v1850, %v1856
        %v1858 = vadd.f32 %v1857, 0.18741608
        %v1859 = vmul.f32 %v1850, %v1858
        %v1860 = vadd.f32 %v1859, 1.1283791
        %v1861 = vmul.f32 %v1177, %v1860
        %v1862 = vmul.f32 %v1850, 3.8918573e-05
        %v1863 = vadd.f32 %v1862, 0.001143296
        %v1864 = vmul.f32 %v1850, %v1863
        %v1865 = vadd.f32 %v1864, 0.014752088
        %v1866 = vmul.f32 %v1850, %v1865
        %v1867 = vadd.f32 %v1866, 0.112945676
        %v1868 = vmul.f32 %v1850, %v1867
        %v1869 = vadd.f32 %v1868, 0.4994258
        %v1870 = vmul.f32 %v1850, %v1869
        %v1871 = vadd.f32 %v1870, 1.0
        %v1872 = vrcp.pop %v1871
        %v1873 = vmul.f32 %v1871, %v1872
        %v1874 = vsub.f32 1.0, %v1873
        %v1875 = vmul.f32 %v1872, %v1874
        %v1876 = vadd.f32 %v1872, %v1875
        %vm1877 = vweird.f32 %v1871
        %vm1878 = vweird.f32 %v1872
        %vm1879 = vmor %vm1877, %vm1878
        %v1880 = vsel %vm1879, %v1872, %v1876
        %v1881 = vand.u32 2147483647, %v1871
        %vm1882 = vcmp.eq.f32.partialorder %v1881, 8.507059e+37
        %v1883 = vand.u32 %v1871, 2147483648
        %v1884 = vor.u32 1.1754944e-38, %v1883
        %v1885 = vsel %vm1882, %v1884, %v1880
        %v1886 = vmul.f32 %v1861, %v1885
        %v1887 = vmin.f32 %v1886, 1.0
        %v1888 = vmax.f32 %v1887, -1.0
        %v1889 = vmul.f32 %v1178, %v1178
        %v1890 = vmin.f32 16.0, %v1889
        %v1891 = vmul.f32 %v1890, 2.1237322e-06
        %v1892 = vadd.f32 %v1891, 0.00028619796
        %v1893 = vmul.f32 %v1890, %v1892
        %v1894 = vadd.f32 %v1893, 0.0036580483
        %v1895 = vmul.f32 %v1890, %v1894
        %v1896 = vadd.f32 %v1895, 0.05243302
        %v1897 = vmul.f32 %v1890, %v1896
        %v1898 = vadd.f32 %v1897, 0.18741608
        %v1899 = vmul.f32 %v1890, %v1898
        %v1900 = vadd.f32 %v1899, 1.1283791
        %v1901 = vmul.f32 %v1178, %v1900
        %v1902 = vmul.f32 %v1890, 3.8918573e-05
        %v1903 = vadd.f32 %v1902, 0.001143296
        %v1904 = vmul.f32 %v1890, %v1903
        %v1905 = vadd.f32 %v1904, 0.014752088
        %v1906 = vmul.f32 %v1890, %v1905
        %v1907 = vadd.f32 %v1906, 0.112945676
        %v1908 = vmul.f32 %v1890, %v1907
        %v1909 = vadd.f32 %v1908, 0.4994258
        %v1910 = vmul.f32 %v1890, %v1909
        %v1911 = vadd.f32 %v1910, 1.0
        %v1912 = vrcp.pop %v1911
        %v1913 = vmul.f32 %v1911, %v1912
        %v1914 = vsub.f32 1.0, %v1913
        %v1915 = vmul.f32 %v1912, %v1914
        %v1916 = vadd.f32 %v1912, %v1915
        %vm1917 = vweird.f32 %v1911
        %vm1918 = vweird.f32 %v1912
        %vm1919 = vmor %vm1917, %vm1918
        %v1920 = vsel %vm1919, %v1912, %v1916
        %v1921 = vand.u32 2147483647, %v1911
        %vm1922 = vcmp.eq.f32.partialorder %v1921, 8.507059e+37
        %v1923 = vand.u32 %v1911, 2147483648
        %v1924 = vor.u32 1.1754944e-38, %v1923
        %v1925 = vsel %vm1922, %v1924, %v1920
        %v1926 = vmul.f32 %v1901, %v1925
        %v1927 = vmin.f32 %v1926, 1.0
        %v1928 = vmax.f32 %v1927, -1.0
        %v1929 = vmul.f32 %v1179, %v1179
        %v1930 = vmin.f32 16.0, %v1929
        %v1931 = vmul.f32 %v1930, 2.1237322e-06
        %v1932 = vadd.f32 %v1931, 0.00028619796
        %v1933 = vmul.f32 %v1930, %v1932
        %v1934 = vadd.f32 %v1933, 0.0036580483
        %v1935 = vmul.f32 %v1930, %v1934
        %v1936 = vadd.f32 %v1935, 0.05243302
        %v1937 = vmul.f32 %v1930, %v1936
        %v1938 = vadd.f32 %v1937, 0.18741608
        %v1939 = vmul.f32 %v1930, %v1938
        %v1940 = vadd.f32 %v1939, 1.1283791
        %v1941 = vmul.f32 %v1179, %v1940
        %v1942 = vmul.f32 %v1930, 3.8918573e-05
        %v1943 = vadd.f32 %v1942, 0.001143296
        %v1944 = vmul.f32 %v1930, %v1943
        %v1945 = vadd.f32 %v1944, 0.014752088
        %v1946 = vmul.f32 %v1930, %v1945
        %v1947 = vadd.f32 %v1946, 0.112945676
        %v1948 = vmul.f32 %v1930, %v1947
        %v1949 = vadd.f32 %v1948, 0.4994258
        %v1950 = vmul.f32 %v1930, %v1949
        %v1951 = vadd.f32 %v1950, 1.0
        %v1952 = vrcp.pop %v1951
        %v1953 = vmul.f32 %v1951, %v1952
        %v1954 = vsub.f32 1.0, %v1953
        %v1955 = vmul.f32 %v1952, %v1954
        %v1956 = vadd.f32 %v1952, %v1955
        %vm1957 = vweird.f32 %v1951
        %vm1958 = vweird.f32 %v1952
        %vm1959 = vmor %vm1957, %vm1958
        %v1960 = vsel %vm1959, %v1952, %v1956
        %v1961 = vand.u32 2147483647, %v1951
        %vm1962 = vcmp.eq.f32.partialorder %v1961, 8.507059e+37
        %v1963 = vand.u32 %v1951, 2147483648
        %v1964 = vor.u32 1.1754944e-38, %v1963
        %v1965 = vsel %vm1962, %v1964, %v1960
        %v1966 = vmul.f32 %v1941, %v1965
        %v1967 = vmin.f32 %v1966, 1.0
        %v1968 = vmax.f32 %v1967, -1.0
        %v1969 = vmul.f32 %v1180, %v1180
        %v1970 = vmin.f32 16.0, %v1969
        %v1971 = vmul.f32 %v1970, 2.1237322e-06
        %v1972 = vadd.f32 %v1971, 0.00028619796
        %v1973 = vmul.f32 %v1970, %v1972
        %v1974 = vadd.f32 %v1973, 0.0036580483
        %v1975 = vmul.f32 %v1970, %v1974
        %v1976 = vadd.f32 %v1975, 0.05243302
        %v1977 = vmul.f32 %v1970, %v1976
        %v1978 = vadd.f32 %v1977, 0.18741608
        %v1979 = vmul.f32 %v1970, %v1978
        %v1980 = vadd.f32 %v1979, 1.1283791
        %v1981 = vmul.f32 %v1180, %v1980
        %v1982 = vmul.f32 %v1970, 3.8918573e-05
        %v1983 = vadd.f32 %v1982, 0.001143296
        %v1984 = vmul.f32 %v1970, %v1983
        %v1985 = vadd.f32 %v1984, 0.014752088
        %v1986 = vmul.f32 %v1970, %v1985
        %v1987 = vadd.f32 %v1986, 0.112945676
        %v1988 = vmul.f32 %v1970, %v1987
        %v1989 = vadd.f32 %v1988, 0.4994258
        %v1990 = vmul.f32 %v1970, %v1989
        %v1991 = vadd.f32 %v1990, 1.0
        %v1992 = vrcp.pop %v1991
        %v1993 = vmul.f32 %v1991, %v1992
        %v1994 = vsub.f32 1.0, %v1993
        %v1995 = vmul.f32 %v1992, %v1994
        %v1996 = vadd.f32 %v1992, %v1995
        %vm1997 = vweird.f32 %v1991
        %vm1998 = vweird.f32 %v1992
        %vm1999 = vmor %vm1997, %vm1998
        %v2000 = vsel %vm1999, %v1992, %v1996
        %v2001 = vand.u32 2147483647, %v1991
        %vm2002 = vcmp.eq.f32.partialorder %v2001, 8.507059e+37
        %v2003 = vand.u32 %v1991, 2147483648
        %v2004 = vor.u32 1.1754944e-38, %v2003
        %v2005 = vsel %vm2002, %v2004, %v2000
        %v2006 = vmul.f32 %v1981, %v2005
        %v2007 = vmin.f32 %v2006, 1.0
        %v2008 = vmax.f32 %v2007, -1.0
        %v2009 = vmul.f32 %v1181, %v1181
        %v2010 = vmin.f32 16.0, %v2009
        %v2011 = vmul.f32 %v2010, 2.1237322e-06
        %v2012 = vadd.f32 %v2011, 0.00028619796
        %v2013 = vmul.f32 %v2010, %v2012
        %v2014 = vadd.f32 %v2013, 0.0036580483
        %v2015 = vmul.f32 %v2010, %v2014
        %v2016 = vadd.f32 %v2015, 0.05243302
        %v2017 = vmul.f32 %v2010, %v2016
        %v2018 = vadd.f32 %v2017, 0.18741608
        %v2019 = vmul.f32 %v2010, %v2018
        %v2020 = vadd.f32 %v2019, 1.1283791
        %v2021 = vmul.f32 %v1181, %v2020
        %v2022 = vmul.f32 %v2010, 3.8918573e-05
        %v2023 = vadd.f32 %v2022, 0.001143296
        %v2024 = vmul.f32 %v2010, %v2023
        %v2025 = vadd.f32 %v2024, 0.014752088
        %v2026 = vmul.f32 %v2010, %v2025
        %v2027 = vadd.f32 %v2026, 0.112945676
        %v2028 = vmul.f32 %v2010, %v2027
        %v2029 = vadd.f32 %v2028, 0.4994258
        %v2030 = vmul.f32 %v2010, %v2029
        %v2031 = vadd.f32 %v2030, 1.0
        %v2032 = vrcp.pop %v2031
        %v2033 = vmul.f32 %v2031, %v2032
        %v2034 = vsub.f32 1.0, %v2033
        %v2035 = vmul.f32 %v2032, %v2034
        %v2036 = vadd.f32 %v2032, %v2035
        %vm2037 = vweird.f32 %v2031
        %vm2038 = vweird.f32 %v2032
        %vm2039 = vmor %vm2037, %vm2038
        %v2040 = vsel %vm2039, %v2032, %v2036
        %v2041 = vand.u32 2147483647, %v2031
        %vm2042 = vcmp.eq.f32.partialorder %v2041, 8.507059e+37
        %v2043 = vand.u32 %v2031, 2147483648
        %v2044 = vor.u32 1.1754944e-38, %v2043
        %v2045 = vsel %vm2042, %v2044, %v2040
        %v2046 = vmul.f32 %v2021, %v2045
        %v2047 = vmin.f32 %v2046, 1.0
        %v2048 = vmax.f32 %v2047, -1.0
        %v2049 = vmul.f32 %v1182, %v1182
        %v2050 = vmin.f32 16.0, %v2049
        %v2051 = vmul.f32 %v2050, 2.1237322e-06
        %v2052 = vadd.f32 %v2051, 0.00028619796
        %v2053 = vmul.f32 %v2050, %v2052
        %v2054 = vadd.f32 %v2053, 0.0036580483
        %v2055 = vmul.f32 %v2050, %v2054
        %v2056 = vadd.f32 %v2055, 0.05243302
        %v2057 = vmul.f32 %v2050, %v2056
        %v2058 = vadd.f32 %v2057, 0.18741608
        %v2059 = vmul.f32 %v2050, %v2058
        %v2060 = vadd.f32 %v2059, 1.1283791
        %v2061 = vmul.f32 %v1182, %v2060
        %v2062 = vmul.f32 %v2050, 3.8918573e-05
        %v2063 = vadd.f32 %v2062, 0.001143296
        %v2064 = vmul.f32 %v2050, %v2063
        %v2065 = vadd.f32 %v2064, 0.014752088
        %v2066 = vmul.f32 %v2050, %v2065
        %v2067 = vadd.f32 %v2066, 0.112945676
        %v2068 = vmul.f32 %v2050, %v2067
        %v2069 = vadd.f32 %v2068, 0.4994258
        %v2070 = vmul.f32 %v2050, %v2069
        %v2071 = vadd.f32 %v2070, 1.0
        %v2072 = vrcp.pop %v2071
        %v2073 = vmul.f32 %v2071, %v2072
        %v2074 = vsub.f32 1.0, %v2073
        %v2075 = vmul.f32 %v2072, %v2074
        %v2076 = vadd.f32 %v2072, %v2075
        %vm2077 = vweird.f32 %v2071
        %vm2078 = vweird.f32 %v2072
        %vm2079 = vmor %vm2077, %vm2078
        %v2080 = vsel %vm2079, %v2072, %v2076
        %v2081 = vand.u32 2147483647, %v2071
        %vm2082 = vcmp.eq.f32.partialorder %v2081, 8.507059e+37
        %v2083 = vand.u32 %v2071, 2147483648
        %v2084 = vor.u32 1.1754944e-38, %v2083
        %v2085 = vsel %vm2082, %v2084, %v2080
        %v2086 = vmul.f32 %v2061, %v2085
        %v2087 = vmin.f32 %v2086, 1.0
        %v2088 = vmax.f32 %v2087, -1.0
        %v2089 = vmul.f32 %v1183, %v1183
        %v2090 = vmin.f32 16.0, %v2089
        %v2091 = vmul.f32 %v2090, 2.1237322e-06
        %v2092 = vadd.f32 %v2091, 0.00028619796
        %v2093 = vmul.f32 %v2090, %v2092
        %v2094 = vadd.f32 %v2093, 0.0036580483
        %v2095 = vmul.f32 %v2090, %v2094
        %v2096 = vadd.f32 %v2095, 0.05243302
        %v2097 = vmul.f32 %v2090, %v2096
        %v2098 = vadd.f32 %v2097, 0.18741608
        %v2099 = vmul.f32 %v2090, %v2098
        %v2100 = vadd.f32 %v2099, 1.1283791
        %v2101 = vmul.f32 %v1183, %v2100
        %v2102 = vmul.f32 %v2090, 3.8918573e-05
        %v2103 = vadd.f32 %v2102, 0.001143296
        %v2104 = vmul.f32 %v2090, %v2103
        %v2105 = vadd.f32 %v2104, 0.014752088
        %v2106 = vmul.f32 %v2090, %v2105
        %v2107 = vadd.f32 %v2106, 0.112945676
        %v2108 = vmul.f32 %v2090, %v2107
        %v2109 = vadd.f32 %v2108, 0.4994258
        %v2110 = vmul.f32 %v2090, %v2109
        %v2111 = vadd.f32 %v2110, 1.0
        %v2112 = vrcp.pop %v2111
        %v2113 = vmul.f32 %v2111, %v2112
        %v2114 = vsub.f32 1.0, %v2113
        %v2115 = vmul.f32 %v2112, %v2114
        %v2116 = vadd.f32 %v2112, %v2115
        %vm2117 = vweird.f32 %v2111
        %vm2118 = vweird.f32 %v2112
        %vm2119 = vmor %vm2117, %vm2118
        %v2120 = vsel %vm2119, %v2112, %v2116
        %v2121 = vand.u32 2147483647, %v2111
        %vm2122 = vcmp.eq.f32.partialorder %v2121, 8.507059e+37
        %v2123 = vand.u32 %v2111, 2147483648
        %v2124 = vor.u32 1.1754944e-38, %v2123
        %v2125 = vsel %vm2122, %v2124, %v2120
        %v2126 = vmul.f32 %v2101, %v2125
        %v2127 = vmin.f32 %v2126, 1.0
        %v2128 = vmax.f32 %v2127, -1.0
        %v2129 = vmul.f32 %v1184, %v1184
        %v2130 = vmin.f32 16.0, %v2129
        %v2131 = vmul.f32 %v2130, 2.1237322e-06
        %v2132 = vadd.f32 %v2131, 0.00028619796
        %v2133 = vmul.f32 %v2130, %v2132
        %v2134 = vadd.f32 %v2133, 0.0036580483
        %v2135 = vmul.f32 %v2130, %v2134
        %v2136 = vadd.f32 %v2135, 0.05243302
        %v2137 = vmul.f32 %v2130, %v2136
        %v2138 = vadd.f32 %v2137, 0.18741608
        %v2139 = vmul.f32 %v2130, %v2138
        %v2140 = vadd.f32 %v2139, 1.1283791
        %v2141 = vmul.f32 %v1184, %v2140
        %v2142 = vmul.f32 %v2130, 3.8918573e-05
        %v2143 = vadd.f32 %v2142, 0.001143296
        %v2144 = vmul.f32 %v2130, %v2143
        %v2145 = vadd.f32 %v2144, 0.014752088
        %v2146 = vmul.f32 %v2130, %v2145
        %v2147 = vadd.f32 %v2146, 0.112945676
        %v2148 = vmul.f32 %v2130, %v2147
        %v2149 = vadd.f32 %v2148, 0.4994258
        %v2150 = vmul.f32 %v2130, %v2149
        %v2151 = vadd.f32 %v2150, 1.0
        %v2152 = vrcp.pop %v2151
        %v2153 = vmul.f32 %v2151, %v2152
        %v2154 = vsub.f32 1.0, %v2153
        %v2155 = vmul.f32 %v2152, %v2154
        %v2156 = vadd.f32 %v2152, %v2155
        %vm2157 = vweird.f32 %v2151
        %vm2158 = vweird.f32 %v2152
        %vm2159 = vmor %vm2157, %vm2158
        %v2160 = vsel %vm2159, %v2152, %v2156
        %v2161 = vand.u32 2147483647, %v2151
        %vm2162 = vcmp.eq.f32.partialorder %v2161, 8.507059e+37
        %v2163 = vand.u32 %v2151, 2147483648
        %v2164 = vor.u32 1.1754944e-38, %v2163
        %v2165 = vsel %vm2162, %v2164, %v2160
        %v2166 = vmul.f32 %v2141, %v2165
        %v2167 = vmin.f32 %v2166, 1.0
        %v2168 = vmax.f32 %v2167, -1.0
        %v2169 = vmul.f32 %v1185, %v1185
        %v2170 = vmin.f32 16.0, %v2169
        %v2171 = vmul.f32 %v2170, 2.1237322e-06
        %v2172 = vadd.f32 %v2171, 0.00028619796
        %v2173 = vmul.f32 %v2170, %v2172
        %v2174 = vadd.f32 %v2173, 0.0036580483
        %v2175 = vmul.f32 %v2170, %v2174
        %v2176 = vadd.f32 %v2175, 0.05243302
        %v2177 = vmul.f32 %v2170, %v2176
        %v2178 = vadd.f32 %v2177, 0.18741608
        %v2179 = vmul.f32 %v2170, %v2178
        %v2180 = vadd.f32 %v2179, 1.1283791
        %v2181 = vmul.f32 %v1185, %v2180
        %v2182 = vmul.f32 %v2170, 3.8918573e-05
        %v2183 = vadd.f32 %v2182, 0.001143296
        %v2184 = vmul.f32 %v2170, %v2183
        %v2185 = vadd.f32 %v2184, 0.014752088
        %v2186 = vmul.f32 %v2170, %v2185
        %v2187 = vadd.f32 %v2186, 0.112945676
        %v2188 = vmul.f32 %v2170, %v2187
        %v2189 = vadd.f32 %v2188, 0.4994258
        %v2190 = vmul.f32 %v2170, %v2189
        %v2191 = vadd.f32 %v2190, 1.0
        %v2192 = vrcp.pop %v2191
        %v2193 = vmul.f32 %v2191, %v2192
        %v2194 = vsub.f32 1.0, %v2193
        %v2195 = vmul.f32 %v2192, %v2194
        %v2196 = vadd.f32 %v2192, %v2195
        %vm2197 = vweird.f32 %v2191
        %vm2198 = vweird.f32 %v2192
        %vm2199 = vmor %vm2197, %vm2198
        %v2200 = vsel %vm2199, %v2192, %v2196
        %v2201 = vand.u32 2147483647, %v2191
        %vm2202 = vcmp.eq.f32.partialorder %v2201, 8.507059e+37
        %v2203 = vand.u32 %v2191, 2147483648
        %v2204 = vor.u32 1.1754944e-38, %v2203
        %v2205 = vsel %vm2202, %v2204, %v2200
        %v2206 = vmul.f32 %v2181, %v2205
        %v2207 = vmin.f32 %v2206, 1.0
        %v2208 = vmax.f32 %v2207, -1.0
        %v2209 = vmul.f32 %v1186, %v1186
        %v2210 = vmin.f32 16.0, %v2209
        %v2211 = vmul.f32 %v2210, 2.1237322e-06
        %v2212 = vadd.f32 %v2211, 0.00028619796
        %v2213 = vmul.f32 %v2210, %v2212
        %v2214 = vadd.f32 %v2213, 0.0036580483
        %v2215 = vmul.f32 %v2210, %v2214
        %v2216 = vadd.f32 %v2215, 0.05243302
        %v2217 = vmul.f32 %v2210, %v2216
        %v2218 = vadd.f32 %v2217, 0.18741608
        %v2219 = vmul.f32 %v2210, %v2218
        %v2220 = vadd.f32 %v2219, 1.1283791
        %v2221 = vmul.f32 %v1186, %v2220
        %v2222 = vmul.f32 %v2210, 3.8918573e-05
        %v2223 = vadd.f32 %v2222, 0.001143296
        %v2224 = vmul.f32 %v2210, %v2223
        %v2225 = vadd.f32 %v2224, 0.014752088
        %v2226 = vmul.f32 %v2210, %v2225
        %v2227 = vadd.f32 %v2226, 0.112945676
        %v2228 = vmul.f32 %v2210, %v2227
        %v2229 = vadd.f32 %v2228, 0.4994258
        %v2230 = vmul.f32 %v2210, %v2229
        %v2231 = vadd.f32 %v2230, 1.0
        %v2232 = vrcp.pop %v2231
        %v2233 = vmul.f32 %v2231, %v2232
        %v2234 = vsub.f32 1.0, %v2233
        %v2235 = vmul.f32 %v2232, %v2234
        %v2236 = vadd.f32 %v2232, %v2235
        %vm2237 = vweird.f32 %v2231
        %vm2238 = vweird.f32 %v2232
        %vm2239 = vmor %vm2237, %vm2238
        %v2240 = vsel %vm2239, %v2232, %v2236
        %v2241 = vand.u32 2147483647, %v2231
        %vm2242 = vcmp.eq.f32.partialorder %v2241, 8.507059e+37
        %v2243 = vand.u32 %v2231, 2147483648
        %v2244 = vor.u32 1.1754944e-38, %v2243
        %v2245 = vsel %vm2242, %v2244, %v2240
        %v2246 = vmul.f32 %v2221, %v2245
        %v2247 = vmin.f32 %v2246, 1.0
        %v2248 = vmax.f32 %v2247, -1.0
        %v2249 = vmul.f32 %v1187, %v1187
        %v2250 = vmin.f32 16.0, %v2249
        %v2251 = vmul.f32 %v2250, 2.1237322e-06
        %v2252 = vadd.f32 %v2251, 0.00028619796
        %v2253 = vmul.f32 %v2250, %v2252
        %v2254 = vadd.f32 %v2253, 0.0036580483
        %v2255 = vmul.f32 %v2250, %v2254
        %v2256 = vadd.f32 %v2255, 0.05243302
        %v2257 = vmul.f32 %v2250, %v2256
        %v2258 = vadd.f32 %v2257, 0.18741608
        %v2259 = vmul.f32 %v2250, %v2258
        %v2260 = vadd.f32 %v2259, 1.1283791
        %v2261 = vmul.f32 %v1187, %v2260
        %v2262 = vmul.f32 %v2250, 3.8918573e-05
        %v2263 = vadd.f32 %v2262, 0.001143296
        %v2264 = vmul.f32 %v2250, %v2263
        %v2265 = vadd.f32 %v2264, 0.014752088
        %v2266 = vmul.f32 %v2250, %v2265
        %v2267 = vadd.f32 %v2266, 0.112945676
        %v2268 = vmul.f32 %v2250, %v2267
        %v2269 = vadd.f32 %v2268, 0.4994258
        %v2270 = vmul.f32 %v2250, %v2269
        %v2271 = vadd.f32 %v2270, 1.0
        %v2272 = vrcp.pop %v2271
        %v2273 = vmul.f32 %v2271, %v2272
        %v2274 = vsub.f32 1.0, %v2273
        %v2275 = vmul.f32 %v2272, %v2274
        %v2276 = vadd.f32 %v2272, %v2275
        %vm2277 = vweird.f32 %v2271
        %vm2278 = vweird.f32 %v2272
        %vm2279 = vmor %vm2277, %vm2278
        %v2280 = vsel %vm2279, %v2272, %v2276
        %v2281 = vand.u32 2147483647, %v2271
        %vm2282 = vcmp.eq.f32.partialorder %v2281, 8.507059e+37
        %v2283 = vand.u32 %v2271, 2147483648
        %v2284 = vor.u32 1.1754944e-38, %v2283
        %v2285 = vsel %vm2282, %v2284, %v2280
        %v2286 = vmul.f32 %v2261, %v2285
        %v2287 = vmin.f32 %v2286, 1.0
        %v2288 = vmax.f32 %v2287, -1.0
        %v2289 = vmul.f32 %v1188, %v1188
        %v2290 = vmin.f32 16.0, %v2289
        %v2291 = vmul.f32 %v2290, 2.1237322e-06
        %v2292 = vadd.f32 %v2291, 0.00028619796
        %v2293 = vmul.f32 %v2290, %v2292
        %v2294 = vadd.f32 %v2293, 0.0036580483
        %v2295 = vmul.f32 %v2290, %v2294
        %v2296 = vadd.f32 %v2295, 0.05243302
        %v2297 = vmul.f32 %v2290, %v2296
        %v2298 = vadd.f32 %v2297, 0.18741608
        %v2299 = vmul.f32 %v2290, %v2298
        %v2300 = vadd.f32 %v2299, 1.1283791
        %v2301 = vmul.f32 %v1188, %v2300
        %v2302 = vmul.f32 %v2290, 3.8918573e-05
        %v2303 = vadd.f32 %v2302, 0.001143296
        %v2304 = vmul.f32 %v2290, %v2303
        %v2305 = vadd.f32 %v2304, 0.014752088
        %v2306 = vmul.f32 %v2290, %v2305
        %v2307 = vadd.f32 %v2306, 0.112945676
        %v2308 = vmul.f32 %v2290, %v2307
        %v2309 = vadd.f32 %v2308, 0.4994258
        %v2310 = vmul.f32 %v2290, %v2309
        %v2311 = vadd.f32 %v2310, 1.0
        %v2312 = vrcp.pop %v2311
        %v2313 = vmul.f32 %v2311, %v2312
        %v2314 = vsub.f32 1.0, %v2313
        %v2315 = vmul.f32 %v2312, %v2314
        %v2316 = vadd.f32 %v2312, %v2315
        %vm2317 = vweird.f32 %v2311
        %vm2318 = vweird.f32 %v2312
        %vm2319 = vmor %vm2317, %vm2318
        %v2320 = vsel %vm2319, %v2312, %v2316
        %v2321 = vand.u32 2147483647, %v2311
        %vm2322 = vcmp.eq.f32.partialorder %v2321, 8.507059e+37
        %v2323 = vand.u32 %v2311, 2147483648
        %v2324 = vor.u32 1.1754944e-38, %v2323
        %v2325 = vsel %vm2322, %v2324, %v2320
        %v2326 = vmul.f32 %v2301, %v2325
        %v2327 = vmin.f32 %v2326, 1.0
        %v2328 = vmax.f32 %v2327, -1.0
        %v2329 = vmul.f32 %v1189, %v1189
        %v2330 = vmin.f32 16.0, %v2329
        %v2331 = vmul.f32 %v2330, 2.1237322e-06
        %v2332 = vadd.f32 %v2331, 0.00028619796
        %v2333 = vmul.f32 %v2330, %v2332
        %v2334 = vadd.f32 %v2333, 0.0036580483
        %v2335 = vmul.f32 %v2330, %v2334
        %v2336 = vadd.f32 %v2335, 0.05243302
        %v2337 = vmul.f32 %v2330, %v2336
        %v2338 = vadd.f32 %v2337, 0.18741608
        %v2339 = vmul.f32 %v2330, %v2338
        %v2340 = vadd.f32 %v2339, 1.1283791
        %v2341 = vmul.f32 %v1189, %v2340
        %v2342 = vmul.f32 %v2330, 3.8918573e-05
        %v2343 = vadd.f32 %v2342, 0.001143296
        %v2344 = vmul.f32 %v2330, %v2343
        %v2345 = vadd.f32 %v2344, 0.014752088
        %v2346 = vmul.f32 %v2330, %v2345
        %v2347 = vadd.f32 %v2346, 0.112945676
        %v2348 = vmul.f32 %v2330, %v2347
        %v2349 = vadd.f32 %v2348, 0.4994258
        %v2350 = vmul.f32 %v2330, %v2349
        %v2351 = vadd.f32 %v2350, 1.0
        %v2352 = vrcp.pop %v2351
        %v2353 = vmul.f32 %v2351, %v2352
        %v2354 = vsub.f32 1.0, %v2353
        %v2355 = vmul.f32 %v2352, %v2354
        %v2356 = vadd.f32 %v2352, %v2355
        %vm2357 = vweird.f32 %v2351
        %vm2358 = vweird.f32 %v2352
        %vm2359 = vmor %vm2357, %vm2358
        %v2360 = vsel %vm2359, %v2352, %v2356
        %v2361 = vand.u32 2147483647, %v2351
        %vm2362 = vcmp.eq.f32.partialorder %v2361, 8.507059e+37
        %v2363 = vand.u32 %v2351, 2147483648
        %v2364 = vor.u32 1.1754944e-38, %v2363
        %v2365 = vsel %vm2362, %v2364, %v2360
        %v2366 = vmul.f32 %v2341, %v2365
        %v2367 = vmin.f32 %v2366, 1.0
        %v2368 = vmax.f32 %v2367, -1.0
        %v2369 = vmul.f32 %v1190, %v1190
        %v2370 = vmin.f32 16.0, %v2369
        %v2371 = vmul.f32 %v2370, 2.1237322e-06
        %v2372 = vadd.f32 %v2371, 0.00028619796
        %v2373 = vmul.f32 %v2370, %v2372
        %v2374 = vadd.f32 %v2373, 0.0036580483
        %v2375 = vmul.f32 %v2370, %v2374
        %v2376 = vadd.f32 %v2375, 0.05243302
        %v2377 = vmul.f32 %v2370, %v2376
        %v2378 = vadd.f32 %v2377, 0.18741608
        %v2379 = vmul.f32 %v2370, %v2378
        %v2380 = vadd.f32 %v2379, 1.1283791
        %v2381 = vmul.f32 %v1190, %v2380
        %v2382 = vmul.f32 %v2370, 3.8918573e-05
        %v2383 = vadd.f32 %v2382, 0.001143296
        %v2384 = vmul.f32 %v2370, %v2383
        %v2385 = vadd.f32 %v2384, 0.014752088
        %v2386 = vmul.f32 %v2370, %v2385
        %v2387 = vadd.f32 %v2386, 0.112945676
        %v2388 = vmul.f32 %v2370, %v2387
        %v2389 = vadd.f32 %v2388, 0.4994258
        %v2390 = vmul.f32 %v2370, %v2389
        %v2391 = vadd.f32 %v2390, 1.0
        %v2392 = vrcp.pop %v2391
        %v2393 = vmul.f32 %v2391, %v2392
        %v2394 = vsub.f32 1.0, %v2393
        %v2395 = vmul.f32 %v2392, %v2394
        %v2396 = vadd.f32 %v2392, %v2395
        %vm2397 = vweird.f32 %v2391
        %vm2398 = vweird.f32 %v2392
        %vm2399 = vmor %vm2397, %vm2398
        %v2400 = vsel %vm2399, %v2392, %v2396
        %v2401 = vand.u32 2147483647, %v2391
        %vm2402 = vcmp.eq.f32.partialorder %v2401, 8.507059e+37
        %v2403 = vand.u32 %v2391, 2147483648
        %v2404 = vor.u32 1.1754944e-38, %v2403
        %v2405 = vsel %vm2402, %v2404, %v2400
        %v2406 = vmul.f32 %v2381, %v2405
        %v2407 = vmin.f32 %v2406, 1.0
        %v2408 = vmax.f32 %v2407, -1.0
        %v2409 = vmul.f32 %v1191, %v1191
        %v2410 = vmin.f32 16.0, %v2409
        %v2411 = vmul.f32 %v2410, 2.1237322e-06
        %v2412 = vadd.f32 %v2411, 0.00028619796
        %v2413 = vmul.f32 %v2410, %v2412
        %v2414 = vadd.f32 %v2413, 0.0036580483
        %v2415 = vmul.f32 %v2410, %v2414
        %v2416 = vadd.f32 %v2415, 0.05243302
        %v2417 = vmul.f32 %v2410, %v2416
        %v2418 = vadd.f32 %v2417, 0.18741608
        %v2419 = vmul.f32 %v2410, %v2418
        %v2420 = vadd.f32 %v2419, 1.1283791
        %v2421 = vmul.f32 %v1191, %v2420
        %v2422 = vmul.f32 %v2410, 3.8918573e-05
        %v2423 = vadd.f32 %v2422, 0.001143296
        %v2424 = vmul.f32 %v2410, %v2423
        %v2425 = vadd.f32 %v2424, 0.014752088
        %v2426 = vmul.f32 %v2410, %v2425
        %v2427 = vadd.f32 %v2426, 0.112945676
        %v2428 = vmul.f32 %v2410, %v2427
        %v2429 = vadd.f32 %v2428, 0.4994258
        %v2430 = vmul.f32 %v2410, %v2429
        %v2431 = vadd.f32 %v2430, 1.0
        %v2432 = vrcp.pop %v2431
        %v2433 = vmul.f32 %v2431, %v2432
        %v2434 = vsub.f32 1.0, %v2433
        %v2435 = vmul.f32 %v2432, %v2434
        %v2436 = vadd.f32 %v2432, %v2435
        %vm2437 = vweird.f32 %v2431
        %vm2438 = vweird.f32 %v2432
        %vm2439 = vmor %vm2437, %vm2438
        %v2440 = vsel %vm2439, %v2432, %v2436
        %v2441 = vand.u32 2147483647, %v2431
        %vm2442 = vcmp.eq.f32.partialorder %v2441, 8.507059e+37
        %v2443 = vand.u32 %v2431, 2147483648
        %v2444 = vor.u32 1.1754944e-38, %v2443
        %v2445 = vsel %vm2442, %v2444, %v2440
        %v2446 = vmul.f32 %v2421, %v2445
        %v2447 = vmin.f32 %v2446, 1.0
        %v2448 = vmax.f32 %v2447, -1.0
        %v2449 = vmul.f32 %v1192, %v1192
        %v2450 = vmin.f32 16.0, %v2449
        %v2451 = vmul.f32 %v2450, 2.1237322e-06
        %v2452 = vadd.f32 %v2451, 0.00028619796
        %v2453 = vmul.f32 %v2450, %v2452
        %v2454 = vadd.f32 %v2453, 0.0036580483
        %v2455 = vmul.f32 %v2450, %v2454
        %v2456 = vadd.f32 %v2455, 0.05243302
        %v2457 = vmul.f32 %v2450, %v2456
        %v2458 = vadd.f32 %v2457, 0.18741608
        %v2459 = vmul.f32 %v2450, %v2458
        %v2460 = vadd.f32 %v2459, 1.1283791
        %v2461 = vmul.f32 %v1192, %v2460
        %v2462 = vmul.f32 %v2450, 3.8918573e-05
        %v2463 = vadd.f32 %v2462, 0.001143296
        %v2464 = vmul.f32 %v2450, %v2463
        %v2465 = vadd.f32 %v2464, 0.014752088
        %v2466 = vmul.f32 %v2450, %v2465
        %v2467 = vadd.f32 %v2466, 0.112945676
        %v2468 = vmul.f32 %v2450, %v2467
        %v2469 = vadd.f32 %v2468, 0.4994258
        %v2470 = vmul.f32 %v2450, %v2469
        %v2471 = vadd.f32 %v2470, 1.0
        %v2472 = vrcp.pop %v2471
        %v2473 = vmul.f32 %v2471, %v2472
        %v2474 = vsub.f32 1.0, %v2473
        %v2475 = vmul.f32 %v2472, %v2474
        %v2476 = vadd.f32 %v2472, %v2475
        %vm2477 = vweird.f32 %v2471
        %vm2478 = vweird.f32 %v2472
        %vm2479 = vmor %vm2477, %vm2478
        %v2480 = vsel %vm2479, %v2472, %v2476
        %v2481 = vand.u32 2147483647, %v2471
        %vm2482 = vcmp.eq.f32.partialorder %v2481, 8.507059e+37
        %v2483 = vand.u32 %v2471, 2147483648
        %v2484 = vor.u32 1.1754944e-38, %v2483
        %v2485 = vsel %vm2482, %v2484, %v2480
        %v2486 = vmul.f32 %v2461, %v2485
        %v2487 = vmin.f32 %v2486, 1.0
        %v2488 = vmax.f32 %v2487, -1.0
        %v2489 = vmul.f32 %v1193, %v1193
        %v2490 = vmin.f32 16.0, %v2489
        %v2491 = vmul.f32 %v2490, 2.1237322e-06
        %v2492 = vadd.f32 %v2491, 0.00028619796
        %v2493 = vmul.f32 %v2490, %v2492
        %v2494 = vadd.f32 %v2493, 0.0036580483
        %v2495 = vmul.f32 %v2490, %v2494
        %v2496 = vadd.f32 %v2495, 0.05243302
        %v2497 = vmul.f32 %v2490, %v2496
        %v2498 = vadd.f32 %v2497, 0.18741608
        %v2499 = vmul.f32 %v2490, %v2498
        %v2500 = vadd.f32 %v2499, 1.1283791
        %v2501 = vmul.f32 %v1193, %v2500
        %v2502 = vmul.f32 %v2490, 3.8918573e-05
        %v2503 = vadd.f32 %v2502, 0.001143296
        %v2504 = vmul.f32 %v2490, %v2503
        %v2505 = vadd.f32 %v2504, 0.014752088
        %v2506 = vmul.f32 %v2490, %v2505
        %v2507 = vadd.f32 %v2506, 0.112945676
        %v2508 = vmul.f32 %v2490, %v2507
        %v2509 = vadd.f32 %v2508, 0.4994258
        %v2510 = vmul.f32 %v2490, %v2509
        %v2511 = vadd.f32 %v2510, 1.0
        %v2512 = vrcp.pop %v2511
        %v2513 = vmul.f32 %v2511, %v2512
        %v2514 = vsub.f32 1.0, %v2513
        %v2515 = vmul.f32 %v2512, %v2514
        %v2516 = vadd.f32 %v2512, %v2515
        %vm2517 = vweird.f32 %v2511
        %vm2518 = vweird.f32 %v2512
        %vm2519 = vmor %vm2517, %vm2518
        %v2520 = vsel %vm2519, %v2512, %v2516
        %v2521 = vand.u32 2147483647, %v2511
        %vm2522 = vcmp.eq.f32.partialorder %v2521, 8.507059e+37
        %v2523 = vand.u32 %v2511, 2147483648
        %v2524 = vor.u32 1.1754944e-38, %v2523
        %v2525 = vsel %vm2522, %v2524, %v2520
        %v2526 = vmul.f32 %v2501, %v2525
        %v2527 = vmin.f32 %v2526, 1.0
        %v2528 = vmax.f32 %v2527, -1.0
        %v2529 = vmul.f32 %v1194, %v1194
        %v2530 = vmin.f32 16.0, %v2529
        %v2531 = vmul.f32 %v2530, 2.1237322e-06
        %v2532 = vadd.f32 %v2531, 0.00028619796
        %v2533 = vmul.f32 %v2530, %v2532
        %v2534 = vadd.f32 %v2533, 0.0036580483
        %v2535 = vmul.f32 %v2530, %v2534
        %v2536 = vadd.f32 %v2535, 0.05243302
        %v2537 = vmul.f32 %v2530, %v2536
        %v2538 = vadd.f32 %v2537, 0.18741608
        %v2539 = vmul.f32 %v2530, %v2538
        %v2540 = vadd.f32 %v2539, 1.1283791
        %v2541 = vmul.f32 %v1194, %v2540
        %v2542 = vmul.f32 %v2530, 3.8918573e-05
        %v2543 = vadd.f32 %v2542, 0.001143296
        %v2544 = vmul.f32 %v2530, %v2543
        %v2545 = vadd.f32 %v2544, 0.014752088
        %v2546 = vmul.f32 %v2530, %v2545
        %v2547 = vadd.f32 %v2546, 0.112945676
        %v2548 = vmul.f32 %v2530, %v2547
        %v2549 = vadd.f32 %v2548, 0.4994258
        %v2550 = vmul.f32 %v2530, %v2549
        %v2551 = vadd.f32 %v2550, 1.0
        %v2552 = vrcp.pop %v2551
        %v2553 = vmul.f32 %v2551, %v2552
        %v2554 = vsub.f32 1.0, %v2553
        %v2555 = vmul.f32 %v2552, %v2554
        %v2556 = vadd.f32 %v2552, %v2555
        %vm2557 = vweird.f32 %v2551
        %vm2558 = vweird.f32 %v2552
        %vm2559 = vmor %vm2557, %vm2558
        %v2560 = vsel %vm2559, %v2552, %v2556
        %v2561 = vand.u32 2147483647, %v2551
        %vm2562 = vcmp.eq.f32.partialorder %v2561, 8.507059e+37
        %v2563 = vand.u32 %v2551, 2147483648
        %v2564 = vor.u32 1.1754944e-38, %v2563
        %v2565 = vsel %vm2562, %v2564, %v2560
        %v2566 = vmul.f32 %v2541, %v2565
        %v2567 = vmin.f32 %v2566, 1.0
        %v2568 = vmax.f32 %v2567, -1.0
        %v2569 = vmul.f32 %v1195, %v1195
        %v2570 = vmin.f32 16.0, %v2569
        %v2571 = vmul.f32 %v2570, 2.1237322e-06
        %v2572 = vadd.f32 %v2571, 0.00028619796
        %v2573 = vmul.f32 %v2570, %v2572
        %v2574 = vadd.f32 %v2573, 0.0036580483
        %v2575 = vmul.f32 %v2570, %v2574
        %v2576 = vadd.f32 %v2575, 0.05243302
        %v2577 = vmul.f32 %v2570, %v2576
        %v2578 = vadd.f32 %v2577, 0.18741608
        %v2579 = vmul.f32 %v2570, %v2578
        %v2580 = vadd.f32 %v2579, 1.1283791
        %v2581 = vmul.f32 %v1195, %v2580
        %v2582 = vmul.f32 %v2570, 3.8918573e-05
        %v2583 = vadd.f32 %v2582, 0.001143296
        %v2584 = vmul.f32 %v2570, %v2583
        %v2585 = vadd.f32 %v2584, 0.014752088
        %v2586 = vmul.f32 %v2570, %v2585
        %v2587 = vadd.f32 %v2586, 0.112945676
        %v2588 = vmul.f32 %v2570, %v2587
        %v2589 = vadd.f32 %v2588, 0.4994258
        %v2590 = vmul.f32 %v2570, %v2589
        %v2591 = vadd.f32 %v2590, 1.0
        %v2592 = vrcp.pop %v2591
        %v2593 = vmul.f32 %v2591, %v2592
        %v2594 = vsub.f32 1.0, %v2593
        %v2595 = vmul.f32 %v2592, %v2594
        %v2596 = vadd.f32 %v2592, %v2595
        %vm2597 = vweird.f32 %v2591
        %vm2598 = vweird.f32 %v2592
        %vm2599 = vmor %vm2597, %vm2598
        %v2600 = vsel %vm2599, %v2592, %v2596
        %v2601 = vand.u32 2147483647, %v2591
        %vm2602 = vcmp.eq.f32.partialorder %v2601, 8.507059e+37
        %v2603 = vand.u32 %v2591, 2147483648
        %v2604 = vor.u32 1.1754944e-38, %v2603
        %v2605 = vsel %vm2602, %v2604, %v2600
        %v2606 = vmul.f32 %v2581, %v2605
        %v2607 = vmin.f32 %v2606, 1.0
        %v2608 = vmax.f32 %v2607, -1.0
        %v2609 = vmul.f32 %v1196, %v1196
        %v2610 = vmin.f32 16.0, %v2609
        %v2611 = vmul.f32 %v2610, 2.1237322e-06
        %v2612 = vadd.f32 %v2611, 0.00028619796
        %v2613 = vmul.f32 %v2610, %v2612
        %v2614 = vadd.f32 %v2613, 0.0036580483
        %v2615 = vmul.f32 %v2610, %v2614
        %v2616 = vadd.f32 %v2615, 0.05243302
        %v2617 = vmul.f32 %v2610, %v2616
        %v2618 = vadd.f32 %v2617, 0.18741608
        %v2619 = vmul.f32 %v2610, %v2618
        %v2620 = vadd.f32 %v2619, 1.1283791
        %v2621 = vmul.f32 %v1196, %v2620
        %v2622 = vmul.f32 %v2610, 3.8918573e-05
        %v2623 = vadd.f32 %v2622, 0.001143296
        %v2624 = vmul.f32 %v2610, %v2623
        %v2625 = vadd.f32 %v2624, 0.014752088
        %v2626 = vmul.f32 %v2610, %v2625
        %v2627 = vadd.f32 %v2626, 0.112945676
        %v2628 = vmul.f32 %v2610, %v2627
        %v2629 = vadd.f32 %v2628, 0.4994258
        %v2630 = vmul.f32 %v2610, %v2629
        %v2631 = vadd.f32 %v2630, 1.0
        %v2632 = vrcp.pop %v2631
        %v2633 = vmul.f32 %v2631, %v2632
        %v2634 = vsub.f32 1.0, %v2633
        %v2635 = vmul.f32 %v2632, %v2634
        %v2636 = vadd.f32 %v2632, %v2635
        %vm2637 = vweird.f32 %v2631
        %vm2638 = vweird.f32 %v2632
        %vm2639 = vmor %vm2637, %vm2638
        %v2640 = vsel %vm2639, %v2632, %v2636
        %v2641 = vand.u32 2147483647, %v2631
        %vm2642 = vcmp.eq.f32.partialorder %v2641, 8.507059e+37
        %v2643 = vand.u32 %v2631, 2147483648
        %v2644 = vor.u32 1.1754944e-38, %v2643
        %v2645 = vsel %vm2642, %v2644, %v2640
        %v2646 = vmul.f32 %v2621, %v2645
        %v2647 = vmin.f32 %v2646, 1.0
        %v2648 = vmax.f32 %v2647, -1.0
        %v2649 = vmul.f32 %v1197, %v1197
        %v2650 = vmin.f32 16.0, %v2649
        %v2651 = vmul.f32 %v2650, 2.1237322e-06
        %v2652 = vadd.f32 %v2651, 0.00028619796
        %v2653 = vmul.f32 %v2650, %v2652
        %v2654 = vadd.f32 %v2653, 0.0036580483
        %v2655 = vmul.f32 %v2650, %v2654
        %v2656 = vadd.f32 %v2655, 0.05243302
        %v2657 = vmul.f32 %v2650, %v2656
        %v2658 = vadd.f32 %v2657, 0.18741608
        %v2659 = vmul.f32 %v2650, %v2658
        %v2660 = vadd.f32 %v2659, 1.1283791
        %v2661 = vmul.f32 %v1197, %v2660
        %v2662 = vmul.f32 %v2650, 3.8918573e-05
        %v2663 = vadd.f32 %v2662, 0.001143296
        %v2664 = vmul.f32 %v2650, %v2663
        %v2665 = vadd.f32 %v2664, 0.014752088
        %v2666 = vmul.f32 %v2650, %v2665
        %v2667 = vadd.f32 %v2666, 0.112945676
        %v2668 = vmul.f32 %v2650, %v2667
        %v2669 = vadd.f32 %v2668, 0.4994258
        %v2670 = vmul.f32 %v2650, %v2669
        %v2671 = vadd.f32 %v2670, 1.0
        %v2672 = vrcp.pop %v2671
        %v2673 = vmul.f32 %v2671, %v2672
        %v2674 = vsub.f32 1.0, %v2673
        %v2675 = vmul.f32 %v2672, %v2674
        %v2676 = vadd.f32 %v2672, %v2675
        %vm2677 = vweird.f32 %v2671
        %vm2678 = vweird.f32 %v2672
        %vm2679 = vmor %vm2677, %vm2678
        %v2680 = vsel %vm2679, %v2672, %v2676
        %v2681 = vand.u32 2147483647, %v2671
        %vm2682 = vcmp.eq.f32.partialorder %v2681, 8.507059e+37
        %v2683 = vand.u32 %v2671, 2147483648
        %v2684 = vor.u32 1.1754944e-38, %v2683
        %v2685 = vsel %vm2682, %v2684, %v2680
        %v2686 = vmul.f32 %v2661, %v2685
        %v2687 = vmin.f32 %v2686, 1.0
        %v2688 = vmax.f32 %v2687, -1.0
        %v2689 = vmul.f32 %v1198, %v1198
        %v2690 = vmin.f32 16.0, %v2689
        %v2691 = vmul.f32 %v2690, 2.1237322e-06
        %v2692 = vadd.f32 %v2691, 0.00028619796
        %v2693 = vmul.f32 %v2690, %v2692
        %v2694 = vadd.f32 %v2693, 0.0036580483
        %v2695 = vmul.f32 %v2690, %v2694
        %v2696 = vadd.f32 %v2695, 0.05243302
        %v2697 = vmul.f32 %v2690, %v2696
        %v2698 = vadd.f32 %v2697, 0.18741608
        %v2699 = vmul.f32 %v2690, %v2698
        %v2700 = vadd.f32 %v2699, 1.1283791
        %v2701 = vmul.f32 %v1198, %v2700
        %v2702 = vmul.f32 %v2690, 3.8918573e-05
        %v2703 = vadd.f32 %v2702, 0.001143296
        %v2704 = vmul.f32 %v2690, %v2703
        %v2705 = vadd.f32 %v2704, 0.014752088
        %v2706 = vmul.f32 %v2690, %v2705
        %v2707 = vadd.f32 %v2706, 0.112945676
        %v2708 = vmul.f32 %v2690, %v2707
        %v2709 = vadd.f32 %v2708, 0.4994258
        %v2710 = vmul.f32 %v2690, %v2709
        %v2711 = vadd.f32 %v2710, 1.0
        %v2712 = vrcp.pop %v2711
        %v2713 = vmul.f32 %v2711, %v2712
        %v2714 = vsub.f32 1.0, %v2713
        %v2715 = vmul.f32 %v2712, %v2714
        %v2716 = vadd.f32 %v2712, %v2715
        %vm2717 = vweird.f32 %v2711
        %vm2718 = vweird.f32 %v2712
        %vm2719 = vmor %vm2717, %vm2718
        %v2720 = vsel %vm2719, %v2712, %v2716
        %v2721 = vand.u32 2147483647, %v2711
        %vm2722 = vcmp.eq.f32.partialorder %v2721, 8.507059e+37
        %v2723 = vand.u32 %v2711, 2147483648
        %v2724 = vor.u32 1.1754944e-38, %v2723
        %v2725 = vsel %vm2722, %v2724, %v2720
        %v2726 = vmul.f32 %v2701, %v2725
        %v2727 = vmin.f32 %v2726, 1.0
        %v2728 = vmax.f32 %v2727, -1.0
        %v2729 = vmul.f32 %v1199, %v1199
        %v2730 = vmin.f32 16.0, %v2729
        %v2731 = vmul.f32 %v2730, 2.1237322e-06
        %v2732 = vadd.f32 %v2731, 0.00028619796
        %v2733 = vmul.f32 %v2730, %v2732
        %v2734 = vadd.f32 %v2733, 0.0036580483
        %v2735 = vmul.f32 %v2730, %v2734
        %v2736 = vadd.f32 %v2735, 0.05243302
        %v2737 = vmul.f32 %v2730, %v2736
        %v2738 = vadd.f32 %v2737, 0.18741608
        %v2739 = vmul.f32 %v2730, %v2738
        %v2740 = vadd.f32 %v2739, 1.1283791
        %v2741 = vmul.f32 %v1199, %v2740
        %v2742 = vmul.f32 %v2730, 3.8918573e-05
        %v2743 = vadd.f32 %v2742, 0.001143296
        %v2744 = vmul.f32 %v2730, %v2743
        %v2745 = vadd.f32 %v2744, 0.014752088
        %v2746 = vmul.f32 %v2730, %v2745
        %v2747 = vadd.f32 %v2746, 0.112945676
        %v2748 = vmul.f32 %v2730, %v2747
        %v2749 = vadd.f32 %v2748, 0.4994258
        %v2750 = vmul.f32 %v2730, %v2749
        %v2751 = vadd.f32 %v2750, 1.0
        %v2752 = vrcp.pop %v2751
        %v2753 = vmul.f32 %v2751, %v2752
        %v2754 = vsub.f32 1.0, %v2753
        %v2755 = vmul.f32 %v2752, %v2754
        %v2756 = vadd.f32 %v2752, %v2755
        %vm2757 = vweird.f32 %v2751
        %vm2758 = vweird.f32 %v2752
        %vm2759 = vmor %vm2757, %vm2758
        %v2760 = vsel %vm2759, %v2752, %v2756
        %v2761 = vand.u32 2147483647, %v2751
        %vm2762 = vcmp.eq.f32.partialorder %v2761, 8.507059e+37
        %v2763 = vand.u32 %v2751, 2147483648
        %v2764 = vor.u32 1.1754944e-38, %v2763
        %v2765 = vsel %vm2762, %v2764, %v2760
        %v2766 = vmul.f32 %v2741, %v2765
        %v2767 = vmin.f32 %v2766, 1.0
        %v2768 = vmax.f32 %v2767, -1.0
        %v2769 = vmul.f32 %v1200, %v1200
        %v2770 = vmin.f32 16.0, %v2769
        %v2771 = vmul.f32 %v2770, 2.1237322e-06
        %v2772 = vadd.f32 %v2771, 0.00028619796
        %v2773 = vmul.f32 %v2770, %v2772
        %v2774 = vadd.f32 %v2773, 0.0036580483
        %v2775 = vmul.f32 %v2770, %v2774
        %v2776 = vadd.f32 %v2775, 0.05243302
        %v2777 = vmul.f32 %v2770, %v2776
        %v2778 = vadd.f32 %v2777, 0.18741608
        %v2779 = vmul.f32 %v2770, %v2778
        %v2780 = vadd.f32 %v2779, 1.1283791
        %v2781 = vmul.f32 %v1200, %v2780
        %v2782 = vmul.f32 %v2770, 3.8918573e-05
        %v2783 = vadd.f32 %v2782, 0.001143296
        %v2784 = vmul.f32 %v2770, %v2783
        %v2785 = vadd.f32 %v2784, 0.014752088
        %v2786 = vmul.f32 %v2770, %v2785
        %v2787 = vadd.f32 %v2786, 0.112945676
        %v2788 = vmul.f32 %v2770, %v2787
        %v2789 = vadd.f32 %v2788, 0.4994258
        %v2790 = vmul.f32 %v2770, %v2789
        %v2791 = vadd.f32 %v2790, 1.0
        %v2792 = vrcp.pop %v2791
        %v2793 = vmul.f32 %v2791, %v2792
        %v2794 = vsub.f32 1.0, %v2793
        %v2795 = vmul.f32 %v2792, %v2794
        %v2796 = vadd.f32 %v2792, %v2795
        %vm2797 = vweird.f32 %v2791
        %vm2798 = vweird.f32 %v2792
        %vm2799 = vmor %vm2797, %vm2798
        %v2800 = vsel %vm2799, %v2792, %v2796
        %v2801 = vand.u32 2147483647, %v2791
        %vm2802 = vcmp.eq.f32.partialorder %v2801, 8.507059e+37
        %v2803 = vand.u32 %v2791, 2147483648
        %v2804 = vor.u32 1.1754944e-38, %v2803
        %v2805 = vsel %vm2802, %v2804, %v2800
        %v2806 = vmul.f32 %v2781, %v2805
        %v2807 = vmin.f32 %v2806, 1.0
        %v2808 = vmax.f32 %v2807, -1.0
        %v2809 = vmul.f32 %v1201, %v1201
        %v2810 = vmin.f32 16.0, %v2809
        %v2811 = vmul.f32 %v2810, 2.1237322e-06
        %v2812 = vadd.f32 %v2811, 0.00028619796
        %v2813 = vmul.f32 %v2810, %v2812
        %v2814 = vadd.f32 %v2813, 0.0036580483
        %v2815 = vmul.f32 %v2810, %v2814
        %v2816 = vadd.f32 %v2815, 0.05243302
        %v2817 = vmul.f32 %v2810, %v2816
        %v2818 = vadd.f32 %v2817, 0.18741608
        %v2819 = vmul.f32 %v2810, %v2818
        %v2820 = vadd.f32 %v2819, 1.1283791
        %v2821 = vmul.f32 %v1201, %v2820
        %v2822 = vmul.f32 %v2810, 3.8918573e-05
        %v2823 = vadd.f32 %v2822, 0.001143296
        %v2824 = vmul.f32 %v2810, %v2823
        %v2825 = vadd.f32 %v2824, 0.014752088
        %v2826 = vmul.f32 %v2810, %v2825
        %v2827 = vadd.f32 %v2826, 0.112945676
        %v2828 = vmul.f32 %v2810, %v2827
        %v2829 = vadd.f32 %v2828, 0.4994258
        %v2830 = vmul.f32 %v2810, %v2829
        %v2831 = vadd.f32 %v2830, 1.0
        %v2832 = vrcp.pop %v2831
        %v2833 = vmul.f32 %v2831, %v2832
        %v2834 = vsub.f32 1.0, %v2833
        %v2835 = vmul.f32 %v2832, %v2834
        %v2836 = vadd.f32 %v2832, %v2835
        %vm2837 = vweird.f32 %v2831
        %vm2838 = vweird.f32 %v2832
        %vm2839 = vmor %vm2837, %vm2838
        %v2840 = vsel %vm2839, %v2832, %v2836
        %v2841 = vand.u32 2147483647, %v2831
        %vm2842 = vcmp.eq.f32.partialorder %v2841, 8.507059e+37
        %v2843 = vand.u32 %v2831, 2147483648
        %v2844 = vor.u32 1.1754944e-38, %v2843
        %v2845 = vsel %vm2842, %v2844, %v2840
        %v2846 = vmul.f32 %v2821, %v2845
        %v2847 = vmin.f32 %v2846, 1.0
        %v2848 = vmax.f32 %v2847, -1.0
        %v2849 = vmul.f32 %v1202, %v1202
        %v2850 = vmin.f32 16.0, %v2849
        %v2851 = vmul.f32 %v2850, 2.1237322e-06
        %v2852 = vadd.f32 %v2851, 0.00028619796
        %v2853 = vmul.f32 %v2850, %v2852
        %v2854 = vadd.f32 %v2853, 0.0036580483
        %v2855 = vmul.f32 %v2850, %v2854
        %v2856 = vadd.f32 %v2855, 0.05243302
        %v2857 = vmul.f32 %v2850, %v2856
        %v2858 = vadd.f32 %v2857, 0.18741608
        %v2859 = vmul.f32 %v2850, %v2858
        %v2860 = vadd.f32 %v2859, 1.1283791
        %v2861 = vmul.f32 %v1202, %v2860
        %v2862 = vmul.f32 %v2850, 3.8918573e-05
        %v2863 = vadd.f32 %v2862, 0.001143296
        %v2864 = vmul.f32 %v2850, %v2863
        %v2865 = vadd.f32 %v2864, 0.014752088
        %v2866 = vmul.f32 %v2850, %v2865
        %v2867 = vadd.f32 %v2866, 0.112945676
        %v2868 = vmul.f32 %v2850, %v2867
        %v2869 = vadd.f32 %v2868, 0.4994258
        %v2870 = vmul.f32 %v2850, %v2869
        %v2871 = vadd.f32 %v2870, 1.0
        %v2872 = vrcp.pop %v2871
        %v2873 = vmul.f32 %v2871, %v2872
        %v2874 = vsub.f32 1.0, %v2873
        %v2875 = vmul.f32 %v2872, %v2874
        %v2876 = vadd.f32 %v2872, %v2875
        %vm2877 = vweird.f32 %v2871
        %vm2878 = vweird.f32 %v2872
        %vm2879 = vmor %vm2877, %vm2878
        %v2880 = vsel %vm2879, %v2872, %v2876
        %v2881 = vand.u32 2147483647, %v2871
        %vm2882 = vcmp.eq.f32.partialorder %v2881, 8.507059e+37
        %v2883 = vand.u32 %v2871, 2147483648
        %v2884 = vor.u32 1.1754944e-38, %v2883
        %v2885 = vsel %vm2882, %v2884, %v2880
        %v2886 = vmul.f32 %v2861, %v2885
        %v2887 = vmin.f32 %v2886, 1.0
        %v2888 = vmax.f32 %v2887, -1.0
        %v2889 = vmul.f32 %v1203, %v1203
        %v2890 = vmin.f32 16.0, %v2889
        %v2891 = vmul.f32 %v2890, 2.1237322e-06
        %v2892 = vadd.f32 %v2891, 0.00028619796
        %v2893 = vmul.f32 %v2890, %v2892
        %v2894 = vadd.f32 %v2893, 0.0036580483
        %v2895 = vmul.f32 %v2890, %v2894
        %v2896 = vadd.f32 %v2895, 0.05243302
        %v2897 = vmul.f32 %v2890, %v2896
        %v2898 = vadd.f32 %v2897, 0.18741608
        %v2899 = vmul.f32 %v2890, %v2898
        %v2900 = vadd.f32 %v2899, 1.1283791
        %v2901 = vmul.f32 %v1203, %v2900
        %v2902 = vmul.f32 %v2890, 3.8918573e-05
        %v2903 = vadd.f32 %v2902, 0.001143296
        %v2904 = vmul.f32 %v2890, %v2903
        %v2905 = vadd.f32 %v2904, 0.014752088
        %v2906 = vmul.f32 %v2890, %v2905
        %v2907 = vadd.f32 %v2906, 0.112945676
        %v2908 = vmul.f32 %v2890, %v2907
        %v2909 = vadd.f32 %v2908, 0.4994258
        %v2910 = vmul.f32 %v2890, %v2909
        %v2911 = vadd.f32 %v2910, 1.0
        %v2912 = vrcp.pop %v2911
        %v2913 = vmul.f32 %v2911, %v2912
        %v2914 = vsub.f32 1.0, %v2913
        %v2915 = vmul.f32 %v2912, %v2914
        %v2916 = vadd.f32 %v2912, %v2915
        %vm2917 = vweird.f32 %v2911
        %vm2918 = vweird.f32 %v2912
        %vm2919 = vmor %vm2917, %vm2918
        %v2920 = vsel %vm2919, %v2912, %v2916
        %v2921 = vand.u32 2147483647, %v2911
        %vm2922 = vcmp.eq.f32.partialorder %v2921, 8.507059e+37
        %v2923 = vand.u32 %v2911, 2147483648
        %v2924 = vor.u32 1.1754944e-38, %v2923
        %v2925 = vsel %vm2922, %v2924, %v2920
        %v2926 = vmul.f32 %v2901, %v2925
        %v2927 = vmin.f32 %v2926, 1.0
        %v2928 = vmax.f32 %v2927, -1.0
        %v2929 = vmul.f32 %v1204, %v1204
        %v2930 = vmin.f32 16.0, %v2929
        %v2931 = vmul.f32 %v2930, 2.1237322e-06
        %v2932 = vadd.f32 %v2931, 0.00028619796
        %v2933 = vmul.f32 %v2930, %v2932
        %v2934 = vadd.f32 %v2933, 0.0036580483
        %v2935 = vmul.f32 %v2930, %v2934
        %v2936 = vadd.f32 %v2935, 0.05243302
        %v2937 = vmul.f32 %v2930, %v2936
        %v2938 = vadd.f32 %v2937, 0.18741608
        %v2939 = vmul.f32 %v2930, %v2938
        %v2940 = vadd.f32 %v2939, 1.1283791
        %v2941 = vmul.f32 %v1204, %v2940
        %v2942 = vmul.f32 %v2930, 3.8918573e-05
        %v2943 = vadd.f32 %v2942, 0.001143296
        %v2944 = vmul.f32 %v2930, %v2943
        %v2945 = vadd.f32 %v2944, 0.014752088
        %v2946 = vmul.f32 %v2930, %v2945
        %v2947 = vadd.f32 %v2946, 0.112945676
        %v2948 = vmul.f32 %v2930, %v2947
        %v2949 = vadd.f32 %v2948, 0.4994258
        %v2950 = vmul.f32 %v2930, %v2949
        %v2951 = vadd.f32 %v2950, 1.0
        %v2952 = vrcp.pop %v2951
        %v2953 = vmul.f32 %v2951, %v2952
        %v2954 = vsub.f32 1.0, %v2953
        %v2955 = vmul.f32 %v2952, %v2954
        %v2956 = vadd.f32 %v2952, %v2955
        %vm2957 = vweird.f32 %v2951
        %vm2958 = vweird.f32 %v2952
        %vm2959 = vmor %vm2957, %vm2958
        %v2960 = vsel %vm2959, %v2952, %v2956
        %v2961 = vand.u32 2147483647, %v2951
        %vm2962 = vcmp.eq.f32.partialorder %v2961, 8.507059e+37
        %v2963 = vand.u32 %v2951, 2147483648
        %v2964 = vor.u32 1.1754944e-38, %v2963
        %v2965 = vsel %vm2962, %v2964, %v2960
        %v2966 = vmul.f32 %v2941, %v2965
        %v2967 = vmin.f32 %v2966, 1.0
        %v2968 = vmax.f32 %v2967, -1.0
        %v2969 = vmul.f32 %v1205, %v1205
        %v2970 = vmin.f32 16.0, %v2969
        %v2971 = vmul.f32 %v2970, 2.1237322e-06
        %v2972 = vadd.f32 %v2971, 0.00028619796
        %v2973 = vmul.f32 %v2970, %v2972
        %v2974 = vadd.f32 %v2973, 0.0036580483
        %v2975 = vmul.f32 %v2970, %v2974
        %v2976 = vadd.f32 %v2975, 0.05243302
        %v2977 = vmul.f32 %v2970, %v2976
        %v2978 = vadd.f32 %v2977, 0.18741608
        %v2979 = vmul.f32 %v2970, %v2978
        %v2980 = vadd.f32 %v2979, 1.1283791
        %v2981 = vmul.f32 %v1205, %v2980
        %v2982 = vmul.f32 %v2970, 3.8918573e-05
        %v2983 = vadd.f32 %v2982, 0.001143296
        %v2984 = vmul.f32 %v2970, %v2983
        %v2985 = vadd.f32 %v2984, 0.014752088
        %v2986 = vmul.f32 %v2970, %v2985
        %v2987 = vadd.f32 %v2986, 0.112945676
        %v2988 = vmul.f32 %v2970, %v2987
        %v2989 = vadd.f32 %v2988, 0.4994258
        %v2990 = vmul.f32 %v2970, %v2989
        %v2991 = vadd.f32 %v2990, 1.0
        %v2992 = vrcp.pop %v2991
        %v2993 = vmul.f32 %v2991, %v2992
        %v2994 = vsub.f32 1.0, %v2993
        %v2995 = vmul.f32 %v2992, %v2994
        %v2996 = vadd.f32 %v2992, %v2995
        %vm2997 = vweird.f32 %v2991
        %vm2998 = vweird.f32 %v2992
        %vm2999 = vmor %vm2997, %vm2998
        %v3000 = vsel %vm2999, %v2992, %v2996
        %v3001 = vand.u32 2147483647, %v2991
        %vm3002 = vcmp.eq.f32.partialorder %v3001, 8.507059e+37
        %v3003 = vand.u32 %v2991, 2147483648
        %v3004 = vor.u32 1.1754944e-38, %v3003
        %v3005 = vsel %vm3002, %v3004, %v3000
        %v3006 = vmul.f32 %v2981, %v3005
        %v3007 = vmin.f32 %v3006, 1.0
        %v3008 = vmax.f32 %v3007, -1.0
        %v3009 = vmul.f32 %v1206, %v1206
        %v3010 = vmin.f32 16.0, %v3009
        %v3011 = vmul.f32 %v3010, 2.1237322e-06
        %v3012 = vadd.f32 %v3011, 0.00028619796
        %v3013 = vmul.f32 %v3010, %v3012
        %v3014 = vadd.f32 %v3013, 0.0036580483
        %v3015 = vmul.f32 %v3010, %v3014
        %v3016 = vadd.f32 %v3015, 0.05243302
        %v3017 = vmul.f32 %v3010, %v3016
        %v3018 = vadd.f32 %v3017, 0.18741608
        %v3019 = vmul.f32 %v3010, %v3018
        %v3020 = vadd.f32 %v3019, 1.1283791
        %v3021 = vmul.f32 %v1206, %v3020
        %v3022 = vmul.f32 %v3010, 3.8918573e-05
        %v3023 = vadd.f32 %v3022, 0.001143296
        %v3024 = vmul.f32 %v3010, %v3023
        %v3025 = vadd.f32 %v3024, 0.014752088
        %v3026 = vmul.f32 %v3010, %v3025
        %v3027 = vadd.f32 %v3026, 0.112945676
        %v3028 = vmul.f32 %v3010, %v3027
        %v3029 = vadd.f32 %v3028, 0.4994258
        %v3030 = vmul.f32 %v3010, %v3029
        %v3031 = vadd.f32 %v3030, 1.0
        %v3032 = vrcp.pop %v3031
        %v3033 = vmul.f32 %v3031, %v3032
        %v3034 = vsub.f32 1.0, %v3033
        %v3035 = vmul.f32 %v3032, %v3034
        %v3036 = vadd.f32 %v3032, %v3035
        %vm3037 = vweird.f32 %v3031
        %vm3038 = vweird.f32 %v3032
        %vm3039 = vmor %vm3037, %vm3038
        %v3040 = vsel %vm3039, %v3032, %v3036
        %v3041 = vand.u32 2147483647, %v3031
        %vm3042 = vcmp.eq.f32.partialorder %v3041, 8.507059e+37
        %v3043 = vand.u32 %v3031, 2147483648
        %v3044 = vor.u32 1.1754944e-38, %v3043
        %v3045 = vsel %vm3042, %v3044, %v3040
        %v3046 = vmul.f32 %v3021, %v3045
        %v3047 = vmin.f32 %v3046, 1.0
        %v3048 = vmax.f32 %v3047, -1.0
        %v3049 = vmul.f32 %v1207, %v1207
        %v3050 = vmin.f32 16.0, %v3049
        %v3051 = vmul.f32 %v3050, 2.1237322e-06
        %v3052 = vadd.f32 %v3051, 0.00028619796
        %v3053 = vmul.f32 %v3050, %v3052
        %v3054 = vadd.f32 %v3053, 0.0036580483
        %v3055 = vmul.f32 %v3050, %v3054
        %v3056 = vadd.f32 %v3055, 0.05243302
        %v3057 = vmul.f32 %v3050, %v3056
        %v3058 = vadd.f32 %v3057, 0.18741608
        %v3059 = vmul.f32 %v3050, %v3058
        %v3060 = vadd.f32 %v3059, 1.1283791
        %v3061 = vmul.f32 %v1207, %v3060
        %v3062 = vmul.f32 %v3050, 3.8918573e-05
        %v3063 = vadd.f32 %v3062, 0.001143296
        %v3064 = vmul.f32 %v3050, %v3063
        %v3065 = vadd.f32 %v3064, 0.014752088
        %v3066 = vmul.f32 %v3050, %v3065
        %v3067 = vadd.f32 %v3066, 0.112945676
        %v3068 = vmul.f32 %v3050, %v3067
        %v3069 = vadd.f32 %v3068, 0.4994258
        %v3070 = vmul.f32 %v3050, %v3069
        %v3071 = vadd.f32 %v3070, 1.0
        %v3072 = vrcp.pop %v3071
        %v3073 = vmul.f32 %v3071, %v3072
        %v3074 = vsub.f32 1.0, %v3073
        %v3075 = vmul.f32 %v3072, %v3074
        %v3076 = vadd.f32 %v3072, %v3075
        %vm3077 = vweird.f32 %v3071
        %vm3078 = vweird.f32 %v3072
        %vm3079 = vmor %vm3077, %vm3078
        %v3080 = vsel %vm3079, %v3072, %v3076
        %v3081 = vand.u32 2147483647, %v3071
        %vm3082 = vcmp.eq.f32.partialorder %v3081, 8.507059e+37
        %v3083 = vand.u32 %v3071, 2147483648
        %v3084 = vor.u32 1.1754944e-38, %v3083
        %v3085 = vsel %vm3082, %v3084, %v3080
        %v3086 = vmul.f32 %v3061, %v3085
        %v3087 = vmin.f32 %v3086, 1.0
        %v3088 = vmax.f32 %v3087, -1.0
        %v3089 = vmul.f32 %v1208, %v1208
        %v3090 = vmin.f32 16.0, %v3089
        %v3091 = vmul.f32 %v3090, 2.1237322e-06
        %v3092 = vadd.f32 %v3091, 0.00028619796
        %v3093 = vmul.f32 %v3090, %v3092
        %v3094 = vadd.f32 %v3093, 0.0036580483
        %v3095 = vmul.f32 %v3090, %v3094
        %v3096 = vadd.f32 %v3095, 0.05243302
        %v3097 = vmul.f32 %v3090, %v3096
        %v3098 = vadd.f32 %v3097, 0.18741608
        %v3099 = vmul.f32 %v3090, %v3098
        %v3100 = vadd.f32 %v3099, 1.1283791
        %v3101 = vmul.f32 %v1208, %v3100
        %v3102 = vmul.f32 %v3090, 3.8918573e-05
        %v3103 = vadd.f32 %v3102, 0.001143296
        %v3104 = vmul.f32 %v3090, %v3103
        %v3105 = vadd.f32 %v3104, 0.014752088
        %v3106 = vmul.f32 %v3090, %v3105
        %v3107 = vadd.f32 %v3106, 0.112945676
        %v3108 = vmul.f32 %v3090, %v3107
        %v3109 = vadd.f32 %v3108, 0.4994258
        %v3110 = vmul.f32 %v3090, %v3109
        %v3111 = vadd.f32 %v3110, 1.0
        %v3112 = vrcp.pop %v3111
        %v3113 = vmul.f32 %v3111, %v3112
        %v3114 = vsub.f32 1.0, %v3113
        %v3115 = vmul.f32 %v3112, %v3114
        %v3116 = vadd.f32 %v3112, %v3115
        %vm3117 = vweird.f32 %v3111
        %vm3118 = vweird.f32 %v3112
        %vm3119 = vmor %vm3117, %vm3118
        %v3120 = vsel %vm3119, %v3112, %v3116
        %v3121 = vand.u32 2147483647, %v3111
        %vm3122 = vcmp.eq.f32.partialorder %v3121, 8.507059e+37
        %v3123 = vand.u32 %v3111, 2147483648
        %v3124 = vor.u32 1.1754944e-38, %v3123
        %v3125 = vsel %vm3122, %v3124, %v3120
        %v3126 = vmul.f32 %v3101, %v3125
        %v3127 = vmin.f32 %v3126, 1.0
        %v3128 = vmax.f32 %v3127, -1.0
        %v3129 = vadd.f32 %v1248, 1.0
        %v3130 = vadd.f32 %v1288, 1.0
        %v3131 = vadd.f32 %v1328, 1.0
        %v3132 = vadd.f32 %v1368, 1.0
        %v3133 = vadd.f32 %v1408, 1.0
        %v3134 = vadd.f32 %v1448, 1.0
        %v3135 = vadd.f32 %v1488, 1.0
        %v3136 = vadd.f32 %v1528, 1.0
        %v3137 = vadd.f32 %v1568, 1.0
        %v3138 = vadd.f32 %v1608, 1.0
        %v3139 = vadd.f32 %v1648, 1.0
        %v3140 = vadd.f32 %v1688, 1.0
        %v3141 = vadd.f32 %v1728, 1.0
        %v3142 = vadd.f32 %v1768, 1.0
        %v3143 = vadd.f32 %v1808, 1.0
        %v3144 = vadd.f32 %v1848, 1.0
        %v3145 = vadd.f32 %v1888, 1.0
        %v3146 = vadd.f32 %v1928, 1.0
        %v3147 = vadd.f32 %v1968, 1.0
        %v3148 = vadd.f32 %v2008, 1.0
        %v3149 = vadd.f32 %v2048, 1.0
        %v3150 = vadd.f32 %v2088, 1.0
        %v3151 = vadd.f32 %v2128, 1.0
        %v3152 = vadd.f32 %v2168, 1.0
        %v3153 = vadd.f32 %v2208, 1.0
        %v3154 = vadd.f32 %v2248, 1.0
        %v3155 = vadd.f32 %v2288, 1.0
        %v3156 = vadd.f32 %v2328, 1.0
        %v3157 = vadd.f32 %v2368, 1.0
        %v3158 = vadd.f32 %v2408, 1.0
        %v3159 = vadd.f32 %v2448, 1.0
        %v3160 = vadd.f32 %v2488, 1.0
        %v3161 = vadd.f32 %v2528, 1.0
        %v3162 = vadd.f32 %v2568, 1.0
        %v3163 = vadd.f32 %v2608, 1.0
        %v3164 = vadd.f32 %v2648, 1.0
        %v3165 = vadd.f32 %v2688, 1.0
        %v3166 = vadd.f32 %v2728, 1.0
        %v3167 = vadd.f32 %v2768, 1.0
        %v3168 = vadd.f32 %v2808, 1.0
        %v3169 = vadd.f32 %v2848, 1.0
        %v3170 = vadd.f32 %v2888, 1.0
        %v3171 = vadd.f32 %v2928, 1.0
        %v3172 = vadd.f32 %v2968, 1.0
        %v3173 = vadd.f32 %v3008, 1.0
        %v3174 = vadd.f32 %v3048, 1.0
        %v3175 = vadd.f32 %v3088, 1.0
        %v3176 = vadd.f32 %v3128, 1.0
        %v3177 = vmul.f32 %v1106, %v3129
        %v3178 = vmul.f32 %v1107, %v3130
        %v3179 = vmul.f32 %v1108, %v3131
        %v3180 = vmul.f32 %v1109, %v3132
        %v3181 = vmul.f32 %v1110, %v3133
        %v3182 = vmul.f32 %v1111, %v3134
        %v3183 = vmul.f32 %v1112, %v3135
        %v3184 = vmul.f32 %v1113, %v3136
        %v3185 = vmul.f32 %v1114, %v3137
        %v3186 = vmul.f32 %v1115, %v3138
        %v3187 = vmul.f32 %v1116, %v3139
        %v3188 = vmul.f32 %v1117, %v3140
        %v3189 = vmul.f32 %v1118, %v3141
        %v3190 = vmul.f32 %v1119, %v3142
        %v3191 = vmul.f32 %v1120, %v3143
        %v3192 = vmul.f32 %v1121, %v3144
        %v3193 = vmul.f32 %v1122, %v3145
        %v3194 = vmul.f32 %v1123, %v3146
        %v3195 = vmul.f32 %v1124, %v3147
        %v3196 = vmul.f32 %v1125, %v3148
        %v3197 = vmul.f32 %v1126, %v3149
        %v3198 = vmul.f32 %v1127, %v3150
        %v3199 = vmul.f32 %v1128, %v3151
        %v3200 = vmul.f32 %v1129, %v3152
        %v3201 = vmul.f32 %v1130, %v3153
        %v3202 = vmul.f32 %v1131, %v3154
        %v3203 = vmul.f32 %v1132, %v3155
        %v3204 = vmul.f32 %v1133, %v3156
        %v3205 = vmul.f32 %v1134, %v3157
        %v3206 = vmul.f32 %v1135, %v3158
        %v3207 = vmul.f32 %v1136, %v3159
        %v3208 = vmul.f32 %v1137, %v3160
        %v3209 = vmul.f32 %v1138, %v3161
        %v3210 = vmul.f32 %v1139, %v3162
        %v3211 = vmul.f32 %v1140, %v3163
        %v3212 = vmul.f32 %v1141, %v3164
        %v3213 = vmul.f32 %v1142, %v3165
        %v3214 = vmul.f32 %v1143, %v3166
        %v3215 = vmul.f32 %v1144, %v3167
        %v3216 = vmul.f32 %v1145, %v3168
        %v3217 = vmul.f32 %v1146, %v3169
        %v3218 = vmul.f32 %v1147, %v3170
        %v3219 = vmul.f32 %v1148, %v3171
        %v3220 = vmul.f32 %v1149, %v3172
        %v3221 = vmul.f32 %v1150, %v3173
        %v3222 = vmul.f32 %v1151, %v3174
        %v3223 = vmul.f32 %v1152, %v3175
        %v3224 = vmul.f32 %v1153, %v3176
        %v3225 = vpack.c.bf16 %v3178, %v3177
        %v3226 = vpack.c.bf16 %v3180, %v3179
        %v3227 = vpack.c.bf16 %v3182, %v3181
        %v3228 = vpack.c.bf16 %v3184, %v3183
        %v3229 = vpack.c.bf16 %v3186, %v3185
        %v3230 = vpack.c.bf16 %v3188, %v3187
        %v3231 = vpack.c.bf16 %v3190, %v3189
        %v3232 = vpack.c.bf16 %v3192, %v3191
        %v3233 = vpack.c.bf16 %v3194, %v3193
        %v3234 = vpack.c.bf16 %v3196, %v3195
        %v3235 = vpack.c.bf16 %v3198, %v3197
        %v3236 = vpack.c.bf16 %v3200, %v3199
        %v3237 = vpack.c.bf16 %v3202, %v3201
        %v3238 = vpack.c.bf16 %v3204, %v3203
        %v3239 = vpack.c.bf16 %v3206, %v3205
        %v3240 = vpack.c.bf16 %v3208, %v3207
        %v3241 = vpack.c.bf16 %v3210, %v3209
        %v3242 = vpack.c.bf16 %v3212, %v3211
        %v3243 = vpack.c.bf16 %v3214, %v3213
        %v3244 = vpack.c.bf16 %v3216, %v3215
        %v3245 = vpack.c.bf16 %v3218, %v3217
        %v3246 = vpack.c.bf16 %v3220, %v3219
        %v3247 = vpack.c.bf16 %v3222, %v3221
        %v3248 = vpack.c.bf16 %v3224, %v3223
        %v3249 = vld [vmem:[#allocation2] sm:$0xff]
        %v3250 = vld [vmem:[#allocation2 + $0x8] sm:$0xff]
        %v3251 = vld [vmem:[#allocation2 + $0x10] sm:$0xff]
        %v3252 = vld [vmem:[#allocation2 + $0x18] sm:$0xff]
        %v3253 = vld [vmem:[#allocation2 + $0x20] sm:$0xff]
        %v3254 = vld [vmem:[#allocation2 + $0x28] sm:$0xff]
        %v3255 = vld [vmem:[#allocation2 + $0x30] sm:$0xff]
        %v3256 = vld [vmem:[#allocation2 + $0x38] sm:$0xff]
        %v3257 = vld [vmem:[#allocation2 + $0x40] sm:$0xff]
        %v3258 = vld [vmem:[#allocation2 + $0x48] sm:$0xff]
        %v3259 = vld [vmem:[#allocation2 + $0x50] sm:$0xff]
        %v3260 = vld [vmem:[#allocation2 + $0x58] sm:$0xff]
        %v3261 = vld [vmem:[#allocation2 + $0x60] sm:$0xff]
        %v3262 = vld [vmem:[#allocation2 + $0x68] sm:$0xff]
        %v3263 = vld [vmem:[#allocation2 + $0x70] sm:$0xff]
        %v3264 = vld [vmem:[#allocation2 + $0x78] sm:$0xff]
        %v3265 = vld [vmem:[%s411] sm:$0xff]
        %v3266 = vld [vmem:[%s411 + $0x8] sm:$0xf]
        %v3267 = vld [vmem:[%s411 + $0xc] sm:$0xff]
        %v3268 = vld [vmem:[%s411 + $0x14] sm:$0xf]
        %v3269 = vld [vmem:[%s411 + $0x18] sm:$0xff]
        %v3270 = vld [vmem:[%s411 + $0x20] sm:$0xf]
        %v3271 = vld [vmem:[%s411 + $0x24] sm:$0xff]
        %v3272 = vld [vmem:[%s411 + $0x2c] sm:$0xf]
        %v3273 = vld [vmem:[%s411 + $0x30] sm:$0xff]
        %v3274 = vld [vmem:[%s411 + $0x38] sm:$0xf]
        %v3275 = vld [vmem:[%s411 + $0x3c] sm:$0xff]
        %v3276 = vld [vmem:[%s411 + $0x44] sm:$0xf]
        %v3277 = vld [vmem:[%s411 + $0x48] sm:$0xff]
        %v3278 = vld [vmem:[%s411 + $0x50] sm:$0xf]
        %v3279 = vld [vmem:[%s411 + $0x54] sm:$0xff]
        %v3280 = vld [vmem:[%s411 + $0x5c] sm:$0xf]
        %v3281 = vld [vmem:[%s411 + $0x60] sm:$0xff]
        %v3282 = vld [vmem:[%s411 + $0x68] sm:$0xf]
        %v3283 = vld [vmem:[%s411 + $0x6c] sm:$0xff]
        %v3284 = vld [vmem:[%s411 + $0x74] sm:$0xf]
        %v3285 = vld [vmem:[%s411 + $0x78] sm:$0xff]
        %v3286 = vld [vmem:[%s411 + $0x80] sm:$0xf]
        %v3287 = vld [vmem:[%s411 + $0x84] sm:$0xff]
        %v3288 = vld [vmem:[%s411 + $0x8c] sm:$0xf]
        %v3289 = vld [vmem:[%s411 + $0x90] sm:$0xff]
        %v3290 = vld [vmem:[%s411 + $0x98] sm:$0xf]
        %v3291 = vld [vmem:[%s411 + $0x9c] sm:$0xff]
        %v3292 = vld [vmem:[%s411 + $0xa4] sm:$0xf]
        %v3293 = vld [vmem:[%s411 + $0xa8] sm:$0xff]
        %v3294 = vld [vmem:[%s411 + $0xb0] sm:$0xf]
        %v3295 = vld [vmem:[%s411 + $0xb4] sm:$0xff]
        %v3296 = vld [vmem:[%s411 + $0xbc] sm:$0xf]
        %v3329 = vunpack.c.l.b16 %v3265
        %v3330 = vunpack.c.h.b16 %v3265
        %v3331 = vunpack.c.l.b16 %v3266
        %v3332 = vunpack.c.l.b16 %v3267
        %v3333 = vunpack.c.h.b16 %v3267
        %v3334 = vunpack.c.l.b16 %v3268
        %v3335 = vunpack.c.l.b16 %v3269
        %v3336 = vunpack.c.h.b16 %v3269
        %v3337 = vunpack.c.l.b16 %v3270
        %v3338 = vunpack.c.l.b16 %v3271
        %v3339 = vunpack.c.h.b16 %v3271
        %v3340 = vunpack.c.l.b16 %v3272
        %v3341 = vunpack.c.l.b16 %v3273
        %v3342 = vunpack.c.h.b16 %v3273
        %v3343 = vunpack.c.l.b16 %v3274
        %v3344 = vunpack.c.l.b16 %v3275
        %v3345 = vunpack.c.h.b16 %v3275
        %v3346 = vunpack.c.l.b16 %v3276
        %v3347 = vunpack.c.l.b16 %v3277
        %v3348 = vunpack.c.h.b16 %v3277
        %v3349 = vunpack.c.l.b16 %v3278
        %v3350 = vunpack.c.l.b16 %v3279
        %v3351 = vunpack.c.h.b16 %v3279
        %v3352 = vunpack.c.l.b16 %v3280
        %v3353 = vunpack.c.l.b16 %v3281
        %v3354 = vunpack.c.h.b16 %v3281
        %v3355 = vunpack.c.l.b16 %v3282
        %v3356 = vunpack.c.l.b16 %v3283
        %v3357 = vunpack.c.h.b16 %v3283
        %v3358 = vunpack.c.l.b16 %v3284
        %v3359 = vunpack.c.l.b16 %v3285
        %v3360 = vunpack.c.h.b16 %v3285
        %v3361 = vunpack.c.l.b16 %v3286
        %v3362 = vunpack.c.l.b16 %v3287
        %v3363 = vunpack.c.h.b16 %v3287
        %v3364 = vunpack.c.l.b16 %v3288
        %v3365 = vunpack.c.l.b16 %v3289
        %v3366 = vunpack.c.h.b16 %v3289
        %v3367 = vunpack.c.l.b16 %v3290
        %v3368 = vunpack.c.l.b16 %v3291
        %v3369 = vunpack.c.h.b16 %v3291
        %v3370 = vunpack.c.l.b16 %v3292
        %v3371 = vunpack.c.l.b16 %v3293
        %v3372 = vunpack.c.h.b16 %v3293
        %v3373 = vunpack.c.l.b16 %v3294
        %v3374 = vunpack.c.l.b16 %v3295
        %v3375 = vunpack.c.h.b16 %v3295
        %v3376 = vunpack.c.l.b16 %v3296
        %v3377 = vpack.c.b16 %v3332, %v3329
        %v3378 = vpack.c.b16 %v3333, %v3330
        %v3379 = vpack.c.b16 %v3334, %v3331
        %v3380 = vpack.c.b16 %v3338, %v3335
        %v3381 = vpack.c.b16 %v3339, %v3336
        %v3382 = vpack.c.b16 %v3340, %v3337
        %v3383 = vpack.c.b16 %v3344, %v3341
        %v3384 = vpack.c.b16 %v3345, %v3342
        %v3385 = vpack.c.b16 %v3346, %v3343
        %v3386 = vpack.c.b16 %v3350, %v3347
        %v3387 = vpack.c.b16 %v3351, %v3348
        %v3388 = vpack.c.b16 %v3352, %v3349
        %v3389 = vpack.c.b16 %v3356, %v3353
        %v3390 = vpack.c.b16 %v3357, %v3354
        %v3391 = vpack.c.b16 %v3358, %v3355
        %v3392 = vpack.c.b16 %v3362, %v3359
        %v3393 = vpack.c.b16 %v3363, %v3360
        %v3394 = vpack.c.b16 %v3364, %v3361
        %v3395 = vpack.c.b16 %v3368, %v3365
        %v3396 = vpack.c.b16 %v3369, %v3366
        %v3397 = vpack.c.b16 %v3370, %v3367
        %v3398 = vpack.c.b16 %v3374, %v3371
        %v3399 = vpack.c.b16 %v3375, %v3372
        %v3400 = vpack.c.b16 %v3376, %v3373
        %3425 = vmatpush.bf16.msra.mxu0 %v3232
        %3426 = vmatpush.bf16.msra.mxu0 %v3231
        %3427 = vmatpush.bf16.msra.mxu0 %v3230
        %3428 = vmatpush.bf16.msra.mxu0 %v3229
        %3429 = vmatpush.bf16.msra.mxu0 %v3228
        %3430 = vmatpush.bf16.msra.mxu0 %v3227
        %3431 = vmatpush.bf16.msra.mxu0 %v3226
        %3432 = vmatpush.bf16.msra.mxu0 %v3225
        %3433 = vmatmul.bf16.gmra.mxu0 %v3377
        %v3434 = vpop.f32.mrf.mxu0
        %v3435 = vadd.f32 0.0, %v3434
        %v3436 = vpop.f32.mrf.mxu0
        %v3437 = vadd.f32 0.0, %v3436
        %3438 = vmatmul.bf16.gmra.mxu0 %v3380
        %v3439 = vpop.f32.mrf.mxu0
        %v3440 = vadd.f32 0.0, %v3439
        %v3441 = vpop.f32.mrf.mxu0
        %v3442 = vadd.f32 0.0, %v3441
        %3443 = vmatmul.bf16.gmra.mxu0 %v3383
        %v3444 = vpop.f32.mrf.mxu0
        %v3445 = vadd.f32 0.0, %v3444
        %v3446 = vpop.f32.mrf.mxu0
        %v3447 = vadd.f32 0.0, %v3446
        %3448 = vmatmul.bf16.gmra.mxu0 %v3386
        %v3449 = vpop.f32.mrf.mxu0
        %v3450 = vadd.f32 0.0, %v3449
        %v3451 = vpop.f32.mrf.mxu0
        %v3452 = vadd.f32 0.0, %v3451
        %3453 = vmatmul.bf16.gmra.mxu0 %v3389
        %v3454 = vpop.f32.mrf.mxu0
        %v3455 = vadd.f32 0.0, %v3454
        %v3456 = vpop.f32.mrf.mxu0
        %v3457 = vadd.f32 0.0, %v3456
        %3458 = vmatmul.bf16.gmra.mxu0 %v3392
        %v3459 = vpop.f32.mrf.mxu0
        %v3460 = vadd.f32 0.0, %v3459
        %v3461 = vpop.f32.mrf.mxu0
        %v3462 = vadd.f32 0.0, %v3461
        %3463 = vmatmul.bf16.gmra.mxu0 %v3395
        %v3464 = vpop.f32.mrf.mxu0
        %v3465 = vadd.f32 0.0, %v3464
        %v3466 = vpop.f32.mrf.mxu0
        %v3467 = vadd.f32 0.0, %v3466
        %3468 = vmatmul.bf16.gmra.mxu0 %v3398
        %v3469 = vpop.f32.mrf.mxu0
        %v3470 = vadd.f32 0.0, %v3469
        %v3471 = vpop.f32.mrf.mxu0
        %v3472 = vadd.f32 0.0, %v3471
        %3473 = vdwg.mxu0
        %3474 = vmatpush.bf16.msra.mxu0 %v3240
        %3475 = vmatpush.bf16.msra.mxu0 %v3239
        %3476 = vmatpush.bf16.msra.mxu0 %v3238
        %3477 = vmatpush.bf16.msra.mxu0 %v3237
        %3478 = vmatpush.bf16.msra.mxu0 %v3236
        %3479 = vmatpush.bf16.msra.mxu0 %v3235
        %3480 = vmatpush.bf16.msra.mxu0 %v3234
        %3481 = vmatpush.bf16.msra.mxu0 %v3233
        %3482 = vmatmul.bf16.gmra.mxu0 %v3378
        %v3483 = vpop.f32.mrf.mxu0
        %v3484 = vadd.f32 %v3435, %v3483
        %v3485 = vpop.f32.mrf.mxu0
        %v3486 = vadd.f32 %v3437, %v3485
        %3487 = vmatmul.bf16.gmra.mxu0 %v3381
        %v3488 = vpop.f32.mrf.mxu0
        %v3489 = vadd.f32 %v3440, %v3488
        %v3490 = vpop.f32.mrf.mxu0
        %v3491 = vadd.f32 %v3442, %v3490
        %3492 = vmatmul.bf16.gmra.mxu0 %v3384
        %v3493 = vpop.f32.mrf.mxu0
        %v3494 = vadd.f32 %v3445, %v3493
        %v3495 = vpop.f32.mrf.mxu0
        %v3496 = vadd.f32 %v3447, %v3495
        %3497 = vmatmul.bf16.gmra.mxu0 %v3387
        %v3498 = vpop.f32.mrf.mxu0
        %v3499 = vadd.f32 %v3450, %v3498
        %v3500 = vpop.f32.mrf.mxu0
        %v3501 = vadd.f32 %v3452, %v3500
        %3502 = vmatmul.bf16.gmra.mxu0 %v3390
        %v3503 = vpop.f32.mrf.mxu0
        %v3504 = vadd.f32 %v3455, %v3503
        %v3505 = vpop.f32.mrf.mxu0
        %v3506 = vadd.f32 %v3457, %v3505
        %3507 = vmatmul.bf16.gmra.mxu0 %v3393
        %v3508 = vpop.f32.mrf.mxu0
        %v3509 = vadd.f32 %v3460, %v3508
        %v3510 = vpop.f32.mrf.mxu0
        %v3511 = vadd.f32 %v3462, %v3510
        %3512 = vmatmul.bf16.gmra.mxu0 %v3396
        %v3513 = vpop.f32.mrf.mxu0
        %v3514 = vadd.f32 %v3465, %v3513
        %v3515 = vpop.f32.mrf.mxu0
        %v3516 = vadd.f32 %v3467, %v3515
        %3517 = vmatmul.bf16.gmra.mxu0 %v3399
        %v3518 = vpop.f32.mrf.mxu0
        %v3519 = vadd.f32 %v3470, %v3518
        %v3520 = vpop.f32.mrf.mxu0
        %v3521 = vadd.f32 %v3472, %v3520
        %3522 = vdwg.mxu0
        %3523 = vmatpush.bf16.msra.mxu0 %v3248
        %3524 = vmatpush.bf16.msra.mxu0 %v3247
        %3525 = vmatpush.bf16.msra.mxu0 %v3246
        %3526 = vmatpush.bf16.msra.mxu0 %v3245
        %3527 = vmatpush.bf16.msra.mxu0 %v3244
        %3528 = vmatpush.bf16.msra.mxu0 %v3243
        %3529 = vmatpush.bf16.msra.mxu0 %v3242
        %3530 = vmatpush.bf16.msra.mxu0 %v3241
        %3531 = vmatmul.bf16.gmra.mxu0 %v3379
        %v3532 = vpop.f32.mrf.mxu0
        %v3533 = vadd.f32 %v3484, %v3532
        %v3534 = vpop.f32.mrf.mxu0
        %v3535 = vadd.f32 %v3486, %v3534
        %3536 = vmatmul.bf16.gmra.mxu0 %v3382
        %v3537 = vpop.f32.mrf.mxu0
        %v3538 = vadd.f32 %v3489, %v3537
        %v3539 = vpop.f32.mrf.mxu0
        %v3540 = vadd.f32 %v3491, %v3539
        %3541 = vmatmul.bf16.gmra.mxu0 %v3385
        %v3542 = vpop.f32.mrf.mxu0
        %v3543 = vadd.f32 %v3494, %v3542
        %v3544 = vpop.f32.mrf.mxu0
        %v3545 = vadd.f32 %v3496, %v3544
        %3546 = vmatmul.bf16.gmra.mxu0 %v3388
        %v3547 = vpop.f32.mrf.mxu0
        %v3548 = vadd.f32 %v3499, %v3547
        %v3549 = vpop.f32.mrf.mxu0
        %v3550 = vadd.f32 %v3501, %v3549
        %3551 = vmatmul.bf16.gmra.mxu0 %v3391
        %v3552 = vpop.f32.mrf.mxu0
        %v3553 = vadd.f32 %v3504, %v3552
        %v3554 = vpop.f32.mrf.mxu0
        %v3555 = vadd.f32 %v3506, %v3554
        %3556 = vmatmul.bf16.gmra.mxu0 %v3394
        %v3557 = vpop.f32.mrf.mxu0
        %v3558 = vadd.f32 %v3509, %v3557
        %v3559 = vpop.f32.mrf.mxu0
        %v3560 = vadd.f32 %v3511, %v3559
        %3561 = vmatmul.bf16.gmra.mxu0 %v3397
        %v3562 = vpop.f32.mrf.mxu0
        %v3563 = vadd.f32 %v3514, %v3562
        %v3564 = vpop.f32.mrf.mxu0
        %v3565 = vadd.f32 %v3516, %v3564
        %3566 = vmatmul.bf16.gmra.mxu0 %v3400
        %v3567 = vpop.f32.mrf.mxu0
        %v3568 = vadd.f32 %v3519, %v3567
        %v3569 = vpop.f32.mrf.mxu0
        %v3570 = vadd.f32 %v3521, %v3569
        %3571 = vdwg.mxu0
        %v3572 = vadd.f32 %v3249, %v3533
        %v3573 = vadd.f32 %v3250, %v3535
        %v3574 = vadd.f32 %v3251, %v3538
        %v3575 = vadd.f32 %v3252, %v3540
        %v3576 = vadd.f32 %v3253, %v3543
        %v3577 = vadd.f32 %v3254, %v3545
        %v3578 = vadd.f32 %v3255, %v3548
        %v3579 = vadd.f32 %v3256, %v3550
        %v3580 = vadd.f32 %v3257, %v3553
        %v3581 = vadd.f32 %v3258, %v3555
        %v3582 = vadd.f32 %v3259, %v3558
        %v3583 = vadd.f32 %v3260, %v3560
        %v3584 = vadd.f32 %v3261, %v3563
        %v3585 = vadd.f32 %v3262, %v3565
        %v3586 = vadd.f32 %v3263, %v3568
        %v3587 = vadd.f32 %v3264, %v3570
        %3588 = vst [vmem:[#allocation2] sm:$0xff] %v3572
        %3589 = vst [vmem:[#allocation2 + $0x8] sm:$0xff] %v3573
        %3590 = vst [vmem:[#allocation2 + $0x10] sm:$0xff] %v3574
        %3591 = vst [vmem:[#allocation2 + $0x18] sm:$0xff] %v3575
        %3592 = vst [vmem:[#allocation2 + $0x20] sm:$0xff] %v3576
        %3593 = vst [vmem:[#allocation2 + $0x28] sm:$0xff] %v3577
        %3594 = vst [vmem:[#allocation2 + $0x30] sm:$0xff] %v3578
        %3595 = vst [vmem:[#allocation2 + $0x38] sm:$0xff] %v3579
        %3596 = vst [vmem:[#allocation2 + $0x40] sm:$0xff] %v3580
        %3597 = vst [vmem:[#allocation2 + $0x48] sm:$0xff] %v3581
        %3598 = vst [vmem:[#allocation2 + $0x50] sm:$0xff] %v3582
        %3599 = vst [vmem:[#allocation2 + $0x58] sm:$0xff] %v3583
        %3600 = vst [vmem:[#allocation2 + $0x60] sm:$0xff] %v3584
        %3601 = vst [vmem:[#allocation2 + $0x68] sm:$0xff] %v3585
        %3602 = vst [vmem:[#allocation2 + $0x70] sm:$0xff] %v3586
        %3603 = vst [vmem:[#allocation2 + $0x78] sm:$0xff] %v3587
        // Predicated region
        $region86: #{mlp_forward.1} parent=76 // pred_check
          %p3604 = pneg %p413
        $region87: #{mlp_forward.1} parent=76 // pred_check_branch
          %3606 = sbr.rel (%p3604) target = $region89
        $region88: #{mlp_forward.1} parent=76 // pred_region
          %v3607 = vld [vmem:[#allocation2] sm:$0xff]
          %v3608 = vld [vmem:[#allocation2 + $0x8] sm:$0xff]
          %v3609 = vld [vmem:[#allocation2 + $0x10] sm:$0xff]
          %v3610 = vld [vmem:[#allocation2 + $0x18] sm:$0xff]
          %v3611 = vld [vmem:[#allocation2 + $0x20] sm:$0xff]
          %v3612 = vld [vmem:[#allocation2 + $0x28] sm:$0xff]
          %v3613 = vld [vmem:[#allocation2 + $0x30] sm:$0xff]
          %v3614 = vld [vmem:[#allocation2 + $0x38] sm:$0xff]
          %v3615 = vld [vmem:[#allocation2 + $0x40] sm:$0xff]
          %v3616 = vld [vmem:[#allocation2 + $0x48] sm:$0xff]
          %v3617 = vld [vmem:[#allocation2 + $0x50] sm:$0xff]
          %v3618 = vld [vmem:[#allocation2 + $0x58] sm:$0xff]
          %v3619 = vld [vmem:[#allocation2 + $0x60] sm:$0xff]
          %v3620 = vld [vmem:[#allocation2 + $0x68] sm:$0xff]
          %v3621 = vld [vmem:[#allocation2 + $0x70] sm:$0xff]
          %v3622 = vld [vmem:[#allocation2 + $0x78] sm:$0xff]
          %v3623 = vld [vmem:[%s4] sm:$0xff]
          %v3624 = vld [vmem:[%s4 + $0x8] sm:$0xff]
          %v3625 = vld [vmem:[%s4 + $0x10] sm:$0xff]
          %v3626 = vld [vmem:[%s4 + $0x18] sm:$0xff]
          %v3627 = vld [vmem:[%s4 + $0x20] sm:$0xff]
          %v3628 = vld [vmem:[%s4 + $0x28] sm:$0xff]
          %v3629 = vld [vmem:[%s4 + $0x30] sm:$0xff]
          %v3630 = vld [vmem:[%s4 + $0x38] sm:$0xff]
          %v3631 = vld [vmem:[%s4 + $0x40] sm:$0xff]
          %v3632 = vld [vmem:[%s4 + $0x48] sm:$0xff]
          %v3633 = vld [vmem:[%s4 + $0x50] sm:$0xff]
          %v3634 = vld [vmem:[%s4 + $0x58] sm:$0xff]
          %v3635 = vld [vmem:[%s4 + $0x60] sm:$0xff]
          %v3636 = vld [vmem:[%s4 + $0x68] sm:$0xff]
          %v3637 = vld [vmem:[%s4 + $0x70] sm:$0xff]
          %v3638 = vld [vmem:[%s4 + $0x78] sm:$0xff]
          %3640 = vset.pattern.permute.xlu0 0
          %3641 = vperm.xlu0 %3640, %v3623
          %v3642 = vpop.permute.xlu0 %3641
          %3645 = vset.pattern.permute.xlu0 0
          %3646 = vperm.xlu0 %3645, %v3624
          %v3647 = vpop.permute.xlu0 %3646
          %3650 = vset.pattern.permute.xlu0 0
          %3651 = vperm.xlu0 %3650, %v3625
          %v3652 = vpop.permute.xlu0 %3651
          %3655 = vset.pattern.permute.xlu0 0
          %3656 = vperm.xlu0 %3655, %v3626
          %v3657 = vpop.permute.xlu0 %3656
          %3660 = vset.pattern.permute.xlu0 0
          %3661 = vperm.xlu0 %3660, %v3627
          %v3662 = vpop.permute.xlu0 %3661
          %3665 = vset.pattern.permute.xlu0 0
          %3666 = vperm.xlu0 %3665, %v3628
          %v3667 = vpop.permute.xlu0 %3666
          %3670 = vset.pattern.permute.xlu0 0
          %3671 = vperm.xlu0 %3670, %v3629
          %v3672 = vpop.permute.xlu0 %3671
          %3675 = vset.pattern.permute.xlu0 0
          %3676 = vperm.xlu0 %3675, %v3630
          %v3677 = vpop.permute.xlu0 %3676
          %3680 = vset.pattern.permute.xlu0 0
          %3681 = vperm.xlu0 %3680, %v3631
          %v3682 = vpop.permute.xlu0 %3681
          %3685 = vset.pattern.permute.xlu0 0
          %3686 = vperm.xlu0 %3685, %v3632
          %v3687 = vpop.permute.xlu0 %3686
          %3690 = vset.pattern.permute.xlu0 0
          %3691 = vperm.xlu0 %3690, %v3633
          %v3692 = vpop.permute.xlu0 %3691
          %3695 = vset.pattern.permute.xlu0 0
          %3696 = vperm.xlu0 %3695, %v3634
          %v3697 = vpop.permute.xlu0 %3696
          %3700 = vset.pattern.permute.xlu0 0
          %3701 = vperm.xlu0 %3700, %v3635
          %v3702 = vpop.permute.xlu0 %3701
          %3705 = vset.pattern.permute.xlu0 0
          %3706 = vperm.xlu0 %3705, %v3636
          %v3707 = vpop.permute.xlu0 %3706
          %3710 = vset.pattern.permute.xlu0 0
          %3711 = vperm.xlu0 %3710, %v3637
          %v3712 = vpop.permute.xlu0 %3711
          %3715 = vset.pattern.permute.xlu0 0
          %3716 = vperm.xlu0 %3715, %v3638
          %v3717 = vpop.permute.xlu0 %3716
          %v3719 = vadd.f32 %v3607, %v3642
          %v3720 = vadd.f32 %v3608, %v3647
          %v3721 = vadd.f32 %v3609, %v3652
          %v3722 = vadd.f32 %v3610, %v3657
          %v3723 = vadd.f32 %v3611, %v3662
          %v3724 = vadd.f32 %v3612, %v3667
          %v3725 = vadd.f32 %v3613, %v3672
          %v3726 = vadd.f32 %v3614, %v3677
          %v3727 = vadd.f32 %v3615, %v3682
          %v3728 = vadd.f32 %v3616, %v3687
          %v3729 = vadd.f32 %v3617, %v3692
          %v3730 = vadd.f32 %v3618, %v3697
          %v3731 = vadd.f32 %v3619, %v3702
          %v3732 = vadd.f32 %v3620, %v3707
          %v3733 = vadd.f32 %v3621, %v3712
          %v3734 = vadd.f32 %v3622, %v3717
          %3735 = vst [vmem:[%s394] sm:$0xff] %v3719
          %3736 = vst [vmem:[%s394 + $0x8] sm:$0xff] %v3720
          %3737 = vst [vmem:[%s394 + $0x10] sm:$0xff] %v3721
          %3738 = vst [vmem:[%s394 + $0x18] sm:$0xff] %v3722
          %3739 = vst [vmem:[%s394 + $0x20] sm:$0xff] %v3723
          %3740 = vst [vmem:[%s394 + $0x28] sm:$0xff] %v3724
          %3741 = vst [vmem:[%s394 + $0x30] sm:$0xff] %v3725
          %3742 = vst [vmem:[%s394 + $0x38] sm:$0xff] %v3726
          %3743 = vst [vmem:[%s394 + $0x40] sm:$0xff] %v3727
          %3744 = vst [vmem:[%s394 + $0x48] sm:$0xff] %v3728
          %3745 = vst [vmem:[%s394 + $0x50] sm:$0xff] %v3729
          %3746 = vst [vmem:[%s394 + $0x58] sm:$0xff] %v3730
          %3747 = vst [vmem:[%s394 + $0x60] sm:$0xff] %v3731
          %3748 = vst [vmem:[%s394 + $0x68] sm:$0xff] %v3732
          %3749 = vst [vmem:[%s394 + $0x70] sm:$0xff] %v3733
          %3750 = vst [vmem:[%s394 + $0x78] sm:$0xff] %v3734
        $region89: #{mlp_forward.1} parent=76 // pred_fallthru
          _
        %s3751 = sand.u32 %s172, 1
        %s3752 = sand.u32 %s172, 1
        %s3753 = smul.addr %s3752, 128
        %s3754 = scalar_lea.vmem [#allocation4], %s3753
        // Predicated region
        $region90: #{mlp_forward.1} parent=76 // pred_check
          %p3755 = pneg %p182
        $region91: #{mlp_forward.1} parent=76 // pred_check_branch
          %3757 = sbr.rel (%p3755) target = $region93
        $region92: #{mlp_forward.1} parent=76 // pred_region
          %s3758 = smul.addr %s21, 32
          %s3759 = sadd.s32 %s22, %s3758
          %s3760 = smul.addr %s3759, 8
          %s3761 = scalar_lea.vmem %s5, %s3760
          // Predicated region
          $region94: #{mlp_forward.1} parent=92 // pred_check
            _
          $region95: #{mlp_forward.1} parent=92 // pred_check_branch
            %3763 = sbr.rel (0) target = $region97
          $region96: #{mlp_forward.1} parent=92 // pred_region
            // Predicated region
            $region98: #{mlp_forward.1} parent=96 // pred_check
              _
            $region99: #{mlp_forward.1} parent=96 // pred_check_branch
              %3765 = sbr.rel (0) target = $region101
            $region100: #{mlp_forward.1} parent=96 // pred_region
              // Predicated region
              $region113: #{mlp_forward.1} parent=100 // pred_check
                _
              $region114: #{mlp_forward.1} parent=100 // pred_check_branch
                %3811 = sbr.rel (0) target = $region116
              $region115: #{mlp_forward.1} parent=100 // pred_region
                loop: start=0, step=1, limit=1
                $region117: #{mlp_forward.1} parent=115 // loop_pre_header
                  _
                $region118: #{mlp_forward.1} parent=115 // loop_header
                  %s3813 = sphi 0, %s3817
                  %p3814 = scmp.ge.s32.totalorder %s3813, 1
                  %s3818 = sphi %s3754, %s3754
                  %s3819 = sphi %s3761, %s3761
                $region119: #{mlp_forward.1} parent=115 // loop_header_branch
                  %3816 = sbr.rel (%p3814) target = $region123
                $region120: #{mlp_forward.1} parent=115 // loop_body
                  %v3820 = vld [vmem:[%s3818] sm:$0xff]
                  %3821 = vst [vmem:[%s3819] sm:$0xff] %v3820
                  %v3822 = vld [vmem:[%s3818 + $0x8] sm:$0xff]
                  %3823 = vst [vmem:[%s3819 + $0x10] sm:$0xff] %v3822
                  %v3824 = vld [vmem:[%s3818 + $0x10] sm:$0xff]
                  %3825 = vst [vmem:[%s3819 + $0x20] sm:$0xff] %v3824
                  %v3826 = vld [vmem:[%s3818 + $0x18] sm:$0xff]
                  %3827 = vst [vmem:[%s3819 + $0x30] sm:$0xff] %v3826
                  %v3828 = vld [vmem:[%s3818 + $0x20] sm:$0xff]
                  %3829 = vst [vmem:[%s3819 + $0x40] sm:$0xff] %v3828
                  %v3830 = vld [vmem:[%s3818 + $0x28] sm:$0xff]
                  %3831 = vst [vmem:[%s3819 + $0x50] sm:$0xff] %v3830
                  %v3832 = vld [vmem:[%s3818 + $0x30] sm:$0xff]
                  %3833 = vst [vmem:[%s3819 + $0x60] sm:$0xff] %v3832
                  %v3834 = vld [vmem:[%s3818 + $0x38] sm:$0xff]
                  %3835 = vst [vmem:[%s3819 + $0x70] sm:$0xff] %v3834
                  %v3836 = vld [vmem:[%s3818 + $0x40] sm:$0xff]
                  %3837 = vst [vmem:[%s3819 + $0x80] sm:$0xff] %v3836
                  %v3838 = vld [vmem:[%s3818 + $0x48] sm:$0xff]
                  %3839 = vst [vmem:[%s3819 + $0x90] sm:$0xff] %v3838
                  %v3840 = vld [vmem:[%s3818 + $0x50] sm:$0xff]
                  %3841 = vst [vmem:[%s3819 + $0xa0] sm:$0xff] %v3840
                  %v3842 = vld [vmem:[%s3818 + $0x58] sm:$0xff]
                  %3843 = vst [vmem:[%s3819 + $0xb0] sm:$0xff] %v3842
                  %v3844 = vld [vmem:[%s3818 + $0x60] sm:$0xff]
                  %3845 = vst [vmem:[%s3819 + $0xc0] sm:$0xff] %v3844
                  %v3846 = vld [vmem:[%s3818 + $0x68] sm:$0xff]
                  %3847 = vst [vmem:[%s3819 + $0xd0] sm:$0xff] %v3846
                  %v3848 = vld [vmem:[%s3818 + $0x70] sm:$0xff]
                  %3849 = vst [vmem:[%s3819 + $0xe0] sm:$0xff] %v3848
                  %v3850 = vld [vmem:[%s3818 + $0x78] sm:$0xff]
                  %3851 = vst [vmem:[%s3819 + $0xf0] sm:$0xff] %v3850
                $region121: #{mlp_forward.1} parent=115 // loop_footer
                  %s3817 = sadd.s32 1, %s3813
                $region122: #{mlp_forward.1} parent=115 // loop_footer_branch
                  %3812 = sbr.rel target = $region118
                $region123: #{mlp_forward.1} parent=115 // loop_exit
                  _
              $region116: #{mlp_forward.1} parent=100 // pred_fallthru
                _
              // Predicated region
              $region124: #{mlp_forward.1} parent=100 // pred_check
                _
              $region125: #{mlp_forward.1} parent=100 // pred_check_branch
                %3853 = sbr.rel target = $region127
              $region126: #{mlp_forward.1} parent=100 // pred_region
                _
              $region127: #{mlp_forward.1} parent=100 // pred_fallthru
                _
            $region101: #{mlp_forward.1} parent=96 // pred_fallthru
              _
            // Predicated region
            $region102: #{mlp_forward.1} parent=96 // pred_check
              _
            $region103: #{mlp_forward.1} parent=96 // pred_check_branch
              %3767 = sbr.rel target = $region105
            $region104: #{mlp_forward.1} parent=96 // pred_region
              %s3769 = ssub.s32 256, 1
              loop: start=0, step=1, limit=1
              $region106: #{mlp_forward.1} parent=104 // loop_pre_header
                _
              $region107: #{mlp_forward.1} parent=104 // loop_header
                %s3771 = sphi 0, %s3775
                %p3772 = scmp.ge.s32.totalorder %s3771, 1
                %s3776 = sphi %s3754, %s3754
                %s3777 = sphi %s3761, %s3761
              $region108: #{mlp_forward.1} parent=104 // loop_header_branch
                %3774 = sbr.rel (%p3772) target = $region112
              $region109: #{mlp_forward.1} parent=104 // loop_body
                %v3778 = vld [vmem:[%s3776] sm:%s3769]
                %3779 = vst [vmem:[%s3777] sm:%s3769] %v3778
                %v3780 = vld [vmem:[%s3776 + $0x8] sm:%s3769]
                %3781 = vst [vmem:[%s3777 + $0x10] sm:%s3769] %v3780
                %v3782 = vld [vmem:[%s3776 + $0x10] sm:%s3769]
                %3783 = vst [vmem:[%s3777 + $0x20] sm:%s3769] %v3782
                %v3784 = vld [vmem:[%s3776 + $0x18] sm:%s3769]
                %3785 = vst [vmem:[%s3777 + $0x30] sm:%s3769] %v3784
                %v3786 = vld [vmem:[%s3776 + $0x20] sm:%s3769]
                %3787 = vst [vmem:[%s3777 + $0x40] sm:%s3769] %v3786
                %v3788 = vld [vmem:[%s3776 + $0x28] sm:%s3769]
                %3789 = vst [vmem:[%s3777 + $0x50] sm:%s3769] %v3788
                %v3790 = vld [vmem:[%s3776 + $0x30] sm:%s3769]
                %3791 = vst [vmem:[%s3777 + $0x60] sm:%s3769] %v3790
                %v3792 = vld [vmem:[%s3776 + $0x38] sm:%s3769]
                %3793 = vst [vmem:[%s3777 + $0x70] sm:%s3769] %v3792
                %v3794 = vld [vmem:[%s3776 + $0x40] sm:%s3769]
                %3795 = vst [vmem:[%s3777 + $0x80] sm:%s3769] %v3794
                %v3796 = vld [vmem:[%s3776 + $0x48] sm:%s3769]
                %3797 = vst [vmem:[%s3777 + $0x90] sm:%s3769] %v3796
                %v3798 = vld [vmem:[%s3776 + $0x50] sm:%s3769]
                %3799 = vst [vmem:[%s3777 + $0xa0] sm:%s3769] %v3798
                %v3800 = vld [vmem:[%s3776 + $0x58] sm:%s3769]
                %3801 = vst [vmem:[%s3777 + $0xb0] sm:%s3769] %v3800
                %v3802 = vld [vmem:[%s3776 + $0x60] sm:%s3769]
                %3803 = vst [vmem:[%s3777 + $0xc0] sm:%s3769] %v3802
                %v3804 = vld [vmem:[%s3776 + $0x68] sm:%s3769]
                %3805 = vst [vmem:[%s3777 + $0xd0] sm:%s3769] %v3804
                %v3806 = vld [vmem:[%s3776 + $0x70] sm:%s3769]
                %3807 = vst [vmem:[%s3777 + $0xe0] sm:%s3769] %v3806
                %v3808 = vld [vmem:[%s3776 + $0x78] sm:%s3769]
                %3809 = vst [vmem:[%s3777 + $0xf0] sm:%s3769] %v3808
              $region110: #{mlp_forward.1} parent=104 // loop_footer
                %s3775 = sadd.s32 1, %s3771
              $region111: #{mlp_forward.1} parent=104 // loop_footer_branch
                %3770 = sbr.rel target = $region107
              $region112: #{mlp_forward.1} parent=104 // loop_exit
                _
            $region105: #{mlp_forward.1} parent=96 // pred_fallthru
              _
          $region97: #{mlp_forward.1} parent=92 // pred_fallthru
            _
          %3854 = vnop
        $region93: #{mlp_forward.1} parent=76 // pred_fallthru
          _
      $region77: #{mlp_forward.1} parent=5 // pred_fallthru
        _
      %p3855 = scmp.le.s32.totalorder 2, %s11
      // Predicated region
      $region128: #{mlp_forward.1} parent=5 // pred_check
        %p3856 = pneg %p3855
      $region129: #{mlp_forward.1} parent=5 // pred_check_branch
        %3858 = sbr.rel (%p3856) target = $region131
      $region130: #{mlp_forward.1} parent=5 // pred_region
        %s3859 = ssub.s32 %s11, 2
        // Predicated region
        $region132: #{mlp_forward.1} parent=130 // pred_check
          %p3860 = pneg %p188
        $region133: #{mlp_forward.1} parent=130 // pred_check_branch
          %3862 = sbr.rel (%p3860) target = $region135
        $region134: #{mlp_forward.1} parent=130 // pred_region
          %s3863 = sand.u32 %s173, 1
          %s3864 = sand.u32 %s173, 1
          %s3865 = smul.addr %s3864, 128
          %s3866 = scalar_lea.vmem [#allocation4], %s3865
        $region135: #{mlp_forward.1} parent=130 // pred_fallthru
          _
      $region131: #{mlp_forward.1} parent=5 // pred_fallthru
        _
    $region6: #{mlp_forward.1} parent=1 // loop_footer
      %s15 = sadd.s32 1, %s11
    $region7: #{mlp_forward.1} parent=1 // loop_footer_branch
      %10 = sbr.rel target = $region3
    $region8: #{mlp_forward.1} parent=1 // loop_exit
      _

// kernel: mlp_forward.1
$region0: #{mlp_forward.1}
  #allocation0 [shape = 'u32[]', space=smem, size = 0x4, offset = 0x4, fixed_abs, tag = 'smem constant byte address 0x4 - core index']
  #allocation1 [shape = 'u32[72,128]{1,0:T(1,128)}', space=vmem, size = 0x9000, scoped, tag = 'internal scratch']
  #allocation2 [shape = 'f32[128,128]{1,0:T(8,128)}', space=vmem, size = 0x10000, scoped, tag = 'scratch operand']
  %s0 = inlined_call_operand.vmem [shape: bf16[2,128,256], index: 0, kind: input, shape index: {}]
  %s1 = inlined_call_operand.vmem [shape: bf16[384,128], index: 1, kind: input, shape index: {}]
  %s2 = inlined_call_operand.vmem [shape: f32[384,1], index: 2, kind: input, shape index: {}]
  %s3 = inlined_call_operand.vmem [shape: bf16[128,384], index: 3, kind: input, shape index: {}]
  %s4 = inlined_call_operand.vmem [shape: f32[128,1], index: 4, kind: input, shape index: {}]
  %s5 = inlined_call_operand.vmem [shape: f32[2,128,256], index: 5, kind: output, shape index: {}]
  %s6 = sld [smem:[#allocation0]]
  $region136: #{mlp_forward.1} parent=0
    _
  %s8 = ssub.s32 1, %s6
  %s9 = scalar_select 0, %s8, %s6
  $region1: #{mlp_forward.1} parent=0
    #allocation3 [shape = 'u8[65536]{0}', space=vmem, size = 0x10000, scoped, tag = 'input window, operand 0']
    #allocation4 [shape = 'u8[131072]{0}', space=vmem, size = 0x20000, scoped, tag = 'output window, operand 0']
    loop: start=0, step=1, limit=6
    $region2: #{mlp_forward.1} parent=1 // loop_pre_header
      _
    $region3: #{mlp_forward.1} parent=1 // loop_header
      %s11 = sphi 0, %s15
      %p12 = scmp.ge.s32.totalorder %s11, 6
      %s18 = sphi 0, %s37
      %s19 = sphi 0, %s33
      %s20 = sphi 0, %s29
      %s21 = sphi 0, %s18
      %s22 = sphi 0, %s19
      %s23 = sphi 0, %s20
      %s24 = sphi 0, %s21
      %s25 = sphi 0, %s22
      %s26 = sphi 0, %s23
      %s42 = sphi 0, %s44
      %s45 = sphi 0, %s42
      %s46 = sphi 0, %s45
      %s62 = sphi 0, %s46
      %s68 = sphi 0, %s70
      %s71 = sphi 0, %s68
      %s72 = sphi 0, %s71
      %s88 = sphi 0, %s72
      %s94 = sphi 0, %s96
      %s97 = sphi 0, %s94
      %s98 = sphi 0, %s97
      %s114 = sphi 0, %s98
      %s120 = sphi 0, %s122
      %s123 = sphi 0, %s120
      %s124 = sphi 0, %s123
      %s140 = sphi 0, %s124
      %s144 = sphi 0, %s144
      %s146 = sphi 0, %s144
      %s147 = sphi 0, %s146
      %s161 = sphi 0, %s147
      %s169 = sphi 0, %s171
      %s172 = sphi 0, %s169
      %s173 = sphi 0, %s172
      %s189 = sphi 0, %s173
    $region4: #{mlp_forward.1} parent=1 // loop_header_branch
      %14 = sbr.rel (%p12) target = $region8
    $region5: #{mlp_forward.1} parent=1 // loop_body
      %s16 = ssub.s32 %s11, 1
      %s17 = ssub.s32 %s11, 2
      %s27 = sadd.s32 1, %s20
      %p28 = scmp.ge.s32.totalorder %s27, 1
      %s29 = scalar_select %p28, 0, %s27
      %s30 = sadd.s32 1, %s19
      %s31 = scalar_select %p28, %s30, %s19
      %p32 = scmp.ge.s32.totalorder %s31, 2
      %s33 = scalar_select %p32, 0, %s31
      %s34 = sadd.s32 1, %s18
      %s35 = scalar_select %p32, %s34, %s18
      %p36 = scmp.ge.s32.totalorder %s35, 2
      %s37 = scalar_select %p36, 0, %s35
      %s38 = ssub.s32 %s18, %s37
      %s39 = ssub.s32 %s19, %s33
      %s40 = sor.u32 %s38, %s39
      %p41 = scmp.eq.s32.totalorder %s40, 0
      %s43 = sadd.s32 %s42, 1
      %s44 = scalar_select %p41, %s42, %s43
      %p47 = pneg %p41
      %p48 = scmp.eq.s32.totalorder %s11, 3
      %p49 = por %p47, %p48
      %p50 = scmp.ne.s32.totalorder %s42, %s45
      %p51 = scmp.eq.s32.totalorder %s11, 0
      %p52 = por %p50, %p51
      %p53 = scmp.ne.s32.totalorder %s42, %s45
      %p54 = scmp.eq.s32.totalorder %s16, 3
      %p55 = por %p53, %p54
      %p56 = scmp.ne.s32.totalorder %s45, %s46
      %p57 = scmp.eq.s32.totalorder %s16, 0
      %p58 = por %p56, %p57
      %p59 = scmp.ne.s32.totalorder %s45, %s46
      %p60 = scmp.eq.s32.totalorder %s17, 3
      %p61 = por %p59, %p60
      %p63 = scmp.ne.s32.totalorder %s46, %s62
      %p64 = scmp.eq.s32.totalorder %s17, 0
      %p65 = por %p63, %p64
      %s66 = ssub.s32 %s20, %s29
      %p67 = scmp.eq.s32.totalorder %s66, 0
      %s69 = sadd.s32 %s68, 1
      %s70 = scalar_select %p67, %s68, %s69
      %p73 = pneg %p67
      %p74 = scmp.eq.s32.totalorder %s11, 3
      %p75 = por %p73, %p74
      %p76 = scmp.ne.s32.totalorder %s68, %s71
      %p77 = scmp.eq.s32.totalorder %s11, 0
      %p78 = por %p76, %p77
      %p79 = scmp.ne.s32.totalorder %s68, %s71
      %p80 = scmp.eq.s32.totalorder %s16, 3
      %p81 = por %p79, %p80
      %p82 = scmp.ne.s32.totalorder %s71, %s72
      %p83 = scmp.eq.s32.totalorder %s16, 0
      %p84 = por %p82, %p83
      %p85 = scmp.ne.s32.totalorder %s71, %s72
      %p86 = scmp.eq.s32.totalorder %s17, 3
      %p87 = por %p85, %p86
      %p89 = scmp.ne.s32.totalorder %s72, %s88
      %p90 = scmp.eq.s32.totalorder %s17, 0
      %p91 = por %p89, %p90
      %s92 = ssub.s32 %s20, %s29
      %p93 = scmp.eq.s32.totalorder %s92, 0
      %s95 = sadd.s32 %s94, 1
      %s96 = scalar_select %p93, %s94, %s95
      %p99 = pneg %p93
      %p100 = scmp.eq.s32.totalorder %s11, 3
      %p101 = por %p99, %p100
      %p102 = scmp.ne.s32.totalorder %s94, %s97
      %p103 = scmp.eq.s32.totalorder %s11, 0
      %p104 = por %p102, %p103
      %p105 = scmp.ne.s32.totalorder %s94, %s97
      %p106 = scmp.eq.s32.totalorder %s16, 3
      %p107 = por %p105, %p106
      %p108 = scmp.ne.s32.totalorder %s97, %s98
      %p109 = scmp.eq.s32.totalorder %s16, 0
      %p110 = por %p108, %p109
      %p111 = scmp.ne.s32.totalorder %s97, %s98
      %p112 = scmp.eq.s32.totalorder %s17, 3
      %p113 = por %p111, %p112
      %p115 = scmp.ne.s32.totalorder %s98, %s114
      %p116 = scmp.eq.s32.totalorder %s17, 0
      %p117 = por %p115, %p116
      %s118 = ssub.s32 %s20, %s29
      %p119 = scmp.eq.s32.totalorder %s118, 0
      %s121 = sadd.s32 %s120, 1
      %s122 = scalar_select %p119, %s120, %s121
      %p125 = pneg %p119
      %p126 = scmp.eq.s32.totalorder %s11, 3
      %p127 = por %p125, %p126
      %p128 = scmp.ne.s32.totalorder %s120, %s123
      %p129 = scmp.eq.s32.totalorder %s11, 0
      %p130 = por %p128, %p129
      %p131 = scmp.ne.s32.totalorder %s120, %s123
      %p132 = scmp.eq.s32.totalorder %s16, 3
      %p133 = por %p131, %p132
      %p134 = scmp.ne.s32.totalorder %s123, %s124
      %p135 = scmp.eq.s32.totalorder %s16, 0
      %p136 = por %p134, %p135
      %p137 = scmp.ne.s32.totalorder %s123, %s124
      %p138 = scmp.eq.s32.totalorder %s17, 3
      %p139 = por %p137, %p138
      %p141 = scmp.ne.s32.totalorder %s124, %s140
      %p142 = scmp.eq.s32.totalorder %s17, 0
      %p143 = por %p141, %p142
      %s145 = sadd.s32 %s144, 1
      %p148 = scmp.eq.s32.totalorder %s11, 3
      %p149 = scmp.ne.s32.totalorder %s144, %s146
      %p150 = scmp.eq.s32.totalorder %s11, 0
      %p151 = por %p149, %p150
      %p152 = scmp.ne.s32.totalorder %s144, %s146
      %p153 = scmp.eq.s32.totalorder %s16, 3
      %p154 = por %p152, %p153
      %p155 = scmp.ne.s32.totalorder %s146, %s147
      %p156 = scmp.eq.s32.totalorder %s16, 0
      %p157 = por %p155, %p156
      %p158 = scmp.ne.s32.totalorder %s146, %s147
      %p159 = scmp.eq.s32.totalorder %s17, 3
      %p160 = por %p158, %p159
      %p162 = scmp.ne.s32.totalorder %s147, %s161
      %p163 = scmp.eq.s32.totalorder %s17, 0
      %p164 = por %p162, %p163
      %s165 = ssub.s32 %s18, %s37
      %s166 = ssub.s32 %s19, %s33
      %s167 = sor.u32 %s165, %s166
      %p168 = scmp.eq.s32.totalorder %s167, 0
      %s170 = sadd.s32 %s169, 1
      %s171 = scalar_select %p168, %s169, %s170
      %p174 = pneg %p168
      %p175 = scmp.eq.s32.totalorder %s11, 3
      %p176 = por %p174, %p175
      %p177 = scmp.ne.s32.totalorder %s169, %s172
      %p178 = scmp.eq.s32.totalorder %s11, 0
      %p179 = por %p177, %p178
      %p180 = scmp.ne.s32.totalorder %s169, %s172
      %p181 = scmp.eq.s32.totalorder %s16, 3
      %p182 = por %p180, %p181
      %p183 = scmp.ne.s32.totalorder %s172, %s173
      %p184 = scmp.eq.s32.totalorder %s16, 0
      %p185 = por %p183, %p184
      %p186 = scmp.ne.s32.totalorder %s172, %s173
      %p187 = scmp.eq.s32.totalorder %s17, 3
      %p188 = por %p186, %p187
      %p190 = scmp.ne.s32.totalorder %s173, %s189
      %p191 = scmp.eq.s32.totalorder %s17, 0
      %p192 = por %p190, %p191
      %p193 = scmp.le.s32.totalorder 1, %s11
      %p194 = scmp.lt.s32.totalorder %s11, 5
      %p195 = pnand %p193, %p194
      %p196 = pneg %p195
      // Predicated region
      $region9: #{mlp_forward.1} parent=5 // pred_check
        _
      $region10: #{mlp_forward.1} parent=5 // pred_check_branch
        %198 = sbr.rel (%p195) target = $region12
      $region11: #{mlp_forward.1} parent=5 // pred_region
        %s199 = ssub.s32 %s11, 1
        // Predicated region
        $region13: #{mlp_forward.1} parent=11 // pred_check
          %p200 = pneg %p84
        $region14: #{mlp_forward.1} parent=11 // pred_check_branch
          %202 = sbr.rel (%p200) target = $region16
        $region15: #{mlp_forward.1} parent=11 // pred_region
          %s203 = smul.u32 48, %s23
          %p204 = scmp.lt.s32.totalorder %s203, 47
          %s205 = scalar_select %p204, %s203, 47
          %s206 = smul.addr %s205, 4
          %s207 = scalar_lea.vmem %s1, %s206
          %s208 = smul.u32 48, %s23
        $region16: #{mlp_forward.1} parent=11 // pred_fallthru
          _
        // Predicated region
        $region17: #{mlp_forward.1} parent=11 // pred_check
          %p209 = pneg %p110
        $region18: #{mlp_forward.1} parent=11 // pred_check_branch
          %211 = sbr.rel (%p209) target = $region20
        $region19: #{mlp_forward.1} parent=11 // pred_region
          %s212 = smul.u32 48, %s23
          %p213 = scmp.lt.s32.totalorder %s212, 47
          %s214 = scalar_select %p213, %s212, 47
          %s215 = smul.addr %s214, 8
          %s216 = scalar_lea.vmem %s2, %s215
          %s217 = smul.u32 48, %s23
        $region20: #{mlp_forward.1} parent=11 // pred_fallthru
          _
        // Predicated region
        $region21: #{mlp_forward.1} parent=11 // pred_check
          %p218 = pneg %p136
        $region22: #{mlp_forward.1} parent=11 // pred_check_branch
          %220 = sbr.rel (%p218) target = $region24
        $region23: #{mlp_forward.1} parent=11 // pred_region
          %s221 = smul.u32 3, %s23
          %p222 = scmp.lt.s32.totalorder %s221, 2
          %s223 = scalar_select %p222, %s221, 2
          %s224 = smul.addr %s223, 4
          %s225 = scalar_lea.vmem %s3, %s224
          %s226 = smul.u32 3, %s23
        $region24: #{mlp_forward.1} parent=11 // pred_fallthru
          _
        // Predicated region
        $region25: #{mlp_forward.1} parent=11 // pred_check
          %p227 = pneg %p157
        $region26: #{mlp_forward.1} parent=11 // pred_check_branch
          %229 = sbr.rel (%p227) target = $region28
        $region27: #{mlp_forward.1} parent=11 // pred_region
          _
        $region28: #{mlp_forward.1} parent=11 // pred_fallthru
          _
      $region12: #{mlp_forward.1} parent=5 // pred_fallthru
        _
      %p230 = scmp.lt.s32.totalorder %s11, 4
      // Predicated region
      $region29: #{mlp_forward.1} parent=5 // pred_check
        %p231 = pneg %p230
      $region30: #{mlp_forward.1} parent=5 // pred_check_branch
        %233 = sbr.rel (%p231) target = $region32
      $region31: #{mlp_forward.1} parent=5 // pred_region
        // Predicated region
        $region33: #{mlp_forward.1} parent=31 // pred_check
          %p234 = pneg %p52
        $region34: #{mlp_forward.1} parent=31 // pred_check_branch
          %236 = sbr.rel (%p234) target = $region36
        $region35: #{mlp_forward.1} parent=31 // pred_region
          %s237 = sand.u32 %s42, 1
          %s238 = sand.u32 %s42, 1
          %s239 = smul.addr %s238, 64
          %s240 = scalar_lea.vmem [#allocation3], %s239
          %s241 = smul.addr %s18, 32
          %s242 = sadd.s32 %s19, %s241
          %s243 = smul.addr %s242, 4
          %s244 = scalar_lea.vmem %s0, %s243
          // Predicated region
          $region37: #{mlp_forward.1} parent=35 // pred_check
            _
          $region38: #{mlp_forward.1} parent=35 // pred_check_branch
            %246 = sbr.rel (0) target = $region40
          $region39: #{mlp_forward.1} parent=35 // pred_region
            // Predicated region
            $region41: #{mlp_forward.1} parent=39 // pred_check
              _
            $region42: #{mlp_forward.1} parent=39 // pred_check_branch
              %248 = sbr.rel target = $region44
            $region43: #{mlp_forward.1} parent=39 // pred_region
              // Predicated region
              $region56: #{mlp_forward.1} parent=43 // pred_check
                _
              $region57: #{mlp_forward.1} parent=43 // pred_check_branch
                %294 = sbr.rel (0) target = $region59
              $region58: #{mlp_forward.1} parent=43 // pred_region
                loop: start=0, step=1, limit=1
                $region60: #{mlp_forward.1} parent=58 // loop_pre_header
                  _
                $region61: #{mlp_forward.1} parent=58 // loop_header
                  %s296 = sphi 0, %s300
                  %p297 = scmp.ge.s32.totalorder %s296, 1
                  %s301 = sphi %s244, %s244
                  %s302 = sphi %s240, %s240
                $region62: #{mlp_forward.1} parent=58 // loop_header_branch
                  %299 = sbr.rel (%p297) target = $region66
                $region63: #{mlp_forward.1} parent=58 // loop_body
                  _
                $region64: #{mlp_forward.1} parent=58 // loop_footer
                  %s300 = sadd.s32 1, %s296
                $region65: #{mlp_forward.1} parent=58 // loop_footer_branch
                  %295 = sbr.rel target = $region61
                $region66: #{mlp_forward.1} parent=58 // loop_exit
                  _
                %s304 = ssub.s32 16, 1
                loop: start=0, step=1, limit=1
                $region67: #{mlp_forward.1} parent=58 // loop_pre_header
                  _
                $region68: #{mlp_forward.1} parent=58 // loop_header
                  %s306 = sphi 0, %s310
                  %p307 = scmp.ge.s32.totalorder %s306, 1
                  %s311 = sphi %s244, %s244
                  %s312 = sphi %s240, %s240
                $region69: #{mlp_forward.1} parent=58 // loop_header_branch
                  %309 = sbr.rel (%p307) target = $region73
                $region70: #{mlp_forward.1} parent=58 // loop_body
                  %v313 = vld [vmem:[%s311] sm:%s304]
                  %314 = vst [vmem:[%s312] sm:%s304] %v313
                  %v315 = vld [vmem:[%s311 + $0x8] sm:%s304]
                  %316 = vst [vmem:[%s312 + $0x4] sm:%s304] %v315
                  %v317 = vld [vmem:[%s311 + $0x10] sm:%s304]
                  %318 = vst [vmem:[%s312 + $0x8] sm:%s304] %v317
                  %v319 = vld [vmem:[%s311 + $0x18] sm:%s304]
                  %320 = vst [vmem:[%s312 + $0xc] sm:%s304] %v319
                  %v321 = vld [vmem:[%s311 + $0x20] sm:%s304]
                  %322 = vst [vmem:[%s312 + $0x10] sm:%s304] %v321
                  %v323 = vld [vmem:[%s311 + $0x28] sm:%s304]
                  %324 = vst [vmem:[%s312 + $0x14] sm:%s304] %v323
                  %v325 = vld [vmem:[%s311 + $0x30] sm:%s304]
                  %326 = vst [vmem:[%s312 + $0x18] sm:%s304] %v325
                  %v327 = vld [vmem:[%s311 + $0x38] sm:%s304]
                  %328 = vst [vmem:[%s312 + $0x1c] sm:%s304] %v327
                  %v329 = vld [vmem:[%s311 + $0x40] sm:%s304]
                  %330 = vst [vmem:[%s312 + $0x20] sm:%s304] %v329
                  %v331 = vld [vmem:[%s311 + $0x48] sm:%s304]
                  %332 = vst [vmem:[%s312 + $0x24] sm:%s304] %v331
                  %v333 = vld [vmem:[%s311 + $0x50] sm:%s304]
                  %334 = vst [vmem:[%s312 + $0x28] sm:%s304] %v333
                  %v335 = vld [vmem:[%s311 + $0x58] sm:%s304]
                  %336 = vst [vmem:[%s312 + $0x2c] sm:%s304] %v335
                  %v337 = vld [vmem:[%s311 + $0x60] sm:%s304]
                  %338 = vst [vmem:[%s312 + $0x30] sm:%s304] %v337
                  %v339 = vld [vmem:[%s311 + $0x68] sm:%s304]
                  %340 = vst [vmem:[%s312 + $0x34] sm:%s304] %v339
                  %v341 = vld [vmem:[%s311 + $0x70] sm:%s304]
                  %342 = vst [vmem:[%s312 + $0x38] sm:%s304] %v341
                  %v343 = vld [vmem:[%s311 + $0x78] sm:%s304]
                  %344 = vst [vmem:[%s312 + $0x3c] sm:%s304] %v343
                $region71: #{mlp_forward.1} parent=58 // loop_footer
                  %s310 = sadd.s32 1, %s306
                $region72: #{mlp_forward.1} parent=58 // loop_footer_branch
                  %305 = sbr.rel target = $region68
                $region73: #{mlp_forward.1} parent=58 // loop_exit
                  _
              $region59: #{mlp_forward.1} parent=43 // pred_fallthru
                _
            $region44: #{mlp_forward.1} parent=39 // pred_fallthru
              _
            // Predicated region
            $region45: #{mlp_forward.1} parent=39 // pred_check
              _
            $region46: #{mlp_forward.1} parent=39 // pred_check_branch
              %250 = sbr.rel (0) target = $region48
            $region47: #{mlp_forward.1} parent=39 // pred_region
              %s252 = ssub.s32 16, 1
              loop: start=0, step=1, limit=1
              $region49: #{mlp_forward.1} parent=47 // loop_pre_header
                _
              $region50: #{mlp_forward.1} parent=47 // loop_header
                %s254 = sphi 0, %s258
                %p255 = scmp.ge.s32.totalorder %s254, 1
                %s259 = sphi %s244, %s244
                %s260 = sphi %s240, %s240
              $region51: #{mlp_forward.1} parent=47 // loop_header_branch
                %257 = sbr.rel (%p255) target = $region55
              $region52: #{mlp_forward.1} parent=47 // loop_body
                %v261 = vld [vmem:[%s259] sm:%s252]
                %262 = vst [vmem:[%s260] sm:%s252] %v261
                %v263 = vld [vmem:[%s259 + $0x8] sm:%s252]
                %264 = vst [vmem:[%s260 + $0x4] sm:%s252] %v263
                %v265 = vld [vmem:[%s259 + $0x10] sm:%s252]
                %266 = vst [vmem:[%s260 + $0x8] sm:%s252] %v265
                %v267 = vld [vmem:[%s259 + $0x18] sm:%s252]
                %268 = vst [vmem:[%s260 + $0xc] sm:%s252] %v267
                %v269 = vld [vmem:[%s259 + $0x20] sm:%s252]
                %270 = vst [vmem:[%s260 + $0x10] sm:%s252] %v269
                %v271 = vld [vmem:[%s259 + $0x28] sm:%s252]
                %272 = vst [vmem:[%s260 + $0x14] sm:%s252] %v271
                %v273 = vld [vmem:[%s259 + $0x30] sm:%s252]
                %274 = vst [vmem:[%s260 + $0x18] sm:%s252] %v273
                %v275 = vld [vmem:[%s259 + $0x38] sm:%s252]
                %276 = vst [vmem:[%s260 + $0x1c] sm:%s252] %v275
                %v277 = vld [vmem:[%s259 + $0x40] sm:%s252]
                %278 = vst [vmem:[%s260 + $0x20] sm:%s252] %v277
                %v279 = vld [vmem:[%s259 + $0x48] sm:%s252]
                %280 = vst [vmem:[%s260 + $0x24] sm:%s252] %v279
                %v281 = vld [vmem:[%s259 + $0x50] sm:%s252]
                %282 = vst [vmem:[%s260 + $0x28] sm:%s252] %v281
                %v283 = vld [vmem:[%s259 + $0x58] sm:%s252]
                %284 = vst [vmem:[%s260 + $0x2c] sm:%s252] %v283
                %v285 = vld [vmem:[%s259 + $0x60] sm:%s252]
                %286 = vst [vmem:[%s260 + $0x30] sm:%s252] %v285
                %v287 = vld [vmem:[%s259 + $0x68] sm:%s252]
                %288 = vst [vmem:[%s260 + $0x34] sm:%s252] %v287
                %v289 = vld [vmem:[%s259 + $0x70] sm:%s252]
                %290 = vst [vmem:[%s260 + $0x38] sm:%s252] %v289
                %v291 = vld [vmem:[%s259 + $0x78] sm:%s252]
                %292 = vst [vmem:[%s260 + $0x3c] sm:%s252] %v291
              $region53: #{mlp_forward.1} parent=47 // loop_footer
                %s258 = sadd.s32 1, %s254
              $region54: #{mlp_forward.1} parent=47 // loop_footer_branch
                %253 = sbr.rel target = $region50
              $region55: #{mlp_forward.1} parent=47 // loop_exit
                _
            $region48: #{mlp_forward.1} parent=39 // pred_fallthru
              _
          $region40: #{mlp_forward.1} parent=35 // pred_fallthru
            _
          %345 = vnop
        $region36: #{mlp_forward.1} parent=31 // pred_fallthru
          _
      $region32: #{mlp_forward.1} parent=5 // pred_fallthru
        _
      %p346 = scmp.le.s32.totalorder 1, %s11
      %p347 = scmp.lt.s32.totalorder %s11, 5
      %p348 = pnand %p346, %p347
      %p349 = pneg %p348
      // Predicated region
      $region74: #{mlp_forward.1} parent=5 // pred_check
        _
      $region75: #{mlp_forward.1} parent=5 // pred_check_branch
        %351 = sbr.rel (%p348) target = $region77
      $region76: #{mlp_forward.1} parent=5 // pred_region
        %s352 = ssub.s32 %s11, 1
        %s353 = sand.u32 %s45, 1
        %s354 = sand.u32 %s45, 1
        %s355 = smul.addr %s354, 64
        %s356 = scalar_lea.vmem [#allocation3], %s355
        // Predicated region
        $region78: #{mlp_forward.1} parent=76 // pred_check
          %p357 = pneg %p58
        $region79: #{mlp_forward.1} parent=76 // pred_check_branch
          %359 = sbr.rel (%p357) target = $region81
        $region80: #{mlp_forward.1} parent=76 // pred_region
          _
        $region81: #{mlp_forward.1} parent=76 // pred_fallthru
          _
        %s360 = sand.u32 %s45, 1
        %s361 = sand.u32 %s45, 1
        %s362 = smul.addr %s361, 64
        %s363 = scalar_lea.vmem [#allocation3], %s362
        %p364 = pneg %p58
        %p365 = pneg %p55
        %s366 = smul.u32 48, %s23
        %p367 = scmp.lt.s32.totalorder %s366, 47
        %s368 = scalar_select %p367, %s366, 47
        %s369 = smul.addr %s368, 4
        %s370 = scalar_lea.vmem %s1, %s369
        %p371 = pneg %p84
        %p372 = pneg %p81
        %s373 = smul.u32 48, %s23
        %p374 = scmp.lt.s32.totalorder %s373, 47
        %s375 = scalar_select %p374, %s373, 47
        %s376 = smul.addr %s375, 8
        %s377 = scalar_lea.vmem %s2, %s376
        %p378 = pneg %p110
        %p379 = pneg %p107
        %s380 = smul.u32 3, %s23
        %p381 = scmp.lt.s32.totalorder %s380, 2
        %s382 = scalar_select %p381, %s380, 2
        %s383 = smul.addr %s382, 4
        %s384 = scalar_lea.vmem %s3, %s383
        %p385 = pneg %p136
        %p386 = pneg %p133
        %p387 = pneg %p157
        %p388 = pneg %p154
        %p389 = pneg %p185
        %p390 = pneg %p182
        %s391 = sand.u32 %s172, 1
        %s392 = sand.u32 %s172, 1
        %s393 = smul.addr %s392, 128
        %s394 = scalar_lea.vmem [#allocation4], %s393
        %s395 = smul.u32 48, %s23
        %p396 = scmp.lt.s32.totalorder %s395, 47
        %s397 = scalar_select %p396, %s395, 47
        %s398 = smul.addr %s397, 4
        %s399 = scalar_lea.vmem %s1, %s398
        %s400 = smul.u32 48, %s23
        %s401 = smul.u32 48, %s23
        %p402 = scmp.lt.s32.totalorder %s401, 47
        %s403 = scalar_select %p402, %s401, 47
        %s404 = smul.addr %s403, 8
        %s405 = scalar_lea.vmem %s2, %s404
        %s406 = smul.u32 48, %s23
        %s407 = smul.u32 3, %s23
        %p408 = scmp.lt.s32.totalorder %s407, 2
        %s409 = scalar_select %p408, %s407, 2
        %s410 = smul.addr %s409, 4
        %s411 = scalar_lea.vmem %s3, %s410
        %s412 = smul.u32 3, %s23
        %p413 = scmp.eq.s32.totalorder %s23, 0
        // Predicated region
        $region82: #{mlp_forward.1} parent=76 // pred_check
          %p414 = pneg %p413
        $region83: #{mlp_forward.1} parent=76 // pred_check_branch
          %416 = sbr.rel (%p414) target = $region85
        $region84: #{mlp_forward.1} parent=76 // pred_region
          %417 = vst [vmem:[#allocation2] sm:$0xff] 0.0
          %418 = vst [vmem:[#allocation2 + $0x8] sm:$0xff] 0.0
          %419 = vst [vmem:[#allocation2 + $0x10] sm:$0xff] 0.0
          %420 = vst [vmem:[#allocation2 + $0x18] sm:$0xff] 0.0
          %421 = vst [vmem:[#allocation2 + $0x20] sm:$0xff] 0.0
          %422 = vst [vmem:[#allocation2 + $0x28] sm:$0xff] 0.0
          %423 = vst [vmem:[#allocation2 + $0x30] sm:$0xff] 0.0
          %424 = vst [vmem:[#allocation2 + $0x38] sm:$0xff] 0.0
          %425 = vst [vmem:[#allocation2 + $0x40] sm:$0xff] 0.0
          %426 = vst [vmem:[#allocation2 + $0x48] sm:$0xff] 0.0
          %427 = vst [vmem:[#allocation2 + $0x50] sm:$0xff] 0.0
          %428 = vst [vmem:[#allocation2 + $0x58] sm:$0xff] 0.0
          %429 = vst [vmem:[#allocation2 + $0x60] sm:$0xff] 0.0
          %430 = vst [vmem:[#allocation2 + $0x68] sm:$0xff] 0.0
          %431 = vst [vmem:[#allocation2 + $0x70] sm:$0xff] 0.0
          %432 = vst [vmem:[#allocation2 + $0x78] sm:$0xff] 0.0
        $region85: #{mlp_forward.1} parent=76 // pred_fallthru
          _
        %v433 = vld [vmem:[%s356] sm:$0xf]
        %v434 = vld [vmem:[%s356 + $0x4] sm:$0xf]
        %v435 = vld [vmem:[%s356 + $0x8] sm:$0xf]
        %v436 = vld [vmem:[%s356 + $0xc] sm:$0xf]
        %v437 = vld [vmem:[%s356 + $0x10] sm:$0xf]
        %v438 = vld [vmem:[%s356 + $0x14] sm:$0xf]
        %v439 = vld [vmem:[%s356 + $0x18] sm:$0xf]
        %v440 = vld [vmem:[%s356 + $0x1c] sm:$0xf]
        %v441 = vld [vmem:[%s356 + $0x20] sm:$0xf]
        %v442 = vld [vmem:[%s356 + $0x24] sm:$0xf]
        %v443 = vld [vmem:[%s356 + $0x28] sm:$0xf]
        %v444 = vld [vmem:[%s356 + $0x2c] sm:$0xf]
        %v445 = vld [vmem:[%s356 + $0x30] sm:$0xf]
        %v446 = vld [vmem:[%s356 + $0x34] sm:$0xf]
        %v447 = vld [vmem:[%s356 + $0x38] sm:$0xf]
        %v448 = vld [vmem:[%s356 + $0x3c] sm:$0xf]
        %v449 = vld [vmem:[%s399] sm:$0xf]
        %v450 = vld [vmem:[%s399 + $0x4] sm:$0xf]
        %v451 = vld [vmem:[%s399 + $0x8] sm:$0xf]
        %v452 = vld [vmem:[%s399 + $0xc] sm:$0xf]
        %v453 = vld [vmem:[%s399 + $0x10] sm:$0xf]
        %v454 = vld [vmem:[%s399 + $0x14] sm:$0xf]
        %v455 = vld [vmem:[%s399 + $0x18] sm:$0xf]
        %v456 = vld [vmem:[%s399 + $0x1c] sm:$0xf]
        %v457 = vld [vmem:[%s399 + $0x20] sm:$0xf]
        %v458 = vld [vmem:[%s399 + $0x24] sm:$0xf]
        %v459 = vld [vmem:[%s399 + $0x28] sm:$0xf]
        %v460 = vld [vmem:[%s399 + $0x2c] sm:$0xf]
        %v461 = vld [vmem:[%s399 + $0x30] sm:$0xf]
        %v462 = vld [vmem:[%s399 + $0x34] sm:$0xf]
        %v463 = vld [vmem:[%s399 + $0x38] sm:$0xf]
        %v464 = vld [vmem:[%s399 + $0x3c] sm:$0xf]
        %v465 = vld [vmem:[%s399 + $0x40] sm:$0xf]
        %v466 = vld [vmem:[%s399 + $0x44] sm:$0xf]
        %v467 = vld [vmem:[%s399 + $0x48] sm:$0xf]
        %v468 = vld [vmem:[%s399 + $0x4c] sm:$0xf]
        %v469 = vld [vmem:[%s399 + $0x50] sm:$0xf]
        %v470 = vld [vmem:[%s399 + $0x54] sm:$0xf]
        %v471 = vld [vmem:[%s399 + $0x58] sm:$0xf]
        %v472 = vld [vmem:[%s399 + $0x5c] sm:$0xf]
        %v473 = vld [vmem:[%s399 + $0x60] sm:$0xf]
        %v474 = vld [vmem:[%s399 + $0x64] sm:$0xf]
        %v475 = vld [vmem:[%s399 + $0x68] sm:$0xf]
        %v476 = vld [vmem:[%s399 + $0x6c] sm:$0xf]
        %v477 = vld [vmem:[%s399 + $0x70] sm:$0xf]
        %v478 = vld [vmem:[%s399 + $0x74] sm:$0xf]
        %v479 = vld [vmem:[%s399 + $0x78] sm:$0xf]
        %v480 = vld [vmem:[%s399 + $0x7c] sm:$0xf]
        %v481 = vld [vmem:[%s399 + $0x80] sm:$0xf]
        %v482 = vld [vmem:[%s399 + $0x84] sm:$0xf]
        %v483 = vld [vmem:[%s399 + $0x88] sm:$0xf]
        %v484 = vld [vmem:[%s399 + $0x8c] sm:$0xf]
        %v485 = vld [vmem:[%s399 + $0x90] sm:$0xf]
        %v486 = vld [vmem:[%s399 + $0x94] sm:$0xf]
        %v487 = vld [vmem:[%s399 + $0x98] sm:$0xf]
        %v488 = vld [vmem:[%s399 + $0x9c] sm:$0xf]
        %v489 = vld [vmem:[%s399 + $0xa0] sm:$0xf]
        %v490 = vld [vmem:[%s399 + $0xa4] sm:$0xf]
        %v491 = vld [vmem:[%s399 + $0xa8] sm:$0xf]
        %v492 = vld [vmem:[%s399 + $0xac] sm:$0xf]
        %v493 = vld [vmem:[%s399 + $0xb0] sm:$0xf]
        %v494 = vld [vmem:[%s399 + $0xb4] sm:$0xf]
        %v495 = vld [vmem:[%s399 + $0xb8] sm:$0xf]
        %v496 = vld [vmem:[%s399 + $0xbc] sm:$0xf]
        %v497 = vld [vmem:[%s405] sm:$0xff]
        %v498 = vld [vmem:[%s405 + $0x8] sm:$0xff]
        %v499 = vld [vmem:[%s405 + $0x10] sm:$0xff]
        %v500 = vld [vmem:[%s405 + $0x18] sm:$0xff]
        %v501 = vld [vmem:[%s405 + $0x20] sm:$0xff]
        %v502 = vld [vmem:[%s405 + $0x28] sm:$0xff]
        %v503 = vld [vmem:[%s405 + $0x30] sm:$0xff]
        %v504 = vld [vmem:[%s405 + $0x38] sm:$0xff]
        %v505 = vld [vmem:[%s405 + $0x40] sm:$0xff]
        %v506 = vld [vmem:[%s405 + $0x48] sm:$0xff]
        %v507 = vld [vmem:[%s405 + $0x50] sm:$0xff]
        %v508 = vld [vmem:[%s405 + $0x58] sm:$0xff]
        %v509 = vld [vmem:[%s405 + $0x60] sm:$0xff]
        %v510 = vld [vmem:[%s405 + $0x68] sm:$0xff]
        %v511 = vld [vmem:[%s405 + $0x70] sm:$0xff]
        %v512 = vld [vmem:[%s405 + $0x78] sm:$0xff]
        %v513 = vld [vmem:[%s405 + $0x80] sm:$0xff]
        %v514 = vld [vmem:[%s405 + $0x88] sm:$0xff]
        %v515 = vld [vmem:[%s405 + $0x90] sm:$0xff]
        %v516 = vld [vmem:[%s405 + $0x98] sm:$0xff]
        %v517 = vld [vmem:[%s405 + $0xa0] sm:$0xff]
        %v518 = vld [vmem:[%s405 + $0xa8] sm:$0xff]
        %v519 = vld [vmem:[%s405 + $0xb0] sm:$0xff]
        %v520 = vld [vmem:[%s405 + $0xb8] sm:$0xff]
        %v521 = vld [vmem:[%s405 + $0xc0] sm:$0xff]
        %v522 = vld [vmem:[%s405 + $0xc8] sm:$0xff]
        %v523 = vld [vmem:[%s405 + $0xd0] sm:$0xff]
        %v524 = vld [vmem:[%s405 + $0xd8] sm:$0xff]
        %v525 = vld [vmem:[%s405 + $0xe0] sm:$0xff]
        %v526 = vld [vmem:[%s405 + $0xe8] sm:$0xff]
        %v527 = vld [vmem:[%s405 + $0xf0] sm:$0xff]
        %v528 = vld [vmem:[%s405 + $0xf8] sm:$0xff]
        %v529 = vld [vmem:[%s405 + $0x100] sm:$0xff]
        %v530 = vld [vmem:[%s405 + $0x108] sm:$0xff]
        %v531 = vld [vmem:[%s405 + $0x110] sm:$0xff]
        %v532 = vld [vmem:[%s405 + $0x118] sm:$0xff]
        %v533 = vld [vmem:[%s405 + $0x120] sm:$0xff]
        %v534 = vld [vmem:[%s405 + $0x128] sm:$0xff]
        %v535 = vld [vmem:[%s405 + $0x130] sm:$0xff]
        %v536 = vld [vmem:[%s405 + $0x138] sm:$0xff]
        %v537 = vld [vmem:[%s405 + $0x140] sm:$0xff]
        %v538 = vld [vmem:[%s405 + $0x148] sm:$0xff]
        %v539 = vld [vmem:[%s405 + $0x150] sm:$0xff]
        %v540 = vld [vmem:[%s405 + $0x158] sm:$0xff]
        %v541 = vld [vmem:[%s405 + $0x160] sm:$0xff]
        %v542 = vld [vmem:[%s405 + $0x168] sm:$0xff]
        %v543 = vld [vmem:[%s405 + $0x170] sm:$0xff]
        %v544 = vld [vmem:[%s405 + $0x178] sm:$0xff]
        %546 = vset.pattern.permute.xlu0 0
        %547 = vperm.xlu0 %546, %v497
        %v548 = vpop.permute.xlu0 %547
        %551 = vset.pattern.permute.xlu0 0
        %552 = vperm.xlu0 %551, %v498
        %v553 = vpop.permute.xlu0 %552
        %556 = vset.pattern.permute.xlu0 0
        %557 = vperm.xlu0 %556, %v499
        %v558 = vpop.permute.xlu0 %557
        %561 = vset.pattern.permute.xlu0 0
        %562 = vperm.xlu0 %561, %v500
        %v563 = vpop.permute.xlu0 %562
        %566 = vset.pattern.permute.xlu0 0
        %567 = vperm.xlu0 %566, %v501
        %v568 = vpop.permute.xlu0 %567
        %571 = vset.pattern.permute.xlu0 0
        %572 = vperm.xlu0 %571, %v502
        %v573 = vpop.permute.xlu0 %572
        %576 = vset.pattern.permute.xlu0 0
        %577 = vperm.xlu0 %576, %v503
        %v578 = vpop.permute.xlu0 %577
        %581 = vset.pattern.permute.xlu0 0
        %582 = vperm.xlu0 %581, %v504
        %v583 = vpop.permute.xlu0 %582
        %586 = vset.pattern.permute.xlu0 0
        %587 = vperm.xlu0 %586, %v505
        %v588 = vpop.permute.xlu0 %587
        %591 = vset.pattern.permute.xlu0 0
        %592 = vperm.xlu0 %591, %v506
        %v593 = vpop.permute.xlu0 %592
        %596 = vset.pattern.permute.xlu0 0
        %597 = vperm.xlu0 %596, %v507
        %v598 = vpop.permute.xlu0 %597
        %601 = vset.pattern.permute.xlu0 0
        %602 = vperm.xlu0 %601, %v508
        %v603 = vpop.permute.xlu0 %602
        %606 = vset.pattern.permute.xlu0 0
        %607 = vperm.xlu0 %606, %v509
        %v608 = vpop.permute.xlu0 %607
        %611 = vset.pattern.permute.xlu0 0
        %612 = vperm.xlu0 %611, %v510
        %v613 = vpop.permute.xlu0 %612
        %616 = vset.pattern.permute.xlu0 0
        %617 = vperm.xlu0 %616, %v511
        %v618 = vpop.permute.xlu0 %617
        %621 = vset.pattern.permute.xlu0 0
        %622 = vperm.xlu0 %621, %v512
        %v623 = vpop.permute.xlu0 %622
        %626 = vset.pattern.permute.xlu0 0
        %627 = vperm.xlu0 %626, %v513
        %v628 = vpop.permute.xlu0 %627
        %631 = vset.pattern.permute.xlu0 0
        %632 = vperm.xlu0 %631, %v514
        %v633 = vpop.permute.xlu0 %632
        %636 = vset.pattern.permute.xlu0 0
        %637 = vperm.xlu0 %636, %v515
        %v638 = vpop.permute.xlu0 %637
        %641 = vset.pattern.permute.xlu0 0
        %642 = vperm.xlu0 %641, %v516
        %v643 = vpop.permute.xlu0 %642
        %646 = vset.pattern.permute.xlu0 0
        %647 = vperm.xlu0 %646, %v517
        %v648 = vpop.permute.xlu0 %647
        %651 = vset.pattern.permute.xlu0 0
        %652 = vperm.xlu0 %651, %v518
        %v653 = vpop.permute.xlu0 %652
        %656 = vset.pattern.permute.xlu0 0
        %657 = vperm.xlu0 %656, %v519
        %v658 = vpop.permute.xlu0 %657
        %661 = vset.pattern.permute.xlu0 0
        %662 = vperm.xlu0 %661, %v520
        %v663 = vpop.permute.xlu0 %662
        %666 = vset.pattern.permute.xlu0 0
        %667 = vperm.xlu0 %666, %v521
        %v668 = vpop.permute.xlu0 %667
        %671 = vset.pattern.permute.xlu0 0
        %672 = vperm.xlu0 %671, %v522
        %v673 = vpop.permute.xlu0 %672
        %676 = vset.pattern.permute.xlu0 0
        %677 = vperm.xlu0 %676, %v523
        %v678 = vpop.permute.xlu0 %677
        %681 = vset.pattern.permute.xlu0 0
        %682 = vperm.xlu0 %681, %v524
        %v683 = vpop.permute.xlu0 %682
        %686 = vset.pattern.permute.xlu0 0
        %687 = vperm.xlu0 %686, %v525
        %v688 = vpop.permute.xlu0 %687
        %691 = vset.pattern.permute.xlu0 0
        %692 = vperm.xlu0 %691, %v526
        %v693 = vpop.permute.xlu0 %692
        %696 = vset.pattern.permute.xlu0 0
        %697 = vperm.xlu0 %696, %v527
        %v698 = vpop.permute.xlu0 %697
        %701 = vset.pattern.permute.xlu0 0
        %702 = vperm.xlu0 %701, %v528
        %v703 = vpop.permute.xlu0 %702
        %706 = vset.pattern.permute.xlu0 0
        %707 = vperm.xlu0 %706, %v529
        %v708 = vpop.permute.xlu0 %707
        %711 = vset.pattern.permute.xlu0 0
        %712 = vperm.xlu0 %711, %v530
        %v713 = vpop.permute.xlu0 %712
        %716 = vset.pattern.permute.xlu0 0
        %717 = vperm.xlu0 %716, %v531
        %v718 = vpop.permute.xlu0 %717
        %721 = vset.pattern.permute.xlu0 0
        %722 = vperm.xlu0 %721, %v532
        %v723 = vpop.permute.xlu0 %722
        %726 = vset.pattern.permute.xlu0 0
        %727 = vperm.xlu0 %726, %v533
        %v728 = vpop.permute.xlu0 %727
        %731 = vset.pattern.permute.xlu0 0
        %732 = vperm.xlu0 %731, %v534
        %v733 = vpop.permute.xlu0 %732
        %736 = vset.pattern.permute.xlu0 0
        %737 = vperm.xlu0 %736, %v535
        %v738 = vpop.permute.xlu0 %737
        %741 = vset.pattern.permute.xlu0 0
        %742 = vperm.xlu0 %741, %v536
        %v743 = vpop.permute.xlu0 %742
        %746 = vset.pattern.permute.xlu0 0
        %747 = vperm.xlu0 %746, %v537
        %v748 = vpop.permute.xlu0 %747
        %751 = vset.pattern.permute.xlu0 0
        %752 = vperm.xlu0 %751, %v538
        %v753 = vpop.permute.xlu0 %752
        %756 = vset.pattern.permute.xlu0 0
        %757 = vperm.xlu0 %756, %v539
        %v758 = vpop.permute.xlu0 %757
        %761 = vset.pattern.permute.xlu0 0
        %762 = vperm.xlu0 %761, %v540
        %v763 = vpop.permute.xlu0 %762
        %766 = vset.pattern.permute.xlu0 0
        %767 = vperm.xlu0 %766, %v541
        %v768 = vpop.permute.xlu0 %767
        %771 = vset.pattern.permute.xlu0 0
        %772 = vperm.xlu0 %771, %v542
        %v773 = vpop.permute.xlu0 %772
        %776 = vset.pattern.permute.xlu0 0
        %777 = vperm.xlu0 %776, %v543
        %v778 = vpop.permute.xlu0 %777
        %781 = vset.pattern.permute.xlu0 0
        %782 = vperm.xlu0 %781, %v544
        %v783 = vpop.permute.xlu0 %782
        %v833 = vunpack.c.l.b16 %v449
        %v834 = vunpack.c.l.b16 %v450
        %v835 = vunpack.c.l.b16 %v451
        %v836 = vunpack.c.l.b16 %v452
        %v837 = vunpack.c.l.b16 %v453
        %v838 = vunpack.c.l.b16 %v454
        %v839 = vunpack.c.l.b16 %v455
        %v840 = vunpack.c.l.b16 %v456
        %v841 = vunpack.c.l.b16 %v457
        %v842 = vunpack.c.l.b16 %v458
        %v843 = vunpack.c.l.b16 %v459
        %v844 = vunpack.c.l.b16 %v460
        %v845 = vunpack.c.l.b16 %v461
        %v846 = vunpack.c.l.b16 %v462
        %v847 = vunpack.c.l.b16 %v463
        %v848 = vunpack.c.l.b16 %v464
        %v849 = vunpack.c.l.b16 %v465
        %v850 = vunpack.c.l.b16 %v466
        %v851 = vunpack.c.l.b16 %v467
        %v852 = vunpack.c.l.b16 %v468
        %v853 = vunpack.c.l.b16 %v469
        %v854 = vunpack.c.l.b16 %v470
        %v855 = vunpack.c.l.b16 %v471
        %v856 = vunpack.c.l.b16 %v472
        %v857 = vunpack.c.l.b16 %v473
        %v858 = vunpack.c.l.b16 %v474
        %v859 = vunpack.c.l.b16 %v475
        %v860 = vunpack.c.l.b16 %v476
        %v861 = vunpack.c.l.b16 %v477
        %v862 = vunpack.c.l.b16 %v478
        %v863 = vunpack.c.l.b16 %v479
        %v864 = vunpack.c.l.b16 %v480
        %v865 = vunpack.c.l.b16 %v481
        %v866 = vunpack.c.l.b16 %v482
        %v867 = vunpack.c.l.b16 %v483
        %v868 = vunpack.c.l.b16 %v484
        %v869 = vunpack.c.l.b16 %v485
        %v870 = vunpack.c.l.b16 %v486
        %v871 = vunpack.c.l.b16 %v487
        %v872 = vunpack.c.l.b16 %v488
        %v873 = vunpack.c.l.b16 %v489
        %v874 = vunpack.c.l.b16 %v490
        %v875 = vunpack.c.l.b16 %v491
        %v876 = vunpack.c.l.b16 %v492
        %v877 = vunpack.c.l.b16 %v493
        %v878 = vunpack.c.l.b16 %v494
        %v879 = vunpack.c.l.b16 %v495
        %v880 = vunpack.c.l.b16 %v496
        %v881 = vpack.c.b16 %v834, %v833
        %v882 = vpack.c.b16 %v836, %v835
        %v883 = vpack.c.b16 %v838, %v837
        %v884 = vpack.c.b16 %v840, %v839
        %v885 = vpack.c.b16 %v842, %v841
        %v886 = vpack.c.b16 %v844, %v843
        %v887 = vpack.c.b16 %v846, %v845
        %v888 = vpack.c.b16 %v848, %v847
        %v889 = vpack.c.b16 %v850, %v849
        %v890 = vpack.c.b16 %v852, %v851
        %v891 = vpack.c.b16 %v854, %v853
        %v892 = vpack.c.b16 %v856, %v855
        %v893 = vpack.c.b16 %v858, %v857
        %v894 = vpack.c.b16 %v860, %v859
        %v895 = vpack.c.b16 %v862, %v861
        %v896 = vpack.c.b16 %v864, %v863
        %v897 = vpack.c.b16 %v866, %v865
        %v898 = vpack.c.b16 %v868, %v867
        %v899 = vpack.c.b16 %v870, %v869
        %v900 = vpack.c.b16 %v872, %v871
        %v901 = vpack.c.b16 %v874, %v873
        %v902 = vpack.c.b16 %v876, %v875
        %v903 = vpack.c.b16 %v878, %v877
        %v904 = vpack.c.b16 %v880, %v879
        %v945 = vunpack.c.l.b16 %v433
        %v946 = vunpack.c.l.b16 %v434
        %v947 = vunpack.c.l.b16 %v435
        %v948 = vunpack.c.l.b16 %v436
        %v949 = vunpack.c.l.b16 %v437
        %v950 = vunpack.c.l.b16 %v438
        %v951 = vunpack.c.l.b16 %v439
        %v952 = vunpack.c.l.b16 %v440
        %v953 = vunpack.c.l.b16 %v441
        %v954 = vunpack.c.l.b16 %v442
        %v955 = vunpack.c.l.b16 %v443
        %v956 = vunpack.c.l.b16 %v444
        %v957 = vunpack.c.l.b16 %v445
        %v958 = vunpack.c.l.b16 %v446
        %v959 = vunpack.c.l.b16 %v447
        %v960 = vunpack.c.l.b16 %v448
        %v961 = vpack.c.b16 %v946, %v945
        %v962 = vpack.c.b16 %v948, %v947
        %v963 = vpack.c.b16 %v950, %v949
        %v964 = vpack.c.b16 %v952, %v951
        %v965 = vpack.c.b16 %v954, %v953
        %v966 = vpack.c.b16 %v956, %v955
        %v967 = vpack.c.b16 %v958, %v957
        %v968 = vpack.c.b16 %v960, %v959
        %977 = vmatpush.bf16.msra.mxu0 %v968
        %978 = vmatpush.bf16.msra.mxu0 %v967
        %979 = vmatpush.bf16.msra.mxu0 %v966
        %980 = vmatpush.bf16.msra.mxu0 %v965
        %981 = vmatpush.bf16.msra.mxu0 %v964
        %982 = vmatpush.bf16.msra.mxu0 %v963
        %983 = vmatpush.bf16.msra.mxu0 %v962
        %984 = vmatpush.bf16.msra.mxu0 %v961
        %985 = vmatmul.bf16.gmra.mxu0 %v881
        %v986 = vpop.f32.mrf.mxu0
        %v987 = vadd.f32 %v548, %v986
        %v988 = vpop.f32.mrf.mxu0
        %v989 = vadd.f32 %v553, %v988
        %990 = vmatmul.bf16.gmra.mxu0 %v882
        %v991 = vpop.f32.mrf.mxu0
        %v992 = vadd.f32 %v558, %v991
        %v993 = vpop.f32.mrf.mxu0
        %v994 = vadd.f32 %v563, %v993
        %995 = vmatmul.bf16.gmra.mxu0 %v883
        %v996 = vpop.f32.mrf.mxu0
        %v997 = vadd.f32 %v568, %v996
        %v998 = vpop.f32.mrf.mxu0
        %v999 = vadd.f32 %v573, %v998
        %1000 = vmatmul.bf16.gmra.mxu0 %v884
        %v1001 = vpop.f32.mrf.mxu0
        %v1002 = vadd.f32 %v578, %v1001
        %v1003 = vpop.f32.mrf.mxu0
        %v1004 = vadd.f32 %v583, %v1003
        %1005 = vmatmul.bf16.gmra.mxu0 %v885
        %v1006 = vpop.f32.mrf.mxu0
        %v1007 = vadd.f32 %v588, %v1006
        %v1008 = vpop.f32.mrf.mxu0
        %v1009 = vadd.f32 %v593, %v1008
        %1010 = vmatmul.bf16.gmra.mxu0 %v886
        %v1011 = vpop.f32.mrf.mxu0
        %v1012 = vadd.f32 %v598, %v1011
        %v1013 = vpop.f32.mrf.mxu0
        %v1014 = vadd.f32 %v603, %v1013
        %1015 = vmatmul.bf16.gmra.mxu0 %v887
        %v1016 = vpop.f32.mrf.mxu0
        %v1017 = vadd.f32 %v608, %v1016
        %v1018 = vpop.f32.mrf.mxu0
        %v1019 = vadd.f32 %v613, %v1018
        %1020 = vmatmul.bf16.gmra.mxu0 %v888
        %v1021 = vpop.f32.mrf.mxu0
        %v1022 = vadd.f32 %v618, %v1021
        %v1023 = vpop.f32.mrf.mxu0
        %v1024 = vadd.f32 %v623, %v1023
        %1025 = vmatmul.bf16.gmra.mxu0 %v889
        %v1026 = vpop.f32.mrf.mxu0
        %v1027 = vadd.f32 %v628, %v1026
        %v1028 = vpop.f32.mrf.mxu0
        %v1029 = vadd.f32 %v633, %v1028
        %1030 = vmatmul.bf16.gmra.mxu0 %v890
        %v1031 = vpop.f32.mrf.mxu0
        %v1032 = vadd.f32 %v638, %v1031
        %v1033 = vpop.f32.mrf.mxu0
        %v1034 = vadd.f32 %v643, %v1033
        %1035 = vmatmul.bf16.gmra.mxu0 %v891
        %v1036 = vpop.f32.mrf.mxu0
        %v1037 = vadd.f32 %v648, %v1036
        %v1038 = vpop.f32.mrf.mxu0
        %v1039 = vadd.f32 %v653, %v1038
        %1040 = vmatmul.bf16.gmra.mxu0 %v892
        %v1041 = vpop.f32.mrf.mxu0
        %v1042 = vadd.f32 %v658, %v1041
        %v1043 = vpop.f32.mrf.mxu0
        %v1044 = vadd.f32 %v663, %v1043
        %1045 = vmatmul.bf16.gmra.mxu0 %v893
        %v1046 = vpop.f32.mrf.mxu0
        %v1047 = vadd.f32 %v668, %v1046
        %v1048 = vpop.f32.mrf.mxu0
        %v1049 = vadd.f32 %v673, %v1048
        %1050 = vmatmul.bf16.gmra.mxu0 %v894
        %v1051 = vpop.f32.mrf.mxu0
        %v1052 = vadd.f32 %v678, %v1051
        %v1053 = vpop.f32.mrf.mxu0
        %v1054 = vadd.f32 %v683, %v1053
        %1055 = vmatmul.bf16.gmra.mxu0 %v895
        %v1056 = vpop.f32.mrf.mxu0
        %v1057 = vadd.f32 %v688, %v1056
        %v1058 = vpop.f32.mrf.mxu0
        %v1059 = vadd.f32 %v693, %v1058
        %1060 = vmatmul.bf16.gmra.mxu0 %v896
        %v1061 = vpop.f32.mrf.mxu0
        %v1062 = vadd.f32 %v698, %v1061
        %v1063 = vpop.f32.mrf.mxu0
        %v1064 = vadd.f32 %v703, %v1063
        %1065 = vmatmul.bf16.gmra.mxu0 %v897
        %v1066 = vpop.f32.mrf.mxu0
        %v1067 = vadd.f32 %v708, %v1066
        %v1068 = vpop.f32.mrf.mxu0
        %v1069 = vadd.f32 %v713, %v1068
        %1070 = vmatmul.bf16.gmra.mxu0 %v898
        %v1071 = vpop.f32.mrf.mxu0
        %v1072 = vadd.f32 %v718, %v1071
        %v1073 = vpop.f32.mrf.mxu0
        %v1074 = vadd.f32 %v723, %v1073
        %1075 = vmatmul.bf16.gmra.mxu0 %v899
        %v1076 = vpop.f32.mrf.mxu0
        %v1077 = vadd.f32 %v728, %v1076
        %v1078 = vpop.f32.mrf.mxu0
        %v1079 = vadd.f32 %v733, %v1078
        %1080 = vmatmul.bf16.gmra.mxu0 %v900
        %v1081 = vpop.f32.mrf.mxu0
        %v1082 = vadd.f32 %v738, %v1081
        %v1083 = vpop.f32.mrf.mxu0
        %v1084 = vadd.f32 %v743, %v1083
        %1085 = vmatmul.bf16.gmra.mxu0 %v901
        %v1086 = vpop.f32.mrf.mxu0
        %v1087 = vadd.f32 %v748, %v1086
        %v1088 = vpop.f32.mrf.mxu0
        %v1089 = vadd.f32 %v753, %v1088
        %1090 = vmatmul.bf16.gmra.mxu0 %v902
        %v1091 = vpop.f32.mrf.mxu0
        %v1092 = vadd.f32 %v758, %v1091
        %v1093 = vpop.f32.mrf.mxu0
        %v1094 = vadd.f32 %v763, %v1093
        %1095 = vmatmul.bf16.gmra.mxu0 %v903
        %v1096 = vpop.f32.mrf.mxu0
        %v1097 = vadd.f32 %v768, %v1096
        %v1098 = vpop.f32.mrf.mxu0
        %v1099 = vadd.f32 %v773, %v1098
        %1100 = vmatmul.bf16.gmra.mxu0 %v904
        %v1101 = vpop.f32.mrf.mxu0
        %v1102 = vadd.f32 %v778, %v1101
        %v1103 = vpop.f32.mrf.mxu0
        %v1104 = vadd.f32 %v783, %v1103
        %1105 = vdwg.mxu0
        %v1106 = vmul.f32 %v987, 0.5
        %v1107 = vmul.f32 %v989, 0.5
        %v1108 = vmul.f32 %v992, 0.5
        %v1109 = vmul.f32 %v994, 0.5
        %v1110 = vmul.f32 %v997, 0.5
        %v1111 = vmul.f32 %v999, 0.5
        %v1112 = vmul.f32 %v1002, 0.5
        %v1113 = vmul.f32 %v1004, 0.5
        %v1114 = vmul.f32 %v1007, 0.5
        %v1115 = vmul.f32 %v1009, 0.5
        %v1116 = vmul.f32 %v1012, 0.5
        %v1117 = vmul.f32 %v1014, 0.5
        %v1118 = vmul.f32 %v1017, 0.5
        %v1119 = vmul.f32 %v1019, 0.5
        %v1120 = vmul.f32 %v1022, 0.5
        %v1121 = vmul.f32 %v1024, 0.5
        %v1122 = vmul.f32 %v1027, 0.5
        %v1123 = vmul.f32 %v1029, 0.5
        %v1124 = vmul.f32 %v1032, 0.5
        %v1125 = vmul.f32 %v1034, 0.5
        %v1126 = vmul.f32 %v1037, 0.5
        %v1127 = vmul.f32 %v1039, 0.5
        %v1128 = vmul.f32 %v1042, 0.5
        %v1129 = vmul.f32 %v1044, 0.5
        %v1130 = vmul.f32 %v1047, 0.5
        %v1131 = vmul.f32 %v1049, 0.5
        %v1132 = vmul.f32 %v1052, 0.5
        %v1133 = vmul.f32 %v1054, 0.5
        %v1134 = vmul.f32 %v1057, 0.5
        %v1135 = vmul.f32 %v1059, 0.5
        %v1136 = vmul.f32 %v1062, 0.5
        %v1137 = vmul.f32 %v1064, 0.5
        %v1138 = vmul.f32 %v1067, 0.5
        %v1139 = vmul.f32 %v1069, 0.5
        %v1140 = vmul.f32 %v1072, 0.5
        %v1141 = vmul.f32 %v1074, 0.5
        %v1142 = vmul.f32 %v1077, 0.5
        %v1143 = vmul.f32 %v1079, 0.5
        %v1144 = vmul.f32 %v1082, 0.5
        %v1145 = vmul.f32 %v1084, 0.5
        %v1146 = vmul.f32 %v1087, 0.5
        %v1147 = vmul.f32 %v1089, 0.5
        %v1148 = vmul.f32 %v1092, 0.5
        %v1149 = vmul.f32 %v1094, 0.5
        %v1150 = vmul.f32 %v1097, 0.5
        %v1151 = vmul.f32 %v1099, 0.5
        %v1152 = vmul.f32 %v1102, 0.5
        %v1153 = vmul.f32 %v1104, 0.5
        %v1154 = vrcp.pop 1.4142135
        %v1155 = vmul.f32 1.4142135, %v1154
        %v1156 = vsub.f32 1.0, %v1155
        %v1157 = vmul.f32 %v1154, %v1156
        %v1158 = vadd.f32 %v1154, %v1157
        %vm1159 = vweird.f32 %v1154
        %v1160 = vsel %vm1159, %v1154, %v1158
        %v1161 = vmul.f32 %v987, %v1160
        %v1162 = vmul.f32 %v989, %v1160
        %v1163 = vmul.f32 %v992, %v1160
        %v1164 = vmul.f32 %v994, %v1160
        %v1165 = vmul.f32 %v997, %v1160
        %v1166 = vmul.f32 %v999, %v1160
        %v1167 = vmul.f32 %v1002, %v1160
        %v1168 = vmul.f32 %v1004, %v1160
        %v1169 = vmul.f32 %v1007, %v1160
        %v1170 = vmul.f32 %v1009, %v1160
        %v1171 = vmul.f32 %v1012, %v1160
        %v1172 = vmul.f32 %v1014, %v1160
        %v1173 = vmul.f32 %v1017, %v1160
        %v1174 = vmul.f32 %v1019, %v1160
        %v1175 = vmul.f32 %v1022, %v1160
        %v1176 = vmul.f32 %v1024, %v1160
        %v1177 = vmul.f32 %v1027, %v1160
        %v1178 = vmul.f32 %v1029, %v1160
        %v1179 = vmul.f32 %v1032, %v1160
        %v1180 = vmul.f32 %v1034, %v1160
        %v1181 = vmul.f32 %v1037, %v1160
        %v1182 = vmul.f32 %v1039, %v1160
        %v1183 = vmul.f32 %v1042, %v1160
        %v1184 = vmul.f32 %v1044, %v1160
        %v1185 = vmul.f32 %v1047, %v1160
        %v1186 = vmul.f32 %v1049, %v1160
        %v1187 = vmul.f32 %v1052, %v1160
        %v1188 = vmul.f32 %v1054, %v1160
        %v1189 = vmul.f32 %v1057, %v1160
        %v1190 = vmul.f32 %v1059, %v1160
        %v1191 = vmul.f32 %v1062, %v1160
        %v1192 = vmul.f32 %v1064, %v1160
        %v1193 = vmul.f32 %v1067, %v1160
        %v1194 = vmul.f32 %v1069, %v1160
        %v1195 = vmul.f32 %v1072, %v1160
        %v1196 = vmul.f32 %v1074, %v1160
        %v1197 = vmul.f32 %v1077, %v1160
        %v1198 = vmul.f32 %v1079, %v1160
        %v1199 = vmul.f32 %v1082, %v1160
        %v1200 = vmul.f32 %v1084, %v1160
        %v1201 = vmul.f32 %v1087, %v1160
        %v1202 = vmul.f32 %v1089, %v1160
        %v1203 = vmul.f32 %v1092, %v1160
        %v1204 = vmul.f32 %v1094, %v1160
        %v1205 = vmul.f32 %v1097, %v1160
        %v1206 = vmul.f32 %v1099, %v1160
        %v1207 = vmul.f32 %v1102, %v1160
        %v1208 = vmul.f32 %v1104, %v1160
        %v1209 = vmul.f32 %v1161, %v1161
        %v1210 = vmin.f32 16.0, %v1209
        %v1211 = vmul.f32 %v1210, 2.1237322e-06
        %v1212 = vadd.f32 %v1211, 0.00028619796
        %v1213 = vmul.f32 %v1210, %v1212
        %v1214 = vadd.f32 %v1213, 0.0036580483
        %v1215 = vmul.f32 %v1210, %v1214
        %v1216 = vadd.f32 %v1215, 0.05243302
        %v1217 = vmul.f32 %v1210, %v1216
        %v1218 = vadd.f32 %v1217, 0.18741608
        %v1219 = vmul.f32 %v1210, %v1218
        %v1220 = vadd.f32 %v1219, 1.1283791
        %v1221 = vmul.f32 %v1161, %v1220
        %v1222 = vmul.f32 %v1210, 3.8918573e-05
        %v1223 = vadd.f32 %v1222, 0.001143296
        %v1224 = vmul.f32 %v1210, %v1223
        %v1225 = vadd.f32 %v1224, 0.014752088
        %v1226 = vmul.f32 %v1210, %v1225
        %v1227 = vadd.f32 %v1226, 0.112945676
        %v1228 = vmul.f32 %v1210, %v1227
        %v1229 = vadd.f32 %v1228, 0.4994258
        %v1230 = vmul.f32 %v1210, %v1229
        %v1231 = vadd.f32 %v1230, 1.0
        %v1232 = vrcp.pop %v1231
        %v1233 = vmul.f32 %v1231, %v1232
        %v1234 = vsub.f32 1.0, %v1233
        %v1235 = vmul.f32 %v1232, %v1234
        %v1236 = vadd.f32 %v1232, %v1235
        %vm1237 = vweird.f32 %v1231
        %vm1238 = vweird.f32 %v1232
        %vm1239 = vmor %vm1237, %vm1238
        %v1240 = vsel %vm1239, %v1232, %v1236
        %v1241 = vand.u32 2147483647, %v1231
        %vm1242 = vcmp.eq.f32.partialorder %v1241, 8.507059e+37
        %v1243 = vand.u32 %v1231, 2147483648
        %v1244 = vor.u32 1.1754944e-38, %v1243
        %v1245 = vsel %vm1242, %v1244, %v1240
        %v1246 = vmul.f32 %v1221, %v1245
        %v1247 = vmin.f32 %v1246, 1.0
        %v1248 = vmax.f32 %v1247, -1.0
        %v1249 = vmul.f32 %v1162, %v1162
        %v1250 = vmin.f32 16.0, %v1249
        %v1251 = vmul.f32 %v1250, 2.1237322e-06
        %v1252 = vadd.f32 %v1251, 0.00028619796
        %v1253 = vmul.f32 %v1250, %v1252
        %v1254 = vadd.f32 %v1253, 0.0036580483
        %v1255 = vmul.f32 %v1250, %v1254
        %v1256 = vadd.f32 %v1255, 0.05243302
        %v1257 = vmul.f32 %v1250, %v1256
        %v1258 = vadd.f32 %v1257, 0.18741608
        %v1259 = vmul.f32 %v1250, %v1258
        %v1260 = vadd.f32 %v1259, 1.1283791
        %v1261 = vmul.f32 %v1162, %v1260
        %v1262 = vmul.f32 %v1250, 3.8918573e-05
        %v1263 = vadd.f32 %v1262, 0.001143296
        %v1264 = vmul.f32 %v1250, %v1263
        %v1265 = vadd.f32 %v1264, 0.014752088
        %v1266 = vmul.f32 %v1250, %v1265
        %v1267 = vadd.f32 %v1266, 0.112945676
        %v1268 = vmul.f32 %v1250, %v1267
        %v1269 = vadd.f32 %v1268, 0.4994258
        %v1270 = vmul.f32 %v1250, %v1269
        %v1271 = vadd.f32 %v1270, 1.0
        %v1272 = vrcp.pop %v1271
        %v1273 = vmul.f32 %v1271, %v1272
        %v1274 = vsub.f32 1.0, %v1273
        %v1275 = vmul.f32 %v1272, %v1274
        %v1276 = vadd.f32 %v1272, %v1275
        %vm1277 = vweird.f32 %v1271
        %vm1278 = vweird.f32 %v1272
        %vm1279 = vmor %vm1277, %vm1278
        %v1280 = vsel %vm1279, %v1272, %v1276
        %v1281 = vand.u32 2147483647, %v1271
        %vm1282 = vcmp.eq.f32.partialorder %v1281, 8.507059e+37
        %v1283 = vand.u32 %v1271, 2147483648
        %v1284 = vor.u32 1.1754944e-38, %v1283
        %v1285 = vsel %vm1282, %v1284, %v1280
        %v1286 = vmul.f32 %v1261, %v1285
        %v1287 = vmin.f32 %v1286, 1.0
        %v1288 = vmax.f32 %v1287, -1.0
        %v1289 = vmul.f32 %v1163, %v1163
        %v1290 = vmin.f32 16.0, %v1289
        %v1291 = vmul.f32 %v1290, 2.1237322e-06
        %v1292 = vadd.f32 %v1291, 0.00028619796
        %v1293 = vmul.f32 %v1290, %v1292
        %v1294 = vadd.f32 %v1293, 0.0036580483
        %v1295 = vmul.f32 %v1290, %v1294
        %v1296 = vadd.f32 %v1295, 0.05243302
        %v1297 = vmul.f32 %v1290, %v1296
        %v1298 = vadd.f32 %v1297, 0.18741608
        %v1299 = vmul.f32 %v1290, %v1298
        %v1300 = vadd.f32 %v1299, 1.1283791
        %v1301 = vmul.f32 %v1163, %v1300
        %v1302 = vmul.f32 %v1290, 3.8918573e-05
        %v1303 = vadd.f32 %v1302, 0.001143296
        %v1304 = vmul.f32 %v1290, %v1303
        %v1305 = vadd.f32 %v1304, 0.014752088
        %v1306 = vmul.f32 %v1290, %v1305
        %v1307 = vadd.f32 %v1306, 0.112945676
        %v1308 = vmul.f32 %v1290, %v1307
        %v1309 = vadd.f32 %v1308, 0.4994258
        %v1310 = vmul.f32 %v1290, %v1309
        %v1311 = vadd.f32 %v1310, 1.0
        %v1312 = vrcp.pop %v1311
        %v1313 = vmul.f32 %v1311, %v1312
        %v1314 = vsub.f32 1.0, %v1313
        %v1315 = vmul.f32 %v1312, %v1314
        %v1316 = vadd.f32 %v1312, %v1315
        %vm1317 = vweird.f32 %v1311
        %vm1318 = vweird.f32 %v1312
        %vm1319 = vmor %vm1317, %vm1318
        %v1320 = vsel %vm1319, %v1312, %v1316
        %v1321 = vand.u32 2147483647, %v1311
        %vm1322 = vcmp.eq.f32.partialorder %v1321, 8.507059e+37
        %v1323 = vand.u32 %v1311, 2147483648
        %v1324 = vor.u32 1.1754944e-38, %v1323
        %v1325 = vsel %vm1322, %v1324, %v1320
        %v1326 = vmul.f32 %v1301, %v1325
        %v1327 = vmin.f32 %v1326, 1.0
        %v1328 = vmax.f32 %v1327, -1.0
        %v1329 = vmul.f32 %v1164, %v1164
        %v1330 = vmin.f32 16.0, %v1329
        %v1331 = vmul.f32 %v1330, 2.1237322e-06
        %v1332 = vadd.f32 %v1331, 0.00028619796
        %v1333 = vmul.f32 %v1330, %v1332
        %v1334 = vadd.f32 %v1333, 0.0036580483
        %v1335 = vmul.f32 %v1330, %v1334
        %v1336 = vadd.f32 %v1335, 0.05243302
        %v1337 = vmul.f32 %v1330, %v1336
        %v1338 = vadd.f32 %v1337, 0.18741608
        %v1339 = vmul.f32 %v1330, %v1338
        %v1340 = vadd.f32 %v1339, 1.1283791
        %v1341 = vmul.f32 %v1164, %v1340
        %v1342 = vmul.f32 %v1330, 3.8918573e-05
        %v1343 = vadd.f32 %v1342, 0.001143296
        %v1344 = vmul.f32 %v1330, %v1343
        %v1345 = vadd.f32 %v1344, 0.014752088
        %v1346 = vmul.f32 %v1330, %v1345
        %v1347 = vadd.f32 %v1346, 0.112945676
        %v1348 = vmul.f32 %v1330, %v1347
        %v1349 = vadd.f32 %v1348, 0.4994258
        %v1350 = vmul.f32 %v1330, %v1349
        %v1351 = vadd.f32 %v1350, 1.0
        %v1352 = vrcp.pop %v1351
        %v1353 = vmul.f32 %v1351, %v1352
        %v1354 = vsub.f32 1.0, %v1353
        %v1355 = vmul.f32 %v1352, %v1354
        %v1356 = vadd.f32 %v1352, %v1355
        %vm1357 = vweird.f32 %v1351
        %vm1358 = vweird.f32 %v1352
        %vm1359 = vmor %vm1357, %vm1358
        %v1360 = vsel %vm1359, %v1352, %v1356
        %v1361 = vand.u32 2147483647, %v1351
        %vm1362 = vcmp.eq.f32.partialorder %v1361, 8.507059e+37
        %v1363 = vand.u32 %v1351, 2147483648
        %v1364 = vor.u32 1.1754944e-38, %v1363
        %v1365 = vsel %vm1362, %v1364, %v1360
        %v1366 = vmul.f32 %v1341, %v1365
        %v1367 = vmin.f32 %v1366, 1.0
        %v1368 = vmax.f32 %v1367, -1.0
        %v1369 = vmul.f32 %v1165, %v1165
        %v1370 = vmin.f32 16.0, %v1369
        %v1371 = vmul.f32 %v1370, 2.1237322e-06
        %v1372 = vadd.f32 %v1371, 0.00028619796
        %v1373 = vmul.f32 %v1370, %v1372
        %v1374 = vadd.f32 %v1373, 0.0036580483
        %v1375 = vmul.f32 %v1370, %v1374
        %v1376 = vadd.f32 %v1375, 0.05243302
        %v1377 = vmul.f32 %v1370, %v1376
        %v1378 = vadd.f32 %v1377, 0.18741608
        %v1379 = vmul.f32 %v1370, %v1378
        %v1380 = vadd.f32 %v1379, 1.1283791
        %v1381 = vmul.f32 %v1165, %v1380
        %v1382 = vmul.f32 %v1370, 3.8918573e-05
        %v1383 = vadd.f32 %v1382, 0.001143296
        %v1384 = vmul.f32 %v1370, %v1383
        %v1385 = vadd.f32 %v1384, 0.014752088
        %v1386 = vmul.f32 %v1370, %v1385
        %v1387 = vadd.f32 %v1386, 0.112945676
        %v1388 = vmul.f32 %v1370, %v1387
        %v1389 = vadd.f32 %v1388, 0.4994258
        %v1390 = vmul.f32 %v1370, %v1389
        %v1391 = vadd.f32 %v1390, 1.0
        %v1392 = vrcp.pop %v1391
        %v1393 = vmul.f32 %v1391, %v1392
        %v1394 = vsub.f32 1.0, %v1393
        %v1395 = vmul.f32 %v1392, %v1394
        %v1396 = vadd.f32 %v1392, %v1395
        %vm1397 = vweird.f32 %v1391
        %vm1398 = vweird.f32 %v1392
        %vm1399 = vmor %vm1397, %vm1398
        %v1400 = vsel %vm1399, %v1392, %v1396
        %v1401 = vand.u32 2147483647, %v1391
        %vm1402 = vcmp.eq.f32.partialorder %v1401, 8.507059e+37
        %v1403 = vand.u32 %v1391, 2147483648
        %v1404 = vor.u32 1.1754944e-38, %v1403
        %v1405 = vsel %vm1402, %v1404, %v1400
        %v1406 = vmul.f32 %v1381, %v1405
        %v1407 = vmin.f32 %v1406, 1.0
        %v1408 = vmax.f32 %v1407, -1.0
        %v1409 = vmul.f32 %v1166, %v1166
        %v1410 = vmin.f32 16.0, %v1409
        %v1411 = vmul.f32 %v1410, 2.1237322e-06
        %v1412 = vadd.f32 %v1411, 0.00028619796
        %v1413 = vmul.f32 %v1410, %v1412
        %v1414 = vadd.f32 %v1413, 0.0036580483
        %v1415 = vmul.f32 %v1410, %v1414
        %v1416 = vadd.f32 %v1415, 0.05243302
        %v1417 = vmul.f32 %v1410, %v1416
        %v1418 = vadd.f32 %v1417, 0.18741608
        %v1419 = vmul.f32 %v1410, %v1418
        %v1420 = vadd.f32 %v1419, 1.1283791
        %v1421 = vmul.f32 %v1166, %v1420
        %v1422 = vmul.f32 %v1410, 3.8918573e-05
        %v1423 = vadd.f32 %v1422, 0.001143296
        %v1424 = vmul.f32 %v1410, %v1423
        %v1425 = vadd.f32 %v1424, 0.014752088
        %v1426 = vmul.f32 %v1410, %v1425
        %v1427 = vadd.f32 %v1426, 0.112945676
        %v1428 = vmul.f32 %v1410, %v1427
        %v1429 = vadd.f32 %v1428, 0.4994258
        %v1430 = vmul.f32 %v1410, %v1429
        %v1431 = vadd.f32 %v1430, 1.0
        %v1432 = vrcp.pop %v1431
        %v1433 = vmul.f32 %v1431, %v1432
        %v1434 = vsub.f32 1.0, %v1433
        %v1435 = vmul.f32 %v1432, %v1434
        %v1436 = vadd.f32 %v1432, %v1435
        %vm1437 = vweird.f32 %v1431
        %vm1438 = vweird.f32 %v1432
        %vm1439 = vmor %vm1437, %vm1438
        %v1440 = vsel %vm1439, %v1432, %v1436
        %v1441 = vand.u32 2147483647, %v1431
        %vm1442 = vcmp.eq.f32.partialorder %v1441, 8.507059e+37
        %v1443 = vand.u32 %v1431, 2147483648
        %v1444 = vor.u32 1.1754944e-38, %v1443
        %v1445 = vsel %vm1442, %v1444, %v1440
        %v1446 = vmul.f32 %v1421, %v1445
        %v1447 = vmin.f32 %v1446, 1.0
        %v1448 = vmax.f32 %v1447, -1.0
        %v1449 = vmul.f32 %v1167, %v1167
        %v1450 = vmin.f32 16.0, %v1449
        %v1451 = vmul.f32 %v1450, 2.1237322e-06
        %v1452 = vadd.f32 %v1451, 0.00028619796
        %v1453 = vmul.f32 %v1450, %v1452
        %v1454 = vadd.f32 %v1453, 0.0036580483
        %v1455 = vmul.f32 %v1450, %v1454
        %v1456 = vadd.f32 %v1455, 0.05243302
        %v1457 = vmul.f32 %v1450, %v1456
        %v1458 = vadd.f32 %v1457, 0.18741608
        %v1459 = vmul.f32 %v1450, %v1458
        %v1460 = vadd.f32 %v1459, 1.1283791
        %v1461 = vmul.f32 %v1167, %v1460
        %v1462 = vmul.f32 %v1450, 3.8918573e-05
        %v1463 = vadd.f32 %v1462, 0.001143296
        %v1464 = vmul.f32 %v1450, %v1463
        %v1465 = vadd.f32 %v1464, 0.014752088
        %v1466 = vmul.f32 %v1450, %v1465
        %v1467 = vadd.f32 %v1466, 0.112945676
        %v1468 = vmul.f32 %v1450, %v1467
        %v1469 = vadd.f32 %v1468, 0.4994258
        %v1470 = vmul.f32 %v1450, %v1469
        %v1471 = vadd.f32 %v1470, 1.0
        %v1472 = vrcp.pop %v1471
        %v1473 = vmul.f32 %v1471, %v1472
        %v1474 = vsub.f32 1.0, %v1473
        %v1475 = vmul.f32 %v1472, %v1474
        %v1476 = vadd.f32 %v1472, %v1475
        %vm1477 = vweird.f32 %v1471
        %vm1478 = vweird.f32 %v1472
        %vm1479 = vmor %vm1477, %vm1478
        %v1480 = vsel %vm1479, %v1472, %v1476
        %v1481 = vand.u32 2147483647, %v1471
        %vm1482 = vcmp.eq.f32.partialorder %v1481, 8.507059e+37
        %v1483 = vand.u32 %v1471, 2147483648
        %v1484 = vor.u32 1.1754944e-38, %v1483
        %v1485 = vsel %vm1482, %v1484, %v1480
        %v1486 = vmul.f32 %v1461, %v1485
        %v1487 = vmin.f32 %v1486, 1.0
        %v1488 = vmax.f32 %v1487, -1.0
        %v1489 = vmul.f32 %v1168, %v1168
        %v1490 = vmin.f32 16.0, %v1489
        %v1491 = vmul.f32 %v1490, 2.1237322e-06
        %v1492 = vadd.f32 %v1491, 0.00028619796
        %v1493 = vmul.f32 %v1490, %v1492
        %v1494 = vadd.f32 %v1493, 0.0036580483
        %v1495 = vmul.f32 %v1490, %v1494
        %v1496 = vadd.f32 %v1495, 0.05243302
        %v1497 = vmul.f32 %v1490, %v1496
        %v1498 = vadd.f32 %v1497, 0.18741608
        %v1499 = vmul.f32 %v1490, %v1498
        %v1500 = vadd.f32 %v1499, 1.1283791
        %v1501 = vmul.f32 %v1168, %v1500
        %v1502 = vmul.f32 %v1490, 3.8918573e-05
        %v1503 = vadd.f32 %v1502, 0.001143296
        %v1504 = vmul.f32 %v1490, %v1503
        %v1505 = vadd.f32 %v1504, 0.014752088
        %v1506 = vmul.f32 %v1490, %v1505
        %v1507 = vadd.f32 %v1506, 0.112945676
        %v1508 = vmul.f32 %v1490, %v1507
        %v1509 = vadd.f32 %v1508, 0.4994258
        %v1510 = vmul.f32 %v1490, %v1509
        %v1511 = vadd.f32 %v1510, 1.0
        %v1512 = vrcp.pop %v1511
        %v1513 = vmul.f32 %v1511, %v1512
        %v1514 = vsub.f32 1.0, %v1513
        %v1515 = vmul.f32 %v1512, %v1514
        %v1516 = vadd.f32 %v1512, %v1515
        %vm1517 = vweird.f32 %v1511
        %vm1518 = vweird.f32 %v1512
        %vm1519 = vmor %vm1517, %vm1518
        %v1520 = vsel %vm1519, %v1512, %v1516
        %v1521 = vand.u32 2147483647, %v1511
        %vm1522 = vcmp.eq.f32.partialorder %v1521, 8.507059e+37
        %v1523 = vand.u32 %v1511, 2147483648
        %v1524 = vor.u32 1.1754944e-38, %v1523
        %v1525 = vsel %vm1522, %v1524, %v1520
        %v1526 = vmul.f32 %v1501, %v1525
        %v1527 = vmin.f32 %v1526, 1.0
        %v1528 = vmax.f32 %v1527, -1.0
        %v1529 = vmul.f32 %v1169, %v1169
        %v1530 = vmin.f32 16.0, %v1529
        %v1531 = vmul.f32 %v1530, 2.1237322e-06
        %v1532 = vadd.f32 %v1531, 0.00028619796
        %v1533 = vmul.f32 %v1530, %v1532
        %v1534 = vadd.f32 %v1533, 0.0036580483
        %v1535 = vmul.f32 %v1530, %v1534
        %v1536 = vadd.f32 %v1535, 0.05243302
        %v1537 = vmul.f32 %v1530, %v1536
        %v1538 = vadd.f32 %v1537, 0.18741608
        %v1539 = vmul.f32 %v1530, %v1538
        %v1540 = vadd.f32 %v1539, 1.1283791
        %v1541 = vmul.f32 %v1169, %v1540
        %v1542 = vmul.f32 %v1530, 3.8918573e-05
        %v1543 = vadd.f32 %v1542, 0.001143296
        %v1544 = vmul.f32 %v1530, %v1543
        %v1545 = vadd.f32 %v1544, 0.014752088
        %v1546 = vmul.f32 %v1530, %v1545
        %v1547 = vadd.f32 %v1546, 0.112945676
        %v1548 = vmul.f32 %v1530, %v1547
        %v1549 = vadd.f32 %v1548, 0.4994258
        %v1550 = vmul.f32 %v1530, %v1549
        %v1551 = vadd.f32 %v1550, 1.0
        %v1552 = vrcp.pop %v1551
        %v1553 = vmul.f32 %v1551, %v1552
        %v1554 = vsub.f32 1.0, %v1553
        %v1555 = vmul.f32 %v1552, %v1554
        %v1556 = vadd.f32 %v1552, %v1555
        %vm1557 = vweird.f32 %v1551
        %vm1558 = vweird.f32 %v1552
        %vm1559 = vmor %vm1557, %vm1558
        %v1560 = vsel %vm1559, %v1552, %v1556
        %v1561 = vand.u32 2147483647, %v1551
        %vm1562 = vcmp.eq.f32.partialorder %v1561, 8.507059e+37
        %v1563 = vand.u32 %v1551, 2147483648
        %v1564 = vor.u32 1.1754944e-38, %v1563
        %v1565 = vsel %vm1562, %v1564, %v1560
        %v1566 = vmul.f32 %v1541, %v1565
        %v1567 = vmin.f32 %v1566, 1.0
        %v1568 = vmax.f32 %v1567, -1.0
        %v1569 = vmul.f32 %v1170, %v1170
        %v1570 = vmin.f32 16.0, %v1569
        %v1571 = vmul.f32 %v1570, 2.1237322e-06
        %v1572 = vadd.f32 %v1571, 0.00028619796
        %v1573 = vmul.f32 %v1570, %v1572
        %v1574 = vadd.f32 %v1573, 0.0036580483
        %v1575 = vmul.f32 %v1570, %v1574
        %v1576 = vadd.f32 %v1575, 0.05243302
        %v1577 = vmul.f32 %v1570, %v1576
        %v1578 = vadd.f32 %v1577, 0.18741608
        %v1579 = vmul.f32 %v1570, %v1578
        %v1580 = vadd.f32 %v1579, 1.1283791
        %v1581 = vmul.f32 %v1170, %v1580
        %v1582 = vmul.f32 %v1570, 3.8918573e-05
        %v1583 = vadd.f32 %v1582, 0.001143296
        %v1584 = vmul.f32 %v1570, %v1583
        %v1585 = vadd.f32 %v1584, 0.014752088
        %v1586 = vmul.f32 %v1570, %v1585
        %v1587 = vadd.f32 %v1586, 0.112945676
        %v1588 = vmul.f32 %v1570, %v1587
        %v1589 = vadd.f32 %v1588, 0.4994258
        %v1590 = vmul.f32 %v1570, %v1589
        %v1591 = vadd.f32 %v1590, 1.0
        %v1592 = vrcp.pop %v1591
        %v1593 = vmul.f32 %v1591, %v1592
        %v1594 = vsub.f32 1.0, %v1593
        %v1595 = vmul.f32 %v1592, %v1594
        %v1596 = vadd.f32 %v1592, %v1595
        %vm1597 = vweird.f32 %v1591
        %vm1598 = vweird.f32 %v1592
        %vm1599 = vmor %vm1597, %vm1598
        %v1600 = vsel %vm1599, %v1592, %v1596
        %v1601 = vand.u32 2147483647, %v1591
        %vm1602 = vcmp.eq.f32.partialorder %v1601, 8.507059e+37
        %v1603 = vand.u32 %v1591, 2147483648
        %v1604 = vor.u32 1.1754944e-38, %v1603
        %v1605 = vsel %vm1602, %v1604, %v1600
        %v1606 = vmul.f32 %v1581, %v1605
        %v1607 = vmin.f32 %v1606, 1.0
        %v1608 = vmax.f32 %v1607, -1.0
        %v1609 = vmul.f32 %v1171, %v1171
        %v1610 = vmin.f32 16.0, %v1609
        %v1611 = vmul.f32 %v1610, 2.1237322e-06
        %v1612 = vadd.f32 %v1611, 0.00028619796
        %v1613 = vmul.f32 %v1610, %v1612
        %v1614 = vadd.f32 %v1613, 0.0036580483
        %v1615 = vmul.f32 %v1610, %v1614
        %v1616 = vadd.f32 %v1615, 0.05243302
        %v1617 = vmul.f32 %v1610, %v1616
        %v1618 = vadd.f32 %v1617, 0.18741608
        %v1619 = vmul.f32 %v1610, %v1618
        %v1620 = vadd.f32 %v1619, 1.1283791
        %v1621 = vmul.f32 %v1171, %v1620
        %v1622 = vmul.f32 %v1610, 3.8918573e-05
        %v1623 = vadd.f32 %v1622, 0.001143296
        %v1624 = vmul.f32 %v1610, %v1623
        %v1625 = vadd.f32 %v1624, 0.014752088
        %v1626 = vmul.f32 %v1610, %v1625
        %v1627 = vadd.f32 %v1626, 0.112945676
        %v1628 = vmul.f32 %v1610, %v1627
        %v1629 = vadd.f32 %v1628, 0.4994258
        %v1630 = vmul.f32 %v1610, %v1629
        %v1631 = vadd.f32 %v1630, 1.0
        %v1632 = vrcp.pop %v1631
        %v1633 = vmul.f32 %v1631, %v1632
        %v1634 = vsub.f32 1.0, %v1633
        %v1635 = vmul.f32 %v1632, %v1634
        %v1636 = vadd.f32 %v1632, %v1635
        %vm1637 = vweird.f32 %v1631
        %vm1638 = vweird.f32 %v1632
        %vm1639 = vmor %vm1637, %vm1638
        %v1640 = vsel %vm1639, %v1632, %v1636
        %v1641 = vand.u32 2147483647, %v1631
        %vm1642 = vcmp.eq.f32.partialorder %v1641, 8.507059e+37
        %v1643 = vand.u32 %v1631, 2147483648
        %v1644 = vor.u32 1.1754944e-38, %v1643
        %v1645 = vsel %vm1642, %v1644, %v1640
        %v1646 = vmul.f32 %v1621, %v1645
        %v1647 = vmin.f32 %v1646, 1.0
        %v1648 = vmax.f32 %v1647, -1.0
        %v1649 = vmul.f32 %v1172, %v1172
        %v1650 = vmin.f32 16.0, %v1649
        %v1651 = vmul.f32 %v1650, 2.1237322e-06
        %v1652 = vadd.f32 %v1651, 0.00028619796
        %v1653 = vmul.f32 %v1650, %v1652
        %v1654 = vadd.f32 %v1653, 0.0036580483
        %v1655 = vmul.f32 %v1650, %v1654
        %v1656 = vadd.f32 %v1655, 0.05243302
        %v1657 = vmul.f32 %v1650, %v1656
        %v1658 = vadd.f32 %v1657, 0.18741608
        %v1659 = vmul.f32 %v1650, %v1658
        %v1660 = vadd.f32 %v1659, 1.1283791
        %v1661 = vmul.f32 %v1172, %v1660
        %v1662 = vmul.f32 %v1650, 3.8918573e-05
        %v1663 = vadd.f32 %v1662, 0.001143296
        %v1664 = vmul.f32 %v1650, %v1663
        %v1665 = vadd.f32 %v1664, 0.014752088
        %v1666 = vmul.f32 %v1650, %v1665
        %v1667 = vadd.f32 %v1666, 0.112945676
        %v1668 = vmul.f32 %v1650, %v1667
        %v1669 = vadd.f32 %v1668, 0.4994258
        %v1670 = vmul.f32 %v1650, %v1669
        %v1671 = vadd.f32 %v1670, 1.0
        %v1672 = vrcp.pop %v1671
        %v1673 = vmul.f32 %v1671, %v1672
        %v1674 = vsub.f32 1.0, %v1673
        %v1675 = vmul.f32 %v1672, %v1674
        %v1676 = vadd.f32 %v1672, %v1675
        %vm1677 = vweird.f32 %v1671
        %vm1678 = vweird.f32 %v1672
        %vm1679 = vmor %vm1677, %vm1678
        %v1680 = vsel %vm1679, %v1672, %v1676
        %v1681 = vand.u32 2147483647, %v1671
        %vm1682 = vcmp.eq.f32.partialorder %v1681, 8.507059e+37
        %v1683 = vand.u32 %v1671, 2147483648
        %v1684 = vor.u32 1.1754944e-38, %v1683
        %v1685 = vsel %vm1682, %v1684, %v1680
        %v1686 = vmul.f32 %v1661, %v1685
        %v1687 = vmin.f32 %v1686, 1.0
        %v1688 = vmax.f32 %v1687, -1.0
        %v1689 = vmul.f32 %v1173, %v1173
        %v1690 = vmin.f32 16.0, %v1689
        %v1691 = vmul.f32 %v1690, 2.1237322e-06
        %v1692 = vadd.f32 %v1691, 0.00028619796
        %v1693 = vmul.f32 %v1690, %v1692
        %v1694 = vadd.f32 %v1693, 0.0036580483
        %v1695 = vmul.f32 %v1690, %v1694
        %v1696 = vadd.f32 %v1695, 0.05243302
        %v1697 = vmul.f32 %v1690, %v1696
        %v1698 = vadd.f32 %v1697, 0.18741608
        %v1699 = vmul.f32 %v1690, %v1698
        %v1700 = vadd.f32 %v1699, 1.1283791
        %v1701 = vmul.f32 %v1173, %v1700
        %v1702 = vmul.f32 %v1690, 3.8918573e-05
        %v1703 = vadd.f32 %v1702, 0.001143296
        %v1704 = vmul.f32 %v1690, %v1703
        %v1705 = vadd.f32 %v1704, 0.014752088
        %v1706 = vmul.f32 %v1690, %v1705
        %v1707 = vadd.f32 %v1706, 0.112945676
        %v1708 = vmul.f32 %v1690, %v1707
        %v1709 = vadd.f32 %v1708, 0.4994258
        %v1710 = vmul.f32 %v1690, %v1709
        %v1711 = vadd.f32 %v1710, 1.0
        %v1712 = vrcp.pop %v1711
        %v1713 = vmul.f32 %v1711, %v1712
        %v1714 = vsub.f32 1.0, %v1713
        %v1715 = vmul.f32 %v1712, %v1714
        %v1716 = vadd.f32 %v1712, %v1715
        %vm1717 = vweird.f32 %v1711
        %vm1718 = vweird.f32 %v1712
        %vm1719 = vmor %vm1717, %vm1718
        %v1720 = vsel %vm1719, %v1712, %v1716
        %v1721 = vand.u32 2147483647, %v1711
        %vm1722 = vcmp.eq.f32.partialorder %v1721, 8.507059e+37
        %v1723 = vand.u32 %v1711, 2147483648
        %v1724 = vor.u32 1.1754944e-38, %v1723
        %v1725 = vsel %vm1722, %v1724, %v1720
        %v1726 = vmul.f32 %v1701, %v1725
        %v1727 = vmin.f32 %v1726, 1.0
        %v1728 = vmax.f32 %v1727, -1.0
        %v1729 = vmul.f32 %v1174, %v1174
        %v1730 = vmin.f32 16.0, %v1729
        %v1731 = vmul.f32 %v1730, 2.1237322e-06
        %v1732 = vadd.f32 %v1731, 0.00028619796
        %v1733 = vmul.f32 %v1730, %v1732
        %v1734 = vadd.f32 %v1733, 0.0036580483
        %v1735 = vmul.f32 %v1730, %v1734
        %v1736 = vadd.f32 %v1735, 0.05243302
        %v1737 = vmul.f32 %v1730, %v1736
        %v1738 = vadd.f32 %v1737, 0.18741608
        %v1739 = vmul.f32 %v1730, %v1738
        %v1740 = vadd.f32 %v1739, 1.1283791
        %v1741 = vmul.f32 %v1174, %v1740
        %v1742 = vmul.f32 %v1730, 3.8918573e-05
        %v1743 = vadd.f32 %v1742, 0.001143296
        %v1744 = vmul.f32 %v1730, %v1743
        %v1745 = vadd.f32 %v1744, 0.014752088
        %v1746 = vmul.f32 %v1730, %v1745
        %v1747 = vadd.f32 %v1746, 0.112945676
        %v1748 = vmul.f32 %v1730, %v1747
        %v1749 = vadd.f32 %v1748, 0.4994258
        %v1750 = vmul.f32 %v1730, %v1749
        %v1751 = vadd.f32 %v1750, 1.0
        %v1752 = vrcp.pop %v1751
        %v1753 = vmul.f32 %v1751, %v1752
        %v1754 = vsub.f32 1.0, %v1753
        %v1755 = vmul.f32 %v1752, %v1754
        %v1756 = vadd.f32 %v1752, %v1755
        %vm1757 = vweird.f32 %v1751
        %vm1758 = vweird.f32 %v1752
        %vm1759 = vmor %vm1757, %vm1758
        %v1760 = vsel %vm1759, %v1752, %v1756
        %v1761 = vand.u32 2147483647, %v1751
        %vm1762 = vcmp.eq.f32.partialorder %v1761, 8.507059e+37
        %v1763 = vand.u32 %v1751, 2147483648
        %v1764 = vor.u32 1.1754944e-38, %v1763
        %v1765 = vsel %vm1762, %v1764, %v1760
        %v1766 = vmul.f32 %v1741, %v1765
        %v1767 = vmin.f32 %v1766, 1.0
        %v1768 = vmax.f32 %v1767, -1.0
        %v1769 = vmul.f32 %v1175, %v1175
        %v1770 = vmin.f32 16.0, %v1769
        %v1771 = vmul.f32 %v1770, 2.1237322e-06
        %v1772 = vadd.f32 %v1771, 0.00028619796
        %v1773 = vmul.f32 %v1770, %v1772
        %v1774 = vadd.f32 %v1773, 0.0036580483
        %v1775 = vmul.f32 %v1770, %v1774
        %v1776 = vadd.f32 %v1775, 0.05243302
        %v1777 = vmul.f32 %v1770, %v1776
        %v1778 = vadd.f32 %v1777, 0.18741608
        %v1779 = vmul.f32 %v1770, %v1778
        %v1780 = vadd.f32 %v1779, 1.1283791
        %v1781 = vmul.f32 %v1175, %v1780
        %v1782 = vmul.f32 %v1770, 3.8918573e-05
        %v1783 = vadd.f32 %v1782, 0.001143296
        %v1784 = vmul.f32 %v1770, %v1783
        %v1785 = vadd.f32 %v1784, 0.014752088
        %v1786 = vmul.f32 %v1770, %v1785
        %v1787 = vadd.f32 %v1786, 0.112945676
        %v1788 = vmul.f32 %v1770, %v1787
        %v1789 = vadd.f32 %v1788, 0.4994258
        %v1790 = vmul.f32 %v1770, %v1789
        %v1791 = vadd.f32 %v1790, 1.0
        %v1792 = vrcp.pop %v1791
        %v1793 = vmul.f32 %v1791, %v1792
        %v1794 = vsub.f32 1.0, %v1793
        %v1795 = vmul.f32 %v1792, %v1794
        %v1796 = vadd.f32 %v1792, %v1795
        %vm1797 = vweird.f32 %v1791
        %vm1798 = vweird.f32 %v1792
        %vm1799 = vmor %vm1797, %vm1798
        %v1800 = vsel %vm1799, %v1792, %v1796
        %v1801 = vand.u32 2147483647, %v1791
        %vm1802 = vcmp.eq.f32.partialorder %v1801, 8.507059e+37
        %v1803 = vand.u32 %v1791, 2147483648
        %v1804 = vor.u32 1.1754944e-38, %v1803
        %v1805 = vsel %vm1802, %v1804, %v1800
        %v1806 = vmul.f32 %v1781, %v1805
        %v1807 = vmin.f32 %v1806, 1.0
        %v1808 = vmax.f32 %v1807, -1.0
        %v1809 = vmul.f32 %v1176, %v1176
        %v1810 = vmin.f32 16.0, %v1809
        %v1811 = vmul.f32 %v1810, 2.1237322e-06
        %v1812 = vadd.f32 %v1811, 0.00028619796
        %v1813 = vmul.f32 %v1810, %v1812
        %v1814 = vadd.f32 %v1813, 0.0036580483
        %v1815 = vmul.f32 %v1810, %v1814
        %v1816 = vadd.f32 %v1815, 0.05243302
        %v1817 = vmul.f32 %v1810, %v1816
        %v1818 = vadd.f32 %v1817, 0.18741608
        %v1819 = vmul.f32 %v1810, %v1818
        %v1820 = vadd.f32 %v1819, 1.1283791
        %v1821 = vmul.f32 %v1176, %v1820
        %v1822 = vmul.f32 %v1810, 3.8918573e-05
        %v1823 = vadd.f32 %v1822, 0.001143296
        %v1824 = vmul.f32 %v1810, %v1823
        %v1825 = vadd.f32 %v1824, 0.014752088
        %v1826 = vmul.f32 %v1810, %v1825
        %v1827 = vadd.f32 %v1826, 0.112945676
        %v1828 = vmul.f32 %v1810, %v1827
        %v1829 = vadd.f32 %v1828, 0.4994258
        %v1830 = vmul.f32 %v1810, %v1829
        %v1831 = vadd.f32 %v1830, 1.0
        %v1832 = vrcp.pop %v1831
        %v1833 = vmul.f32 %v1831, %v1832
        %v1834 = vsub.f32 1.0, %v1833
        %v1835 = vmul.f32 %v1832, %v1834
        %v1836 = vadd.f32 %v1832, %v1835
        %vm1837 = vweird.f32 %v1831
        %vm1838 = vweird.f32 %v1832
        %vm1839 = vmor %vm1837, %vm1838
        %v1840 = vsel %vm1839, %v1832, %v1836
        %v1841 = vand.u32 2147483647, %v1831
        %vm1842 = vcmp.eq.f32.partialorder %v1841, 8.507059e+37
        %v1843 = vand.u32 %v1831, 2147483648
        %v1844 = vor.u32 1.1754944e-38, %v1843
        %v1845 = vsel %vm1842, %v1844, %v1840
        %v1846 = vmul.f32 %v1821, %v1845
        %v1847 = vmin.f32 %v1846, 1.0
        %v1848 = vmax.f32 %v1847, -1.0
        %v1849 = vmul.f32 %v1177, %v1177
        %v1850 = vmin.f32 16.0, %v1849
        %v1851 = vmul.f32 %v1850, 2.1237322e-06
        %v1852 = vadd.f32 %v1851, 0.00028619796
        %v1853 = vmul.f32 %v1850, %v1852
        %v1854 = vadd.f32 %v1853, 0.0036580483
        %v1855 = vmul.f32 %v1850, %v1854
        %v1856 = vadd.f32 %v1855, 0.05243302
        %v1857 = vmul.f32 %v1850, %v1856
        %v1858 = vadd.f32 %v1857, 0.18741608
        %v1859 = vmul.f32 %v1850, %v1858
        %v1860 = vadd.f32 %v1859, 1.1283791
        %v1861 = vmul.f32 %v1177, %v1860
        %v1862 = vmul.f32 %v1850, 3.8918573e-05
        %v1863 = vadd.f32 %v1862, 0.001143296
        %v1864 = vmul.f32 %v1850, %v1863
        %v1865 = vadd.f32 %v1864, 0.014752088
        %v1866 = vmul.f32 %v1850, %v1865
        %v1867 = vadd.f32 %v1866, 0.112945676
        %v1868 = vmul.f32 %v1850, %v1867
        %v1869 = vadd.f32 %v1868, 0.4994258
        %v1870 = vmul.f32 %v1850, %v1869
        %v1871 = vadd.f32 %v1870, 1.0
        %v1872 = vrcp.pop %v1871
        %v1873 = vmul.f32 %v1871, %v1872
        %v1874 = vsub.f32 1.0, %v1873
        %v1875 = vmul.f32 %v1872, %v1874
        %v1876 = vadd.f32 %v1872, %v1875
        %vm1877 = vweird.f32 %v1871
        %vm1878 = vweird.f32 %v1872
        %vm1879 = vmor %vm1877, %vm1878
        %v1880 = vsel %vm1879, %v1872, %v1876
        %v1881 = vand.u32 2147483647, %v1871
        %vm1882 = vcmp.eq.f32.partialorder %v1881, 8.507059e+37
        %v1883 = vand.u32 %v1871, 2147483648
        %v1884 = vor.u32 1.1754944e-38, %v1883
        %v1885 = vsel %vm1882, %v1884, %v1880
        %v1886 = vmul.f32 %v1861, %v1885
        %v1887 = vmin.f32 %v1886, 1.0
        %v1888 = vmax.f32 %v1887, -1.0
        %v1889 = vmul.f32 %v1178, %v1178
        %v1890 = vmin.f32 16.0, %v1889
        %v1891 = vmul.f32 %v1890, 2.1237322e-06
        %v1892 = vadd.f32 %v1891, 0.00028619796
        %v1893 = vmul.f32 %v1890, %v1892
        %v1894 = vadd.f32 %v1893, 0.0036580483
        %v1895 = vmul.f32 %v1890, %v1894
        %v1896 = vadd.f32 %v1895, 0.05243302
        %v1897 = vmul.f32 %v1890, %v1896
        %v1898 = vadd.f32 %v1897, 0.18741608
        %v1899 = vmul.f32 %v1890, %v1898
        %v1900 = vadd.f32 %v1899, 1.1283791
        %v1901 = vmul.f32 %v1178, %v1900
        %v1902 = vmul.f32 %v1890, 3.8918573e-05
        %v1903 = vadd.f32 %v1902, 0.001143296
        %v1904 = vmul.f32 %v1890, %v1903
        %v1905 = vadd.f32 %v1904, 0.014752088
        %v1906 = vmul.f32 %v1890, %v1905
        %v1907 = vadd.f32 %v1906, 0.112945676
        %v1908 = vmul.f32 %v1890, %v1907
        %v1909 = vadd.f32 %v1908, 0.4994258
        %v1910 = vmul.f32 %v1890, %v1909
        %v1911 = vadd.f32 %v1910, 1.0
        %v1912 = vrcp.pop %v1911
        %v1913 = vmul.f32 %v1911, %v1912
        %v1914 = vsub.f32 1.0, %v1913
        %v1915 = vmul.f32 %v1912, %v1914
        %v1916 = vadd.f32 %v1912, %v1915
        %vm1917 = vweird.f32 %v1911
        %vm1918 = vweird.f32 %v1912
        %vm1919 = vmor %vm1917, %vm1918
        %v1920 = vsel %vm1919, %v1912, %v1916
        %v1921 = vand.u32 2147483647, %v1911
        %vm1922 = vcmp.eq.f32.partialorder %v1921, 8.507059e+37
        %v1923 = vand.u32 %v1911, 2147483648
        %v1924 = vor.u32 1.1754944e-38, %v1923
        %v1925 = vsel %vm1922, %v1924, %v1920
        %v1926 = vmul.f32 %v1901, %v1925
        %v1927 = vmin.f32 %v1926, 1.0
        %v1928 = vmax.f32 %v1927, -1.0
        %v1929 = vmul.f32 %v1179, %v1179
        %v1930 = vmin.f32 16.0, %v1929
        %v1931 = vmul.f32 %v1930, 2.1237322e-06
        %v1932 = vadd.f32 %v1931, 0.00028619796
        %v1933 = vmul.f32 %v1930, %v1932
        %v1934 = vadd.f32 %v1933, 0.0036580483
        %v1935 = vmul.f32 %v1930, %v1934
        %v1936 = vadd.f32 %v1935, 0.05243302
        %v1937 = vmul.f32 %v1930, %v1936
        %v1938 = vadd.f32 %v1937, 0.18741608
        %v1939 = vmul.f32 %v1930, %v1938
        %v1940 = vadd.f32 %v1939, 1.1283791
        %v1941 = vmul.f32 %v1179, %v1940
        %v1942 = vmul.f32 %v1930, 3.8918573e-05
        %v1943 = vadd.f32 %v1942, 0.001143296
        %v1944 = vmul.f32 %v1930, %v1943
        %v1945 = vadd.f32 %v1944, 0.014752088
        %v1946 = vmul.f32 %v1930, %v1945
        %v1947 = vadd.f32 %v1946, 0.112945676
        %v1948 = vmul.f32 %v1930, %v1947
        %v1949 = vadd.f32 %v1948, 0.4994258
        %v1950 = vmul.f32 %v1930, %v1949
        %v1951 = vadd.f32 %v1950, 1.0
        %v1952 = vrcp.pop %v1951
        %v1953 = vmul.f32 %v1951, %v1952
        %v1954 = vsub.f32 1.0, %v1953
        %v1955 = vmul.f32 %v1952, %v1954
        %v1956 = vadd.f32 %v1952, %v1955
        %vm1957 = vweird.f32 %v1951
        %vm1958 = vweird.f32 %v1952
        %vm1959 = vmor %vm1957, %vm1958
        %v1960 = vsel %vm1959, %v1952, %v1956
        %v1961 = vand.u32 2147483647, %v1951
        %vm1962 = vcmp.eq.f32.partialorder %v1961, 8.507059e+37
        %v1963 = vand.u32 %v1951, 2147483648
        %v1964 = vor.u32 1.1754944e-38, %v1963
        %v1965 = vsel %vm1962, %v1964, %v1960
        %v1966 = vmul.f32 %v1941, %v1965
        %v1967 = vmin.f32 %v1966, 1.0
        %v1968 = vmax.f32 %v1967, -1.0
        %v1969 = vmul.f32 %v1180, %v1180
        %v1970 = vmin.f32 16.0, %v1969
        %v1971 = vmul.f32 %v1970, 2.1237322e-06
        %v1972 = vadd.f32 %v1971, 0.00028619796
        %v1973 = vmul.f32 %v1970, %v1972
        %v1974 = vadd.f32 %v1973, 0.0036580483
        %v1975 = vmul.f32 %v1970, %v1974
        %v1976 = vadd.f32 %v1975, 0.05243302
        %v1977 = vmul.f32 %v1970, %v1976
        %v1978 = vadd.f32 %v1977, 0.18741608
        %v1979 = vmul.f32 %v1970, %v1978
        %v1980 = vadd.f32 %v1979, 1.1283791
        %v1981 = vmul.f32 %v1180, %v1980
        %v1982 = vmul.f32 %v1970, 3.8918573e-05
        %v1983 = vadd.f32 %v1982, 0.001143296
        %v1984 = vmul.f32 %v1970, %v1983
        %v1985 = vadd.f32 %v1984, 0.014752088
        %v1986 = vmul.f32 %v1970, %v1985
        %v1987 = vadd.f32 %v1986, 0.112945676
        %v1988 = vmul.f32 %v1970, %v1987
        %v1989 = vadd.f32 %v1988, 0.4994258
        %v1990 = vmul.f32 %v1970, %v1989
        %v1991 = vadd.f32 %v1990, 1.0
        %v1992 = vrcp.pop %v1991
        %v1993 = vmul.f32 %v1991, %v1992
        %v1994 = vsub.f32 1.0, %v1993
        %v1995 = vmul.f32 %v1992, %v1994
        %v1996 = vadd.f32 %v1992, %v1995
        %vm1997 = vweird.f32 %v1991
        %vm1998 = vweird.f32 %v1992
        %vm1999 = vmor %vm1997, %vm1998
        %v2000 = vsel %vm1999, %v1992, %v1996
        %v2001 = vand.u32 2147483647, %v1991
        %vm2002 = vcmp.eq.f32.partialorder %v2001, 8.507059e+37
        %v2003 = vand.u32 %v1991, 2147483648
        %v2004 = vor.u32 1.1754944e-38, %v2003
        %v2005 = vsel %vm2002, %v2004, %v2000
        %v2006 = vmul.f32 %v1981, %v2005
        %v2007 = vmin.f32 %v2006, 1.0
        %v2008 = vmax.f32 %v2007, -1.0
        %v2009 = vmul.f32 %v1181, %v1181
        %v2010 = vmin.f32 16.0, %v2009
        %v2011 = vmul.f32 %v2010, 2.1237322e-06
        %v2012 = vadd.f32 %v2011, 0.00028619796
        %v2013 = vmul.f32 %v2010, %v2012
        %v2014 = vadd.f32 %v2013, 0.0036580483
        %v2015 = vmul.f32 %v2010, %v2014
        %v2016 = vadd.f32 %v2015, 0.05243302
        %v2017 = vmul.f32 %v2010, %v2016
        %v2018 = vadd.f32 %v2017, 0.18741608
        %v2019 = vmul.f32 %v2010, %v2018
        %v2020 = vadd.f32 %v2019, 1.1283791
        %v2021 = vmul.f32 %v1181, %v2020
        %v2022 = vmul.f32 %v2010, 3.8918573e-05
        %v2023 = vadd.f32 %v2022, 0.001143296
        %v2024 = vmul.f32 %v2010, %v2023
        %v2025 = vadd.f32 %v2024, 0.014752088
        %v2026 = vmul.f32 %v2010, %v2025
        %v2027 = vadd.f32 %v2026, 0.112945676
        %v2028 = vmul.f32 %v2010, %v2027
        %v2029 = vadd.f32 %v2028, 0.4994258
        %v2030 = vmul.f32 %v2010, %v2029
        %v2031 = vadd.f32 %v2030, 1.0
        %v2032 = vrcp.pop %v2031
        %v2033 = vmul.f32 %v2031, %v2032
        %v2034 = vsub.f32 1.0, %v2033
        %v2035 = vmul.f32 %v2032, %v2034
        %v2036 = vadd.f32 %v2032, %v2035
        %vm2037 = vweird.f32 %v2031
        %vm2038 = vweird.f32 %v2032
        %vm2039 = vmor %vm2037, %vm2038
        %v2040 = vsel %vm2039, %v2032, %v2036
        %v2041 = vand.u32 2147483647, %v2031
        %vm2042 = vcmp.eq.f32.partialorder %v2041, 8.507059e+37
        %v2043 = vand.u32 %v2031, 2147483648
        %v2044 = vor.u32 1.1754944e-38, %v2043
        %v2045 = vsel %vm2042, %v2044, %v2040
        %v2046 = vmul.f32 %v2021, %v2045
        %v2047 = vmin.f32 %v2046, 1.0
        %v2048 = vmax.f32 %v2047, -1.0
        %v2049 = vmul.f32 %v1182, %v1182
        %v2050 = vmin.f32 16.0, %v2049
        %v2051 = vmul.f32 %v2050, 2.1237322e-06
        %v2052 = vadd.f32 %v2051, 0.00028619796
        %v2053 = vmul.f32 %v2050, %v2052
        %v2054 = vadd.f32 %v2053, 0.0036580483
        %v2055 = vmul.f32 %v2050, %v2054
        %v2056 = vadd.f32 %v2055, 0.05243302
        %v2057 = vmul.f32 %v2050, %v2056
        %v2058 = vadd.f32 %v2057, 0.18741608
        %v2059 = vmul.f32 %v2050, %v2058
        %v2060 = vadd.f32 %v2059, 1.1283791
        %v2061 = vmul.f32 %v1182, %v2060
        %v2062 = vmul.f32 %v2050, 3.8918573e-05
        %v2063 = vadd.f32 %v2062, 0.001143296
        %v2064 = vmul.f32 %v2050, %v2063
        %v2065 = vadd.f32 %v2064, 0.014752088
        %v2066 = vmul.f32 %v2050, %v2065
        %v2067 = vadd.f32 %v2066, 0.112945676
        %v2068 = vmul.f32 %v2050, %v2067
        %v2069 = vadd.f32 %v2068, 0.4994258
        %v2070 = vmul.f32 %v2050, %v2069
        %v2071 = vadd.f32 %v2070, 1.0
        %v2072 = vrcp.pop %v2071
        %v2073 = vmul.f32 %v2071, %v2072
        %v2074 = vsub.f32 1.0, %v2073
        %v2075 = vmul.f32 %v2072, %v2074
        %v2076 = vadd.f32 %v2072, %v2075
        %vm2077 = vweird.f32 %v2071
        %vm2078 = vweird.f32 %v2072
        %vm2079 = vmor %vm2077, %vm2078
        %v2080 = vsel %vm2079, %v2072, %v2076
        %v2081 = vand.u32 2147483647, %v2071
        %vm2082 = vcmp.eq.f32.partialorder %v2081, 8.507059e+37
        %v2083 = vand.u32 %v2071, 2147483648
        %v2084 = vor.u32 1.1754944e-38, %v2083
        %v2085 = vsel %vm2082, %v2084, %v2080
        %v2086 = vmul.f32 %v2061, %v2085
        %v2087 = vmin.f32 %v2086, 1.0
        %v2088 = vmax.f32 %v2087, -1.0
        %v2089 = vmul.f32 %v1183, %v1183
        %v2090 = vmin.f32 16.0, %v2089
        %v2091 = vmul.f32 %v2090, 2.1237322e-06
        %v2092 = vadd.f32 %v2091, 0.00028619796
        %v2093 = vmul.f32 %v2090, %v2092
        %v2094 = vadd.f32 %v2093, 0.0036580483
        %v2095 = vmul.f32 %v2090, %v2094
        %v2096 = vadd.f32 %v2095, 0.05243302
        %v2097 = vmul.f32 %v2090, %v2096
        %v2098 = vadd.f32 %v2097, 0.18741608
        %v2099 = vmul.f32 %v2090, %v2098
        %v2100 = vadd.f32 %v2099, 1.1283791
        %v2101 = vmul.f32 %v1183, %v2100
        %v2102 = vmul.f32 %v2090, 3.8918573e-05
        %v2103 = vadd.f32 %v2102, 0.001143296
        %v2104 = vmul.f32 %v2090, %v2103
        %v2105 = vadd.f32 %v2104, 0.014752088
        %v2106 = vmul.f32 %v2090, %v2105
        %v2107 = vadd.f32 %v2106, 0.112945676
        %v2108 = vmul.f32 %v2090, %v2107
        %v2109 = vadd.f32 %v2108, 0.4994258
        %v2110 = vmul.f32 %v2090, %v2109
        %v2111 = vadd.f32 %v2110, 1.0
        %v2112 = vrcp.pop %v2111
        %v2113 = vmul.f32 %v2111, %v2112
        %v2114 = vsub.f32 1.0, %v2113
        %v2115 = vmul.f32 %v2112, %v2114
        %v2116 = vadd.f32 %v2112, %v2115
        %vm2117 = vweird.f32 %v2111
        %vm2118 = vweird.f32 %v2112
        %vm2119 = vmor %vm2117, %vm2118
        %v2120 = vsel %vm2119, %v2112, %v2116
        %v2121 = vand.u32 2147483647, %v2111
        %vm2122 = vcmp.eq.f32.partialorder %v2121, 8.507059e+37
        %v2123 = vand.u32 %v2111, 2147483648
        %v2124 = vor.u32 1.1754944e-38, %v2123
        %v2125 = vsel %vm2122, %v2124, %v2120
        %v2126 = vmul.f32 %v2101, %v2125
        %v2127 = vmin.f32 %v2126, 1.0
        %v2128 = vmax.f32 %v2127, -1.0
        %v2129 = vmul.f32 %v1184, %v1184
        %v2130 = vmin.f32 16.0, %v2129
        %v2131 = vmul.f32 %v2130, 2.1237322e-06
        %v2132 = vadd.f32 %v2131, 0.00028619796
        %v2133 = vmul.f32 %v2130, %v2132
        %v2134 = vadd.f32 %v2133, 0.0036580483
        %v2135 = vmul.f32 %v2130, %v2134
        %v2136 = vadd.f32 %v2135, 0.05243302
        %v2137 = vmul.f32 %v2130, %v2136
        %v2138 = vadd.f32 %v2137, 0.18741608
        %v2139 = vmul.f32 %v2130, %v2138
        %v2140 = vadd.f32 %v2139, 1.1283791
        %v2141 = vmul.f32 %v1184, %v2140
        %v2142 = vmul.f32 %v2130, 3.8918573e-05
        %v2143 = vadd.f32 %v2142, 0.001143296
        %v2144 = vmul.f32 %v2130, %v2143
        %v2145 = vadd.f32 %v2144, 0.014752088
        %v2146 = vmul.f32 %v2130, %v2145
        %v2147 = vadd.f32 %v2146, 0.112945676
        %v2148 = vmul.f32 %v2130, %v2147
        %v2149 = vadd.f32 %v2148, 0.4994258
        %v2150 = vmul.f32 %v2130, %v2149
        %v2151 = vadd.f32 %v2150, 1.0
        %v2152 = vrcp.pop %v2151
        %v2153 = vmul.f32 %v2151, %v2152
        %v2154 = vsub.f32 1.0, %v2153
        %v2155 = vmul.f32 %v2152, %v2154
        %v2156 = vadd.f32 %v2152, %v2155
        %vm2157 = vweird.f32 %v2151
        %vm2158 = vweird.f32 %v2152
        %vm2159 = vmor %vm2157, %vm2158
        %v2160 = vsel %vm2159, %v2152, %v2156
        %v2161 = vand.u32 2147483647, %v2151
        %vm2162 = vcmp.eq.f32.partialorder %v2161, 8.507059e+37
        %v2163 = vand.u32 %v2151, 2147483648
        %v2164 = vor.u32 1.1754944e-38, %v2163
        %v2165 = vsel %vm2162, %v2164, %v2160
        %v2166 = vmul.f32 %v2141, %v2165
        %v2167 = vmin.f32 %v2166, 1.0
        %v2168 = vmax.f32 %v2167, -1.0
        %v2169 = vmul.f32 %v1185, %v1185
        %v2170 = vmin.f32 16.0, %v2169
        %v2171 = vmul.f32 %v2170, 2.1237322e-06
        %v2172 = vadd.f32 %v2171, 0.00028619796
        %v2173 = vmul.f32 %v2170, %v2172
        %v2174 = vadd.f32 %v2173, 0.0036580483
        %v2175 = vmul.f32 %v2170, %v2174
        %v2176 = vadd.f32 %v2175, 0.05243302
        %v2177 = vmul.f32 %v2170, %v2176
        %v2178 = vadd.f32 %v2177, 0.18741608
        %v2179 = vmul.f32 %v2170, %v2178
        %v2180 = vadd.f32 %v2179, 1.1283791
        %v2181 = vmul.f32 %v1185, %v2180
        %v2182 = vmul.f32 %v2170, 3.8918573e-05
        %v2183 = vadd.f32 %v2182, 0.001143296
        %v2184 = vmul.f32 %v2170, %v2183
        %v2185 = vadd.f32 %v2184, 0.014752088
        %v2186 = vmul.f32 %v2170, %v2185
        %v2187 = vadd.f32 %v2186, 0.112945676
        %v2188 = vmul.f32 %v2170, %v2187
        %v2189 = vadd.f32 %v2188, 0.4994258
        %v2190 = vmul.f32 %v2170, %v2189
        %v2191 = vadd.f32 %v2190, 1.0
        %v2192 = vrcp.pop %v2191
        %v2193 = vmul.f32 %v2191, %v2192
        %v2194 = vsub.f32 1.0, %v2193
        %v2195 = vmul.f32 %v2192, %v2194
        %v2196 = vadd.f32 %v2192, %v2195
        %vm2197 = vweird.f32 %v2191
        %vm2198 = vweird.f32 %v2192
        %vm2199 = vmor %vm2197, %vm2198
        %v2200 = vsel %vm2199, %v2192, %v2196
        %v2201 = vand.u32 2147483647, %v2191
        %vm2202 = vcmp.eq.f32.partialorder %v2201, 8.507059e+37
        %v2203 = vand.u32 %v2191, 2147483648
        %v2204 = vor.u32 1.1754944e-38, %v2203
        %v2205 = vsel %vm2202, %v2204, %v2200
        %v2206 = vmul.f32 %v2181, %v2205
        %v2207 = vmin.f32 %v2206, 1.0
        %v2208 = vmax.f32 %v2207, -1.0
        %v2209 = vmul.f32 %v1186, %v1186
        %v2210 = vmin.f32 16.0, %v2209
        %v2211 = vmul.f32 %v2210, 2.1237322e-06
        %v2212 = vadd.f32 %v2211, 0.00028619796
        %v2213 = vmul.f32 %v2210, %v2212
        %v2214 = vadd.f32 %v2213, 0.0036580483
        %v2215 = vmul.f32 %v2210, %v2214
        %v2216 = vadd.f32 %v2215, 0.05243302
        %v2217 = vmul.f32 %v2210, %v2216
        %v2218 = vadd.f32 %v2217, 0.18741608
        %v2219 = vmul.f32 %v2210, %v2218
        %v2220 = vadd.f32 %v2219, 1.1283791
        %v2221 = vmul.f32 %v1186, %v2220
        %v2222 = vmul.f32 %v2210, 3.8918573e-05
        %v2223 = vadd.f32 %v2222, 0.001143296
        %v2224 = vmul.f32 %v2210, %v2223
        %v2225 = vadd.f32 %v2224, 0.014752088
        %v2226 = vmul.f32 %v2210, %v2225
        %v2227 = vadd.f32 %v2226, 0.112945676
        %v2228 = vmul.f32 %v2210, %v2227
        %v2229 = vadd.f32 %v2228, 0.4994258
        %v2230 = vmul.f32 %v2210, %v2229
        %v2231 = vadd.f32 %v2230, 1.0
        %v2232 = vrcp.pop %v2231
        %v2233 = vmul.f32 %v2231, %v2232
        %v2234 = vsub.f32 1.0, %v2233
        %v2235 = vmul.f32 %v2232, %v2234
        %v2236 = vadd.f32 %v2232, %v2235
        %vm2237 = vweird.f32 %v2231
        %vm2238 = vweird.f32 %v2232
        %vm2239 = vmor %vm2237, %vm2238
        %v2240 = vsel %vm2239, %v2232, %v2236
        %v2241 = vand.u32 2147483647, %v2231
        %vm2242 = vcmp.eq.f32.partialorder %v2241, 8.507059e+37
        %v2243 = vand.u32 %v2231, 2147483648
        %v2244 = vor.u32 1.1754944e-38, %v2243
        %v2245 = vsel %vm2242, %v2244, %v2240
        %v2246 = vmul.f32 %v2221, %v2245
        %v2247 = vmin.f32 %v2246, 1.0
        %v2248 = vmax.f32 %v2247, -1.0
        %v2249 = vmul.f32 %v1187, %v1187
        %v2250 = vmin.f32 16.0, %v2249
        %v2251 = vmul.f32 %v2250, 2.1237322e-06
        %v2252 = vadd.f32 %v2251, 0.00028619796
        %v2253 = vmul.f32 %v2250, %v2252
        %v2254 = vadd.f32 %v2253, 0.0036580483
        %v2255 = vmul.f32 %v2250, %v2254
        %v2256 = vadd.f32 %v2255, 0.05243302
        %v2257 = vmul.f32 %v2250, %v2256
        %v2258 = vadd.f32 %v2257, 0.18741608
        %v2259 = vmul.f32 %v2250, %v2258
        %v2260 = vadd.f32 %v2259, 1.1283791
        %v2261 = vmul.f32 %v1187, %v2260
        %v2262 = vmul.f32 %v2250, 3.8918573e-05
        %v2263 = vadd.f32 %v2262, 0.001143296
        %v2264 = vmul.f32 %v2250, %v2263
        %v2265 = vadd.f32 %v2264, 0.014752088
        %v2266 = vmul.f32 %v2250, %v2265
        %v2267 = vadd.f32 %v2266, 0.112945676
        %v2268 = vmul.f32 %v2250, %v2267
        %v2269 = vadd.f32 %v2268, 0.4994258
        %v2270 = vmul.f32 %v2250, %v2269
        %v2271 = vadd.f32 %v2270, 1.0
        %v2272 = vrcp.pop %v2271
        %v2273 = vmul.f32 %v2271, %v2272
        %v2274 = vsub.f32 1.0, %v2273
        %v2275 = vmul.f32 %v2272, %v2274
        %v2276 = vadd.f32 %v2272, %v2275
        %vm2277 = vweird.f32 %v2271
        %vm2278 = vweird.f32 %v2272
        %vm2279 = vmor %vm2277, %vm2278
        %v2280 = vsel %vm2279, %v2272, %v2276
        %v2281 = vand.u32 2147483647, %v2271
        %vm2282 = vcmp.eq.f32.partialorder %v2281, 8.507059e+37
        %v2283 = vand.u32 %v2271, 2147483648
        %v2284 = vor.u32 1.1754944e-38, %v2283
        %v2285 = vsel %vm2282, %v2284, %v2280
        %v2286 = vmul.f32 %v2261, %v2285
        %v2287 = vmin.f32 %v2286, 1.0
        %v2288 = vmax.f32 %v2287, -1.0
        %v2289 = vmul.f32 %v1188, %v1188
        %v2290 = vmin.f32 16.0, %v2289
        %v2291 = vmul.f32 %v2290, 2.1237322e-06
        %v2292 = vadd.f32 %v2291, 0.00028619796
        %v2293 = vmul.f32 %v2290, %v2292
        %v2294 = vadd.f32 %v2293, 0.0036580483
        %v2295 = vmul.f32 %v2290, %v2294
        %v2296 = vadd.f32 %v2295, 0.05243302
        %v2297 = vmul.f32 %v2290, %v2296
        %v2298 = vadd.f32 %v2297, 0.18741608
        %v2299 = vmul.f32 %v2290, %v2298
        %v2300 = vadd.f32 %v2299, 1.1283791
        %v2301 = vmul.f32 %v1188, %v2300
        %v2302 = vmul.f32 %v2290, 3.8918573e-05
        %v2303 = vadd.f32 %v2302, 0.001143296
        %v2304 = vmul.f32 %v2290, %v2303
        %v2305 = vadd.f32 %v2304, 0.014752088
        %v2306 = vmul.f32 %v2290, %v2305
        %v2307 = vadd.f32 %v2306, 0.112945676
        %v2308 = vmul.f32 %v2290, %v2307
        %v2309 = vadd.f32 %v2308, 0.4994258
        %v2310 = vmul.f32 %v2290, %v2309
        %v2311 = vadd.f32 %v2310, 1.0
        %v2312 = vrcp.pop %v2311
        %v2313 = vmul.f32 %v2311, %v2312
        %v2314 = vsub.f32 1.0, %v2313
        %v2315 = vmul.f32 %v2312, %v2314
        %v2316 = vadd.f32 %v2312, %v2315
        %vm2317 = vweird.f32 %v2311
        %vm2318 = vweird.f32 %v2312
        %vm2319 = vmor %vm2317, %vm2318
        %v2320 = vsel %vm2319, %v2312, %v2316
        %v2321 = vand.u32 2147483647, %v2311
        %vm2322 = vcmp.eq.f32.partialorder %v2321, 8.507059e+37
        %v2323 = vand.u32 %v2311, 2147483648
        %v2324 = vor.u32 1.1754944e-38, %v2323
        %v2325 = vsel %vm2322, %v2324, %v2320
        %v2326 = vmul.f32 %v2301, %v2325
        %v2327 = vmin.f32 %v2326, 1.0
        %v2328 = vmax.f32 %v2327, -1.0
        %v2329 = vmul.f32 %v1189, %v1189
        %v2330 = vmin.f32 16.0, %v2329
        %v2331 = vmul.f32 %v2330, 2.1237322e-06
        %v2332 = vadd.f32 %v2331, 0.00028619796
        %v2333 = vmul.f32 %v2330, %v2332
        %v2334 = vadd.f32 %v2333, 0.0036580483
        %v2335 = vmul.f32 %v2330, %v2334
        %v2336 = vadd.f32 %v2335, 0.05243302
        %v2337 = vmul.f32 %v2330, %v2336
        %v2338 = vadd.f32 %v2337, 0.18741608
        %v2339 = vmul.f32 %v2330, %v2338
        %v2340 = vadd.f32 %v2339, 1.1283791
        %v2341 = vmul.f32 %v1189, %v2340
        %v2342 = vmul.f32 %v2330, 3.8918573e-05
        %v2343 = vadd.f32 %v2342, 0.001143296
        %v2344 = vmul.f32 %v2330, %v2343
        %v2345 = vadd.f32 %v2344, 0.014752088
        %v2346 = vmul.f32 %v2330, %v2345
        %v2347 = vadd.f32 %v2346, 0.112945676
        %v2348 = vmul.f32 %v2330, %v2347
        %v2349 = vadd.f32 %v2348, 0.4994258
        %v2350 = vmul.f32 %v2330, %v2349
        %v2351 = vadd.f32 %v2350, 1.0
        %v2352 = vrcp.pop %v2351
        %v2353 = vmul.f32 %v2351, %v2352
        %v2354 = vsub.f32 1.0, %v2353
        %v2355 = vmul.f32 %v2352, %v2354
        %v2356 = vadd.f32 %v2352, %v2355
        %vm2357 = vweird.f32 %v2351
        %vm2358 = vweird.f32 %v2352
        %vm2359 = vmor %vm2357, %vm2358
        %v2360 = vsel %vm2359, %v2352, %v2356
        %v2361 = vand.u32 2147483647, %v2351
        %vm2362 = vcmp.eq.f32.partialorder %v2361, 8.507059e+37
        %v2363 = vand.u32 %v2351, 2147483648
        %v2364 = vor.u32 1.1754944e-38, %v2363
        %v2365 = vsel %vm2362, %v2364, %v2360
        %v2366 = vmul.f32 %v2341, %v2365
        %v2367 = vmin.f32 %v2366, 1.0
        %v2368 = vmax.f32 %v2367, -1.0
        %v2369 = vmul.f32 %v1190, %v1190
        %v2370 = vmin.f32 16.0, %v2369
        %v2371 = vmul.f32 %v2370, 2.1237322e-06
        %v2372 = vadd.f32 %v2371, 0.00028619796
        %v2373 = vmul.f32 %v2370, %v2372
        %v2374 = vadd.f32 %v2373, 0.0036580483
        %v2375 = vmul.f32 %v2370, %v2374
        %v2376 = vadd.f32 %v2375, 0.05243302
        %v2377 = vmul.f32 %v2370, %v2376
        %v2378 = vadd.f32 %v2377, 0.18741608
        %v2379 = vmul.f32 %v2370, %v2378
        %v2380 = vadd.f32 %v2379, 1.1283791
        %v2381 = vmul.f32 %v1190, %v2380
        %v2382 = vmul.f32 %v2370, 3.8918573e-05
        %v2383 = vadd.f32 %v2382, 0.001143296
        %v2384 = vmul.f32 %v2370, %v2383
        %v2385 = vadd.f32 %v2384, 0.014752088
        %v2386 = vmul.f32 %v2370, %v2385
        %v2387 = vadd.f32 %v2386, 0.112945676
        %v2388 = vmul.f32 %v2370, %v2387
        %v2389 = vadd.f32 %v2388, 0.4994258
        %v2390 = vmul.f32 %v2370, %v2389
        %v2391 = vadd.f32 %v2390, 1.0
        %v2392 = vrcp.pop %v2391
        %v2393 = vmul.f32 %v2391, %v2392
        %v2394 = vsub.f32 1.0, %v2393
        %v2395 = vmul.f32 %v2392, %v2394
        %v2396 = vadd.f32 %v2392, %v2395
        %vm2397 = vweird.f32 %v2391
        %vm2398 = vweird.f32 %v2392
        %vm2399 = vmor %vm2397, %vm2398
        %v2400 = vsel %vm2399, %v2392, %v2396
        %v2401 = vand.u32 2147483647, %v2391
        %vm2402 = vcmp.eq.f32.partialorder %v2401, 8.507059e+37
        %v2403 = vand.u32 %v2391, 2147483648
        %v2404 = vor.u32 1.1754944e-38, %v2403
        %v2405 = vsel %vm2402, %v2404, %v2400
        %v2406 = vmul.f32 %v2381, %v2405
        %v2407 = vmin.f32 %v2406, 1.0
        %v2408 = vmax.f32 %v2407, -1.0
        %v2409 = vmul.f32 %v1191, %v1191
        %v2410 = vmin.f32 16.0, %v2409
        %v2411 = vmul.f32 %v2410, 2.1237322e-06
        %v2412 = vadd.f32 %v2411, 0.00028619796
        %v2413 = vmul.f32 %v2410, %v2412
        %v2414 = vadd.f32 %v2413, 0.0036580483
        %v2415 = vmul.f32 %v2410, %v2414
        %v2416 = vadd.f32 %v2415, 0.05243302
        %v2417 = vmul.f32 %v2410, %v2416
        %v2418 = vadd.f32 %v2417, 0.18741608
        %v2419 = vmul.f32 %v2410, %v2418
        %v2420 = vadd.f32 %v2419, 1.1283791
        %v2421 = vmul.f32 %v1191, %v2420
        %v2422 = vmul.f32 %v2410, 3.8918573e-05
        %v2423 = vadd.f32 %v2422, 0.001143296
        %v2424 = vmul.f32 %v2410, %v2423
        %v2425 = vadd.f32 %v2424, 0.014752088
        %v2426 = vmul.f32 %v2410, %v2425
        %v2427 = vadd.f32 %v2426, 0.112945676
        %v2428 = vmul.f32 %v2410, %v2427
        %v2429 = vadd.f32 %v2428, 0.4994258
        %v2430 = vmul.f32 %v2410, %v2429
        %v2431 = vadd.f32 %v2430, 1.0
        %v2432 = vrcp.pop %v2431
        %v2433 = vmul.f32 %v2431, %v2432
        %v2434 = vsub.f32 1.0, %v2433
        %v2435 = vmul.f32 %v2432, %v2434
        %v2436 = vadd.f32 %v2432, %v2435
        %vm2437 = vweird.f32 %v2431
        %vm2438 = vweird.f32 %v2432
        %vm2439 = vmor %vm2437, %vm2438
        %v2440 = vsel %vm2439, %v2432, %v2436
        %v2441 = vand.u32 2147483647, %v2431
        %vm2442 = vcmp.eq.f32.partialorder %v2441, 8.507059e+37
        %v2443 = vand.u32 %v2431, 2147483648
        %v2444 = vor.u32 1.1754944e-38, %v2443
        %v2445 = vsel %vm2442, %v2444, %v2440
        %v2446 = vmul.f32 %v2421, %v2445
        %v2447 = vmin.f32 %v2446, 1.0
        %v2448 = vmax.f32 %v2447, -1.0
        %v2449 = vmul.f32 %v1192, %v1192
        %v2450 = vmin.f32 16.0, %v2449
        %v2451 = vmul.f32 %v2450, 2.1237322e-06
        %v2452 = vadd.f32 %v2451, 0.00028619796
        %v2453 = vmul.f32 %v2450, %v2452
        %v2454 = vadd.f32 %v2453, 0.0036580483
        %v2455 = vmul.f32 %v2450, %v2454
        %v2456 = vadd.f32 %v2455, 0.05243302
        %v2457 = vmul.f32 %v2450, %v2456
        %v2458 = vadd.f32 %v2457, 0.18741608
        %v2459 = vmul.f32 %v2450, %v2458
        %v2460 = vadd.f32 %v2459, 1.1283791
        %v2461 = vmul.f32 %v1192, %v2460
        %v2462 = vmul.f32 %v2450, 3.8918573e-05
        %v2463 = vadd.f32 %v2462, 0.001143296
        %v2464 = vmul.f32 %v2450, %v2463
        %v2465 = vadd.f32 %v2464, 0.014752088
        %v2466 = vmul.f32 %v2450, %v2465
        %v2467 = vadd.f32 %v2466, 0.112945676
        %v2468 = vmul.f32 %v2450, %v2467
        %v2469 = vadd.f32 %v2468, 0.4994258
        %v2470 = vmul.f32 %v2450, %v2469
        %v2471 = vadd.f32 %v2470, 1.0
        %v2472 = vrcp.pop %v2471
        %v2473 = vmul.f32 %v2471, %v2472
        %v2474 = vsub.f32 1.0, %v2473
        %v2475 = vmul.f32 %v2472, %v2474
        %v2476 = vadd.f32 %v2472, %v2475
        %vm2477 = vweird.f32 %v2471
        %vm2478 = vweird.f32 %v2472
        %vm2479 = vmor %vm2477, %vm2478
        %v2480 = vsel %vm2479, %v2472, %v2476
        %v2481 = vand.u32 2147483647, %v2471
        %vm2482 = vcmp.eq.f32.partialorder %v2481, 8.507059e+37
        %v2483 = vand.u32 %v2471, 2147483648
        %v2484 = vor.u32 1.1754944e-38, %v2483
        %v2485 = vsel %vm2482, %v2484, %v2480
        %v2486 = vmul.f32 %v2461, %v2485
        %v2487 = vmin.f32 %v2486, 1.0
        %v2488 = vmax.f32 %v2487, -1.0
        %v2489 = vmul.f32 %v1193, %v1193
        %v2490 = vmin.f32 16.0, %v2489
        %v2491 = vmul.f32 %v2490, 2.1237322e-06
        %v2492 = vadd.f32 %v2491, 0.00028619796
        %v2493 = vmul.f32 %v2490, %v2492
        %v2494 = vadd.f32 %v2493, 0.0036580483
        %v2495 = vmul.f32 %v2490, %v2494
        %v2496 = vadd.f32 %v2495, 0.05243302
        %v2497 = vmul.f32 %v2490, %v2496
        %v2498 = vadd.f32 %v2497, 0.18741608
        %v2499 = vmul.f32 %v2490, %v2498
        %v2500 = vadd.f32 %v2499, 1.1283791
        %v2501 = vmul.f32 %v1193, %v2500
        %v2502 = vmul.f32 %v2490, 3.8918573e-05
        %v2503 = vadd.f32 %v2502, 0.001143296
        %v2504 = vmul.f32 %v2490, %v2503
        %v2505 = vadd.f32 %v2504, 0.014752088
        %v2506 = vmul.f32 %v2490, %v2505
        %v2507 = vadd.f32 %v2506, 0.112945676
        %v2508 = vmul.f32 %v2490, %v2507
        %v2509 = vadd.f32 %v2508, 0.4994258
        %v2510 = vmul.f32 %v2490, %v2509
        %v2511 = vadd.f32 %v2510, 1.0
        %v2512 = vrcp.pop %v2511
        %v2513 = vmul.f32 %v2511, %v2512
        %v2514 = vsub.f32 1.0, %v2513
        %v2515 = vmul.f32 %v2512, %v2514
        %v2516 = vadd.f32 %v2512, %v2515
        %vm2517 = vweird.f32 %v2511
        %vm2518 = vweird.f32 %v2512
        %vm2519 = vmor %vm2517, %vm2518
        %v2520 = vsel %vm2519, %v2512, %v2516
        %v2521 = vand.u32 2147483647, %v2511
        %vm2522 = vcmp.eq.f32.partialorder %v2521, 8.507059e+37
        %v2523 = vand.u32 %v2511, 2147483648
        %v2524 = vor.u32 1.1754944e-38, %v2523
        %v2525 = vsel %vm2522, %v2524, %v2520
        %v2526 = vmul.f32 %v2501, %v2525
        %v2527 = vmin.f32 %v2526, 1.0
        %v2528 = vmax.f32 %v2527, -1.0
        %v2529 = vmul.f32 %v1194, %v1194
        %v2530 = vmin.f32 16.0, %v2529
        %v2531 = vmul.f32 %v2530, 2.1237322e-06
        %v2532 = vadd.f32 %v2531, 0.00028619796
        %v2533 = vmul.f32 %v2530, %v2532
        %v2534 = vadd.f32 %v2533, 0.0036580483
        %v2535 = vmul.f32 %v2530, %v2534
        %v2536 = vadd.f32 %v2535, 0.05243302
        %v2537 = vmul.f32 %v2530, %v2536
        %v2538 = vadd.f32 %v2537, 0.18741608
        %v2539 = vmul.f32 %v2530, %v2538
        %v2540 = vadd.f32 %v2539, 1.1283791
        %v2541 = vmul.f32 %v1194, %v2540
        %v2542 = vmul.f32 %v2530, 3.8918573e-05
        %v2543 = vadd.f32 %v2542, 0.001143296
        %v2544 = vmul.f32 %v2530, %v2543
        %v2545 = vadd.f32 %v2544, 0.014752088
        %v2546 = vmul.f32 %v2530, %v2545
        %v2547 = vadd.f32 %v2546, 0.112945676
        %v2548 = vmul.f32 %v2530, %v2547
        %v2549 = vadd.f32 %v2548, 0.4994258
        %v2550 = vmul.f32 %v2530, %v2549
        %v2551 = vadd.f32 %v2550, 1.0
        %v2552 = vrcp.pop %v2551
        %v2553 = vmul.f32 %v2551, %v2552
        %v2554 = vsub.f32 1.0, %v2553
        %v2555 = vmul.f32 %v2552, %v2554
        %v2556 = vadd.f32 %v2552, %v2555
        %vm2557 = vweird.f32 %v2551
        %vm2558 = vweird.f32 %v2552
        %vm2559 = vmor %vm2557, %vm2558
        %v2560 = vsel %vm2559, %v2552, %v2556
        %v2561 = vand.u32 2147483647, %v2551
        %vm2562 = vcmp.eq.f32.partialorder %v2561, 8.507059e+37
        %v2563 = vand.u32 %v2551, 2147483648
        %v2564 = vor.u32 1.1754944e-38, %v2563
        %v2565 = vsel %vm2562, %v2564, %v2560
        %v2566 = vmul.f32 %v2541, %v2565
        %v2567 = vmin.f32 %v2566, 1.0
        %v2568 = vmax.f32 %v2567, -1.0
        %v2569 = vmul.f32 %v1195, %v1195
        %v2570 = vmin.f32 16.0, %v2569
        %v2571 = vmul.f32 %v2570, 2.1237322e-06
        %v2572 = vadd.f32 %v2571, 0.00028619796
        %v2573 = vmul.f32 %v2570, %v2572
        %v2574 = vadd.f32 %v2573, 0.0036580483
        %v2575 = vmul.f32 %v2570, %v2574
        %v2576 = vadd.f32 %v2575, 0.05243302
        %v2577 = vmul.f32 %v2570, %v2576
        %v2578 = vadd.f32 %v2577, 0.18741608
        %v2579 = vmul.f32 %v2570, %v2578
        %v2580 = vadd.f32 %v2579, 1.1283791
        %v2581 = vmul.f32 %v1195, %v2580
        %v2582 = vmul.f32 %v2570, 3.8918573e-05
        %v2583 = vadd.f32 %v2582, 0.001143296
        %v2584 = vmul.f32 %v2570, %v2583
        %v2585 = vadd.f32 %v2584, 0.014752088
        %v2586 = vmul.f32 %v2570, %v2585
        %v2587 = vadd.f32 %v2586, 0.112945676
        %v2588 = vmul.f32 %v2570, %v2587
        %v2589 = vadd.f32 %v2588, 0.4994258
        %v2590 = vmul.f32 %v2570, %v2589
        %v2591 = vadd.f32 %v2590, 1.0
        %v2592 = vrcp.pop %v2591
        %v2593 = vmul.f32 %v2591, %v2592
        %v2594 = vsub.f32 1.0, %v2593
        %v2595 = vmul.f32 %v2592, %v2594
        %v2596 = vadd.f32 %v2592, %v2595
        %vm2597 = vweird.f32 %v2591
        %vm2598 = vweird.f32 %v2592
        %vm2599 = vmor %vm2597, %vm2598
        %v2600 = vsel %vm2599, %v2592, %v2596
        %v2601 = vand.u32 2147483647, %v2591
        %vm2602 = vcmp.eq.f32.partialorder %v2601, 8.507059e+37
        %v2603 = vand.u32 %v2591, 2147483648
        %v2604 = vor.u32 1.1754944e-38, %v2603
        %v2605 = vsel %vm2602, %v2604, %v2600
        %v2606 = vmul.f32 %v2581, %v2605
        %v2607 = vmin.f32 %v2606, 1.0
        %v2608 = vmax.f32 %v2607, -1.0
        %v2609 = vmul.f32 %v1196, %v1196
        %v2610 = vmin.f32 16.0, %v2609
        %v2611 = vmul.f32 %v2610, 2.1237322e-06
        %v2612 = vadd.f32 %v2611, 0.00028619796
        %v2613 = vmul.f32 %v2610, %v2612
        %v2614 = vadd.f32 %v2613, 0.0036580483
        %v2615 = vmul.f32 %v2610, %v2614
        %v2616 = vadd.f32 %v2615, 0.05243302
        %v2617 = vmul.f32 %v2610, %v2616
        %v2618 = vadd.f32 %v2617, 0.18741608
        %v2619 = vmul.f32 %v2610, %v2618
        %v2620 = vadd.f32 %v2619, 1.1283791
        %v2621 = vmul.f32 %v1196, %v2620
        %v2622 = vmul.f32 %v2610, 3.8918573e-05
        %v2623 = vadd.f32 %v2622, 0.001143296
        %v2624 = vmul.f32 %v2610, %v2623
        %v2625 = vadd.f32 %v2624, 0.014752088
        %v2626 = vmul.f32 %v2610, %v2625
        %v2627 = vadd.f32 %v2626, 0.112945676
        %v2628 = vmul.f32 %v2610, %v2627
        %v2629 = vadd.f32 %v2628, 0.4994258
        %v2630 = vmul.f32 %v2610, %v2629
        %v2631 = vadd.f32 %v2630, 1.0
        %v2632 = vrcp.pop %v2631
        %v2633 = vmul.f32 %v2631, %v2632
        %v2634 = vsub.f32 1.0, %v2633
        %v2635 = vmul.f32 %v2632, %v2634
        %v2636 = vadd.f32 %v2632, %v2635
        %vm2637 = vweird.f32 %v2631
        %vm2638 = vweird.f32 %v2632
        %vm2639 = vmor %vm2637, %vm2638
        %v2640 = vsel %vm2639, %v2632, %v2636
        %v2641 = vand.u32 2147483647, %v2631
        %vm2642 = vcmp.eq.f32.partialorder %v2641, 8.507059e+37
        %v2643 = vand.u32 %v2631, 2147483648
        %v2644 = vor.u32 1.1754944e-38, %v2643
        %v2645 = vsel %vm2642, %v2644, %v2640
        %v2646 = vmul.f32 %v2621, %v2645
        %v2647 = vmin.f32 %v2646, 1.0
        %v2648 = vmax.f32 %v2647, -1.0
        %v2649 = vmul.f32 %v1197, %v1197
        %v2650 = vmin.f32 16.0, %v2649
        %v2651 = vmul.f32 %v2650, 2.1237322e-06
        %v2652 = vadd.f32 %v2651, 0.00028619796
        %v2653 = vmul.f32 %v2650, %v2652
        %v2654 = vadd.f32 %v2653, 0.0036580483
        %v2655 = vmul.f32 %v2650, %v2654
        %v2656 = vadd.f32 %v2655, 0.05243302
        %v2657 = vmul.f32 %v2650, %v2656
        %v2658 = vadd.f32 %v2657, 0.18741608
        %v2659 = vmul.f32 %v2650, %v2658
        %v2660 = vadd.f32 %v2659, 1.1283791
        %v2661 = vmul.f32 %v1197, %v2660
        %v2662 = vmul.f32 %v2650, 3.8918573e-05
        %v2663 = vadd.f32 %v2662, 0.001143296
        %v2664 = vmul.f32 %v2650, %v2663
        %v2665 = vadd.f32 %v2664, 0.014752088
        %v2666 = vmul.f32 %v2650, %v2665
        %v2667 = vadd.f32 %v2666, 0.112945676
        %v2668 = vmul.f32 %v2650, %v2667
        %v2669 = vadd.f32 %v2668, 0.4994258
        %v2670 = vmul.f32 %v2650, %v2669
        %v2671 = vadd.f32 %v2670, 1.0
        %v2672 = vrcp.pop %v2671
        %v2673 = vmul.f32 %v2671, %v2672
        %v2674 = vsub.f32 1.0, %v2673
        %v2675 = vmul.f32 %v2672, %v2674
        %v2676 = vadd.f32 %v2672, %v2675
        %vm2677 = vweird.f32 %v2671
        %vm2678 = vweird.f32 %v2672
        %vm2679 = vmor %vm2677, %vm2678
        %v2680 = vsel %vm2679, %v2672, %v2676
        %v2681 = vand.u32 2147483647, %v2671
        %vm2682 = vcmp.eq.f32.partialorder %v2681, 8.507059e+37
        %v2683 = vand.u32 %v2671, 2147483648
        %v2684 = vor.u32 1.1754944e-38, %v2683
        %v2685 = vsel %vm2682, %v2684, %v2680
        %v2686 = vmul.f32 %v2661, %v2685
        %v2687 = vmin.f32 %v2686, 1.0
        %v2688 = vmax.f32 %v2687, -1.0
        %v2689 = vmul.f32 %v1198, %v1198
        %v2690 = vmin.f32 16.0, %v2689
        %v2691 = vmul.f32 %v2690, 2.1237322e-06
        %v2692 = vadd.f32 %v2691, 0.00028619796
        %v2693 = vmul.f32 %v2690, %v2692
        %v2694 = vadd.f32 %v2693, 0.0036580483
        %v2695 = vmul.f32 %v2690, %v2694
        %v2696 = vadd.f32 %v2695, 0.05243302
        %v2697 = vmul.f32 %v2690, %v2696
        %v2698 = vadd.f32 %v2697, 0.18741608
        %v2699 = vmul.f32 %v2690, %v2698
        %v2700 = vadd.f32 %v2699, 1.1283791
        %v2701 = vmul.f32 %v1198, %v2700
        %v2702 = vmul.f32 %v2690, 3.8918573e-05
        %v2703 = vadd.f32 %v2702, 0.001143296
        %v2704 = vmul.f32 %v2690, %v2703
        %v2705 = vadd.f32 %v2704, 0.014752088
        %v2706 = vmul.f32 %v2690, %v2705
        %v2707 = vadd.f32 %v2706, 0.112945676
        %v2708 = vmul.f32 %v2690, %v2707
        %v2709 = vadd.f32 %v2708, 0.4994258
        %v2710 = vmul.f32 %v2690, %v2709
        %v2711 = vadd.f32 %v2710, 1.0
        %v2712 = vrcp.pop %v2711
        %v2713 = vmul.f32 %v2711, %v2712
        %v2714 = vsub.f32 1.0, %v2713
        %v2715 = vmul.f32 %v2712, %v2714
        %v2716 = vadd.f32 %v2712, %v2715
        %vm2717 = vweird.f32 %v2711
        %vm2718 = vweird.f32 %v2712
        %vm2719 = vmor %vm2717, %vm2718
        %v2720 = vsel %vm2719, %v2712, %v2716
        %v2721 = vand.u32 2147483647, %v2711
        %vm2722 = vcmp.eq.f32.partialorder %v2721, 8.507059e+37
        %v2723 = vand.u32 %v2711, 2147483648
        %v2724 = vor.u32 1.1754944e-38, %v2723
        %v2725 = vsel %vm2722, %v2724, %v2720
        %v2726 = vmul.f32 %v2701, %v2725
        %v2727 = vmin.f32 %v2726, 1.0
        %v2728 = vmax.f32 %v2727, -1.0
        %v2729 = vmul.f32 %v1199, %v1199
        %v2730 = vmin.f32 16.0, %v2729
        %v2731 = vmul.f32 %v2730, 2.1237322e-06
        %v2732 = vadd.f32 %v2731, 0.00028619796
        %v2733 = vmul.f32 %v2730, %v2732
        %v2734 = vadd.f32 %v2733, 0.0036580483
        %v2735 = vmul.f32 %v2730, %v2734
        %v2736 = vadd.f32 %v2735, 0.05243302
        %v2737 = vmul.f32 %v2730, %v2736
        %v2738 = vadd.f32 %v2737, 0.18741608
        %v2739 = vmul.f32 %v2730, %v2738
        %v2740 = vadd.f32 %v2739, 1.1283791
        %v2741 = vmul.f32 %v1199, %v2740
        %v2742 = vmul.f32 %v2730, 3.8918573e-05
        %v2743 = vadd.f32 %v2742, 0.001143296
        %v2744 = vmul.f32 %v2730, %v2743
        %v2745 = vadd.f32 %v2744, 0.014752088
        %v2746 = vmul.f32 %v2730, %v2745
        %v2747 = vadd.f32 %v2746, 0.112945676
        %v2748 = vmul.f32 %v2730, %v2747
        %v2749 = vadd.f32 %v2748, 0.4994258
        %v2750 = vmul.f32 %v2730, %v2749
        %v2751 = vadd.f32 %v2750, 1.0
        %v2752 = vrcp.pop %v2751
        %v2753 = vmul.f32 %v2751, %v2752
        %v2754 = vsub.f32 1.0, %v2753
        %v2755 = vmul.f32 %v2752, %v2754
        %v2756 = vadd.f32 %v2752, %v2755
        %vm2757 = vweird.f32 %v2751
        %vm2758 = vweird.f32 %v2752
        %vm2759 = vmor %vm2757, %vm2758
        %v2760 = vsel %vm2759, %v2752, %v2756
        %v2761 = vand.u32 2147483647, %v2751
        %vm2762 = vcmp.eq.f32.partialorder %v2761, 8.507059e+37
        %v2763 = vand.u32 %v2751, 2147483648
        %v2764 = vor.u32 1.1754944e-38, %v2763
        %v2765 = vsel %vm2762, %v2764, %v2760
        %v2766 = vmul.f32 %v2741, %v2765
        %v2767 = vmin.f32 %v2766, 1.0
        %v2768 = vmax.f32 %v2767, -1.0
        %v2769 = vmul.f32 %v1200, %v1200
        %v2770 = vmin.f32 16.0, %v2769
        %v2771 = vmul.f32 %v2770, 2.1237322e-06
        %v2772 = vadd.f32 %v2771, 0.00028619796
        %v2773 = vmul.f32 %v2770, %v2772
        %v2774 = vadd.f32 %v2773, 0.0036580483
        %v2775 = vmul.f32 %v2770, %v2774
        %v2776 = vadd.f32 %v2775, 0.05243302
        %v2777 = vmul.f32 %v2770, %v2776
        %v2778 = vadd.f32 %v2777, 0.18741608
        %v2779 = vmul.f32 %v2770, %v2778
        %v2780 = vadd.f32 %v2779, 1.1283791
        %v2781 = vmul.f32 %v1200, %v2780
        %v2782 = vmul.f32 %v2770, 3.8918573e-05
        %v2783 = vadd.f32 %v2782, 0.001143296
        %v2784 = vmul.f32 %v2770, %v2783
        %v2785 = vadd.f32 %v2784, 0.014752088
        %v2786 = vmul.f32 %v2770, %v2785
        %v2787 = vadd.f32 %v2786, 0.112945676
        %v2788 = vmul.f32 %v2770, %v2787
        %v2789 = vadd.f32 %v2788, 0.4994258
        %v2790 = vmul.f32 %v2770, %v2789
        %v2791 = vadd.f32 %v2790, 1.0
        %v2792 = vrcp.pop %v2791
        %v2793 = vmul.f32 %v2791, %v2792
        %v2794 = vsub.f32 1.0, %v2793
        %v2795 = vmul.f32 %v2792, %v2794
        %v2796 = vadd.f32 %v2792, %v2795
        %vm2797 = vweird.f32 %v2791
        %vm2798 = vweird.f32 %v2792
        %vm2799 = vmor %vm2797, %vm2798
        %v2800 = vsel %vm2799, %v2792, %v2796
        %v2801 = vand.u32 2147483647, %v2791
        %vm2802 = vcmp.eq.f32.partialorder %v2801, 8.507059e+37
        %v2803 = vand.u32 %v2791, 2147483648
        %v2804 = vor.u32 1.1754944e-38, %v2803
        %v2805 = vsel %vm2802, %v2804, %v2800
        %v2806 = vmul.f32 %v2781, %v2805
        %v2807 = vmin.f32 %v2806, 1.0
        %v2808 = vmax.f32 %v2807, -1.0
        %v2809 = vmul.f32 %v1201, %v1201
        %v2810 = vmin.f32 16.0, %v2809
        %v2811 = vmul.f32 %v2810, 2.1237322e-06
        %v2812 = vadd.f32 %v2811, 0.00028619796
        %v2813 = vmul.f32 %v2810, %v2812
        %v2814 = vadd.f32 %v2813, 0.0036580483
        %v2815 = vmul.f32 %v2810, %v2814
        %v2816 = vadd.f32 %v2815, 0.05243302
        %v2817 = vmul.f32 %v2810, %v2816
        %v2818 = vadd.f32 %v2817, 0.18741608
        %v2819 = vmul.f32 %v2810, %v2818
        %v2820 = vadd.f32 %v2819, 1.1283791
        %v2821 = vmul.f32 %v1201, %v2820
        %v2822 = vmul.f32 %v2810, 3.8918573e-05
        %v2823 = vadd.f32 %v2822, 0.001143296
        %v2824 = vmul.f32 %v2810, %v2823
        %v2825 = vadd.f32 %v2824, 0.014752088
        %v2826 = vmul.f32 %v2810, %v2825
        %v2827 = vadd.f32 %v2826, 0.112945676
        %v2828 = vmul.f32 %v2810, %v2827
        %v2829 = vadd.f32 %v2828, 0.4994258
        %v2830 = vmul.f32 %v2810, %v2829
        %v2831 = vadd.f32 %v2830, 1.0
        %v2832 = vrcp.pop %v2831
        %v2833 = vmul.f32 %v2831, %v2832
        %v2834 = vsub.f32 1.0, %v2833
        %v2835 = vmul.f32 %v2832, %v2834
        %v2836 = vadd.f32 %v2832, %v2835
        %vm2837 = vweird.f32 %v2831
        %vm2838 = vweird.f32 %v2832
        %vm2839 = vmor %vm2837, %vm2838
        %v2840 = vsel %vm2839, %v2832, %v2836
        %v2841 = vand.u32 2147483647, %v2831
        %vm2842 = vcmp.eq.f32.partialorder %v2841, 8.507059e+37
        %v2843 = vand.u32 %v2831, 2147483648
        %v2844 = vor.u32 1.1754944e-38, %v2843
        %v2845 = vsel %vm2842, %v2844, %v2840
        %v2846 = vmul.f32 %v2821, %v2845
        %v2847 = vmin.f32 %v2846, 1.0
        %v2848 = vmax.f32 %v2847, -1.0
        %v2849 = vmul.f32 %v1202, %v1202
        %v2850 = vmin.f32 16.0, %v2849
        %v2851 = vmul.f32 %v2850, 2.1237322e-06
        %v2852 = vadd.f32 %v2851, 0.00028619796
        %v2853 = vmul.f32 %v2850, %v2852
        %v2854 = vadd.f32 %v2853, 0.0036580483
        %v2855 = vmul.f32 %v2850, %v2854
        %v2856 = vadd.f32 %v2855, 0.05243302
        %v2857 = vmul.f32 %v2850, %v2856
        %v2858 = vadd.f32 %v2857, 0.18741608
        %v2859 = vmul.f32 %v2850, %v2858
        %v2860 = vadd.f32 %v2859, 1.1283791
        %v2861 = vmul.f32 %v1202, %v2860
        %v2862 = vmul.f32 %v2850, 3.8918573e-05
        %v2863 = vadd.f32 %v2862, 0.001143296
        %v2864 = vmul.f32 %v2850, %v2863
        %v2865 = vadd.f32 %v2864, 0.014752088
        %v2866 = vmul.f32 %v2850, %v2865
        %v2867 = vadd.f32 %v2866, 0.112945676
        %v2868 = vmul.f32 %v2850, %v2867
        %v2869 = vadd.f32 %v2868, 0.4994258
        %v2870 = vmul.f32 %v2850, %v2869
        %v2871 = vadd.f32 %v2870, 1.0
        %v2872 = vrcp.pop %v2871
        %v2873 = vmul.f32 %v2871, %v2872
        %v2874 = vsub.f32 1.0, %v2873
        %v2875 = vmul.f32 %v2872, %v2874
        %v2876 = vadd.f32 %v2872, %v2875
        %vm2877 = vweird.f32 %v2871
        %vm2878 = vweird.f32 %v2872
        %vm2879 = vmor %vm2877, %vm2878
        %v2880 = vsel %vm2879, %v2872, %v2876
        %v2881 = vand.u32 2147483647, %v2871
        %vm2882 = vcmp.eq.f32.partialorder %v2881, 8.507059e+37
        %v2883 = vand.u32 %v2871, 2147483648
        %v2884 = vor.u32 1.1754944e-38, %v2883
        %v2885 = vsel %vm2882, %v2884, %v2880
        %v2886 = vmul.f32 %v2861, %v2885
        %v2887 = vmin.f32 %v2886, 1.0
        %v2888 = vmax.f32 %v2887, -1.0
        %v2889 = vmul.f32 %v1203, %v1203
        %v2890 = vmin.f32 16.0, %v2889
        %v2891 = vmul.f32 %v2890, 2.1237322e-06
        %v2892 = vadd.f32 %v2891, 0.00028619796
        %v2893 = vmul.f32 %v2890, %v2892
        %v2894 = vadd.f32 %v2893, 0.0036580483
        %v2895 = vmul.f32 %v2890, %v2894
        %v2896 = vadd.f32 %v2895, 0.05243302
        %v2897 = vmul.f32 %v2890, %v2896
        %v2898 = vadd.f32 %v2897, 0.18741608
        %v2899 = vmul.f32 %v2890, %v2898
        %v2900 = vadd.f32 %v2899, 1.1283791
        %v2901 = vmul.f32 %v1203, %v2900
        %v2902 = vmul.f32 %v2890, 3.8918573e-05
        %v2903 = vadd.f32 %v2902, 0.001143296
        %v2904 = vmul.f32 %v2890, %v2903
        %v2905 = vadd.f32 %v2904, 0.014752088
        %v2906 = vmul.f32 %v2890, %v2905
        %v2907 = vadd.f32 %v2906, 0.112945676
        %v2908 = vmul.f32 %v2890, %v2907
        %v2909 = vadd.f32 %v2908, 0.4994258
        %v2910 = vmul.f32 %v2890, %v2909
        %v2911 = vadd.f32 %v2910, 1.0
        %v2912 = vrcp.pop %v2911
        %v2913 = vmul.f32 %v2911, %v2912
        %v2914 = vsub.f32 1.0, %v2913
        %v2915 = vmul.f32 %v2912, %v2914
        %v2916 = vadd.f32 %v2912, %v2915
        %vm2917 = vweird.f32 %v2911
        %vm2918 = vweird.f32 %v2912
        %vm2919 = vmor %vm2917, %vm2918
        %v2920 = vsel %vm2919, %v2912, %v2916
        %v2921 = vand.u32 2147483647, %v2911
        %vm2922 = vcmp.eq.f32.partialorder %v2921, 8.507059e+37
        %v2923 = vand.u32 %v2911, 2147483648
        %v2924 = vor.u32 1.1754944e-38, %v2923
        %v2925 = vsel %vm2922, %v2924, %v2920
        %v2926 = vmul.f32 %v2901, %v2925
        %v2927 = vmin.f32 %v2926, 1.0
        %v2928 = vmax.f32 %v2927, -1.0
        %v2929 = vmul.f32 %v1204, %v1204
        %v2930 = vmin.f32 16.0, %v2929
        %v2931 = vmul.f32 %v2930, 2.1237322e-06
        %v2932 = vadd.f32 %v2931, 0.00028619796
        %v2933 = vmul.f32 %v2930, %v2932
        %v2934 = vadd.f32 %v2933, 0.0036580483
        %v2935 = vmul.f32 %v2930, %v2934
        %v2936 = vadd.f32 %v2935, 0.05243302
        %v2937 = vmul.f32 %v2930, %v2936
        %v2938 = vadd.f32 %v2937, 0.18741608
        %v2939 = vmul.f32 %v2930, %v2938
        %v2940 = vadd.f32 %v2939, 1.1283791
        %v2941 = vmul.f32 %v1204, %v2940
        %v2942 = vmul.f32 %v2930, 3.8918573e-05
        %v2943 = vadd.f32 %v2942, 0.001143296
        %v2944 = vmul.f32 %v2930, %v2943
        %v2945 = vadd.f32 %v2944, 0.014752088
        %v2946 = vmul.f32 %v2930, %v2945
        %v2947 = vadd.f32 %v2946, 0.112945676
        %v2948 = vmul.f32 %v2930, %v2947
        %v2949 = vadd.f32 %v2948, 0.4994258
        %v2950 = vmul.f32 %v2930, %v2949
        %v2951 = vadd.f32 %v2950, 1.0
        %v2952 = vrcp.pop %v2951
        %v2953 = vmul.f32 %v2951, %v2952
        %v2954 = vsub.f32 1.0, %v2953
        %v2955 = vmul.f32 %v2952, %v2954
        %v2956 = vadd.f32 %v2952, %v2955
        %vm2957 = vweird.f32 %v2951
        %vm2958 = vweird.f32 %v2952
        %vm2959 = vmor %vm2957, %vm2958
        %v2960 = vsel %vm2959, %v2952, %v2956
        %v2961 = vand.u32 2147483647, %v2951
        %vm2962 = vcmp.eq.f32.partialorder %v2961, 8.507059e+37
        %v2963 = vand.u32 %v2951, 2147483648
        %v2964 = vor.u32 1.1754944e-38, %v2963
        %v2965 = vsel %vm2962, %v2964, %v2960
        %v2966 = vmul.f32 %v2941, %v2965
        %v2967 = vmin.f32 %v2966, 1.0
        %v2968 = vmax.f32 %v2967, -1.0
        %v2969 = vmul.f32 %v1205, %v1205
        %v2970 = vmin.f32 16.0, %v2969
        %v2971 = vmul.f32 %v2970, 2.1237322e-06
        %v2972 = vadd.f32 %v2971, 0.00028619796
        %v2973 = vmul.f32 %v2970, %v2972
        %v2974 = vadd.f32 %v2973, 0.0036580483
        %v2975 = vmul.f32 %v2970, %v2974
        %v2976 = vadd.f32 %v2975, 0.05243302
        %v2977 = vmul.f32 %v2970, %v2976
        %v2978 = vadd.f32 %v2977, 0.18741608
        %v2979 = vmul.f32 %v2970, %v2978
        %v2980 = vadd.f32 %v2979, 1.1283791
        %v2981 = vmul.f32 %v1205, %v2980
        %v2982 = vmul.f32 %v2970, 3.8918573e-05
        %v2983 = vadd.f32 %v2982, 0.001143296
        %v2984 = vmul.f32 %v2970, %v2983
        %v2985 = vadd.f32 %v2984, 0.014752088
        %v2986 = vmul.f32 %v2970, %v2985
        %v2987 = vadd.f32 %v2986, 0.112945676
        %v2988 = vmul.f32 %v2970, %v2987
        %v2989 = vadd.f32 %v2988, 0.4994258
        %v2990 = vmul.f32 %v2970, %v2989
        %v2991 = vadd.f32 %v2990, 1.0
        %v2992 = vrcp.pop %v2991
        %v2993 = vmul.f32 %v2991, %v2992
        %v2994 = vsub.f32 1.0, %v2993
        %v2995 = vmul.f32 %v2992, %v2994
        %v2996 = vadd.f32 %v2992, %v2995
        %vm2997 = vweird.f32 %v2991
        %vm2998 = vweird.f32 %v2992
        %vm2999 = vmor %vm2997, %vm2998
        %v3000 = vsel %vm2999, %v2992, %v2996
        %v3001 = vand.u32 2147483647, %v2991
        %vm3002 = vcmp.eq.f32.partialorder %v3001, 8.507059e+37
        %v3003 = vand.u32 %v2991, 2147483648
        %v3004 = vor.u32 1.1754944e-38, %v3003
        %v3005 = vsel %vm3002, %v3004, %v3000
        %v3006 = vmul.f32 %v2981, %v3005
        %v3007 = vmin.f32 %v3006, 1.0
        %v3008 = vmax.f32 %v3007, -1.0
        %v3009 = vmul.f32 %v1206, %v1206
        %v3010 = vmin.f32 16.0, %v3009
        %v3011 = vmul.f32 %v3010, 2.1237322e-06
        %v3012 = vadd.f32 %v3011, 0.00028619796
        %v3013 = vmul.f32 %v3010, %v3012
        %v3014 = vadd.f32 %v3013, 0.0036580483
        %v3015 = vmul.f32 %v3010, %v3014
        %v3016 = vadd.f32 %v3015, 0.05243302
        %v3017 = vmul.f32 %v3010, %v3016
        %v3018 = vadd.f32 %v3017, 0.18741608
        %v3019 = vmul.f32 %v3010, %v3018
        %v3020 = vadd.f32 %v3019, 1.1283791
        %v3021 = vmul.f32 %v1206, %v3020
        %v3022 = vmul.f32 %v3010, 3.8918573e-05
        %v3023 = vadd.f32 %v3022, 0.001143296
        %v3024 = vmul.f32 %v3010, %v3023
        %v3025 = vadd.f32 %v3024, 0.014752088
        %v3026 = vmul.f32 %v3010, %v3025
        %v3027 = vadd.f32 %v3026, 0.112945676
        %v3028 = vmul.f32 %v3010, %v3027
        %v3029 = vadd.f32 %v3028, 0.4994258
        %v3030 = vmul.f32 %v3010, %v3029
        %v3031 = vadd.f32 %v3030, 1.0
        %v3032 = vrcp.pop %v3031
        %v3033 = vmul.f32 %v3031, %v3032
        %v3034 = vsub.f32 1.0, %v3033
        %v3035 = vmul.f32 %v3032, %v3034
        %v3036 = vadd.f32 %v3032, %v3035
        %vm3037 = vweird.f32 %v3031
        %vm3038 = vweird.f32 %v3032
        %vm3039 = vmor %vm3037, %vm3038
        %v3040 = vsel %vm3039, %v3032, %v3036
        %v3041 = vand.u32 2147483647, %v3031
        %vm3042 = vcmp.eq.f32.partialorder %v3041, 8.507059e+37
        %v3043 = vand.u32 %v3031, 2147483648
        %v3044 = vor.u32 1.1754944e-38, %v3043
        %v3045 = vsel %vm3042, %v3044, %v3040
        %v3046 = vmul.f32 %v3021, %v3045
        %v3047 = vmin.f32 %v3046, 1.0
        %v3048 = vmax.f32 %v3047, -1.0
        %v3049 = vmul.f32 %v1207, %v1207
        %v3050 = vmin.f32 16.0, %v3049
        %v3051 = vmul.f32 %v3050, 2.1237322e-06
        %v3052 = vadd.f32 %v3051, 0.00028619796
        %v3053 = vmul.f32 %v3050, %v3052
        %v3054 = vadd.f32 %v3053, 0.0036580483
        %v3055 = vmul.f32 %v3050, %v3054
        %v3056 = vadd.f32 %v3055, 0.05243302
        %v3057 = vmul.f32 %v3050, %v3056
        %v3058 = vadd.f32 %v3057, 0.18741608
        %v3059 = vmul.f32 %v3050, %v3058
        %v3060 = vadd.f32 %v3059, 1.1283791
        %v3061 = vmul.f32 %v1207, %v3060
        %v3062 = vmul.f32 %v3050, 3.8918573e-05
        %v3063 = vadd.f32 %v3062, 0.001143296
        %v3064 = vmul.f32 %v3050, %v3063
        %v3065 = vadd.f32 %v3064, 0.014752088
        %v3066 = vmul.f32 %v3050, %v3065
        %v3067 = vadd.f32 %v3066, 0.112945676
        %v3068 = vmul.f32 %v3050, %v3067
        %v3069 = vadd.f32 %v3068, 0.4994258
        %v3070 = vmul.f32 %v3050, %v3069
        %v3071 = vadd.f32 %v3070, 1.0
        %v3072 = vrcp.pop %v3071
        %v3073 = vmul.f32 %v3071, %v3072
        %v3074 = vsub.f32 1.0, %v3073
        %v3075 = vmul.f32 %v3072, %v3074
        %v3076 = vadd.f32 %v3072, %v3075
        %vm3077 = vweird.f32 %v3071
        %vm3078 = vweird.f32 %v3072
        %vm3079 = vmor %vm3077, %vm3078
        %v3080 = vsel %vm3079, %v3072, %v3076
        %v3081 = vand.u32 2147483647, %v3071
        %vm3082 = vcmp.eq.f32.partialorder %v3081, 8.507059e+37
        %v3083 = vand.u32 %v3071, 2147483648
        %v3084 = vor.u32 1.1754944e-38, %v3083
        %v3085 = vsel %vm3082, %v3084, %v3080
        %v3086 = vmul.f32 %v3061, %v3085
        %v3087 = vmin.f32 %v3086, 1.0
        %v3088 = vmax.f32 %v3087, -1.0
        %v3089 = vmul.f32 %v1208, %v1208
        %v3090 = vmin.f32 16.0, %v3089
        %v3091 = vmul.f32 %v3090, 2.1237322e-06
        %v3092 = vadd.f32 %v3091, 0.00028619796
        %v3093 = vmul.f32 %v3090, %v3092
        %v3094 = vadd.f32 %v3093, 0.0036580483
        %v3095 = vmul.f32 %v3090, %v3094
        %v3096 = vadd.f32 %v3095, 0.05243302
        %v3097 = vmul.f32 %v3090, %v3096
        %v3098 = vadd.f32 %v3097, 0.18741608
        %v3099 = vmul.f32 %v3090, %v3098
        %v3100 = vadd.f32 %v3099, 1.1283791
        %v3101 = vmul.f32 %v1208, %v3100
        %v3102 = vmul.f32 %v3090, 3.8918573e-05
        %v3103 = vadd.f32 %v3102, 0.001143296
        %v3104 = vmul.f32 %v3090, %v3103
        %v3105 = vadd.f32 %v3104, 0.014752088
        %v3106 = vmul.f32 %v3090, %v3105
        %v3107 = vadd.f32 %v3106, 0.112945676
        %v3108 = vmul.f32 %v3090, %v3107
        %v3109 = vadd.f32 %v3108, 0.4994258
        %v3110 = vmul.f32 %v3090, %v3109
        %v3111 = vadd.f32 %v3110, 1.0
        %v3112 = vrcp.pop %v3111
        %v3113 = vmul.f32 %v3111, %v3112
        %v3114 = vsub.f32 1.0, %v3113
        %v3115 = vmul.f32 %v3112, %v3114
        %v3116 = vadd.f32 %v3112, %v3115
        %vm3117 = vweird.f32 %v3111
        %vm3118 = vweird.f32 %v3112
        %vm3119 = vmor %vm3117, %vm3118
        %v3120 = vsel %vm3119, %v3112, %v3116
        %v3121 = vand.u32 2147483647, %v3111
        %vm3122 = vcmp.eq.f32.partialorder %v3121, 8.507059e+37
        %v3123 = vand.u32 %v3111, 2147483648
        %v3124 = vor.u32 1.1754944e-38, %v3123
        %v3125 = vsel %vm3122, %v3124, %v3120
        %v3126 = vmul.f32 %v3101, %v3125
        %v3127 = vmin.f32 %v3126, 1.0
        %v3128 = vmax.f32 %v3127, -1.0
        %v3129 = vadd.f32 %v1248, 1.0
        %v3130 = vadd.f32 %v1288, 1.0
        %v3131 = vadd.f32 %v1328, 1.0
        %v3132 = vadd.f32 %v1368, 1.0
        %v3133 = vadd.f32 %v1408, 1.0
        %v3134 = vadd.f32 %v1448, 1.0
        %v3135 = vadd.f32 %v1488, 1.0
        %v3136 = vadd.f32 %v1528, 1.0
        %v3137 = vadd.f32 %v1568, 1.0
        %v3138 = vadd.f32 %v1608, 1.0
        %v3139 = vadd.f32 %v1648, 1.0
        %v3140 = vadd.f32 %v1688, 1.0
        %v3141 = vadd.f32 %v1728, 1.0
        %v3142 = vadd.f32 %v1768, 1.0
        %v3143 = vadd.f32 %v1808, 1.0
        %v3144 = vadd.f32 %v1848, 1.0
        %v3145 = vadd.f32 %v1888, 1.0
        %v3146 = vadd.f32 %v1928, 1.0
        %v3147 = vadd.f32 %v1968, 1.0
        %v3148 = vadd.f32 %v2008, 1.0
        %v3149 = vadd.f32 %v2048, 1.0
        %v3150 = vadd.f32 %v2088, 1.0
        %v3151 = vadd.f32 %v2128, 1.0
        %v3152 = vadd.f32 %v2168, 1.0
        %v3153 = vadd.f32 %v2208, 1.0
        %v3154 = vadd.f32 %v2248, 1.0
        %v3155 = vadd.f32 %v2288, 1.0
        %v3156 = vadd.f32 %v2328, 1.0
        %v3157 = vadd.f32 %v2368, 1.0
        %v3158 = vadd.f32 %v2408, 1.0
        %v3159 = vadd.f32 %v2448, 1.0
        %v3160 = vadd.f32 %v2488, 1.0
        %v3161 = vadd.f32 %v2528, 1.0
        %v3162 = vadd.f32 %v2568, 1.0
        %v3163 = vadd.f32 %v2608, 1.0
        %v3164 = vadd.f32 %v2648, 1.0
        %v3165 = vadd.f32 %v2688, 1.0
        %v3166 = vadd.f32 %v2728, 1.0
        %v3167 = vadd.f32 %v2768, 1.0
        %v3168 = vadd.f32 %v2808, 1.0
        %v3169 = vadd.f32 %v2848, 1.0
        %v3170 = vadd.f32 %v2888, 1.0
        %v3171 = vadd.f32 %v2928, 1.0
        %v3172 = vadd.f32 %v2968, 1.0
        %v3173 = vadd.f32 %v3008, 1.0
        %v3174 = vadd.f32 %v3048, 1.0
        %v3175 = vadd.f32 %v3088, 1.0
        %v3176 = vadd.f32 %v3128, 1.0
        %v3177 = vmul.f32 %v1106, %v3129
        %v3178 = vmul.f32 %v1107, %v3130
        %v3179 = vmul.f32 %v1108, %v3131
        %v3180 = vmul.f32 %v1109, %v3132
        %v3181 = vmul.f32 %v1110, %v3133
        %v3182 = vmul.f32 %v1111, %v3134
        %v3183 = vmul.f32 %v1112, %v3135
        %v3184 = vmul.f32 %v1113, %v3136
        %v3185 = vmul.f32 %v1114, %v3137
        %v3186 = vmul.f32 %v1115, %v3138
        %v3187 = vmul.f32 %v1116, %v3139
        %v3188 = vmul.f32 %v1117, %v3140
        %v3189 = vmul.f32 %v1118, %v3141
        %v3190 = vmul.f32 %v1119, %v3142
        %v3191 = vmul.f32 %v1120, %v3143
        %v3192 = vmul.f32 %v1121, %v3144
        %v3193 = vmul.f32 %v1122, %v3145
        %v3194 = vmul.f32 %v1123, %v3146
        %v3195 = vmul.f32 %v1124, %v3147
        %v3196 = vmul.f32 %v1125, %v3148
        %v3197 = vmul.f32 %v1126, %v3149
        %v3198 = vmul.f32 %v1127, %v3150
        %v3199 = vmul.f32 %v1128, %v3151
        %v3200 = vmul.f32 %v1129, %v3152
        %v3201 = vmul.f32 %v1130, %v3153
        %v3202 = vmul.f32 %v1131, %v3154
        %v3203 = vmul.f32 %v1132, %v3155
        %v3204 = vmul.f32 %v1133, %v3156
        %v3205 = vmul.f32 %v1134, %v3157
        %v3206 = vmul.f32 %v1135, %v3158
        %v3207 = vmul.f32 %v1136, %v3159
        %v3208 = vmul.f32 %v1137, %v3160
        %v3209 = vmul.f32 %v1138, %v3161
        %v3210 = vmul.f32 %v1139, %v3162
        %v3211 = vmul.f32 %v1140, %v3163
        %v3212 = vmul.f32 %v1141, %v3164
        %v3213 = vmul.f32 %v1142, %v3165
        %v3214 = vmul.f32 %v1143, %v3166
        %v3215 = vmul.f32 %v1144, %v3167
        %v3216 = vmul.f32 %v1145, %v3168
        %v3217 = vmul.f32 %v1146, %v3169
        %v3218 = vmul.f32 %v1147, %v3170
        %v3219 = vmul.f32 %v1148, %v3171
        %v3220 = vmul.f32 %v1149, %v3172
        %v3221 = vmul.f32 %v1150, %v3173
        %v3222 = vmul.f32 %v1151, %v3174
        %v3223 = vmul.f32 %v1152, %v3175
        %v3224 = vmul.f32 %v1153, %v3176
        %v3225 = vpack.c.bf16 %v3178, %v3177
        %v3226 = vpack.c.bf16 %v3180, %v3179
        %v3227 = vpack.c.bf16 %v3182, %v3181
        %v3228 = vpack.c.bf16 %v3184, %v3183
        %v3229 = vpack.c.bf16 %v3186, %v3185
        %v3230 = vpack.c.bf16 %v3188, %v3187
        %v3231 = vpack.c.bf16 %v3190, %v3189
        %v3232 = vpack.c.bf16 %v3192, %v3191
        %v3233 = vpack.c.bf16 %v3194, %v3193
        %v3234 = vpack.c.bf16 %v3196, %v3195
        %v3235 = vpack.c.bf16 %v3198, %v3197
        %v3236 = vpack.c.bf16 %v3200, %v3199
        %v3237 = vpack.c.bf16 %v3202, %v3201
        %v3238 = vpack.c.bf16 %v3204, %v3203
        %v3239 = vpack.c.bf16 %v3206, %v3205
        %v3240 = vpack.c.bf16 %v3208, %v3207
        %v3241 = vpack.c.bf16 %v3210, %v3209
        %v3242 = vpack.c.bf16 %v3212, %v3211
        %v3243 = vpack.c.bf16 %v3214, %v3213
        %v3244 = vpack.c.bf16 %v3216, %v3215
        %v3245 = vpack.c.bf16 %v3218, %v3217
        %v3246 = vpack.c.bf16 %v3220, %v3219
        %v3247 = vpack.c.bf16 %v3222, %v3221
        %v3248 = vpack.c.bf16 %v3224, %v3223
        %v3249 = vld [vmem:[#allocation2] sm:$0xff]
        %v3250 = vld [vmem:[#allocation2 + $0x8] sm:$0xff]
        %v3251 = vld [vmem:[#allocation2 + $0x10] sm:$0xff]
        %v3252 = vld [vmem:[#allocation2 + $0x18] sm:$0xff]
        %v3253 = vld [vmem:[#allocation2 + $0x20] sm:$0xff]
        %v3254 = vld [vmem:[#allocation2 + $0x28] sm:$0xff]
        %v3255 = vld [vmem:[#allocation2 + $0x30] sm:$0xff]
        %v3256 = vld [vmem:[#allocation2 + $0x38] sm:$0xff]
        %v3257 = vld [vmem:[#allocation2 + $0x40] sm:$0xff]
        %v3258 = vld [vmem:[#allocation2 + $0x48] sm:$0xff]
        %v3259 = vld [vmem:[#allocation2 + $0x50] sm:$0xff]
        %v3260 = vld [vmem:[#allocation2 + $0x58] sm:$0xff]
        %v3261 = vld [vmem:[#allocation2 + $0x60] sm:$0xff]
        %v3262 = vld [vmem:[#allocation2 + $0x68] sm:$0xff]
        %v3263 = vld [vmem:[#allocation2 + $0x70] sm:$0xff]
        %v3264 = vld [vmem:[#allocation2 + $0x78] sm:$0xff]
        %v3265 = vld [vmem:[%s411] sm:$0xff]
        %v3266 = vld [vmem:[%s411 + $0x8] sm:$0xf]
        %v3267 = vld [vmem:[%s411 + $0xc] sm:$0xff]
        %v3268 = vld [vmem:[%s411 + $0x14] sm:$0xf]
        %v3269 = vld [vmem:[%s411 + $0x18] sm:$0xff]
        %v3270 = vld [vmem:[%s411 + $0x20] sm:$0xf]
        %v3271 = vld [vmem:[%s411 + $0x24] sm:$0xff]
        %v3272 = vld [vmem:[%s411 + $0x2c] sm:$0xf]
        %v3273 = vld [vmem:[%s411 + $0x30] sm:$0xff]
        %v3274 = vld [vmem:[%s411 + $0x38] sm:$0xf]
        %v3275 = vld [vmem:[%s411 + $0x3c] sm:$0xff]
        %v3276 = vld [vmem:[%s411 + $0x44] sm:$0xf]
        %v3277 = vld [vmem:[%s411 + $0x48] sm:$0xff]
        %v3278 = vld [vmem:[%s411 + $0x50] sm:$0xf]
        %v3279 = vld [vmem:[%s411 + $0x54] sm:$0xff]
        %v3280 = vld [vmem:[%s411 + $0x5c] sm:$0xf]
        %v3281 = vld [vmem:[%s411 + $0x60] sm:$0xff]
        %v3282 = vld [vmem:[%s411 + $0x68] sm:$0xf]
        %v3283 = vld [vmem:[%s411 + $0x6c] sm:$0xff]
        %v3284 = vld [vmem:[%s411 + $0x74] sm:$0xf]
        %v3285 = vld [vmem:[%s411 + $0x78] sm:$0xff]
        %v3286 = vld [vmem:[%s411 + $0x80] sm:$0xf]
        %v3287 = vld [vmem:[%s411 + $0x84] sm:$0xff]
        %v3288 = vld [vmem:[%s411 + $0x8c] sm:$0xf]
        %v3289 = vld [vmem:[%s411 + $0x90] sm:$0xff]
        %v3290 = vld [vmem:[%s411 + $0x98] sm:$0xf]
        %v3291 = vld [vmem:[%s411 + $0x9c] sm:$0xff]
        %v3292 = vld [vmem:[%s411 + $0xa4] sm:$0xf]
        %v3293 = vld [vmem:[%s411 + $0xa8] sm:$0xff]
        %v3294 = vld [vmem:[%s411 + $0xb0] sm:$0xf]
        %v3295 = vld [vmem:[%s411 + $0xb4] sm:$0xff]
        %v3296 = vld [vmem:[%s411 + $0xbc] sm:$0xf]
        %v3329 = vunpack.c.l.b16 %v3265
        %v3330 = vunpack.c.h.b16 %v3265
        %v3331 = vunpack.c.l.b16 %v3266
        %v3332 = vunpack.c.l.b16 %v3267
        %v3333 = vunpack.c.h.b16 %v3267
        %v3334 = vunpack.c.l.b16 %v3268
        %v3335 = vunpack.c.l.b16 %v3269
        %v3336 = vunpack.c.h.b16 %v3269
        %v3337 = vunpack.c.l.b16 %v3270
        %v3338 = vunpack.c.l.b16 %v3271
        %v3339 = vunpack.c.h.b16 %v3271
        %v3340 = vunpack.c.l.b16 %v3272
        %v3341 = vunpack.c.l.b16 %v3273
        %v3342 = vunpack.c.h.b16 %v3273
        %v3343 = vunpack.c.l.b16 %v3274
        %v3344 = vunpack.c.l.b16 %v3275
        %v3345 = vunpack.c.h.b16 %v3275
        %v3346 = vunpack.c.l.b16 %v3276
        %v3347 = vunpack.c.l.b16 %v3277
        %v3348 = vunpack.c.h.b16 %v3277
        %v3349 = vunpack.c.l.b16 %v3278
        %v3350 = vunpack.c.l.b16 %v3279
        %v3351 = vunpack.c.h.b16 %v3279
        %v3352 = vunpack.c.l.b16 %v3280
        %v3353 = vunpack.c.l.b16 %v3281
        %v3354 = vunpack.c.h.b16 %v3281
        %v3355 = vunpack.c.l.b16 %v3282
        %v3356 = vunpack.c.l.b16 %v3283
        %v3357 = vunpack.c.h.b16 %v3283
        %v3358 = vunpack.c.l.b16 %v3284
        %v3359 = vunpack.c.l.b16 %v3285
        %v3360 = vunpack.c.h.b16 %v3285
        %v3361 = vunpack.c.l.b16 %v3286
        %v3362 = vunpack.c.l.b16 %v3287
        %v3363 = vunpack.c.h.b16 %v3287
        %v3364 = vunpack.c.l.b16 %v3288
        %v3365 = vunpack.c.l.b16 %v3289
        %v3366 = vunpack.c.h.b16 %v3289
        %v3367 = vunpack.c.l.b16 %v3290
        %v3368 = vunpack.c.l.b16 %v3291
        %v3369 = vunpack.c.h.b16 %v3291
        %v3370 = vunpack.c.l.b16 %v3292
        %v3371 = vunpack.c.l.b16 %v3293
        %v3372 = vunpack.c.h.b16 %v3293
        %v3373 = vunpack.c.l.b16 %v3294
        %v3374 = vunpack.c.l.b16 %v3295
        %v3375 = vunpack.c.h.b16 %v3295
        %v3376 = vunpack.c.l.b16 %v3296
        %v3377 = vpack.c.b16 %v3332, %v3329
        %v3378 = vpack.c.b16 %v3333, %v3330
        %v3379 = vpack.c.b16 %v3334, %v3331
        %v3380 = vpack.c.b16 %v3338, %v3335
        %v3381 = vpack.c.b16 %v3339, %v3336
        %v3382 = vpack.c.b16 %v3340, %v3337
        %v3383 = vpack.c.b16 %v3344, %v3341
        %v3384 = vpack.c.b16 %v3345, %v3342
        %v3385 = vpack.c.b16 %v3346, %v3343
        %v3386 = vpack.c.b16 %v3350, %v3347
        %v3387 = vpack.c.b16 %v3351, %v3348
        %v3388 = vpack.c.b16 %v3352, %v3349
        %v3389 = vpack.c.b16 %v3356, %v3353
        %v3390 = vpack.c.b16 %v3357, %v3354
        %v3391 = vpack.c.b16 %v3358, %v3355
        %v3392 = vpack.c.b16 %v3362, %v3359
        %v3393 = vpack.c.b16 %v3363, %v3360
        %v3394 = vpack.c.b16 %v3364, %v3361
        %v3395 = vpack.c.b16 %v3368, %v3365
        %v3396 = vpack.c.b16 %v3369, %v3366
        %v3397 = vpack.c.b16 %v3370, %v3367
        %v3398 = vpack.c.b16 %v3374, %v3371
        %v3399 = vpack.c.b16 %v3375, %v3372
        %v3400 = vpack.c.b16 %v3376, %v3373
        %3425 = vmatpush.bf16.msra.mxu0 %v3232
        %3426 = vmatpush.bf16.msra.mxu0 %v3231
        %3427 = vmatpush.bf16.msra.mxu0 %v3230
        %3428 = vmatpush.bf16.msra.mxu0 %v3229
        %3429 = vmatpush.bf16.msra.mxu0 %v3228
        %3430 = vmatpush.bf16.msra.mxu0 %v3227
        %3431 = vmatpush.bf16.msra.mxu0 %v3226
        %3432 = vmatpush.bf16.msra.mxu0 %v3225
        %3433 = vmatmul.bf16.gmra.mxu0 %v3377
        %v3434 = vpop.f32.mrf.mxu0
        %v3435 = vadd.f32 0.0, %v3434
        %v3436 = vpop.f32.mrf.mxu0
        %v3437 = vadd.f32 0.0, %v3436
        %3438 = vmatmul.bf16.gmra.mxu0 %v3380
        %v3439 = vpop.f32.mrf.mxu0
        %v3440 = vadd.f32 0.0, %v3439
        %v3441 = vpop.f32.mrf.mxu0
        %v3442 = vadd.f32 0.0, %v3441
        %3443 = vmatmul.bf16.gmra.mxu0 %v3383
        %v3444 = vpop.f32.mrf.mxu0
        %v3445 = vadd.f32 0.0, %v3444
        %v3446 = vpop.f32.mrf.mxu0
        %v3447 = vadd.f32 0.0, %v3446
        %3448 = vmatmul.bf16.gmra.mxu0 %v3386
        %v3449 = vpop.f32.mrf.mxu0
        %v3450 = vadd.f32 0.0, %v3449
        %v3451 = vpop.f32.mrf.mxu0
        %v3452 = vadd.f32 0.0, %v3451
        %3453 = vmatmul.bf16.gmra.mxu0 %v3389
        %v3454 = vpop.f32.mrf.mxu0
        %v3455 = vadd.f32 0.0, %v3454
        %v3456 = vpop.f32.mrf.mxu0
        %v3457 = vadd.f32 0.0, %v3456
        %3458 = vmatmul.bf16.gmra.mxu0 %v3392
        %v3459 = vpop.f32.mrf.mxu0
        %v3460 = vadd.f32 0.0, %v3459
        %v3461 = vpop.f32.mrf.mxu0
        %v3462 = vadd.f32 0.0, %v3461
        %3463 = vmatmul.bf16.gmra.mxu0 %v3395
        %v3464 = vpop.f32.mrf.mxu0
        %v3465 = vadd.f32 0.0, %v3464
        %v3466 = vpop.f32.mrf.mxu0
        %v3467 = vadd.f32 0.0, %v3466
        %3468 = vmatmul.bf16.gmra.mxu0 %v3398
        %v3469 = vpop.f32.mrf.mxu0
        %v3470 = vadd.f32 0.0, %v3469
        %v3471 = vpop.f32.mrf.mxu0
        %v3472 = vadd.f32 0.0, %v3471
        %3473 = vdwg.mxu0
        %3474 = vmatpush.bf16.msra.mxu0 %v3240
        %3475 = vmatpush.bf16.msra.mxu0 %v3239
        %3476 = vmatpush.bf16.msra.mxu0 %v3238
        %3477 = vmatpush.bf16.msra.mxu0 %v3237
        %3478 = vmatpush.bf16.msra.mxu0 %v3236
        %3479 = vmatpush.bf16.msra.mxu0 %v3235
        %3480 = vmatpush.bf16.msra.mxu0 %v3234
        %3481 = vmatpush.bf16.msra.mxu0 %v3233
        %3482 = vmatmul.bf16.gmra.mxu0 %v3378
        %v3483 = vpop.f32.mrf.mxu0
        %v3484 = vadd.f32 %v3435, %v3483
        %v3485 = vpop.f32.mrf.mxu0
        %v3486 = vadd.f32 %v3437, %v3485
        %3487 = vmatmul.bf16.gmra.mxu0 %v3381
        %v3488 = vpop.f32.mrf.mxu0
        %v3489 = vadd.f32 %v3440, %v3488
        %v3490 = vpop.f32.mrf.mxu0
        %v3491 = vadd.f32 %v3442, %v3490
        %3492 = vmatmul.bf16.gmra.mxu0 %v3384
        %v3493 = vpop.f32.mrf.mxu0
        %v3494 = vadd.f32 %v3445, %v3493
        %v3495 = vpop.f32.mrf.mxu0
        %v3496 = vadd.f32 %v3447, %v3495
        %3497 = vmatmul.bf16.gmra.mxu0 %v3387
        %v3498 = vpop.f32.mrf.mxu0
        %v3499 = vadd.f32 %v3450, %v3498
        %v3500 = vpop.f32.mrf.mxu0
        %v3501 = vadd.f32 %v3452, %v3500
        %3502 = vmatmul.bf16.gmra.mxu0 %v3390
        %v3503 = vpop.f32.mrf.mxu0
        %v3504 = vadd.f32 %v3455, %v3503
        %v3505 = vpop.f32.mrf.mxu0
        %v3506 = vadd.f32 %v3457, %v3505
        %3507 = vmatmul.bf16.gmra.mxu0 %v3393
        %v3508 = vpop.f32.mrf.mxu0
        %v3509 = vadd.f32 %v3460, %v3508
        %v3510 = vpop.f32.mrf.mxu0
        %v3511 = vadd.f32 %v3462, %v3510
        %3512 = vmatmul.bf16.gmra.mxu0 %v3396
        %v3513 = vpop.f32.mrf.mxu0
        %v3514 = vadd.f32 %v3465, %v3513
        %v3515 = vpop.f32.mrf.mxu0
        %v3516 = vadd.f32 %v3467, %v3515
        %3517 = vmatmul.bf16.gmra.mxu0 %v3399
        %v3518 = vpop.f32.mrf.mxu0
        %v3519 = vadd.f32 %v3470, %v3518
        %v3520 = vpop.f32.mrf.mxu0
        %v3521 = vadd.f32 %v3472, %v3520
        %3522 = vdwg.mxu0
        %3523 = vmatpush.bf16.msra.mxu0 %v3248
        %3524 = vmatpush.bf16.msra.mxu0 %v3247
        %3525 = vmatpush.bf16.msra.mxu0 %v3246
        %3526 = vmatpush.bf16.msra.mxu0 %v3245
        %3527 = vmatpush.bf16.msra.mxu0 %v3244
        %3528 = vmatpush.bf16.msra.mxu0 %v3243
        %3529 = vmatpush.bf16.msra.mxu0 %v3242
        %3530 = vmatpush.bf16.msra.mxu0 %v3241
        %3531 = vmatmul.bf16.gmra.mxu0 %v3379
        %v3532 = vpop.f32.mrf.mxu0
        %v3533 = vadd.f32 %v3484, %v3532
        %v3534 = vpop.f32.mrf.mxu0
        %v3535 = vadd.f32 %v3486, %v3534
        %3536 = vmatmul.bf16.gmra.mxu0 %v3382
        %v3537 = vpop.f32.mrf.mxu0
        %v3538 = vadd.f32 %v3489, %v3537
        %v3539 = vpop.f32.mrf.mxu0
        %v3540 = vadd.f32 %v3491, %v3539
        %3541 = vmatmul.bf16.gmra.mxu0 %v3385
        %v3542 = vpop.f32.mrf.mxu0
        %v3543 = vadd.f32 %v3494, %v3542
        %v3544 = vpop.f32.mrf.mxu0
        %v3545 = vadd.f32 %v3496, %v3544
        %3546 = vmatmul.bf16.gmra.mxu0 %v3388
        %v3547 = vpop.f32.mrf.mxu0
        %v3548 = vadd.f32 %v3499, %v3547
        %v3549 = vpop.f32.mrf.mxu0
        %v3550 = vadd.f32 %v3501, %v3549
        %3551 = vmatmul.bf16.gmra.mxu0 %v3391
        %v3552 = vpop.f32.mrf.mxu0
        %v3553 = vadd.f32 %v3504, %v3552
        %v3554 = vpop.f32.mrf.mxu0
        %v3555 = vadd.f32 %v3506, %v3554
        %3556 = vmatmul.bf16.gmra.mxu0 %v3394
        %v3557 = vpop.f32.mrf.mxu0
        %v3558 = vadd.f32 %v3509, %v3557
        %v3559 = vpop.f32.mrf.mxu0
        %v3560 = vadd.f32 %v3511, %v3559
        %3561 = vmatmul.bf16.gmra.mxu0 %v3397
        %v3562 = vpop.f32.mrf.mxu0
        %v3563 = vadd.f32 %v3514, %v3562
        %v3564 = vpop.f32.mrf.mxu0
        %v3565 = vadd.f32 %v3516, %v3564
        %3566 = vmatmul.bf16.gmra.mxu0 %v3400
        %v3567 = vpop.f32.mrf.mxu0
        %v3568 = vadd.f32 %v3519, %v3567
        %v3569 = vpop.f32.mrf.mxu0
        %v3570 = vadd.f32 %v3521, %v3569
        %3571 = vdwg.mxu0
        %v3572 = vadd.f32 %v3249, %v3533
        %v3573 = vadd.f32 %v3250, %v3535
        %v3574 = vadd.f32 %v3251, %v3538
        %v3575 = vadd.f32 %v3252, %v3540
        %v3576 = vadd.f32 %v3253, %v3543
        %v3577 = vadd.f32 %v3254, %v3545
        %v3578 = vadd.f32 %v3255, %v3548
        %v3579 = vadd.f32 %v3256, %v3550
        %v3580 = vadd.f32 %v3257, %v3553
        %v3581 = vadd.f32 %v3258, %v3555
        %v3582 = vadd.f32 %v3259, %v3558
        %v3583 = vadd.f32 %v3260, %v3560
        %v3584 = vadd.f32 %v3261, %v3563
        %v3585 = vadd.f32 %v3262, %v3565
        %v3586 = vadd.f32 %v3263, %v3568
        %v3587 = vadd.f32 %v3264, %v3570
        %3588 = vst [vmem:[#allocation2] sm:$0xff] %v3572
        %3589 = vst [vmem:[#allocation2 + $0x8] sm:$0xff] %v3573
        %3590 = vst [vmem:[#allocation2 + $0x10] sm:$0xff] %v3574
        %3591 = vst [vmem:[#allocation2 + $0x18] sm:$0xff] %v3575
        %3592 = vst [vmem:[#allocation2 + $0x20] sm:$0xff] %v3576
        %3593 = vst [vmem:[#allocation2 + $0x28] sm:$0xff] %v3577
        %3594 = vst [vmem:[#allocation2 + $0x30] sm:$0xff] %v3578
        %3595 = vst [vmem:[#allocation2 + $0x38] sm:$0xff] %v3579
        %3596 = vst [vmem:[#allocation2 + $0x40] sm:$0xff] %v3580
        %3597 = vst [vmem:[#allocation2 + $0x48] sm:$0xff] %v3581
        %3598 = vst [vmem:[#allocation2 + $0x50] sm:$0xff] %v3582
        %3599 = vst [vmem:[#allocation2 + $0x58] sm:$0xff] %v3583
        %3600 = vst [vmem:[#allocation2 + $0x60] sm:$0xff] %v3584
        %3601 = vst [vmem:[#allocation2 + $0x68] sm:$0xff] %v3585
        %3602 = vst [vmem:[#allocation2 + $0x70] sm:$0xff] %v3586
        %3603 = vst [vmem:[#allocation2 + $0x78] sm:$0xff] %v3587
        // Predicated region
        $region86: #{mlp_forward.1} parent=76 // pred_check
          %p3604 = pneg %p413
        $region87: #{mlp_forward.1} parent=76 // pred_check_branch
          %3606 = sbr.rel (%p3604) target = $region89
        $region88: #{mlp_forward.1} parent=76 // pred_region
          %v3607 = vld [vmem:[#allocation2] sm:$0xff]
          %v3608 = vld [vmem:[#allocation2 + $0x8] sm:$0xff]
          %v3609 = vld [vmem:[#allocation2 + $0x10] sm:$0xff]
          %v3610 = vld [vmem:[#allocation2 + $0x18] sm:$0xff]
          %v3611 = vld [vmem:[#allocation2 + $0x20] sm:$0xff]
          %v3612 = vld [vmem:[#allocation2 + $0x28] sm:$0xff]
          %v3613 = vld [vmem:[#allocation2 + $0x30] sm:$0xff]
          %v3614 = vld [vmem:[#allocation2 + $0x38] sm:$0xff]
          %v3615 = vld [vmem:[#allocation2 + $0x40] sm:$0xff]
          %v3616 = vld [vmem:[#allocation2 + $0x48] sm:$0xff]
          %v3617 = vld [vmem:[#allocation2 + $0x50] sm:$0xff]
          %v3618 = vld [vmem:[#allocation2 + $0x58] sm:$0xff]
          %v3619 = vld [vmem:[#allocation2 + $0x60] sm:$0xff]
          %v3620 = vld [vmem:[#allocation2 + $0x68] sm:$0xff]
          %v3621 = vld [vmem:[#allocation2 + $0x70] sm:$0xff]
          %v3622 = vld [vmem:[#allocation2 + $0x78] sm:$0xff]
          %v3623 = vld [vmem:[%s4] sm:$0xff]
          %v3624 = vld [vmem:[%s4 + $0x8] sm:$0xff]
          %v3625 = vld [vmem:[%s4 + $0x10] sm:$0xff]
          %v3626 = vld [vmem:[%s4 + $0x18] sm:$0xff]
          %v3627 = vld [vmem:[%s4 + $0x20] sm:$0xff]
          %v3628 = vld [vmem:[%s4 + $0x28] sm:$0xff]
          %v3629 = vld [vmem:[%s4 + $0x30] sm:$0xff]
          %v3630 = vld [vmem:[%s4 + $0x38] sm:$0xff]
          %v3631 = vld [vmem:[%s4 + $0x40] sm:$0xff]
          %v3632 = vld [vmem:[%s4 + $0x48] sm:$0xff]
          %v3633 = vld [vmem:[%s4 + $0x50] sm:$0xff]
          %v3634 = vld [vmem:[%s4 + $0x58] sm:$0xff]
          %v3635 = vld [vmem:[%s4 + $0x60] sm:$0xff]
          %v3636 = vld [vmem:[%s4 + $0x68] sm:$0xff]
          %v3637 = vld [vmem:[%s4 + $0x70] sm:$0xff]
          %v3638 = vld [vmem:[%s4 + $0x78] sm:$0xff]
          %3640 = vset.pattern.permute.xlu0 0
          %3641 = vperm.xlu0 %3640, %v3623
          %v3642 = vpop.permute.xlu0 %3641
          %3645 = vset.pattern.permute.xlu0 0
          %3646 = vperm.xlu0 %3645, %v3624
          %v3647 = vpop.permute.xlu0 %3646
          %3650 = vset.pattern.permute.xlu0 0
          %3651 = vperm.xlu0 %3650, %v3625
          %v3652 = vpop.permute.xlu0 %3651
          %3655 = vset.pattern.permute.xlu0 0
          %3656 = vperm.xlu0 %3655, %v3626
          %v3657 = vpop.permute.xlu0 %3656
          %3660 = vset.pattern.permute.xlu0 0
          %3661 = vperm.xlu0 %3660, %v3627
          %v3662 = vpop.permute.xlu0 %3661
          %3665 = vset.pattern.permute.xlu0 0
          %3666 = vperm.xlu0 %3665, %v3628
          %v3667 = vpop.permute.xlu0 %3666
          %3670 = vset.pattern.permute.xlu0 0
          %3671 = vperm.xlu0 %3670, %v3629
          %v3672 = vpop.permute.xlu0 %3671
          %3675 = vset.pattern.permute.xlu0 0
          %3676 = vperm.xlu0 %3675, %v3630
          %v3677 = vpop.permute.xlu0 %3676
          %3680 = vset.pattern.permute.xlu0 0
          %3681 = vperm.xlu0 %3680, %v3631
          %v3682 = vpop.permute.xlu0 %3681
          %3685 = vset.pattern.permute.xlu0 0
          %3686 = vperm.xlu0 %3685, %v3632
          %v3687 = vpop.permute.xlu0 %3686
          %3690 = vset.pattern.permute.xlu0 0
          %3691 = vperm.xlu0 %3690, %v3633
          %v3692 = vpop.permute.xlu0 %3691
          %3695 = vset.pattern.permute.xlu0 0
          %3696 = vperm.xlu0 %3695, %v3634
          %v3697 = vpop.permute.xlu0 %3696
          %3700 = vset.pattern.permute.xlu0 0
          %3701 = vperm.xlu0 %3700, %v3635
          %v3702 = vpop.permute.xlu0 %3701
          %3705 = vset.pattern.permute.xlu0 0
          %3706 = vperm.xlu0 %3705, %v3636
          %v3707 = vpop.permute.xlu0 %3706
          %3710 = vset.pattern.permute.xlu0 0
          %3711 = vperm.xlu0 %3710, %v3637
          %v3712 = vpop.permute.xlu0 %3711
          %3715 = vset.pattern.permute.xlu0 0
          %3716 = vperm.xlu0 %3715, %v3638
          %v3717 = vpop.permute.xlu0 %3716
          %v3719 = vadd.f32 %v3607, %v3642
          %v3720 = vadd.f32 %v3608, %v3647
          %v3721 = vadd.f32 %v3609, %v3652
          %v3722 = vadd.f32 %v3610, %v3657
          %v3723 = vadd.f32 %v3611, %v3662
          %v3724 = vadd.f32 %v3612, %v3667
          %v3725 = vadd.f32 %v3613, %v3672
          %v3726 = vadd.f32 %v3614, %v3677
          %v3727 = vadd.f32 %v3615, %v3682
          %v3728 = vadd.f32 %v3616, %v3687
          %v3729 = vadd.f32 %v3617, %v3692
          %v3730 = vadd.f32 %v3618, %v3697
          %v3731 = vadd.f32 %v3619, %v3702
          %v3732 = vadd.f32 %v3620, %v3707
          %v3733 = vadd.f32 %v3621, %v3712
          %v3734 = vadd.f32 %v3622, %v3717
          %3735 = vst [vmem:[%s394] sm:$0xff] %v3719
          %3736 = vst [vmem:[%s394 + $0x8] sm:$0xff] %v3720
          %3737 = vst [vmem:[%s394 + $0x10] sm:$0xff] %v3721
          %3738 = vst [vmem:[%s394 + $0x18] sm:$0xff] %v3722
          %3739 = vst [vmem:[%s394 + $0x20] sm:$0xff] %v3723
          %3740 = vst [vmem:[%s394 + $0x28] sm:$0xff] %v3724
          %3741 = vst [vmem:[%s394 + $0x30] sm:$0xff] %v3725
          %3742 = vst [vmem:[%s394 + $0x38] sm:$0xff] %v3726
          %3743 = vst [vmem:[%s394 + $0x40] sm:$0xff] %v3727
          %3744 = vst [vmem:[%s394 + $0x48] sm:$0xff] %v3728
          %3745 = vst [vmem:[%s394 + $0x50] sm:$0xff] %v3729
          %3746 = vst [vmem:[%s394 + $0x58] sm:$0xff] %v3730
          %3747 = vst [vmem:[%s394 + $0x60] sm:$0xff] %v3731
          %3748 = vst [vmem:[%s394 + $0x68] sm:$0xff] %v3732
          %3749 = vst [vmem:[%s394 + $0x70] sm:$0xff] %v3733
          %3750 = vst [vmem:[%s394 + $0x78] sm:$0xff] %v3734
        $region89: #{mlp_forward.1} parent=76 // pred_fallthru
          _
        %s3751 = sand.u32 %s172, 1
        %s3752 = sand.u32 %s172, 1
        %s3753 = smul.addr %s3752, 128
        %s3754 = scalar_lea.vmem [#allocation4], %s3753
        // Predicated region
        $region90: #{mlp_forward.1} parent=76 // pred_check
          %p3755 = pneg %p182
        $region91: #{mlp_forward.1} parent=76 // pred_check_branch
          %3757 = sbr.rel (%p3755) target = $region93
        $region92: #{mlp_forward.1} parent=76 // pred_region
          %s3758 = smul.addr %s21, 32
          %s3759 = sadd.s32 %s22, %s3758
          %s3760 = smul.addr %s3759, 8
          %s3761 = scalar_lea.vmem %s5, %s3760
          // Predicated region
          $region94: #{mlp_forward.1} parent=92 // pred_check
            _
          $region95: #{mlp_forward.1} parent=92 // pred_check_branch
            %3763 = sbr.rel (0) target = $region97
          $region96: #{mlp_forward.1} parent=92 // pred_region
            // Predicated region
            $region98: #{mlp_forward.1} parent=96 // pred_check
              _
            $region99: #{mlp_forward.1} parent=96 // pred_check_branch
              %3765 = sbr.rel (0) target = $region101
            $region100: #{mlp_forward.1} parent=96 // pred_region
              // Predicated region
              $region113: #{mlp_forward.1} parent=100 // pred_check
                _
              $region114: #{mlp_forward.1} parent=100 // pred_check_branch
                %3811 = sbr.rel (0) target = $region116
              $region115: #{mlp_forward.1} parent=100 // pred_region
                loop: start=0, step=1, limit=1
                $region117: #{mlp_forward.1} parent=115 // loop_pre_header
                  _
                $region118: #{mlp_forward.1} parent=115 // loop_header
                  %s3813 = sphi 0, %s3817
                  %p3814 = scmp.ge.s32.totalorder %s3813, 1
                  %s3818 = sphi %s3754, %s3754
                  %s3819 = sphi %s3761, %s3761
                $region119: #{mlp_forward.1} parent=115 // loop_header_branch
                  %3816 = sbr.rel (%p3814) target = $region123
                $region120: #{mlp_forward.1} parent=115 // loop_body
                  %v3820 = vld [vmem:[%s3818] sm:$0xff]
                  %3821 = vst [vmem:[%s3819] sm:$0xff] %v3820
                  %v3822 = vld [vmem:[%s3818 + $0x8] sm:$0xff]
                  %3823 = vst [vmem:[%s3819 + $0x10] sm:$0xff] %v3822
                  %v3824 = vld [vmem:[%s3818 + $0x10] sm:$0xff]
                  %3825 = vst [vmem:[%s3819 + $0x20] sm:$0xff] %v3824
                  %v3826 = vld [vmem:[%s3818 + $0x18] sm:$0xff]
                  %3827 = vst [vmem:[%s3819 + $0x30] sm:$0xff] %v3826
                  %v3828 = vld [vmem:[%s3818 + $0x20] sm:$0xff]
                  %3829 = vst [vmem:[%s3819 + $0x40] sm:$0xff] %v3828
                  %v3830 = vld [vmem:[%s3818 + $0x28] sm:$0xff]
                  %3831 = vst [vmem:[%s3819 + $0x50] sm:$0xff] %v3830
                  %v3832 = vld [vmem:[%s3818 + $0x30] sm:$0xff]
                  %3833 = vst [vmem:[%s3819 + $0x60] sm:$0xff] %v3832
                  %v3834 = vld [vmem:[%s3818 + $0x38] sm:$0xff]
                  %3835 = vst [vmem:[%s3819 + $0x70] sm:$0xff] %v3834
                  %v3836 = vld [vmem:[%s3818 + $0x40] sm:$0xff]
                  %3837 = vst [vmem:[%s3819 + $0x80] sm:$0xff] %v3836
                  %v3838 = vld [vmem:[%s3818 + $0x48] sm:$0xff]
                  %3839 = vst [vmem:[%s3819 + $0x90] sm:$0xff] %v3838
                  %v3840 = vld [vmem:[%s3818 + $0x50] sm:$0xff]
                  %3841 = vst [vmem:[%s3819 + $0xa0] sm:$0xff] %v3840
                  %v3842 = vld [vmem:[%s3818 + $0x58] sm:$0xff]
                  %3843 = vst [vmem:[%s3819 + $0xb0] sm:$0xff] %v3842
                  %v3844 = vld [vmem:[%s3818 + $0x60] sm:$0xff]
                  %3845 = vst [vmem:[%s3819 + $0xc0] sm:$0xff] %v3844
                  %v3846 = vld [vmem:[%s3818 + $0x68] sm:$0xff]
                  %3847 = vst [vmem:[%s3819 + $0xd0] sm:$0xff] %v3846
                  %v3848 = vld [vmem:[%s3818 + $0x70] sm:$0xff]
                  %3849 = vst [vmem:[%s3819 + $0xe0] sm:$0xff] %v3848
                  %v3850 = vld [vmem:[%s3818 + $0x78] sm:$0xff]
                  %3851 = vst [vmem:[%s3819 + $0xf0] sm:$0xff] %v3850
                $region121: #{mlp_forward.1} parent=115 // loop_footer
                  %s3817 = sadd.s32 1, %s3813
                $region122: #{mlp_forward.1} parent=115 // loop_footer_branch
                  %3812 = sbr.rel target = $region118
                $region123: #{mlp_forward.1} parent=115 // loop_exit
                  _
              $region116: #{mlp_forward.1} parent=100 // pred_fallthru
                _
              // Predicated region
              $region124: #{mlp_forward.1} parent=100 // pred_check
                _
              $region125: #{mlp_forward.1} parent=100 // pred_check_branch
                %3853 = sbr.rel target = $region127
              $region126: #{mlp_forward.1} parent=100 // pred_region
                _
              $region127: #{mlp_forward.1} parent=100 // pred_fallthru
                _
            $region101: #{mlp_forward.1} parent=96 // pred_fallthru
              _
            // Predicated region
            $region102: #{mlp_forward.1} parent=96 // pred_check
              _
            $region103: #{mlp_forward.1} parent=96 // pred_check_branch
              %3767 = sbr.rel target = $region105
            $region104: #{mlp_forward.1} parent=96 // pred_region
              %s3769 = ssub.s32 256, 1
              loop: start=0, step=1, limit=1
              $region106: #{mlp_forward.1} parent=104 // loop_pre_header
                _
              $region107: #{mlp_forward.1} parent=104 // loop_header
                %s3771 = sphi 0, %s3775
                %p3772 = scmp.ge.s32.totalorder %s3771, 1
                %s3776 = sphi %s3754, %s3754
                %s3777 = sphi %s3761, %s3761
              $region108: #{mlp_forward.1} parent=104 // loop_header_branch
                %3774 = sbr.rel (%p3772) target = $region112
              $region109: #{mlp_forward.1} parent=104 // loop_body
                %v3778 = vld [vmem:[%s3776] sm:%s3769]
                %3779 = vst [vmem:[%s3777] sm:%s3769] %v3778
                %v3780 = vld [vmem:[%s3776 + $0x8] sm:%s3769]
                %3781 = vst [vmem:[%s3777 + $0x10] sm:%s3769] %v3780
                %v3782 = vld [vmem:[%s3776 + $0x10] sm:%s3769]
                %3783 = vst [vmem:[%s3777 + $0x20] sm:%s3769] %v3782
                %v3784 = vld [vmem:[%s3776 + $0x18] sm:%s3769]
                %3785 = vst [vmem:[%s3777 + $0x30] sm:%s3769] %v3784
                %v3786 = vld [vmem:[%s3776 + $0x20] sm:%s3769]
                %3787 = vst [vmem:[%s3777 + $0x40] sm:%s3769] %v3786
                %v3788 = vld [vmem:[%s3776 + $0x28] sm:%s3769]
                %3789 = vst [vmem:[%s3777 + $0x50] sm:%s3769] %v3788
                %v3790 = vld [vmem:[%s3776 + $0x30] sm:%s3769]
                %3791 = vst [vmem:[%s3777 + $0x60] sm:%s3769] %v3790
                %v3792 = vld [vmem:[%s3776 + $0x38] sm:%s3769]
                %3793 = vst [vmem:[%s3777 + $0x70] sm:%s3769] %v3792
                %v3794 = vld [vmem:[%s3776 + $0x40] sm:%s3769]
                %3795 = vst [vmem:[%s3777 + $0x80] sm:%s3769] %v3794
                %v3796 = vld [vmem:[%s3776 + $0x48] sm:%s3769]
                %3797 = vst [vmem:[%s3777 + $0x90] sm:%s3769] %v3796
                %v3798 = vld [vmem:[%s3776 + $0x50] sm:%s3769]
                %3799 = vst [vmem:[%s3777 + $0xa0] sm:%s3769] %v3798
                %v3800 = vld [vmem:[%s3776 + $0x58] sm:%s3769]
                %3801 = vst [vmem:[%s3777 + $0xb0] sm:%s3769] %v3800
                %v3802 = vld [vmem:[%s3776 + $0x60] sm:%s3769]
                %3803 = vst [vmem:[%s3777 + $0xc0] sm:%s3769] %v3802
                %v3804 = vld [vmem:[%s3776 + $0x68] sm:%s3769]
                %3805 = vst [vmem:[%s3777 + $0xd0] sm:%s3769] %v3804
                %v3806 = vld [vmem:[%s3776 + $0x70] sm:%s3769]
                %3807 = vst [vmem:[%s3777 + $0xe0] sm:%s3769] %v3806
                %v3808 = vld [vmem:[%s3776 + $0x78] sm:%s3769]
                %3809 = vst [vmem:[%s3777 + $0xf0] sm:%s3769] %v3808
              $region110: #{mlp_forward.1} parent=104 // loop_footer
                %s3775 = sadd.s32 1, %s3771
              $region111: #{mlp_forward.1} parent=104 // loop_footer_branch
                %3770 = sbr.rel target = $region107
              $region112: #{mlp_forward.1} parent=104 // loop_exit
                _
            $region105: #{mlp_forward.1} parent=96 // pred_fallthru
              _
          $region97: #{mlp_forward.1} parent=92 // pred_fallthru
            _
          %3854 = vnop
        $region93: #{mlp_forward.1} parent=76 // pred_fallthru
          _
      $region77: #{mlp_forward.1} parent=5 // pred_fallthru
        _
      %p3855 = scmp.le.s32.totalorder 2, %s11
      // Predicated region
      $region128: #{mlp_forward.1} parent=5 // pred_check
        %p3856 = pneg %p3855
      $region129: #{mlp_forward.1} parent=5 // pred_check_branch
        %3858 = sbr.rel (%p3856) target = $region131
      $region130: #{mlp_forward.1} parent=5 // pred_region
        %s3859 = ssub.s32 %s11, 2
        // Predicated region
        $region132: #{mlp_forward.1} parent=130 // pred_check
          %p3860 = pneg %p188
        $region133: #{mlp_forward.1} parent=130 // pred_check_branch
          %3862 = sbr.rel (%p3860) target = $region135
        $region134: #{mlp_forward.1} parent=130 // pred_region
          %s3863 = sand.u32 %s173, 1
          %s3864 = sand.u32 %s173, 1
          %s3865 = smul.addr %s3864, 128
          %s3866 = scalar_lea.vmem [#allocation4], %s3865
        $region135: #{mlp_forward.1} parent=130 // pred_fallthru
          _
      $region131: #{mlp_forward.1} parent=5 // pred_fallthru
        _
    $region6: #{mlp_forward.1} parent=1 // loop_footer
      %s15 = sadd.s32 1, %s11
    $region7: #{mlp_forward.1} parent=1 // loop_footer_branch
      %10 = sbr.rel target = $region3
    $region8: #{mlp_forward.1} parent=1 // loop_exit
      _

</llo_original>
